<compile_context>
chip_gen: v5e
topology: v5e:2x2
jax: 0.10.0
libtpu: 0.0.40
codegen_flags: <defaults>
</compile_context>

<pallas_src>
import functools

import jax
import jax.numpy as jnp
from jax import lax
from jax.experimental import pallas as pl
from jax.experimental.pallas import tpu as pltpu

LN_EPS = 1e-6


def _layernorm_kernel(*refs, eps, inv_ddof, fuse_residual):
    if fuse_residual:
        x_ref, r_ref, g_ref, b_ref, o_ref = refs
        x = x_ref[...].astype(jnp.float32) + r_ref[...].astype(jnp.float32)
    else:
        x_ref, g_ref, b_ref, o_ref = refs
        x = x_ref[...].astype(jnp.float32)
    mu = jnp.mean(x, axis=-1, keepdims=True)
    d = x - mu
    var = jnp.sum(d * d, axis=-1, keepdims=True) * inv_ddof       # torch.std: unbiased (D-1)
    # sigma.clamp(min=eps) followed by 1/sigma  ==  min(rsqrt(var), 1/eps):
    # a single EUP rsqrt instead of sqrt + reciprocal, and exact numerics.
    inv_sigma = jnp.minimum(lax.rsqrt(var), 1.0 / eps)
    y = d * inv_sigma * g_ref[...].astype(jnp.float32) + b_ref[...].astype(jnp.float32)
    o_ref[...] = y.astype(o_ref.dtype)


def _device_kind():
    try:
        return jax.devices()[0].device_kind.lower()
    except Exception:  # pragma: no cover - defensive only
        return ""


def _pick_block_rows(n_rows, d, itemsize, n_streams, kind, align):
    """Pick a sublane-aligned row tile.

    Targets ~2-4 MiB per block (HBM-roofline sweet spot, fewer ~0.35 us grid
    steps) while keeping the full double-buffered working set
    (n_streams tensors x 2 buffers) inside each generation's scoped-VMEM
    default: ~12 MiB budget on v5e (16 MiB default), ~24 MiB on v6e/v7x
    (32 MiB default, and well under v7x's 64 MiB physical VMEM).
    """
    if n_rows <= align:
        return n_rows                                   # full dim -> always legal
    budget = (12 << 20) if "v5" in kind else (24 << 20)
    target = min(4 << 20, budget // (2 * n_streams))    # bytes per block
    rows = max(align, target // max(1, d * itemsize))
    rows = (rows // align) * align                      # sublane-pack alignment
    return n_rows if rows >= n_rows else rows


def layer_norm(x, gamma, beta, eps=LN_EPS, residual=None, block_rows=None,
               out_dtype=None):
    """LayerNorm over the last dim; optionally fuses `x + residual` in-kernel."""
    shape = x.shape
    D = shape[-1]
    if D % 128 != 0:
        # TODO(synk): pad features (+ gamma/beta) and mask the statistics for
        # non-128-multiple hidden sizes; without padding every store would be a
        # masked (partial) vst and silently cost 2-4x. Real BERT D (768/1024) is fine.
        raise ValueError(f"hidden size {D} must be a multiple of 128")

    x2 = x.reshape(-1, D)
    N = x2.shape[0]
    out_dtype = jnp.dtype(x.dtype) if out_dtype is None else jnp.dtype(out_dtype)

    kind = _device_kind()
    fuse_residual = residual is not None
    n_streams = 3 if fuse_residual else 2               # x (+ residual) + out
    if block_rows is None:
        itemsize = max(jnp.dtype(x.dtype).itemsize, out_dtype.itemsize)
        align = 16 if jnp.dtype(x.dtype).itemsize == 2 else 8   # bf16 packs 16 rows/tile
        block_rows = _pick_block_rows(N, D, itemsize, n_streams, kind, align)

    grid = (pl.cdiv(N, block_rows),)
    row_spec = pl.BlockSpec((block_rows, D), lambda i: (i, 0))
    vec_spec = pl.BlockSpec((1, D), lambda i: (0, 0))

    operands = [x2]
    in_specs = [row_spec]
    if fuse_residual:
        operands.append(residual.reshape(-1, D))
        in_specs.append(row_spec)
    operands += [gamma.reshape(1, D), beta.reshape(1, D)]
    in_specs += [vec_spec, vec_spec]

    # v7x has 2 TensorCores per chip: explicitly shard the row grid across them
    # (plain "parallel" has near-zero codegen impact). v5e/v6e: single TC.
    if "v7" in kind and grid[0] % 2 == 0:
        dims = (pltpu.CORE_PARALLEL,)
    else:
        dims = ("parallel",)

    out = pl.pallas_call(
        functools.partial(_layernorm_kernel, eps=float(eps),
                          inv_ddof=1.0 / float(max(D - 1, 1)),
                          fuse_residual=fuse_residual),
        out_shape=jax.ShapeDtypeStruct((N, D), out_dtype),
        grid=grid,
        in_specs=in_specs,
        out_specs=row_spec,
        compiler_params=pltpu.CompilerParams(dimension_semantics=dims),
    )(*operands)
    return out.reshape(shape)


def layer_norm_ref(x, gamma, beta, eps=LN_EPS):
    """Pure-JAX reference with the exact torch semantics (unbiased std, clamp)."""
    mu = jnp.mean(x, axis=-1, keepdims=True)
    sigma = jnp.maximum(jnp.std(x, axis=-1, keepdims=True, ddof=1), eps)
    return (x - mu) / sigma * gamma + beta


if __name__ == "__main__":
    # Lane-dense shapes: D = 256 (multiple of 128), N = B*S = 2048 rows.
    # The explicit block_rows=256 call exercises an 8-step pipelined grid.
    B, S, D = 2, 1024, 256
    key = jax.random.PRNGKey(0)
    kx, kr, kg, kb = jax.random.split(key, 4)
    x = jax.random.normal(kx, (B, S, D), jnp.float32)
    res = jax.random.normal(kr, (B, S, D), jnp.float32)
    gamma = 1.0 + 0.1 * jax.random.normal(kg, (D,), jnp.float32)
    beta = 0.1 * jax.random.normal(kb, (D,), jnp.float32)

    out = layer_norm(x, gamma, beta)                              # auto block
    out_fused = layer_norm(x, gamma, beta, residual=res)          # LN(x + residual)
    out_tiled = layer_norm(x, gamma, beta, block_rows=256)        # multi-step grid
    out_bf16 = layer_norm(x, gamma, beta, out_dtype=jnp.bfloat16) # halved store bytes
    jax.block_until_ready((out, out_fused, out_tiled, out_bf16))

    ref = layer_norm_ref(x, gamma, beta)
    ref_fused = layer_norm_ref(x + res, gamma, beta)
    assert out.shape == x.shape and out_fused.shape == x.shape
    assert out_bf16.dtype == jnp.bfloat16
    assert bool(jnp.all(jnp.isfinite(out)))
    assert float(jnp.max(jnp.abs(out - ref))) < 1e-4, "plain LN mismatch"
    assert float(jnp.max(jnp.abs(out_fused - ref_fused))) < 1e-4, "fused-residual LN mismatch"
    assert float(jnp.max(jnp.abs(out_tiled - ref))) < 1e-4, "tiled LN mismatch"
    assert float(jnp.max(jnp.abs(out_bf16.astype(jnp.float32) - ref))) < 1e-1, "bf16 LN mismatch"
    print("KERNEL_OK")
</pallas_src>

<mosaic_0001>
module attributes {stable_mosaic.version = 11 : i64} {
  func.func @_layernorm_kernel(%arg0: i32, %arg1: memref<2048x256xf32, #tpu.memory_space<vmem>>, %arg2: memref<1x256xf32, #tpu.memory_space<vmem>>, %arg3: memref<1x256xf32, #tpu.memory_space<vmem>>, %arg4: memref<2048x256xf32, #tpu.memory_space<vmem>>) attributes {dimension_semantics = [#tpu.dimension_semantics<parallel>], iteration_bounds = array<i64: 1>, scalar_prefetch = 0 : i64, scratch_operands = 0 : i64, tpu.core_type = #tpu.core_type<tc>, window_params = [{transform_indices = @transform_0, window_bounds = array<i64: 2048, 256>}, {pipeline_mode = #tpu.pipeline_mode<synchronous>, transform_indices = @transform_1, window_bounds = array<i64: 1, 256>}, {pipeline_mode = #tpu.pipeline_mode<synchronous>, transform_indices = @transform_2, window_bounds = array<i64: 1, 256>}, {transform_indices = @transform_3, window_bounds = array<i64: 2048, 256>}]} {
    %c0 = arith.constant 0 : index
    %c0_0 = arith.constant 0 : index
    %0 = vector.load %arg1[%c0, %c0_0] : memref<2048x256xf32, #tpu.memory_space<vmem>>, vector<2048x256xf32>
    %cst = arith.constant dense<0.000000e+00> : vector<2048xf32>
    %1 = vector.multi_reduction <add>, %0, %cst [1] : vector<2048x256xf32> to vector<2048xf32>
    %2 = vector.shape_cast %1 : vector<2048xf32> to vector<2048x1xf32>
    %cst_1 = arith.constant 2.560000e+02 : f32
    %3 = vector.broadcast %cst_1 : f32 to vector<2048x1xf32>
    %4 = arith.divf %2, %3 : vector<2048x1xf32>
    %5 = vector.broadcast %4 : vector<2048x1xf32> to vector<2048x256xf32>
    %6 = arith.subf %0, %5 : vector<2048x256xf32>
    %7 = arith.mulf %6, %6 : vector<2048x256xf32>
    %cst_2 = arith.constant dense<0.000000e+00> : vector<2048xf32>
    %8 = vector.multi_reduction <add>, %7, %cst_2 [1] : vector<2048x256xf32> to vector<2048xf32>
    %9 = vector.shape_cast %8 : vector<2048xf32> to vector<2048x1xf32>
    %cst_3 = arith.constant 0.00392156886 : f32
    %10 = vector.broadcast %cst_3 : f32 to vector<2048x1xf32>
    %11 = arith.mulf %9, %10 : vector<2048x1xf32>
    %12 = math.rsqrt %11 : vector<2048x1xf32>
    %cst_4 = arith.constant 1.000000e+06 : f32
    %13 = vector.broadcast %cst_4 : f32 to vector<2048x1xf32>
    %14 = arith.minimumf %12, %13 : vector<2048x1xf32>
    %15 = vector.broadcast %14 : vector<2048x1xf32> to vector<2048x256xf32>
    %16 = arith.mulf %6, %15 : vector<2048x256xf32>
    %c0_5 = arith.constant 0 : index
    %c0_6 = arith.constant 0 : index
    %17 = vector.load %arg2[%c0_5, %c0_6] : memref<1x256xf32, #tpu.memory_space<vmem>>, vector<1x256xf32>
    %18 = vector.broadcast %17 : vector<1x256xf32> to vector<2048x256xf32>
    %19 = arith.mulf %16, %18 : vector<2048x256xf32>
    %c0_7 = arith.constant 0 : index
    %c0_8 = arith.constant 0 : index
    %20 = vector.load %arg3[%c0_7, %c0_8] : memref<1x256xf32, #tpu.memory_space<vmem>>, vector<1x256xf32>
    %21 = vector.broadcast %20 : vector<1x256xf32> to vector<2048x256xf32>
    %22 = arith.addf %19, %21 : vector<2048x256xf32>
    %c0_9 = arith.constant 0 : index
    %c0_10 = arith.constant 0 : index
    %23 = vector.load %arg4[%c0_9, %c0_10] : memref<2048x256xf32, #tpu.memory_space<vmem>>, vector<2048x256xf32>
    tpu.vector_store %arg4[%c0_9, %c0_10], %22 {strides = array<i32>} : memref<2048x256xf32, #tpu.memory_space<vmem>>, vector<2048x256xf32>,
    return
  }
  func.func @transform_0(%arg0: i32) -> (i32, i32) {
    %c0_i32 = arith.constant 0 : i32
    %c0_i32_0 = arith.constant 0 : i32
    return %arg0, %c0_i32 : i32, i32
  }
  func.func @transform_1(%arg0: i32) -> (i32, i32) {
    %c0_i32 = arith.constant 0 : i32
    %c0_i32_0 = arith.constant 0 : i32
    %c0_i32_1 = arith.constant 0 : i32
    return %c0_i32, %c0_i32_0 : i32, i32
  }
  func.func @transform_2(%arg0: i32) -> (i32, i32) {
    %c0_i32 = arith.constant 0 : i32
    %c0_i32_0 = arith.constant 0 : i32
    %c0_i32_1 = arith.constant 0 : i32
    return %c0_i32, %c0_i32_0 : i32, i32
  }
  func.func @transform_3(%arg0: i32) -> (i32, i32) {
    %c0_i32 = arith.constant 0 : i32
    %c0_i32_0 = arith.constant 0 : i32
    return %arg0, %c0_i32 : i32, i32
  }
}

</mosaic_0001>

<llo_original>
// kernel: tpu_custom_call.1
$region0: #{tpu_custom_call.1}
  #allocation0 [shape = 'u32[]', space=smem, size = 0x4, offset = 0x4, fixed_abs, tag = 'smem constant byte address 0x4 - core index']
  #allocation1 [shape = 'u32[72,128]{1,0:T(1,128)}', space=vmem, size = 0x9000, scoped, tag = 'internal scratch']
  %s0 = inlined_call_operand.hbm [shape: f32[2048,256], index: 0, kind: input, shape index: {}]
  %s1 = inlined_call_operand.hbm [shape: f32[1,256], index: 1, kind: input, shape index: {}]
  %s2 = inlined_call_operand.hbm [shape: f32[1,256], index: 2, kind: input, shape index: {}]
  %s3 = inlined_call_operand.hbm [shape: f32[2048,256], index: 3, kind: output, shape index: {}]
  %s4 = sld [smem:[#allocation0]]
  $region34: #{tpu_custom_call.1} parent=0
    _
  %s6 = ssub.s32 1, %s4
  %s7 = scalar_select 0, %s6, %s4
  $region1: #{tpu_custom_call.1} parent=0
    #allocation2 [shape = 'u8[2097152]{0}', space=vmem, size = 0x200000, scoped, tag = 'input window, operand 0, single buffered']
    #allocation3 [shape = 's32[1]{0}', space=sflag, size = 0x4, scoped, tag = 'scoped memory for tpu_custom_call.1']
    #allocation4 [shape = 's32[1]{0}', space=sflag, size = 0x4, scoped, tag = 'scoped memory for tpu_custom_call.1']
    #allocation5 [shape = 'u8[1024]{0}', space=vmem, size = 0x400, scoped, tag = 'input window, operand 1, single buffered']
    #allocation6 [shape = 's32[1]{0}', space=sflag, size = 0x4, scoped, tag = 'scoped memory for tpu_custom_call.1']
    #allocation7 [shape = 'u8[1024]{0}', space=vmem, size = 0x400, scoped, tag = 'input window, operand 2, single buffered']
    #allocation8 [shape = 'u8[2097152]{0}', space=vmem, size = 0x200000, scoped, tag = 'output window, operand 0, single buffered']
    %8 = vsyncpa [#allocation3], 0
    %9 = vsyncpa [#allocation6], 0
    %10 = vsyncpa [#allocation4], 0
    // Predicated region
    $region2: #{tpu_custom_call.1} parent=1 // pred_check
      _
    $region3: #{tpu_custom_call.1} parent=1 // pred_check_branch
      %12 = sbr.rel (0) target = $region5
    $region4: #{tpu_custom_call.1} parent=1 // pred_region
      %14 = vsyncadd [#allocation3], 0
      %s15 = sshll.u32 %s0, 4
      %s16 = int_to_ptr.hbm [resolvable:$true] %s15
      %s17 = sshll.u32 [#allocation2], 4
      %s18 = int_to_ptr.vmem [resolvable:$true] %s17
      %23 = dma.hbm_to_vmem [thread:$0]  %s16, 65536, %s18, [#allocation3], 256, 256, 16
    $region5: #{tpu_custom_call.1} parent=1 // pred_fallthru
      _
    // Predicated region
    $region6: #{tpu_custom_call.1} parent=1 // pred_check
      _
    $region7: #{tpu_custom_call.1} parent=1 // pred_check_branch
      %25 = sbr.rel (0) target = $region9
    $region8: #{tpu_custom_call.1} parent=1 // pred_region
      %27 = vsyncadd [#allocation6], 0
      %s29 = sshll.u32 %s1, 4
      %s30 = int_to_ptr.hbm [resolvable:$true] %s29
      %s31 = sshll.u32 [#allocation5], 4
      %s32 = int_to_ptr.vmem [resolvable:$true] %s31
      %34 = dma.hbm_to_vmem [thread:$0]  %s30, 32, %s32, [#allocation6]
    $region9: #{tpu_custom_call.1} parent=1 // pred_fallthru
      _
    // Predicated region
    $region10: #{tpu_custom_call.1} parent=1 // pred_check
      _
    $region11: #{tpu_custom_call.1} parent=1 // pred_check_branch
      %36 = sbr.rel (0) target = $region13
    $region12: #{tpu_custom_call.1} parent=1 // pred_region
      %38 = vsyncadd [#allocation6], 0
      %s40 = sshll.u32 %s2, 4
      %s41 = int_to_ptr.hbm [resolvable:$true] %s40
      %s42 = sshll.u32 [#allocation7], 4
      %s43 = int_to_ptr.vmem [resolvable:$true] %s42
      %45 = dma.hbm_to_vmem [thread:$0]  %s41, 32, %s43, [#allocation6]
    $region13: #{tpu_custom_call.1} parent=1 // pred_fallthru
      _
    // Predicated region
    $region14: #{tpu_custom_call.1} parent=1 // pred_check
      _
    $region15: #{tpu_custom_call.1} parent=1 // pred_check_branch
      %47 = sbr.rel (0) target = $region17
    $region16: #{tpu_custom_call.1} parent=1 // pred_region
      %49 = dma.done [#allocation3], 65536
    $region17: #{tpu_custom_call.1} parent=1 // pred_fallthru
      _
    // Predicated region
    $region18: #{tpu_custom_call.1} parent=1 // pred_check
      _
    $region19: #{tpu_custom_call.1} parent=1 // pred_check_branch
      %51 = sbr.rel (0) target = $region21
    $region20: #{tpu_custom_call.1} parent=1 // pred_region
      %53 = dma.done [#allocation6], 32
    $region21: #{tpu_custom_call.1} parent=1 // pred_fallthru
      _
    // Predicated region
    $region22: #{tpu_custom_call.1} parent=1 // pred_check
      _
    $region23: #{tpu_custom_call.1} parent=1 // pred_check_branch
      %55 = sbr.rel (0) target = $region25
    $region24: #{tpu_custom_call.1} parent=1 // pred_region
      %57 = dma.done [#allocation6], 32
    $region25: #{tpu_custom_call.1} parent=1 // pred_fallthru
      _
    %v58 = vld [vmem:[#allocation2] sm:$0xff]
    %v59 = vld [vmem:[#allocation2 + $0x8] sm:$0xff]
    %v60 = vld [vmem:[#allocation2 + $0x10] sm:$0xff]
    %v61 = vld [vmem:[#allocation2 + $0x18] sm:$0xff]
    %v62 = vld [vmem:[#allocation2 + $0x20] sm:$0xff]
    %v63 = vld [vmem:[#allocation2 + $0x28] sm:$0xff]
    %v64 = vld [vmem:[#allocation2 + $0x30] sm:$0xff]
    %v65 = vld [vmem:[#allocation2 + $0x38] sm:$0xff]
    %v66 = vld [vmem:[#allocation2 + $0x40] sm:$0xff]
    %v67 = vld [vmem:[#allocation2 + $0x48] sm:$0xff]
    %v68 = vld [vmem:[#allocation2 + $0x50] sm:$0xff]
    %v69 = vld [vmem:[#allocation2 + $0x58] sm:$0xff]
    %v70 = vld [vmem:[#allocation2 + $0x60] sm:$0xff]
    %v71 = vld [vmem:[#allocation2 + $0x68] sm:$0xff]
    %v72 = vld [vmem:[#allocation2 + $0x70] sm:$0xff]
    %v73 = vld [vmem:[#allocation2 + $0x78] sm:$0xff]
    %v74 = vld [vmem:[#allocation2 + $0x80] sm:$0xff]
    %v75 = vld [vmem:[#allocation2 + $0x88] sm:$0xff]
    %v76 = vld [vmem:[#allocation2 + $0x90] sm:$0xff]
    %v77 = vld [vmem:[#allocation2 + $0x98] sm:$0xff]
    %v78 = vld [vmem:[#allocation2 + $0xa0] sm:$0xff]
    %v79 = vld [vmem:[#allocation2 + $0xa8] sm:$0xff]
    %v80 = vld [vmem:[#allocation2 + $0xb0] sm:$0xff]
    %v81 = vld [vmem:[#allocation2 + $0xb8] sm:$0xff]
    %v82 = vld [vmem:[#allocation2 + $0xc0] sm:$0xff]
    %v83 = vld [vmem:[#allocation2 + $0xc8] sm:$0xff]
    %v84 = vld [vmem:[#allocation2 + $0xd0] sm:$0xff]
    %v85 = vld [vmem:[#allocation2 + $0xd8] sm:$0xff]
    %v86 = vld [vmem:[#allocation2 + $0xe0] sm:$0xff]
    %v87 = vld [vmem:[#allocation2 + $0xe8] sm:$0xff]
    %v88 = vld [vmem:[#allocation2 + $0xf0] sm:$0xff]
    %v89 = vld [vmem:[#allocation2 + $0xf8] sm:$0xff]
    %v90 = vld [vmem:[#allocation2 + $0x100] sm:$0xff]
    %v91 = vld [vmem:[#allocation2 + $0x108] sm:$0xff]
    %v92 = vld [vmem:[#allocation2 + $0x110] sm:$0xff]
    %v93 = vld [vmem:[#allocation2 + $0x118] sm:$0xff]
    %v94 = vld [vmem:[#allocation2 + $0x120] sm:$0xff]
    %v95 = vld [vmem:[#allocation2 + $0x128] sm:$0xff]
    %v96 = vld [vmem:[#allocation2 + $0x130] sm:$0xff]
    %v97 = vld [vmem:[#allocation2 + $0x138] sm:$0xff]
    %v98 = vld [vmem:[#allocation2 + $0x140] sm:$0xff]
    %v99 = vld [vmem:[#allocation2 + $0x148] sm:$0xff]
    %v100 = vld [vmem:[#allocation2 + $0x150] sm:$0xff]
    %v101 = vld [vmem:[#allocation2 + $0x158] sm:$0xff]
    %v102 = vld [vmem:[#allocation2 + $0x160] sm:$0xff]
    %v103 = vld [vmem:[#allocation2 + $0x168] sm:$0xff]
    %v104 = vld [vmem:[#allocation2 + $0x170] sm:$0xff]
    %v105 = vld [vmem:[#allocation2 + $0x178] sm:$0xff]
    %v106 = vld [vmem:[#allocation2 + $0x180] sm:$0xff]
    %v107 = vld [vmem:[#allocation2 + $0x188] sm:$0xff]
    %v108 = vld [vmem:[#allocation2 + $0x190] sm:$0xff]
    %v109 = vld [vmem:[#allocation2 + $0x198] sm:$0xff]
    %v110 = vld [vmem:[#allocation2 + $0x1a0] sm:$0xff]
    %v111 = vld [vmem:[#allocation2 + $0x1a8] sm:$0xff]
    %v112 = vld [vmem:[#allocation2 + $0x1b0] sm:$0xff]
    %v113 = vld [vmem:[#allocation2 + $0x1b8] sm:$0xff]
    %v114 = vld [vmem:[#allocation2 + $0x1c0] sm:$0xff]
    %v115 = vld [vmem:[#allocation2 + $0x1c8] sm:$0xff]
    %v116 = vld [vmem:[#allocation2 + $0x1d0] sm:$0xff]
    %v117 = vld [vmem:[#allocation2 + $0x1d8] sm:$0xff]
    %v118 = vld [vmem:[#allocation2 + $0x1e0] sm:$0xff]
    %v119 = vld [vmem:[#allocation2 + $0x1e8] sm:$0xff]
    %v120 = vld [vmem:[#allocation2 + $0x1f0] sm:$0xff]
    %v121 = vld [vmem:[#allocation2 + $0x1f8] sm:$0xff]
    %v122 = vld [vmem:[#allocation2 + $0x200] sm:$0xff]
    %v123 = vld [vmem:[#allocation2 + $0x208] sm:$0xff]
    %v124 = vld [vmem:[#allocation2 + $0x210] sm:$0xff]
    %v125 = vld [vmem:[#allocation2 + $0x218] sm:$0xff]
    %v126 = vld [vmem:[#allocation2 + $0x220] sm:$0xff]
    %v127 = vld [vmem:[#allocation2 + $0x228] sm:$0xff]
    %v128 = vld [vmem:[#allocation2 + $0x230] sm:$0xff]
    %v129 = vld [vmem:[#allocation2 + $0x238] sm:$0xff]
    %v130 = vld [vmem:[#allocation2 + $0x240] sm:$0xff]
    %v131 = vld [vmem:[#allocation2 + $0x248] sm:$0xff]
    %v132 = vld [vmem:[#allocation2 + $0x250] sm:$0xff]
    %v133 = vld [vmem:[#allocation2 + $0x258] sm:$0xff]
    %v134 = vld [vmem:[#allocation2 + $0x260] sm:$0xff]
    %v135 = vld [vmem:[#allocation2 + $0x268] sm:$0xff]
    %v136 = vld [vmem:[#allocation2 + $0x270] sm:$0xff]
    %v137 = vld [vmem:[#allocation2 + $0x278] sm:$0xff]
    %v138 = vld [vmem:[#allocation2 + $0x280] sm:$0xff]
    %v139 = vld [vmem:[#allocation2 + $0x288] sm:$0xff]
    %v140 = vld [vmem:[#allocation2 + $0x290] sm:$0xff]
    %v141 = vld [vmem:[#allocation2 + $0x298] sm:$0xff]
    %v142 = vld [vmem:[#allocation2 + $0x2a0] sm:$0xff]
    %v143 = vld [vmem:[#allocation2 + $0x2a8] sm:$0xff]
    %v144 = vld [vmem:[#allocation2 + $0x2b0] sm:$0xff]
    %v145 = vld [vmem:[#allocation2 + $0x2b8] sm:$0xff]
    %v146 = vld [vmem:[#allocation2 + $0x2c0] sm:$0xff]
    %v147 = vld [vmem:[#allocation2 + $0x2c8] sm:$0xff]
    %v148 = vld [vmem:[#allocation2 + $0x2d0] sm:$0xff]
    %v149 = vld [vmem:[#allocation2 + $0x2d8] sm:$0xff]
    %v150 = vld [vmem:[#allocation2 + $0x2e0] sm:$0xff]
    %v151 = vld [vmem:[#allocation2 + $0x2e8] sm:$0xff]
    %v152 = vld [vmem:[#allocation2 + $0x2f0] sm:$0xff]
    %v153 = vld [vmem:[#allocation2 + $0x2f8] sm:$0xff]
    %v154 = vld [vmem:[#allocation2 + $0x300] sm:$0xff]
    %v155 = vld [vmem:[#allocation2 + $0x308] sm:$0xff]
    %v156 = vld [vmem:[#allocation2 + $0x310] sm:$0xff]
    %v157 = vld [vmem:[#allocation2 + $0x318] sm:$0xff]
    %v158 = vld [vmem:[#allocation2 + $0x320] sm:$0xff]
    %v159 = vld [vmem:[#allocation2 + $0x328] sm:$0xff]
    %v160 = vld [vmem:[#allocation2 + $0x330] sm:$0xff]
    %v161 = vld [vmem:[#allocation2 + $0x338] sm:$0xff]
    %v162 = vld [vmem:[#allocation2 + $0x340] sm:$0xff]
    %v163 = vld [vmem:[#allocation2 + $0x348] sm:$0xff]
    %v164 = vld [vmem:[#allocation2 + $0x350] sm:$0xff]
    %v165 = vld [vmem:[#allocation2 + $0x358] sm:$0xff]
    %v166 = vld [vmem:[#allocation2 + $0x360] sm:$0xff]
    %v167 = vld [vmem:[#allocation2 + $0x368] sm:$0xff]
    %v168 = vld [vmem:[#allocation2 + $0x370] sm:$0xff]
    %v169 = vld [vmem:[#allocation2 + $0x378] sm:$0xff]
    %v170 = vld [vmem:[#allocation2 + $0x380] sm:$0xff]
    %v171 = vld [vmem:[#allocation2 + $0x388] sm:$0xff]
    %v172 = vld [vmem:[#allocation2 + $0x390] sm:$0xff]
    %v173 = vld [vmem:[#allocation2 + $0x398] sm:$0xff]
    %v174 = vld [vmem:[#allocation2 + $0x3a0] sm:$0xff]
    %v175 = vld [vmem:[#allocation2 + $0x3a8] sm:$0xff]
    %v176 = vld [vmem:[#allocation2 + $0x3b0] sm:$0xff]
    %v177 = vld [vmem:[#allocation2 + $0x3b8] sm:$0xff]
    %v178 = vld [vmem:[#allocation2 + $0x3c0] sm:$0xff]
    %v179 = vld [vmem:[#allocation2 + $0x3c8] sm:$0xff]
    %v180 = vld [vmem:[#allocation2 + $0x3d0] sm:$0xff]
    %v181 = vld [vmem:[#allocation2 + $0x3d8] sm:$0xff]
    %v182 = vld [vmem:[#allocation2 + $0x3e0] sm:$0xff]
    %v183 = vld [vmem:[#allocation2 + $0x3e8] sm:$0xff]
    %v184 = vld [vmem:[#allocation2 + $0x3f0] sm:$0xff]
    %v185 = vld [vmem:[#allocation2 + $0x3f8] sm:$0xff]
    %v186 = vld [vmem:[#allocation2 + $0x400] sm:$0xff]
    %v187 = vld [vmem:[#allocation2 + $0x408] sm:$0xff]
    %v188 = vld [vmem:[#allocation2 + $0x410] sm:$0xff]
    %v189 = vld [vmem:[#allocation2 + $0x418] sm:$0xff]
    %v190 = vld [vmem:[#allocation2 + $0x420] sm:$0xff]
    %v191 = vld [vmem:[#allocation2 + $0x428] sm:$0xff]
    %v192 = vld [vmem:[#allocation2 + $0x430] sm:$0xff]
    %v193 = vld [vmem:[#allocation2 + $0x438] sm:$0xff]
    %v194 = vld [vmem:[#allocation2 + $0x440] sm:$0xff]
    %v195 = vld [vmem:[#allocation2 + $0x448] sm:$0xff]
    %v196 = vld [vmem:[#allocation2 + $0x450] sm:$0xff]
    %v197 = vld [vmem:[#allocation2 + $0x458] sm:$0xff]
    %v198 = vld [vmem:[#allocation2 + $0x460] sm:$0xff]
    %v199 = vld [vmem:[#allocation2 + $0x468] sm:$0xff]
    %v200 = vld [vmem:[#allocation2 + $0x470] sm:$0xff]
    %v201 = vld [vmem:[#allocation2 + $0x478] sm:$0xff]
    %v202 = vld [vmem:[#allocation2 + $0x480] sm:$0xff]
    %v203 = vld [vmem:[#allocation2 + $0x488] sm:$0xff]
    %v204 = vld [vmem:[#allocation2 + $0x490] sm:$0xff]
    %v205 = vld [vmem:[#allocation2 + $0x498] sm:$0xff]
    %v206 = vld [vmem:[#allocation2 + $0x4a0] sm:$0xff]
    %v207 = vld [vmem:[#allocation2 + $0x4a8] sm:$0xff]
    %v208 = vld [vmem:[#allocation2 + $0x4b0] sm:$0xff]
    %v209 = vld [vmem:[#allocation2 + $0x4b8] sm:$0xff]
    %v210 = vld [vmem:[#allocation2 + $0x4c0] sm:$0xff]
    %v211 = vld [vmem:[#allocation2 + $0x4c8] sm:$0xff]
    %v212 = vld [vmem:[#allocation2 + $0x4d0] sm:$0xff]
    %v213 = vld [vmem:[#allocation2 + $0x4d8] sm:$0xff]
    %v214 = vld [vmem:[#allocation2 + $0x4e0] sm:$0xff]
    %v215 = vld [vmem:[#allocation2 + $0x4e8] sm:$0xff]
    %v216 = vld [vmem:[#allocation2 + $0x4f0] sm:$0xff]
    %v217 = vld [vmem:[#allocation2 + $0x4f8] sm:$0xff]
    %v218 = vld [vmem:[#allocation2 + $0x500] sm:$0xff]
    %v219 = vld [vmem:[#allocation2 + $0x508] sm:$0xff]
    %v220 = vld [vmem:[#allocation2 + $0x510] sm:$0xff]
    %v221 = vld [vmem:[#allocation2 + $0x518] sm:$0xff]
    %v222 = vld [vmem:[#allocation2 + $0x520] sm:$0xff]
    %v223 = vld [vmem:[#allocation2 + $0x528] sm:$0xff]
    %v224 = vld [vmem:[#allocation2 + $0x530] sm:$0xff]
    %v225 = vld [vmem:[#allocation2 + $0x538] sm:$0xff]
    %v226 = vld [vmem:[#allocation2 + $0x540] sm:$0xff]
    %v227 = vld [vmem:[#allocation2 + $0x548] sm:$0xff]
    %v228 = vld [vmem:[#allocation2 + $0x550] sm:$0xff]
    %v229 = vld [vmem:[#allocation2 + $0x558] sm:$0xff]
    %v230 = vld [vmem:[#allocation2 + $0x560] sm:$0xff]
    %v231 = vld [vmem:[#allocation2 + $0x568] sm:$0xff]
    %v232 = vld [vmem:[#allocation2 + $0x570] sm:$0xff]
    %v233 = vld [vmem:[#allocation2 + $0x578] sm:$0xff]
    %v234 = vld [vmem:[#allocation2 + $0x580] sm:$0xff]
    %v235 = vld [vmem:[#allocation2 + $0x588] sm:$0xff]
    %v236 = vld [vmem:[#allocation2 + $0x590] sm:$0xff]
    %v237 = vld [vmem:[#allocation2 + $0x598] sm:$0xff]
    %v238 = vld [vmem:[#allocation2 + $0x5a0] sm:$0xff]
    %v239 = vld [vmem:[#allocation2 + $0x5a8] sm:$0xff]
    %v240 = vld [vmem:[#allocation2 + $0x5b0] sm:$0xff]
    %v241 = vld [vmem:[#allocation2 + $0x5b8] sm:$0xff]
    %v242 = vld [vmem:[#allocation2 + $0x5c0] sm:$0xff]
    %v243 = vld [vmem:[#allocation2 + $0x5c8] sm:$0xff]
    %v244 = vld [vmem:[#allocation2 + $0x5d0] sm:$0xff]
    %v245 = vld [vmem:[#allocation2 + $0x5d8] sm:$0xff]
    %v246 = vld [vmem:[#allocation2 + $0x5e0] sm:$0xff]
    %v247 = vld [vmem:[#allocation2 + $0x5e8] sm:$0xff]
    %v248 = vld [vmem:[#allocation2 + $0x5f0] sm:$0xff]
    %v249 = vld [vmem:[#allocation2 + $0x5f8] sm:$0xff]
    %v250 = vld [vmem:[#allocation2 + $0x600] sm:$0xff]
    %v251 = vld [vmem:[#allocation2 + $0x608] sm:$0xff]
    %v252 = vld [vmem:[#allocation2 + $0x610] sm:$0xff]
    %v253 = vld [vmem:[#allocation2 + $0x618] sm:$0xff]
    %v254 = vld [vmem:[#allocation2 + $0x620] sm:$0xff]
    %v255 = vld [vmem:[#allocation2 + $0x628] sm:$0xff]
    %v256 = vld [vmem:[#allocation2 + $0x630] sm:$0xff]
    %v257 = vld [vmem:[#allocation2 + $0x638] sm:$0xff]
    %v258 = vld [vmem:[#allocation2 + $0x640] sm:$0xff]
    %v259 = vld [vmem:[#allocation2 + $0x648] sm:$0xff]
    %v260 = vld [vmem:[#allocation2 + $0x650] sm:$0xff]
    %v261 = vld [vmem:[#allocation2 + $0x658] sm:$0xff]
    %v262 = vld [vmem:[#allocation2 + $0x660] sm:$0xff]
    %v263 = vld [vmem:[#allocation2 + $0x668] sm:$0xff]
    %v264 = vld [vmem:[#allocation2 + $0x670] sm:$0xff]
    %v265 = vld [vmem:[#allocation2 + $0x678] sm:$0xff]
    %v266 = vld [vmem:[#allocation2 + $0x680] sm:$0xff]
    %v267 = vld [vmem:[#allocation2 + $0x688] sm:$0xff]
    %v268 = vld [vmem:[#allocation2 + $0x690] sm:$0xff]
    %v269 = vld [vmem:[#allocation2 + $0x698] sm:$0xff]
    %v270 = vld [vmem:[#allocation2 + $0x6a0] sm:$0xff]
    %v271 = vld [vmem:[#allocation2 + $0x6a8] sm:$0xff]
    %v272 = vld [vmem:[#allocation2 + $0x6b0] sm:$0xff]
    %v273 = vld [vmem:[#allocation2 + $0x6b8] sm:$0xff]
    %v274 = vld [vmem:[#allocation2 + $0x6c0] sm:$0xff]
    %v275 = vld [vmem:[#allocation2 + $0x6c8] sm:$0xff]
    %v276 = vld [vmem:[#allocation2 + $0x6d0] sm:$0xff]
    %v277 = vld [vmem:[#allocation2 + $0x6d8] sm:$0xff]
    %v278 = vld [vmem:[#allocation2 + $0x6e0] sm:$0xff]
    %v279 = vld [vmem:[#allocation2 + $0x6e8] sm:$0xff]
    %v280 = vld [vmem:[#allocation2 + $0x6f0] sm:$0xff]
    %v281 = vld [vmem:[#allocation2 + $0x6f8] sm:$0xff]
    %v282 = vld [vmem:[#allocation2 + $0x700] sm:$0xff]
    %v283 = vld [vmem:[#allocation2 + $0x708] sm:$0xff]
    %v284 = vld [vmem:[#allocation2 + $0x710] sm:$0xff]
    %v285 = vld [vmem:[#allocation2 + $0x718] sm:$0xff]
    %v286 = vld [vmem:[#allocation2 + $0x720] sm:$0xff]
    %v287 = vld [vmem:[#allocation2 + $0x728] sm:$0xff]
    %v288 = vld [vmem:[#allocation2 + $0x730] sm:$0xff]
    %v289 = vld [vmem:[#allocation2 + $0x738] sm:$0xff]
    %v290 = vld [vmem:[#allocation2 + $0x740] sm:$0xff]
    %v291 = vld [vmem:[#allocation2 + $0x748] sm:$0xff]
    %v292 = vld [vmem:[#allocation2 + $0x750] sm:$0xff]
    %v293 = vld [vmem:[#allocation2 + $0x758] sm:$0xff]
    %v294 = vld [vmem:[#allocation2 + $0x760] sm:$0xff]
    %v295 = vld [vmem:[#allocation2 + $0x768] sm:$0xff]
    %v296 = vld [vmem:[#allocation2 + $0x770] sm:$0xff]
    %v297 = vld [vmem:[#allocation2 + $0x778] sm:$0xff]
    %v298 = vld [vmem:[#allocation2 + $0x780] sm:$0xff]
    %v299 = vld [vmem:[#allocation2 + $0x788] sm:$0xff]
    %v300 = vld [vmem:[#allocation2 + $0x790] sm:$0xff]
    %v301 = vld [vmem:[#allocation2 + $0x798] sm:$0xff]
    %v302 = vld [vmem:[#allocation2 + $0x7a0] sm:$0xff]
    %v303 = vld [vmem:[#allocation2 + $0x7a8] sm:$0xff]
    %v304 = vld [vmem:[#allocation2 + $0x7b0] sm:$0xff]
    %v305 = vld [vmem:[#allocation2 + $0x7b8] sm:$0xff]
    %v306 = vld [vmem:[#allocation2 + $0x7c0] sm:$0xff]
    %v307 = vld [vmem:[#allocation2 + $0x7c8] sm:$0xff]
    %v308 = vld [vmem:[#allocation2 + $0x7d0] sm:$0xff]
    %v309 = vld [vmem:[#allocation2 + $0x7d8] sm:$0xff]
    %v310 = vld [vmem:[#allocation2 + $0x7e0] sm:$0xff]
    %v311 = vld [vmem:[#allocation2 + $0x7e8] sm:$0xff]
    %v312 = vld [vmem:[#allocation2 + $0x7f0] sm:$0xff]
    %v313 = vld [vmem:[#allocation2 + $0x7f8] sm:$0xff]
    %v314 = vld [vmem:[#allocation2 + $0x800] sm:$0xff]
    %v315 = vld [vmem:[#allocation2 + $0x808] sm:$0xff]
    %v316 = vld [vmem:[#allocation2 + $0x810] sm:$0xff]
    %v317 = vld [vmem:[#allocation2 + $0x818] sm:$0xff]
    %v318 = vld [vmem:[#allocation2 + $0x820] sm:$0xff]
    %v319 = vld [vmem:[#allocation2 + $0x828] sm:$0xff]
    %v320 = vld [vmem:[#allocation2 + $0x830] sm:$0xff]
    %v321 = vld [vmem:[#allocation2 + $0x838] sm:$0xff]
    %v322 = vld [vmem:[#allocation2 + $0x840] sm:$0xff]
    %v323 = vld [vmem:[#allocation2 + $0x848] sm:$0xff]
    %v324 = vld [vmem:[#allocation2 + $0x850] sm:$0xff]
    %v325 = vld [vmem:[#allocation2 + $0x858] sm:$0xff]
    %v326 = vld [vmem:[#allocation2 + $0x860] sm:$0xff]
    %v327 = vld [vmem:[#allocation2 + $0x868] sm:$0xff]
    %v328 = vld [vmem:[#allocation2 + $0x870] sm:$0xff]
    %v329 = vld [vmem:[#allocation2 + $0x878] sm:$0xff]
    %v330 = vld [vmem:[#allocation2 + $0x880] sm:$0xff]
    %v331 = vld [vmem:[#allocation2 + $0x888] sm:$0xff]
    %v332 = vld [vmem:[#allocation2 + $0x890] sm:$0xff]
    %v333 = vld [vmem:[#allocation2 + $0x898] sm:$0xff]
    %v334 = vld [vmem:[#allocation2 + $0x8a0] sm:$0xff]
    %v335 = vld [vmem:[#allocation2 + $0x8a8] sm:$0xff]
    %v336 = vld [vmem:[#allocation2 + $0x8b0] sm:$0xff]
    %v337 = vld [vmem:[#allocation2 + $0x8b8] sm:$0xff]
    %v338 = vld [vmem:[#allocation2 + $0x8c0] sm:$0xff]
    %v339 = vld [vmem:[#allocation2 + $0x8c8] sm:$0xff]
    %v340 = vld [vmem:[#allocation2 + $0x8d0] sm:$0xff]
    %v341 = vld [vmem:[#allocation2 + $0x8d8] sm:$0xff]
    %v342 = vld [vmem:[#allocation2 + $0x8e0] sm:$0xff]
    %v343 = vld [vmem:[#allocation2 + $0x8e8] sm:$0xff]
    %v344 = vld [vmem:[#allocation2 + $0x8f0] sm:$0xff]
    %v345 = vld [vmem:[#allocation2 + $0x8f8] sm:$0xff]
    %v346 = vld [vmem:[#allocation2 + $0x900] sm:$0xff]
    %v347 = vld [vmem:[#allocation2 + $0x908] sm:$0xff]
    %v348 = vld [vmem:[#allocation2 + $0x910] sm:$0xff]
    %v349 = vld [vmem:[#allocation2 + $0x918] sm:$0xff]
    %v350 = vld [vmem:[#allocation2 + $0x920] sm:$0xff]
    %v351 = vld [vmem:[#allocation2 + $0x928] sm:$0xff]
    %v352 = vld [vmem:[#allocation2 + $0x930] sm:$0xff]
    %v353 = vld [vmem:[#allocation2 + $0x938] sm:$0xff]
    %v354 = vld [vmem:[#allocation2 + $0x940] sm:$0xff]
    %v355 = vld [vmem:[#allocation2 + $0x948] sm:$0xff]
    %v356 = vld [vmem:[#allocation2 + $0x950] sm:$0xff]
    %v357 = vld [vmem:[#allocation2 + $0x958] sm:$0xff]
    %v358 = vld [vmem:[#allocation2 + $0x960] sm:$0xff]
    %v359 = vld [vmem:[#allocation2 + $0x968] sm:$0xff]
    %v360 = vld [vmem:[#allocation2 + $0x970] sm:$0xff]
    %v361 = vld [vmem:[#allocation2 + $0x978] sm:$0xff]
    %v362 = vld [vmem:[#allocation2 + $0x980] sm:$0xff]
    %v363 = vld [vmem:[#allocation2 + $0x988] sm:$0xff]
    %v364 = vld [vmem:[#allocation2 + $0x990] sm:$0xff]
    %v365 = vld [vmem:[#allocation2 + $0x998] sm:$0xff]
    %v366 = vld [vmem:[#allocation2 + $0x9a0] sm:$0xff]
    %v367 = vld [vmem:[#allocation2 + $0x9a8] sm:$0xff]
    %v368 = vld [vmem:[#allocation2 + $0x9b0] sm:$0xff]
    %v369 = vld [vmem:[#allocation2 + $0x9b8] sm:$0xff]
    %v370 = vld [vmem:[#allocation2 + $0x9c0] sm:$0xff]
    %v371 = vld [vmem:[#allocation2 + $0x9c8] sm:$0xff]
    %v372 = vld [vmem:[#allocation2 + $0x9d0] sm:$0xff]
    %v373 = vld [vmem:[#allocation2 + $0x9d8] sm:$0xff]
    %v374 = vld [vmem:[#allocation2 + $0x9e0] sm:$0xff]
    %v375 = vld [vmem:[#allocation2 + $0x9e8] sm:$0xff]
    %v376 = vld [vmem:[#allocation2 + $0x9f0] sm:$0xff]
    %v377 = vld [vmem:[#allocation2 + $0x9f8] sm:$0xff]
    %v378 = vld [vmem:[#allocation2 + $0xa00] sm:$0xff]
    %v379 = vld [vmem:[#allocation2 + $0xa08] sm:$0xff]
    %v380 = vld [vmem:[#allocation2 + $0xa10] sm:$0xff]
    %v381 = vld [vmem:[#allocation2 + $0xa18] sm:$0xff]
    %v382 = vld [vmem:[#allocation2 + $0xa20] sm:$0xff]
    %v383 = vld [vmem:[#allocation2 + $0xa28] sm:$0xff]
    %v384 = vld [vmem:[#allocation2 + $0xa30] sm:$0xff]
    %v385 = vld [vmem:[#allocation2 + $0xa38] sm:$0xff]
    %v386 = vld [vmem:[#allocation2 + $0xa40] sm:$0xff]
    %v387 = vld [vmem:[#allocation2 + $0xa48] sm:$0xff]
    %v388 = vld [vmem:[#allocation2 + $0xa50] sm:$0xff]
    %v389 = vld [vmem:[#allocation2 + $0xa58] sm:$0xff]
    %v390 = vld [vmem:[#allocation2 + $0xa60] sm:$0xff]
    %v391 = vld [vmem:[#allocation2 + $0xa68] sm:$0xff]
    %v392 = vld [vmem:[#allocation2 + $0xa70] sm:$0xff]
    %v393 = vld [vmem:[#allocation2 + $0xa78] sm:$0xff]
    %v394 = vld [vmem:[#allocation2 + $0xa80] sm:$0xff]
    %v395 = vld [vmem:[#allocation2 + $0xa88] sm:$0xff]
    %v396 = vld [vmem:[#allocation2 + $0xa90] sm:$0xff]
    %v397 = vld [vmem:[#allocation2 + $0xa98] sm:$0xff]
    %v398 = vld [vmem:[#allocation2 + $0xaa0] sm:$0xff]
    %v399 = vld [vmem:[#allocation2 + $0xaa8] sm:$0xff]
    %v400 = vld [vmem:[#allocation2 + $0xab0] sm:$0xff]
    %v401 = vld [vmem:[#allocation2 + $0xab8] sm:$0xff]
    %v402 = vld [vmem:[#allocation2 + $0xac0] sm:$0xff]
    %v403 = vld [vmem:[#allocation2 + $0xac8] sm:$0xff]
    %v404 = vld [vmem:[#allocation2 + $0xad0] sm:$0xff]
    %v405 = vld [vmem:[#allocation2 + $0xad8] sm:$0xff]
    %v406 = vld [vmem:[#allocation2 + $0xae0] sm:$0xff]
    %v407 = vld [vmem:[#allocation2 + $0xae8] sm:$0xff]
    %v408 = vld [vmem:[#allocation2 + $0xaf0] sm:$0xff]
    %v409 = vld [vmem:[#allocation2 + $0xaf8] sm:$0xff]
    %v410 = vld [vmem:[#allocation2 + $0xb00] sm:$0xff]
    %v411 = vld [vmem:[#allocation2 + $0xb08] sm:$0xff]
    %v412 = vld [vmem:[#allocation2 + $0xb10] sm:$0xff]
    %v413 = vld [vmem:[#allocation2 + $0xb18] sm:$0xff]
    %v414 = vld [vmem:[#allocation2 + $0xb20] sm:$0xff]
    %v415 = vld [vmem:[#allocation2 + $0xb28] sm:$0xff]
    %v416 = vld [vmem:[#allocation2 + $0xb30] sm:$0xff]
    %v417 = vld [vmem:[#allocation2 + $0xb38] sm:$0xff]
    %v418 = vld [vmem:[#allocation2 + $0xb40] sm:$0xff]
    %v419 = vld [vmem:[#allocation2 + $0xb48] sm:$0xff]
    %v420 = vld [vmem:[#allocation2 + $0xb50] sm:$0xff]
    %v421 = vld [vmem:[#allocation2 + $0xb58] sm:$0xff]
    %v422 = vld [vmem:[#allocation2 + $0xb60] sm:$0xff]
    %v423 = vld [vmem:[#allocation2 + $0xb68] sm:$0xff]
    %v424 = vld [vmem:[#allocation2 + $0xb70] sm:$0xff]
    %v425 = vld [vmem:[#allocation2 + $0xb78] sm:$0xff]
    %v426 = vld [vmem:[#allocation2 + $0xb80] sm:$0xff]
    %v427 = vld [vmem:[#allocation2 + $0xb88] sm:$0xff]
    %v428 = vld [vmem:[#allocation2 + $0xb90] sm:$0xff]
    %v429 = vld [vmem:[#allocation2 + $0xb98] sm:$0xff]
    %v430 = vld [vmem:[#allocation2 + $0xba0] sm:$0xff]
    %v431 = vld [vmem:[#allocation2 + $0xba8] sm:$0xff]
    %v432 = vld [vmem:[#allocation2 + $0xbb0] sm:$0xff]
    %v433 = vld [vmem:[#allocation2 + $0xbb8] sm:$0xff]
    %v434 = vld [vmem:[#allocation2 + $0xbc0] sm:$0xff]
    %v435 = vld [vmem:[#allocation2 + $0xbc8] sm:$0xff]
    %v436 = vld [vmem:[#allocation2 + $0xbd0] sm:$0xff]
    %v437 = vld [vmem:[#allocation2 + $0xbd8] sm:$0xff]
    %v438 = vld [vmem:[#allocation2 + $0xbe0] sm:$0xff]
    %v439 = vld [vmem:[#allocation2 + $0xbe8] sm:$0xff]
    %v440 = vld [vmem:[#allocation2 + $0xbf0] sm:$0xff]
    %v441 = vld [vmem:[#allocation2 + $0xbf8] sm:$0xff]
    %v442 = vld [vmem:[#allocation2 + $0xc00] sm:$0xff]
    %v443 = vld [vmem:[#allocation2 + $0xc08] sm:$0xff]
    %v444 = vld [vmem:[#allocation2 + $0xc10] sm:$0xff]
    %v445 = vld [vmem:[#allocation2 + $0xc18] sm:$0xff]
    %v446 = vld [vmem:[#allocation2 + $0xc20] sm:$0xff]
    %v447 = vld [vmem:[#allocation2 + $0xc28] sm:$0xff]
    %v448 = vld [vmem:[#allocation2 + $0xc30] sm:$0xff]
    %v449 = vld [vmem:[#allocation2 + $0xc38] sm:$0xff]
    %v450 = vld [vmem:[#allocation2 + $0xc40] sm:$0xff]
    %v451 = vld [vmem:[#allocation2 + $0xc48] sm:$0xff]
    %v452 = vld [vmem:[#allocation2 + $0xc50] sm:$0xff]
    %v453 = vld [vmem:[#allocation2 + $0xc58] sm:$0xff]
    %v454 = vld [vmem:[#allocation2 + $0xc60] sm:$0xff]
    %v455 = vld [vmem:[#allocation2 + $0xc68] sm:$0xff]
    %v456 = vld [vmem:[#allocation2 + $0xc70] sm:$0xff]
    %v457 = vld [vmem:[#allocation2 + $0xc78] sm:$0xff]
    %v458 = vld [vmem:[#allocation2 + $0xc80] sm:$0xff]
    %v459 = vld [vmem:[#allocation2 + $0xc88] sm:$0xff]
    %v460 = vld [vmem:[#allocation2 + $0xc90] sm:$0xff]
    %v461 = vld [vmem:[#allocation2 + $0xc98] sm:$0xff]
    %v462 = vld [vmem:[#allocation2 + $0xca0] sm:$0xff]
    %v463 = vld [vmem:[#allocation2 + $0xca8] sm:$0xff]
    %v464 = vld [vmem:[#allocation2 + $0xcb0] sm:$0xff]
    %v465 = vld [vmem:[#allocation2 + $0xcb8] sm:$0xff]
    %v466 = vld [vmem:[#allocation2 + $0xcc0] sm:$0xff]
    %v467 = vld [vmem:[#allocation2 + $0xcc8] sm:$0xff]
    %v468 = vld [vmem:[#allocation2 + $0xcd0] sm:$0xff]
    %v469 = vld [vmem:[#allocation2 + $0xcd8] sm:$0xff]
    %v470 = vld [vmem:[#allocation2 + $0xce0] sm:$0xff]
    %v471 = vld [vmem:[#allocation2 + $0xce8] sm:$0xff]
    %v472 = vld [vmem:[#allocation2 + $0xcf0] sm:$0xff]
    %v473 = vld [vmem:[#allocation2 + $0xcf8] sm:$0xff]
    %v474 = vld [vmem:[#allocation2 + $0xd00] sm:$0xff]
    %v475 = vld [vmem:[#allocation2 + $0xd08] sm:$0xff]
    %v476 = vld [vmem:[#allocation2 + $0xd10] sm:$0xff]
    %v477 = vld [vmem:[#allocation2 + $0xd18] sm:$0xff]
    %v478 = vld [vmem:[#allocation2 + $0xd20] sm:$0xff]
    %v479 = vld [vmem:[#allocation2 + $0xd28] sm:$0xff]
    %v480 = vld [vmem:[#allocation2 + $0xd30] sm:$0xff]
    %v481 = vld [vmem:[#allocation2 + $0xd38] sm:$0xff]
    %v482 = vld [vmem:[#allocation2 + $0xd40] sm:$0xff]
    %v483 = vld [vmem:[#allocation2 + $0xd48] sm:$0xff]
    %v484 = vld [vmem:[#allocation2 + $0xd50] sm:$0xff]
    %v485 = vld [vmem:[#allocation2 + $0xd58] sm:$0xff]
    %v486 = vld [vmem:[#allocation2 + $0xd60] sm:$0xff]
    %v487 = vld [vmem:[#allocation2 + $0xd68] sm:$0xff]
    %v488 = vld [vmem:[#allocation2 + $0xd70] sm:$0xff]
    %v489 = vld [vmem:[#allocation2 + $0xd78] sm:$0xff]
    %v490 = vld [vmem:[#allocation2 + $0xd80] sm:$0xff]
    %v491 = vld [vmem:[#allocation2 + $0xd88] sm:$0xff]
    %v492 = vld [vmem:[#allocation2 + $0xd90] sm:$0xff]
    %v493 = vld [vmem:[#allocation2 + $0xd98] sm:$0xff]
    %v494 = vld [vmem:[#allocation2 + $0xda0] sm:$0xff]
    %v495 = vld [vmem:[#allocation2 + $0xda8] sm:$0xff]
    %v496 = vld [vmem:[#allocation2 + $0xdb0] sm:$0xff]
    %v497 = vld [vmem:[#allocation2 + $0xdb8] sm:$0xff]
    %v498 = vld [vmem:[#allocation2 + $0xdc0] sm:$0xff]
    %v499 = vld [vmem:[#allocation2 + $0xdc8] sm:$0xff]
    %v500 = vld [vmem:[#allocation2 + $0xdd0] sm:$0xff]
    %v501 = vld [vmem:[#allocation2 + $0xdd8] sm:$0xff]
    %v502 = vld [vmem:[#allocation2 + $0xde0] sm:$0xff]
    %v503 = vld [vmem:[#allocation2 + $0xde8] sm:$0xff]
    %v504 = vld [vmem:[#allocation2 + $0xdf0] sm:$0xff]
    %v505 = vld [vmem:[#allocation2 + $0xdf8] sm:$0xff]
    %v506 = vld [vmem:[#allocation2 + $0xe00] sm:$0xff]
    %v507 = vld [vmem:[#allocation2 + $0xe08] sm:$0xff]
    %v508 = vld [vmem:[#allocation2 + $0xe10] sm:$0xff]
    %v509 = vld [vmem:[#allocation2 + $0xe18] sm:$0xff]
    %v510 = vld [vmem:[#allocation2 + $0xe20] sm:$0xff]
    %v511 = vld [vmem:[#allocation2 + $0xe28] sm:$0xff]
    %v512 = vld [vmem:[#allocation2 + $0xe30] sm:$0xff]
    %v513 = vld [vmem:[#allocation2 + $0xe38] sm:$0xff]
    %v514 = vld [vmem:[#allocation2 + $0xe40] sm:$0xff]
    %v515 = vld [vmem:[#allocation2 + $0xe48] sm:$0xff]
    %v516 = vld [vmem:[#allocation2 + $0xe50] sm:$0xff]
    %v517 = vld [vmem:[#allocation2 + $0xe58] sm:$0xff]
    %v518 = vld [vmem:[#allocation2 + $0xe60] sm:$0xff]
    %v519 = vld [vmem:[#allocation2 + $0xe68] sm:$0xff]
    %v520 = vld [vmem:[#allocation2 + $0xe70] sm:$0xff]
    %v521 = vld [vmem:[#allocation2 + $0xe78] sm:$0xff]
    %v522 = vld [vmem:[#allocation2 + $0xe80] sm:$0xff]
    %v523 = vld [vmem:[#allocation2 + $0xe88] sm:$0xff]
    %v524 = vld [vmem:[#allocation2 + $0xe90] sm:$0xff]
    %v525 = vld [vmem:[#allocation2 + $0xe98] sm:$0xff]
    %v526 = vld [vmem:[#allocation2 + $0xea0] sm:$0xff]
    %v527 = vld [vmem:[#allocation2 + $0xea8] sm:$0xff]
    %v528 = vld [vmem:[#allocation2 + $0xeb0] sm:$0xff]
    %v529 = vld [vmem:[#allocation2 + $0xeb8] sm:$0xff]
    %v530 = vld [vmem:[#allocation2 + $0xec0] sm:$0xff]
    %v531 = vld [vmem:[#allocation2 + $0xec8] sm:$0xff]
    %v532 = vld [vmem:[#allocation2 + $0xed0] sm:$0xff]
    %v533 = vld [vmem:[#allocation2 + $0xed8] sm:$0xff]
    %v534 = vld [vmem:[#allocation2 + $0xee0] sm:$0xff]
    %v535 = vld [vmem:[#allocation2 + $0xee8] sm:$0xff]
    %v536 = vld [vmem:[#allocation2 + $0xef0] sm:$0xff]
    %v537 = vld [vmem:[#allocation2 + $0xef8] sm:$0xff]
    %v538 = vld [vmem:[#allocation2 + $0xf00] sm:$0xff]
    %v539 = vld [vmem:[#allocation2 + $0xf08] sm:$0xff]
    %v540 = vld [vmem:[#allocation2 + $0xf10] sm:$0xff]
    %v541 = vld [vmem:[#allocation2 + $0xf18] sm:$0xff]
    %v542 = vld [vmem:[#allocation2 + $0xf20] sm:$0xff]
    %v543 = vld [vmem:[#allocation2 + $0xf28] sm:$0xff]
    %v544 = vld [vmem:[#allocation2 + $0xf30] sm:$0xff]
    %v545 = vld [vmem:[#allocation2 + $0xf38] sm:$0xff]
    %v546 = vld [vmem:[#allocation2 + $0xf40] sm:$0xff]
    %v547 = vld [vmem:[#allocation2 + $0xf48] sm:$0xff]
    %v548 = vld [vmem:[#allocation2 + $0xf50] sm:$0xff]
    %v549 = vld [vmem:[#allocation2 + $0xf58] sm:$0xff]
    %v550 = vld [vmem:[#allocation2 + $0xf60] sm:$0xff]
    %v551 = vld [vmem:[#allocation2 + $0xf68] sm:$0xff]
    %v552 = vld [vmem:[#allocation2 + $0xf70] sm:$0xff]
    %v553 = vld [vmem:[#allocation2 + $0xf78] sm:$0xff]
    %v554 = vld [vmem:[#allocation2 + $0xf80] sm:$0xff]
    %v555 = vld [vmem:[#allocation2 + $0xf88] sm:$0xff]
    %v556 = vld [vmem:[#allocation2 + $0xf90] sm:$0xff]
    %v557 = vld [vmem:[#allocation2 + $0xf98] sm:$0xff]
    %v558 = vld [vmem:[#allocation2 + $0xfa0] sm:$0xff]
    %v559 = vld [vmem:[#allocation2 + $0xfa8] sm:$0xff]
    %v560 = vld [vmem:[#allocation2 + $0xfb0] sm:$0xff]
    %v561 = vld [vmem:[#allocation2 + $0xfb8] sm:$0xff]
    %v562 = vld [vmem:[#allocation2 + $0xfc0] sm:$0xff]
    %v563 = vld [vmem:[#allocation2 + $0xfc8] sm:$0xff]
    %v564 = vld [vmem:[#allocation2 + $0xfd0] sm:$0xff]
    %v565 = vld [vmem:[#allocation2 + $0xfd8] sm:$0xff]
    %v566 = vld [vmem:[#allocation2 + $0xfe0] sm:$0xff]
    %v567 = vld [vmem:[#allocation2 + $0xfe8] sm:$0xff]
    %v568 = vld [vmem:[#allocation2 + $0xff0] sm:$0xff]
    %v569 = vld [vmem:[#allocation2 + $0xff8] sm:$0xff]
    %v570 = vadd.f32 %v58, %v59
    %571 = vadd.xlane.f32.xlu0 %v570
    %v572 = vpop.xlane.xlu0 %571
    %v573 = vadd.f32 %v60, %v61
    %574 = vadd.xlane.f32.xlu0 %v573
    %v575 = vpop.xlane.xlu0 %574
    %v576 = vadd.f32 %v62, %v63
    %577 = vadd.xlane.f32.xlu0 %v576
    %v578 = vpop.xlane.xlu0 %577
    %v579 = vadd.f32 %v64, %v65
    %580 = vadd.xlane.f32.xlu0 %v579
    %v581 = vpop.xlane.xlu0 %580
    %v582 = vadd.f32 %v66, %v67
    %583 = vadd.xlane.f32.xlu0 %v582
    %v584 = vpop.xlane.xlu0 %583
    %v585 = vadd.f32 %v68, %v69
    %586 = vadd.xlane.f32.xlu0 %v585
    %v587 = vpop.xlane.xlu0 %586
    %v588 = vadd.f32 %v70, %v71
    %589 = vadd.xlane.f32.xlu0 %v588
    %v590 = vpop.xlane.xlu0 %589
    %v591 = vadd.f32 %v72, %v73
    %592 = vadd.xlane.f32.xlu0 %v591
    %v593 = vpop.xlane.xlu0 %592
    %v594 = vadd.f32 %v74, %v75
    %595 = vadd.xlane.f32.xlu0 %v594
    %v596 = vpop.xlane.xlu0 %595
    %v597 = vadd.f32 %v76, %v77
    %598 = vadd.xlane.f32.xlu0 %v597
    %v599 = vpop.xlane.xlu0 %598
    %v600 = vadd.f32 %v78, %v79
    %601 = vadd.xlane.f32.xlu0 %v600
    %v602 = vpop.xlane.xlu0 %601
    %v603 = vadd.f32 %v80, %v81
    %604 = vadd.xlane.f32.xlu0 %v603
    %v605 = vpop.xlane.xlu0 %604
    %v606 = vadd.f32 %v82, %v83
    %607 = vadd.xlane.f32.xlu0 %v606
    %v608 = vpop.xlane.xlu0 %607
    %v609 = vadd.f32 %v84, %v85
    %610 = vadd.xlane.f32.xlu0 %v609
    %v611 = vpop.xlane.xlu0 %610
    %v612 = vadd.f32 %v86, %v87
    %613 = vadd.xlane.f32.xlu0 %v612
    %v614 = vpop.xlane.xlu0 %613
    %v615 = vadd.f32 %v88, %v89
    %616 = vadd.xlane.f32.xlu0 %v615
    %v617 = vpop.xlane.xlu0 %616
    %v618 = vadd.f32 %v90, %v91
    %619 = vadd.xlane.f32.xlu0 %v618
    %v620 = vpop.xlane.xlu0 %619
    %v621 = vadd.f32 %v92, %v93
    %622 = vadd.xlane.f32.xlu0 %v621
    %v623 = vpop.xlane.xlu0 %622
    %v624 = vadd.f32 %v94, %v95
    %625 = vadd.xlane.f32.xlu0 %v624
    %v626 = vpop.xlane.xlu0 %625
    %v627 = vadd.f32 %v96, %v97
    %628 = vadd.xlane.f32.xlu0 %v627
    %v629 = vpop.xlane.xlu0 %628
    %v630 = vadd.f32 %v98, %v99
    %631 = vadd.xlane.f32.xlu0 %v630
    %v632 = vpop.xlane.xlu0 %631
    %v633 = vadd.f32 %v100, %v101
    %634 = vadd.xlane.f32.xlu0 %v633
    %v635 = vpop.xlane.xlu0 %634
    %v636 = vadd.f32 %v102, %v103
    %637 = vadd.xlane.f32.xlu0 %v636
    %v638 = vpop.xlane.xlu0 %637
    %v639 = vadd.f32 %v104, %v105
    %640 = vadd.xlane.f32.xlu0 %v639
    %v641 = vpop.xlane.xlu0 %640
    %v642 = vadd.f32 %v106, %v107
    %643 = vadd.xlane.f32.xlu0 %v642
    %v644 = vpop.xlane.xlu0 %643
    %v645 = vadd.f32 %v108, %v109
    %646 = vadd.xlane.f32.xlu0 %v645
    %v647 = vpop.xlane.xlu0 %646
    %v648 = vadd.f32 %v110, %v111
    %649 = vadd.xlane.f32.xlu0 %v648
    %v650 = vpop.xlane.xlu0 %649
    %v651 = vadd.f32 %v112, %v113
    %652 = vadd.xlane.f32.xlu0 %v651
    %v653 = vpop.xlane.xlu0 %652
    %v654 = vadd.f32 %v114, %v115
    %655 = vadd.xlane.f32.xlu0 %v654
    %v656 = vpop.xlane.xlu0 %655
    %v657 = vadd.f32 %v116, %v117
    %658 = vadd.xlane.f32.xlu0 %v657
    %v659 = vpop.xlane.xlu0 %658
    %v660 = vadd.f32 %v118, %v119
    %661 = vadd.xlane.f32.xlu0 %v660
    %v662 = vpop.xlane.xlu0 %661
    %v663 = vadd.f32 %v120, %v121
    %664 = vadd.xlane.f32.xlu0 %v663
    %v665 = vpop.xlane.xlu0 %664
    %v666 = vadd.f32 %v122, %v123
    %667 = vadd.xlane.f32.xlu0 %v666
    %v668 = vpop.xlane.xlu0 %667
    %v669 = vadd.f32 %v124, %v125
    %670 = vadd.xlane.f32.xlu0 %v669
    %v671 = vpop.xlane.xlu0 %670
    %v672 = vadd.f32 %v126, %v127
    %673 = vadd.xlane.f32.xlu0 %v672
    %v674 = vpop.xlane.xlu0 %673
    %v675 = vadd.f32 %v128, %v129
    %676 = vadd.xlane.f32.xlu0 %v675
    %v677 = vpop.xlane.xlu0 %676
    %v678 = vadd.f32 %v130, %v131
    %679 = vadd.xlane.f32.xlu0 %v678
    %v680 = vpop.xlane.xlu0 %679
    %v681 = vadd.f32 %v132, %v133
    %682 = vadd.xlane.f32.xlu0 %v681
    %v683 = vpop.xlane.xlu0 %682
    %v684 = vadd.f32 %v134, %v135
    %685 = vadd.xlane.f32.xlu0 %v684
    %v686 = vpop.xlane.xlu0 %685
    %v687 = vadd.f32 %v136, %v137
    %688 = vadd.xlane.f32.xlu0 %v687
    %v689 = vpop.xlane.xlu0 %688
    %v690 = vadd.f32 %v138, %v139
    %691 = vadd.xlane.f32.xlu0 %v690
    %v692 = vpop.xlane.xlu0 %691
    %v693 = vadd.f32 %v140, %v141
    %694 = vadd.xlane.f32.xlu0 %v693
    %v695 = vpop.xlane.xlu0 %694
    %v696 = vadd.f32 %v142, %v143
    %697 = vadd.xlane.f32.xlu0 %v696
    %v698 = vpop.xlane.xlu0 %697
    %v699 = vadd.f32 %v144, %v145
    %700 = vadd.xlane.f32.xlu0 %v699
    %v701 = vpop.xlane.xlu0 %700
    %v702 = vadd.f32 %v146, %v147
    %703 = vadd.xlane.f32.xlu0 %v702
    %v704 = vpop.xlane.xlu0 %703
    %v705 = vadd.f32 %v148, %v149
    %706 = vadd.xlane.f32.xlu0 %v705
    %v707 = vpop.xlane.xlu0 %706
    %v708 = vadd.f32 %v150, %v151
    %709 = vadd.xlane.f32.xlu0 %v708
    %v710 = vpop.xlane.xlu0 %709
    %v711 = vadd.f32 %v152, %v153
    %712 = vadd.xlane.f32.xlu0 %v711
    %v713 = vpop.xlane.xlu0 %712
    %v714 = vadd.f32 %v154, %v155
    %715 = vadd.xlane.f32.xlu0 %v714
    %v716 = vpop.xlane.xlu0 %715
    %v717 = vadd.f32 %v156, %v157
    %718 = vadd.xlane.f32.xlu0 %v717
    %v719 = vpop.xlane.xlu0 %718
    %v720 = vadd.f32 %v158, %v159
    %721 = vadd.xlane.f32.xlu0 %v720
    %v722 = vpop.xlane.xlu0 %721
    %v723 = vadd.f32 %v160, %v161
    %724 = vadd.xlane.f32.xlu0 %v723
    %v725 = vpop.xlane.xlu0 %724
    %v726 = vadd.f32 %v162, %v163
    %727 = vadd.xlane.f32.xlu0 %v726
    %v728 = vpop.xlane.xlu0 %727
    %v729 = vadd.f32 %v164, %v165
    %730 = vadd.xlane.f32.xlu0 %v729
    %v731 = vpop.xlane.xlu0 %730
    %v732 = vadd.f32 %v166, %v167
    %733 = vadd.xlane.f32.xlu0 %v732
    %v734 = vpop.xlane.xlu0 %733
    %v735 = vadd.f32 %v168, %v169
    %736 = vadd.xlane.f32.xlu0 %v735
    %v737 = vpop.xlane.xlu0 %736
    %v738 = vadd.f32 %v170, %v171
    %739 = vadd.xlane.f32.xlu0 %v738
    %v740 = vpop.xlane.xlu0 %739
    %v741 = vadd.f32 %v172, %v173
    %742 = vadd.xlane.f32.xlu0 %v741
    %v743 = vpop.xlane.xlu0 %742
    %v744 = vadd.f32 %v174, %v175
    %745 = vadd.xlane.f32.xlu0 %v744
    %v746 = vpop.xlane.xlu0 %745
    %v747 = vadd.f32 %v176, %v177
    %748 = vadd.xlane.f32.xlu0 %v747
    %v749 = vpop.xlane.xlu0 %748
    %v750 = vadd.f32 %v178, %v179
    %751 = vadd.xlane.f32.xlu0 %v750
    %v752 = vpop.xlane.xlu0 %751
    %v753 = vadd.f32 %v180, %v181
    %754 = vadd.xlane.f32.xlu0 %v753
    %v755 = vpop.xlane.xlu0 %754
    %v756 = vadd.f32 %v182, %v183
    %757 = vadd.xlane.f32.xlu0 %v756
    %v758 = vpop.xlane.xlu0 %757
    %v759 = vadd.f32 %v184, %v185
    %760 = vadd.xlane.f32.xlu0 %v759
    %v761 = vpop.xlane.xlu0 %760
    %v762 = vadd.f32 %v186, %v187
    %763 = vadd.xlane.f32.xlu0 %v762
    %v764 = vpop.xlane.xlu0 %763
    %v765 = vadd.f32 %v188, %v189
    %766 = vadd.xlane.f32.xlu0 %v765
    %v767 = vpop.xlane.xlu0 %766
    %v768 = vadd.f32 %v190, %v191
    %769 = vadd.xlane.f32.xlu0 %v768
    %v770 = vpop.xlane.xlu0 %769
    %v771 = vadd.f32 %v192, %v193
    %772 = vadd.xlane.f32.xlu0 %v771
    %v773 = vpop.xlane.xlu0 %772
    %v774 = vadd.f32 %v194, %v195
    %775 = vadd.xlane.f32.xlu0 %v774
    %v776 = vpop.xlane.xlu0 %775
    %v777 = vadd.f32 %v196, %v197
    %778 = vadd.xlane.f32.xlu0 %v777
    %v779 = vpop.xlane.xlu0 %778
    %v780 = vadd.f32 %v198, %v199
    %781 = vadd.xlane.f32.xlu0 %v780
    %v782 = vpop.xlane.xlu0 %781
    %v783 = vadd.f32 %v200, %v201
    %784 = vadd.xlane.f32.xlu0 %v783
    %v785 = vpop.xlane.xlu0 %784
    %v786 = vadd.f32 %v202, %v203
    %787 = vadd.xlane.f32.xlu0 %v786
    %v788 = vpop.xlane.xlu0 %787
    %v789 = vadd.f32 %v204, %v205
    %790 = vadd.xlane.f32.xlu0 %v789
    %v791 = vpop.xlane.xlu0 %790
    %v792 = vadd.f32 %v206, %v207
    %793 = vadd.xlane.f32.xlu0 %v792
    %v794 = vpop.xlane.xlu0 %793
    %v795 = vadd.f32 %v208, %v209
    %796 = vadd.xlane.f32.xlu0 %v795
    %v797 = vpop.xlane.xlu0 %796
    %v798 = vadd.f32 %v210, %v211
    %799 = vadd.xlane.f32.xlu0 %v798
    %v800 = vpop.xlane.xlu0 %799
    %v801 = vadd.f32 %v212, %v213
    %802 = vadd.xlane.f32.xlu0 %v801
    %v803 = vpop.xlane.xlu0 %802
    %v804 = vadd.f32 %v214, %v215
    %805 = vadd.xlane.f32.xlu0 %v804
    %v806 = vpop.xlane.xlu0 %805
    %v807 = vadd.f32 %v216, %v217
    %808 = vadd.xlane.f32.xlu0 %v807
    %v809 = vpop.xlane.xlu0 %808
    %v810 = vadd.f32 %v218, %v219
    %811 = vadd.xlane.f32.xlu0 %v810
    %v812 = vpop.xlane.xlu0 %811
    %v813 = vadd.f32 %v220, %v221
    %814 = vadd.xlane.f32.xlu0 %v813
    %v815 = vpop.xlane.xlu0 %814
    %v816 = vadd.f32 %v222, %v223
    %817 = vadd.xlane.f32.xlu0 %v816
    %v818 = vpop.xlane.xlu0 %817
    %v819 = vadd.f32 %v224, %v225
    %820 = vadd.xlane.f32.xlu0 %v819
    %v821 = vpop.xlane.xlu0 %820
    %v822 = vadd.f32 %v226, %v227
    %823 = vadd.xlane.f32.xlu0 %v822
    %v824 = vpop.xlane.xlu0 %823
    %v825 = vadd.f32 %v228, %v229
    %826 = vadd.xlane.f32.xlu0 %v825
    %v827 = vpop.xlane.xlu0 %826
    %v828 = vadd.f32 %v230, %v231
    %829 = vadd.xlane.f32.xlu0 %v828
    %v830 = vpop.xlane.xlu0 %829
    %v831 = vadd.f32 %v232, %v233
    %832 = vadd.xlane.f32.xlu0 %v831
    %v833 = vpop.xlane.xlu0 %832
    %v834 = vadd.f32 %v234, %v235
    %835 = vadd.xlane.f32.xlu0 %v834
    %v836 = vpop.xlane.xlu0 %835
    %v837 = vadd.f32 %v236, %v237
    %838 = vadd.xlane.f32.xlu0 %v837
    %v839 = vpop.xlane.xlu0 %838
    %v840 = vadd.f32 %v238, %v239
    %841 = vadd.xlane.f32.xlu0 %v840
    %v842 = vpop.xlane.xlu0 %841
    %v843 = vadd.f32 %v240, %v241
    %844 = vadd.xlane.f32.xlu0 %v843
    %v845 = vpop.xlane.xlu0 %844
    %v846 = vadd.f32 %v242, %v243
    %847 = vadd.xlane.f32.xlu0 %v846
    %v848 = vpop.xlane.xlu0 %847
    %v849 = vadd.f32 %v244, %v245
    %850 = vadd.xlane.f32.xlu0 %v849
    %v851 = vpop.xlane.xlu0 %850
    %v852 = vadd.f32 %v246, %v247
    %853 = vadd.xlane.f32.xlu0 %v852
    %v854 = vpop.xlane.xlu0 %853
    %v855 = vadd.f32 %v248, %v249
    %856 = vadd.xlane.f32.xlu0 %v855
    %v857 = vpop.xlane.xlu0 %856
    %v858 = vadd.f32 %v250, %v251
    %859 = vadd.xlane.f32.xlu0 %v858
    %v860 = vpop.xlane.xlu0 %859
    %v861 = vadd.f32 %v252, %v253
    %862 = vadd.xlane.f32.xlu0 %v861
    %v863 = vpop.xlane.xlu0 %862
    %v864 = vadd.f32 %v254, %v255
    %865 = vadd.xlane.f32.xlu0 %v864
    %v866 = vpop.xlane.xlu0 %865
    %v867 = vadd.f32 %v256, %v257
    %868 = vadd.xlane.f32.xlu0 %v867
    %v869 = vpop.xlane.xlu0 %868
    %v870 = vadd.f32 %v258, %v259
    %871 = vadd.xlane.f32.xlu0 %v870
    %v872 = vpop.xlane.xlu0 %871
    %v873 = vadd.f32 %v260, %v261
    %874 = vadd.xlane.f32.xlu0 %v873
    %v875 = vpop.xlane.xlu0 %874
    %v876 = vadd.f32 %v262, %v263
    %877 = vadd.xlane.f32.xlu0 %v876
    %v878 = vpop.xlane.xlu0 %877
    %v879 = vadd.f32 %v264, %v265
    %880 = vadd.xlane.f32.xlu0 %v879
    %v881 = vpop.xlane.xlu0 %880
    %v882 = vadd.f32 %v266, %v267
    %883 = vadd.xlane.f32.xlu0 %v882
    %v884 = vpop.xlane.xlu0 %883
    %v885 = vadd.f32 %v268, %v269
    %886 = vadd.xlane.f32.xlu0 %v885
    %v887 = vpop.xlane.xlu0 %886
    %v888 = vadd.f32 %v270, %v271
    %889 = vadd.xlane.f32.xlu0 %v888
    %v890 = vpop.xlane.xlu0 %889
    %v891 = vadd.f32 %v272, %v273
    %892 = vadd.xlane.f32.xlu0 %v891
    %v893 = vpop.xlane.xlu0 %892
    %v894 = vadd.f32 %v274, %v275
    %895 = vadd.xlane.f32.xlu0 %v894
    %v896 = vpop.xlane.xlu0 %895
    %v897 = vadd.f32 %v276, %v277
    %898 = vadd.xlane.f32.xlu0 %v897
    %v899 = vpop.xlane.xlu0 %898
    %v900 = vadd.f32 %v278, %v279
    %901 = vadd.xlane.f32.xlu0 %v900
    %v902 = vpop.xlane.xlu0 %901
    %v903 = vadd.f32 %v280, %v281
    %904 = vadd.xlane.f32.xlu0 %v903
    %v905 = vpop.xlane.xlu0 %904
    %v906 = vadd.f32 %v282, %v283
    %907 = vadd.xlane.f32.xlu0 %v906
    %v908 = vpop.xlane.xlu0 %907
    %v909 = vadd.f32 %v284, %v285
    %910 = vadd.xlane.f32.xlu0 %v909
    %v911 = vpop.xlane.xlu0 %910
    %v912 = vadd.f32 %v286, %v287
    %913 = vadd.xlane.f32.xlu0 %v912
    %v914 = vpop.xlane.xlu0 %913
    %v915 = vadd.f32 %v288, %v289
    %916 = vadd.xlane.f32.xlu0 %v915
    %v917 = vpop.xlane.xlu0 %916
    %v918 = vadd.f32 %v290, %v291
    %919 = vadd.xlane.f32.xlu0 %v918
    %v920 = vpop.xlane.xlu0 %919
    %v921 = vadd.f32 %v292, %v293
    %922 = vadd.xlane.f32.xlu0 %v921
    %v923 = vpop.xlane.xlu0 %922
    %v924 = vadd.f32 %v294, %v295
    %925 = vadd.xlane.f32.xlu0 %v924
    %v926 = vpop.xlane.xlu0 %925
    %v927 = vadd.f32 %v296, %v297
    %928 = vadd.xlane.f32.xlu0 %v927
    %v929 = vpop.xlane.xlu0 %928
    %v930 = vadd.f32 %v298, %v299
    %931 = vadd.xlane.f32.xlu0 %v930
    %v932 = vpop.xlane.xlu0 %931
    %v933 = vadd.f32 %v300, %v301
    %934 = vadd.xlane.f32.xlu0 %v933
    %v935 = vpop.xlane.xlu0 %934
    %v936 = vadd.f32 %v302, %v303
    %937 = vadd.xlane.f32.xlu0 %v936
    %v938 = vpop.xlane.xlu0 %937
    %v939 = vadd.f32 %v304, %v305
    %940 = vadd.xlane.f32.xlu0 %v939
    %v941 = vpop.xlane.xlu0 %940
    %v942 = vadd.f32 %v306, %v307
    %943 = vadd.xlane.f32.xlu0 %v942
    %v944 = vpop.xlane.xlu0 %943
    %v945 = vadd.f32 %v308, %v309
    %946 = vadd.xlane.f32.xlu0 %v945
    %v947 = vpop.xlane.xlu0 %946
    %v948 = vadd.f32 %v310, %v311
    %949 = vadd.xlane.f32.xlu0 %v948
    %v950 = vpop.xlane.xlu0 %949
    %v951 = vadd.f32 %v312, %v313
    %952 = vadd.xlane.f32.xlu0 %v951
    %v953 = vpop.xlane.xlu0 %952
    %v954 = vadd.f32 %v314, %v315
    %955 = vadd.xlane.f32.xlu0 %v954
    %v956 = vpop.xlane.xlu0 %955
    %v957 = vadd.f32 %v316, %v317
    %958 = vadd.xlane.f32.xlu0 %v957
    %v959 = vpop.xlane.xlu0 %958
    %v960 = vadd.f32 %v318, %v319
    %961 = vadd.xlane.f32.xlu0 %v960
    %v962 = vpop.xlane.xlu0 %961
    %v963 = vadd.f32 %v320, %v321
    %964 = vadd.xlane.f32.xlu0 %v963
    %v965 = vpop.xlane.xlu0 %964
    %v966 = vadd.f32 %v322, %v323
    %967 = vadd.xlane.f32.xlu0 %v966
    %v968 = vpop.xlane.xlu0 %967
    %v969 = vadd.f32 %v324, %v325
    %970 = vadd.xlane.f32.xlu0 %v969
    %v971 = vpop.xlane.xlu0 %970
    %v972 = vadd.f32 %v326, %v327
    %973 = vadd.xlane.f32.xlu0 %v972
    %v974 = vpop.xlane.xlu0 %973
    %v975 = vadd.f32 %v328, %v329
    %976 = vadd.xlane.f32.xlu0 %v975
    %v977 = vpop.xlane.xlu0 %976
    %v978 = vadd.f32 %v330, %v331
    %979 = vadd.xlane.f32.xlu0 %v978
    %v980 = vpop.xlane.xlu0 %979
    %v981 = vadd.f32 %v332, %v333
    %982 = vadd.xlane.f32.xlu0 %v981
    %v983 = vpop.xlane.xlu0 %982
    %v984 = vadd.f32 %v334, %v335
    %985 = vadd.xlane.f32.xlu0 %v984
    %v986 = vpop.xlane.xlu0 %985
    %v987 = vadd.f32 %v336, %v337
    %988 = vadd.xlane.f32.xlu0 %v987
    %v989 = vpop.xlane.xlu0 %988
    %v990 = vadd.f32 %v338, %v339
    %991 = vadd.xlane.f32.xlu0 %v990
    %v992 = vpop.xlane.xlu0 %991
    %v993 = vadd.f32 %v340, %v341
    %994 = vadd.xlane.f32.xlu0 %v993
    %v995 = vpop.xlane.xlu0 %994
    %v996 = vadd.f32 %v342, %v343
    %997 = vadd.xlane.f32.xlu0 %v996
    %v998 = vpop.xlane.xlu0 %997
    %v999 = vadd.f32 %v344, %v345
    %1000 = vadd.xlane.f32.xlu0 %v999
    %v1001 = vpop.xlane.xlu0 %1000
    %v1002 = vadd.f32 %v346, %v347
    %1003 = vadd.xlane.f32.xlu0 %v1002
    %v1004 = vpop.xlane.xlu0 %1003
    %v1005 = vadd.f32 %v348, %v349
    %1006 = vadd.xlane.f32.xlu0 %v1005
    %v1007 = vpop.xlane.xlu0 %1006
    %v1008 = vadd.f32 %v350, %v351
    %1009 = vadd.xlane.f32.xlu0 %v1008
    %v1010 = vpop.xlane.xlu0 %1009
    %v1011 = vadd.f32 %v352, %v353
    %1012 = vadd.xlane.f32.xlu0 %v1011
    %v1013 = vpop.xlane.xlu0 %1012
    %v1014 = vadd.f32 %v354, %v355
    %1015 = vadd.xlane.f32.xlu0 %v1014
    %v1016 = vpop.xlane.xlu0 %1015
    %v1017 = vadd.f32 %v356, %v357
    %1018 = vadd.xlane.f32.xlu0 %v1017
    %v1019 = vpop.xlane.xlu0 %1018
    %v1020 = vadd.f32 %v358, %v359
    %1021 = vadd.xlane.f32.xlu0 %v1020
    %v1022 = vpop.xlane.xlu0 %1021
    %v1023 = vadd.f32 %v360, %v361
    %1024 = vadd.xlane.f32.xlu0 %v1023
    %v1025 = vpop.xlane.xlu0 %1024
    %v1026 = vadd.f32 %v362, %v363
    %1027 = vadd.xlane.f32.xlu0 %v1026
    %v1028 = vpop.xlane.xlu0 %1027
    %v1029 = vadd.f32 %v364, %v365
    %1030 = vadd.xlane.f32.xlu0 %v1029
    %v1031 = vpop.xlane.xlu0 %1030
    %v1032 = vadd.f32 %v366, %v367
    %1033 = vadd.xlane.f32.xlu0 %v1032
    %v1034 = vpop.xlane.xlu0 %1033
    %v1035 = vadd.f32 %v368, %v369
    %1036 = vadd.xlane.f32.xlu0 %v1035
    %v1037 = vpop.xlane.xlu0 %1036
    %v1038 = vadd.f32 %v370, %v371
    %1039 = vadd.xlane.f32.xlu0 %v1038
    %v1040 = vpop.xlane.xlu0 %1039
    %v1041 = vadd.f32 %v372, %v373
    %1042 = vadd.xlane.f32.xlu0 %v1041
    %v1043 = vpop.xlane.xlu0 %1042
    %v1044 = vadd.f32 %v374, %v375
    %1045 = vadd.xlane.f32.xlu0 %v1044
    %v1046 = vpop.xlane.xlu0 %1045
    %v1047 = vadd.f32 %v376, %v377
    %1048 = vadd.xlane.f32.xlu0 %v1047
    %v1049 = vpop.xlane.xlu0 %1048
    %v1050 = vadd.f32 %v378, %v379
    %1051 = vadd.xlane.f32.xlu0 %v1050
    %v1052 = vpop.xlane.xlu0 %1051
    %v1053 = vadd.f32 %v380, %v381
    %1054 = vadd.xlane.f32.xlu0 %v1053
    %v1055 = vpop.xlane.xlu0 %1054
    %v1056 = vadd.f32 %v382, %v383
    %1057 = vadd.xlane.f32.xlu0 %v1056
    %v1058 = vpop.xlane.xlu0 %1057
    %v1059 = vadd.f32 %v384, %v385
    %1060 = vadd.xlane.f32.xlu0 %v1059
    %v1061 = vpop.xlane.xlu0 %1060
    %v1062 = vadd.f32 %v386, %v387
    %1063 = vadd.xlane.f32.xlu0 %v1062
    %v1064 = vpop.xlane.xlu0 %1063
    %v1065 = vadd.f32 %v388, %v389
    %1066 = vadd.xlane.f32.xlu0 %v1065
    %v1067 = vpop.xlane.xlu0 %1066
    %v1068 = vadd.f32 %v390, %v391
    %1069 = vadd.xlane.f32.xlu0 %v1068
    %v1070 = vpop.xlane.xlu0 %1069
    %v1071 = vadd.f32 %v392, %v393
    %1072 = vadd.xlane.f32.xlu0 %v1071
    %v1073 = vpop.xlane.xlu0 %1072
    %v1074 = vadd.f32 %v394, %v395
    %1075 = vadd.xlane.f32.xlu0 %v1074
    %v1076 = vpop.xlane.xlu0 %1075
    %v1077 = vadd.f32 %v396, %v397
    %1078 = vadd.xlane.f32.xlu0 %v1077
    %v1079 = vpop.xlane.xlu0 %1078
    %v1080 = vadd.f32 %v398, %v399
    %1081 = vadd.xlane.f32.xlu0 %v1080
    %v1082 = vpop.xlane.xlu0 %1081
    %v1083 = vadd.f32 %v400, %v401
    %1084 = vadd.xlane.f32.xlu0 %v1083
    %v1085 = vpop.xlane.xlu0 %1084
    %v1086 = vadd.f32 %v402, %v403
    %1087 = vadd.xlane.f32.xlu0 %v1086
    %v1088 = vpop.xlane.xlu0 %1087
    %v1089 = vadd.f32 %v404, %v405
    %1090 = vadd.xlane.f32.xlu0 %v1089
    %v1091 = vpop.xlane.xlu0 %1090
    %v1092 = vadd.f32 %v406, %v407
    %1093 = vadd.xlane.f32.xlu0 %v1092
    %v1094 = vpop.xlane.xlu0 %1093
    %v1095 = vadd.f32 %v408, %v409
    %1096 = vadd.xlane.f32.xlu0 %v1095
    %v1097 = vpop.xlane.xlu0 %1096
    %v1098 = vadd.f32 %v410, %v411
    %1099 = vadd.xlane.f32.xlu0 %v1098
    %v1100 = vpop.xlane.xlu0 %1099
    %v1101 = vadd.f32 %v412, %v413
    %1102 = vadd.xlane.f32.xlu0 %v1101
    %v1103 = vpop.xlane.xlu0 %1102
    %v1104 = vadd.f32 %v414, %v415
    %1105 = vadd.xlane.f32.xlu0 %v1104
    %v1106 = vpop.xlane.xlu0 %1105
    %v1107 = vadd.f32 %v416, %v417
    %1108 = vadd.xlane.f32.xlu0 %v1107
    %v1109 = vpop.xlane.xlu0 %1108
    %v1110 = vadd.f32 %v418, %v419
    %1111 = vadd.xlane.f32.xlu0 %v1110
    %v1112 = vpop.xlane.xlu0 %1111
    %v1113 = vadd.f32 %v420, %v421
    %1114 = vadd.xlane.f32.xlu0 %v1113
    %v1115 = vpop.xlane.xlu0 %1114
    %v1116 = vadd.f32 %v422, %v423
    %1117 = vadd.xlane.f32.xlu0 %v1116
    %v1118 = vpop.xlane.xlu0 %1117
    %v1119 = vadd.f32 %v424, %v425
    %1120 = vadd.xlane.f32.xlu0 %v1119
    %v1121 = vpop.xlane.xlu0 %1120
    %v1122 = vadd.f32 %v426, %v427
    %1123 = vadd.xlane.f32.xlu0 %v1122
    %v1124 = vpop.xlane.xlu0 %1123
    %v1125 = vadd.f32 %v428, %v429
    %1126 = vadd.xlane.f32.xlu0 %v1125
    %v1127 = vpop.xlane.xlu0 %1126
    %v1128 = vadd.f32 %v430, %v431
    %1129 = vadd.xlane.f32.xlu0 %v1128
    %v1130 = vpop.xlane.xlu0 %1129
    %v1131 = vadd.f32 %v432, %v433
    %1132 = vadd.xlane.f32.xlu0 %v1131
    %v1133 = vpop.xlane.xlu0 %1132
    %v1134 = vadd.f32 %v434, %v435
    %1135 = vadd.xlane.f32.xlu0 %v1134
    %v1136 = vpop.xlane.xlu0 %1135
    %v1137 = vadd.f32 %v436, %v437
    %1138 = vadd.xlane.f32.xlu0 %v1137
    %v1139 = vpop.xlane.xlu0 %1138
    %v1140 = vadd.f32 %v438, %v439
    %1141 = vadd.xlane.f32.xlu0 %v1140
    %v1142 = vpop.xlane.xlu0 %1141
    %v1143 = vadd.f32 %v440, %v441
    %1144 = vadd.xlane.f32.xlu0 %v1143
    %v1145 = vpop.xlane.xlu0 %1144
    %v1146 = vadd.f32 %v442, %v443
    %1147 = vadd.xlane.f32.xlu0 %v1146
    %v1148 = vpop.xlane.xlu0 %1147
    %v1149 = vadd.f32 %v444, %v445
    %1150 = vadd.xlane.f32.xlu0 %v1149
    %v1151 = vpop.xlane.xlu0 %1150
    %v1152 = vadd.f32 %v446, %v447
    %1153 = vadd.xlane.f32.xlu0 %v1152
    %v1154 = vpop.xlane.xlu0 %1153
    %v1155 = vadd.f32 %v448, %v449
    %1156 = vadd.xlane.f32.xlu0 %v1155
    %v1157 = vpop.xlane.xlu0 %1156
    %v1158 = vadd.f32 %v450, %v451
    %1159 = vadd.xlane.f32.xlu0 %v1158
    %v1160 = vpop.xlane.xlu0 %1159
    %v1161 = vadd.f32 %v452, %v453
    %1162 = vadd.xlane.f32.xlu0 %v1161
    %v1163 = vpop.xlane.xlu0 %1162
    %v1164 = vadd.f32 %v454, %v455
    %1165 = vadd.xlane.f32.xlu0 %v1164
    %v1166 = vpop.xlane.xlu0 %1165
    %v1167 = vadd.f32 %v456, %v457
    %1168 = vadd.xlane.f32.xlu0 %v1167
    %v1169 = vpop.xlane.xlu0 %1168
    %v1170 = vadd.f32 %v458, %v459
    %1171 = vadd.xlane.f32.xlu0 %v1170
    %v1172 = vpop.xlane.xlu0 %1171
    %v1173 = vadd.f32 %v460, %v461
    %1174 = vadd.xlane.f32.xlu0 %v1173
    %v1175 = vpop.xlane.xlu0 %1174
    %v1176 = vadd.f32 %v462, %v463
    %1177 = vadd.xlane.f32.xlu0 %v1176
    %v1178 = vpop.xlane.xlu0 %1177
    %v1179 = vadd.f32 %v464, %v465
    %1180 = vadd.xlane.f32.xlu0 %v1179
    %v1181 = vpop.xlane.xlu0 %1180
    %v1182 = vadd.f32 %v466, %v467
    %1183 = vadd.xlane.f32.xlu0 %v1182
    %v1184 = vpop.xlane.xlu0 %1183
    %v1185 = vadd.f32 %v468, %v469
    %1186 = vadd.xlane.f32.xlu0 %v1185
    %v1187 = vpop.xlane.xlu0 %1186
    %v1188 = vadd.f32 %v470, %v471
    %1189 = vadd.xlane.f32.xlu0 %v1188
    %v1190 = vpop.xlane.xlu0 %1189
    %v1191 = vadd.f32 %v472, %v473
    %1192 = vadd.xlane.f32.xlu0 %v1191
    %v1193 = vpop.xlane.xlu0 %1192
    %v1194 = vadd.f32 %v474, %v475
    %1195 = vadd.xlane.f32.xlu0 %v1194
    %v1196 = vpop.xlane.xlu0 %1195
    %v1197 = vadd.f32 %v476, %v477
    %1198 = vadd.xlane.f32.xlu0 %v1197
    %v1199 = vpop.xlane.xlu0 %1198
    %v1200 = vadd.f32 %v478, %v479
    %1201 = vadd.xlane.f32.xlu0 %v1200
    %v1202 = vpop.xlane.xlu0 %1201
    %v1203 = vadd.f32 %v480, %v481
    %1204 = vadd.xlane.f32.xlu0 %v1203
    %v1205 = vpop.xlane.xlu0 %1204
    %v1206 = vadd.f32 %v482, %v483
    %1207 = vadd.xlane.f32.xlu0 %v1206
    %v1208 = vpop.xlane.xlu0 %1207
    %v1209 = vadd.f32 %v484, %v485
    %1210 = vadd.xlane.f32.xlu0 %v1209
    %v1211 = vpop.xlane.xlu0 %1210
    %v1212 = vadd.f32 %v486, %v487
    %1213 = vadd.xlane.f32.xlu0 %v1212
    %v1214 = vpop.xlane.xlu0 %1213
    %v1215 = vadd.f32 %v488, %v489
    %1216 = vadd.xlane.f32.xlu0 %v1215
    %v1217 = vpop.xlane.xlu0 %1216
    %v1218 = vadd.f32 %v490, %v491
    %1219 = vadd.xlane.f32.xlu0 %v1218
    %v1220 = vpop.xlane.xlu0 %1219
    %v1221 = vadd.f32 %v492, %v493
    %1222 = vadd.xlane.f32.xlu0 %v1221
    %v1223 = vpop.xlane.xlu0 %1222
    %v1224 = vadd.f32 %v494, %v495
    %1225 = vadd.xlane.f32.xlu0 %v1224
    %v1226 = vpop.xlane.xlu0 %1225
    %v1227 = vadd.f32 %v496, %v497
    %1228 = vadd.xlane.f32.xlu0 %v1227
    %v1229 = vpop.xlane.xlu0 %1228
    %v1230 = vadd.f32 %v498, %v499
    %1231 = vadd.xlane.f32.xlu0 %v1230
    %v1232 = vpop.xlane.xlu0 %1231
    %v1233 = vadd.f32 %v500, %v501
    %1234 = vadd.xlane.f32.xlu0 %v1233
    %v1235 = vpop.xlane.xlu0 %1234
    %v1236 = vadd.f32 %v502, %v503
    %1237 = vadd.xlane.f32.xlu0 %v1236
    %v1238 = vpop.xlane.xlu0 %1237
    %v1239 = vadd.f32 %v504, %v505
    %1240 = vadd.xlane.f32.xlu0 %v1239
    %v1241 = vpop.xlane.xlu0 %1240
    %v1242 = vadd.f32 %v506, %v507
    %1243 = vadd.xlane.f32.xlu0 %v1242
    %v1244 = vpop.xlane.xlu0 %1243
    %v1245 = vadd.f32 %v508, %v509
    %1246 = vadd.xlane.f32.xlu0 %v1245
    %v1247 = vpop.xlane.xlu0 %1246
    %v1248 = vadd.f32 %v510, %v511
    %1249 = vadd.xlane.f32.xlu0 %v1248
    %v1250 = vpop.xlane.xlu0 %1249
    %v1251 = vadd.f32 %v512, %v513
    %1252 = vadd.xlane.f32.xlu0 %v1251
    %v1253 = vpop.xlane.xlu0 %1252
    %v1254 = vadd.f32 %v514, %v515
    %1255 = vadd.xlane.f32.xlu0 %v1254
    %v1256 = vpop.xlane.xlu0 %1255
    %v1257 = vadd.f32 %v516, %v517
    %1258 = vadd.xlane.f32.xlu0 %v1257
    %v1259 = vpop.xlane.xlu0 %1258
    %v1260 = vadd.f32 %v518, %v519
    %1261 = vadd.xlane.f32.xlu0 %v1260
    %v1262 = vpop.xlane.xlu0 %1261
    %v1263 = vadd.f32 %v520, %v521
    %1264 = vadd.xlane.f32.xlu0 %v1263
    %v1265 = vpop.xlane.xlu0 %1264
    %v1266 = vadd.f32 %v522, %v523
    %1267 = vadd.xlane.f32.xlu0 %v1266
    %v1268 = vpop.xlane.xlu0 %1267
    %v1269 = vadd.f32 %v524, %v525
    %1270 = vadd.xlane.f32.xlu0 %v1269
    %v1271 = vpop.xlane.xlu0 %1270
    %v1272 = vadd.f32 %v526, %v527
    %1273 = vadd.xlane.f32.xlu0 %v1272
    %v1274 = vpop.xlane.xlu0 %1273
    %v1275 = vadd.f32 %v528, %v529
    %1276 = vadd.xlane.f32.xlu0 %v1275
    %v1277 = vpop.xlane.xlu0 %1276
    %v1278 = vadd.f32 %v530, %v531
    %1279 = vadd.xlane.f32.xlu0 %v1278
    %v1280 = vpop.xlane.xlu0 %1279
    %v1281 = vadd.f32 %v532, %v533
    %1282 = vadd.xlane.f32.xlu0 %v1281
    %v1283 = vpop.xlane.xlu0 %1282
    %v1284 = vadd.f32 %v534, %v535
    %1285 = vadd.xlane.f32.xlu0 %v1284
    %v1286 = vpop.xlane.xlu0 %1285
    %v1287 = vadd.f32 %v536, %v537
    %1288 = vadd.xlane.f32.xlu0 %v1287
    %v1289 = vpop.xlane.xlu0 %1288
    %v1290 = vadd.f32 %v538, %v539
    %1291 = vadd.xlane.f32.xlu0 %v1290
    %v1292 = vpop.xlane.xlu0 %1291
    %v1293 = vadd.f32 %v540, %v541
    %1294 = vadd.xlane.f32.xlu0 %v1293
    %v1295 = vpop.xlane.xlu0 %1294
    %v1296 = vadd.f32 %v542, %v543
    %1297 = vadd.xlane.f32.xlu0 %v1296
    %v1298 = vpop.xlane.xlu0 %1297
    %v1299 = vadd.f32 %v544, %v545
    %1300 = vadd.xlane.f32.xlu0 %v1299
    %v1301 = vpop.xlane.xlu0 %1300
    %v1302 = vadd.f32 %v546, %v547
    %1303 = vadd.xlane.f32.xlu0 %v1302
    %v1304 = vpop.xlane.xlu0 %1303
    %v1305 = vadd.f32 %v548, %v549
    %1306 = vadd.xlane.f32.xlu0 %v1305
    %v1307 = vpop.xlane.xlu0 %1306
    %v1308 = vadd.f32 %v550, %v551
    %1309 = vadd.xlane.f32.xlu0 %v1308
    %v1310 = vpop.xlane.xlu0 %1309
    %v1311 = vadd.f32 %v552, %v553
    %1312 = vadd.xlane.f32.xlu0 %v1311
    %v1313 = vpop.xlane.xlu0 %1312
    %v1314 = vadd.f32 %v554, %v555
    %1315 = vadd.xlane.f32.xlu0 %v1314
    %v1316 = vpop.xlane.xlu0 %1315
    %v1317 = vadd.f32 %v556, %v557
    %1318 = vadd.xlane.f32.xlu0 %v1317
    %v1319 = vpop.xlane.xlu0 %1318
    %v1320 = vadd.f32 %v558, %v559
    %1321 = vadd.xlane.f32.xlu0 %v1320
    %v1322 = vpop.xlane.xlu0 %1321
    %v1323 = vadd.f32 %v560, %v561
    %1324 = vadd.xlane.f32.xlu0 %v1323
    %v1325 = vpop.xlane.xlu0 %1324
    %v1326 = vadd.f32 %v562, %v563
    %1327 = vadd.xlane.f32.xlu0 %v1326
    %v1328 = vpop.xlane.xlu0 %1327
    %v1329 = vadd.f32 %v564, %v565
    %1330 = vadd.xlane.f32.xlu0 %v1329
    %v1331 = vpop.xlane.xlu0 %1330
    %v1332 = vadd.f32 %v566, %v567
    %1333 = vadd.xlane.f32.xlu0 %v1332
    %v1334 = vpop.xlane.xlu0 %1333
    %v1335 = vadd.f32 %v568, %v569
    %1336 = vadd.xlane.f32.xlu0 %v1335
    %v1337 = vpop.xlane.xlu0 %1336
    %v1338 = vrcp.pop 256.0
    %v1339 = vmul.f32 256.0, %v1338
    %v1340 = vsub.f32 1.0, %v1339
    %v1341 = vmul.f32 %v1338, %v1340
    %v1342 = vadd.f32 %v1338, %v1341
    %vm1343 = vweird.f32 %v1338
    %v1344 = vsel %vm1343, %v1338, %v1342
    %v1345 = vmul.f32 %v572, %v1344
    %v1346 = vmul.f32 %v575, %v1344
    %v1347 = vmul.f32 %v578, %v1344
    %v1348 = vmul.f32 %v581, %v1344
    %v1349 = vmul.f32 %v584, %v1344
    %v1350 = vmul.f32 %v587, %v1344
    %v1351 = vmul.f32 %v590, %v1344
    %v1352 = vmul.f32 %v593, %v1344
    %v1353 = vmul.f32 %v596, %v1344
    %v1354 = vmul.f32 %v599, %v1344
    %v1355 = vmul.f32 %v602, %v1344
    %v1356 = vmul.f32 %v605, %v1344
    %v1357 = vmul.f32 %v608, %v1344
    %v1358 = vmul.f32 %v611, %v1344
    %v1359 = vmul.f32 %v614, %v1344
    %v1360 = vmul.f32 %v617, %v1344
    %v1361 = vmul.f32 %v620, %v1344
    %v1362 = vmul.f32 %v623, %v1344
    %v1363 = vmul.f32 %v626, %v1344
    %v1364 = vmul.f32 %v629, %v1344
    %v1365 = vmul.f32 %v632, %v1344
    %v1366 = vmul.f32 %v635, %v1344
    %v1367 = vmul.f32 %v638, %v1344
    %v1368 = vmul.f32 %v641, %v1344
    %v1369 = vmul.f32 %v644, %v1344
    %v1370 = vmul.f32 %v647, %v1344
    %v1371 = vmul.f32 %v650, %v1344
    %v1372 = vmul.f32 %v653, %v1344
    %v1373 = vmul.f32 %v656, %v1344
    %v1374 = vmul.f32 %v659, %v1344
    %v1375 = vmul.f32 %v662, %v1344
    %v1376 = vmul.f32 %v665, %v1344
    %v1377 = vmul.f32 %v668, %v1344
    %v1378 = vmul.f32 %v671, %v1344
    %v1379 = vmul.f32 %v674, %v1344
    %v1380 = vmul.f32 %v677, %v1344
    %v1381 = vmul.f32 %v680, %v1344
    %v1382 = vmul.f32 %v683, %v1344
    %v1383 = vmul.f32 %v686, %v1344
    %v1384 = vmul.f32 %v689, %v1344
    %v1385 = vmul.f32 %v692, %v1344
    %v1386 = vmul.f32 %v695, %v1344
    %v1387 = vmul.f32 %v698, %v1344
    %v1388 = vmul.f32 %v701, %v1344
    %v1389 = vmul.f32 %v704, %v1344
    %v1390 = vmul.f32 %v707, %v1344
    %v1391 = vmul.f32 %v710, %v1344
    %v1392 = vmul.f32 %v713, %v1344
    %v1393 = vmul.f32 %v716, %v1344
    %v1394 = vmul.f32 %v719, %v1344
    %v1395 = vmul.f32 %v722, %v1344
    %v1396 = vmul.f32 %v725, %v1344
    %v1397 = vmul.f32 %v728, %v1344
    %v1398 = vmul.f32 %v731, %v1344
    %v1399 = vmul.f32 %v734, %v1344
    %v1400 = vmul.f32 %v737, %v1344
    %v1401 = vmul.f32 %v740, %v1344
    %v1402 = vmul.f32 %v743, %v1344
    %v1403 = vmul.f32 %v746, %v1344
    %v1404 = vmul.f32 %v749, %v1344
    %v1405 = vmul.f32 %v752, %v1344
    %v1406 = vmul.f32 %v755, %v1344
    %v1407 = vmul.f32 %v758, %v1344
    %v1408 = vmul.f32 %v761, %v1344
    %v1409 = vmul.f32 %v764, %v1344
    %v1410 = vmul.f32 %v767, %v1344
    %v1411 = vmul.f32 %v770, %v1344
    %v1412 = vmul.f32 %v773, %v1344
    %v1413 = vmul.f32 %v776, %v1344
    %v1414 = vmul.f32 %v779, %v1344
    %v1415 = vmul.f32 %v782, %v1344
    %v1416 = vmul.f32 %v785, %v1344
    %v1417 = vmul.f32 %v788, %v1344
    %v1418 = vmul.f32 %v791, %v1344
    %v1419 = vmul.f32 %v794, %v1344
    %v1420 = vmul.f32 %v797, %v1344
    %v1421 = vmul.f32 %v800, %v1344
    %v1422 = vmul.f32 %v803, %v1344
    %v1423 = vmul.f32 %v806, %v1344
    %v1424 = vmul.f32 %v809, %v1344
    %v1425 = vmul.f32 %v812, %v1344
    %v1426 = vmul.f32 %v815, %v1344
    %v1427 = vmul.f32 %v818, %v1344
    %v1428 = vmul.f32 %v821, %v1344
    %v1429 = vmul.f32 %v824, %v1344
    %v1430 = vmul.f32 %v827, %v1344
    %v1431 = vmul.f32 %v830, %v1344
    %v1432 = vmul.f32 %v833, %v1344
    %v1433 = vmul.f32 %v836, %v1344
    %v1434 = vmul.f32 %v839, %v1344
    %v1435 = vmul.f32 %v842, %v1344
    %v1436 = vmul.f32 %v845, %v1344
    %v1437 = vmul.f32 %v848, %v1344
    %v1438 = vmul.f32 %v851, %v1344
    %v1439 = vmul.f32 %v854, %v1344
    %v1440 = vmul.f32 %v857, %v1344
    %v1441 = vmul.f32 %v860, %v1344
    %v1442 = vmul.f32 %v863, %v1344
    %v1443 = vmul.f32 %v866, %v1344
    %v1444 = vmul.f32 %v869, %v1344
    %v1445 = vmul.f32 %v872, %v1344
    %v1446 = vmul.f32 %v875, %v1344
    %v1447 = vmul.f32 %v878, %v1344
    %v1448 = vmul.f32 %v881, %v1344
    %v1449 = vmul.f32 %v884, %v1344
    %v1450 = vmul.f32 %v887, %v1344
    %v1451 = vmul.f32 %v890, %v1344
    %v1452 = vmul.f32 %v893, %v1344
    %v1453 = vmul.f32 %v896, %v1344
    %v1454 = vmul.f32 %v899, %v1344
    %v1455 = vmul.f32 %v902, %v1344
    %v1456 = vmul.f32 %v905, %v1344
    %v1457 = vmul.f32 %v908, %v1344
    %v1458 = vmul.f32 %v911, %v1344
    %v1459 = vmul.f32 %v914, %v1344
    %v1460 = vmul.f32 %v917, %v1344
    %v1461 = vmul.f32 %v920, %v1344
    %v1462 = vmul.f32 %v923, %v1344
    %v1463 = vmul.f32 %v926, %v1344
    %v1464 = vmul.f32 %v929, %v1344
    %v1465 = vmul.f32 %v932, %v1344
    %v1466 = vmul.f32 %v935, %v1344
    %v1467 = vmul.f32 %v938, %v1344
    %v1468 = vmul.f32 %v941, %v1344
    %v1469 = vmul.f32 %v944, %v1344
    %v1470 = vmul.f32 %v947, %v1344
    %v1471 = vmul.f32 %v950, %v1344
    %v1472 = vmul.f32 %v953, %v1344
    %v1473 = vmul.f32 %v956, %v1344
    %v1474 = vmul.f32 %v959, %v1344
    %v1475 = vmul.f32 %v962, %v1344
    %v1476 = vmul.f32 %v965, %v1344
    %v1477 = vmul.f32 %v968, %v1344
    %v1478 = vmul.f32 %v971, %v1344
    %v1479 = vmul.f32 %v974, %v1344
    %v1480 = vmul.f32 %v977, %v1344
    %v1481 = vmul.f32 %v980, %v1344
    %v1482 = vmul.f32 %v983, %v1344
    %v1483 = vmul.f32 %v986, %v1344
    %v1484 = vmul.f32 %v989, %v1344
    %v1485 = vmul.f32 %v992, %v1344
    %v1486 = vmul.f32 %v995, %v1344
    %v1487 = vmul.f32 %v998, %v1344
    %v1488 = vmul.f32 %v1001, %v1344
    %v1489 = vmul.f32 %v1004, %v1344
    %v1490 = vmul.f32 %v1007, %v1344
    %v1491 = vmul.f32 %v1010, %v1344
    %v1492 = vmul.f32 %v1013, %v1344
    %v1493 = vmul.f32 %v1016, %v1344
    %v1494 = vmul.f32 %v1019, %v1344
    %v1495 = vmul.f32 %v1022, %v1344
    %v1496 = vmul.f32 %v1025, %v1344
    %v1497 = vmul.f32 %v1028, %v1344
    %v1498 = vmul.f32 %v1031, %v1344
    %v1499 = vmul.f32 %v1034, %v1344
    %v1500 = vmul.f32 %v1037, %v1344
    %v1501 = vmul.f32 %v1040, %v1344
    %v1502 = vmul.f32 %v1043, %v1344
    %v1503 = vmul.f32 %v1046, %v1344
    %v1504 = vmul.f32 %v1049, %v1344
    %v1505 = vmul.f32 %v1052, %v1344
    %v1506 = vmul.f32 %v1055, %v1344
    %v1507 = vmul.f32 %v1058, %v1344
    %v1508 = vmul.f32 %v1061, %v1344
    %v1509 = vmul.f32 %v1064, %v1344
    %v1510 = vmul.f32 %v1067, %v1344
    %v1511 = vmul.f32 %v1070, %v1344
    %v1512 = vmul.f32 %v1073, %v1344
    %v1513 = vmul.f32 %v1076, %v1344
    %v1514 = vmul.f32 %v1079, %v1344
    %v1515 = vmul.f32 %v1082, %v1344
    %v1516 = vmul.f32 %v1085, %v1344
    %v1517 = vmul.f32 %v1088, %v1344
    %v1518 = vmul.f32 %v1091, %v1344
    %v1519 = vmul.f32 %v1094, %v1344
    %v1520 = vmul.f32 %v1097, %v1344
    %v1521 = vmul.f32 %v1100, %v1344
    %v1522 = vmul.f32 %v1103, %v1344
    %v1523 = vmul.f32 %v1106, %v1344
    %v1524 = vmul.f32 %v1109, %v1344
    %v1525 = vmul.f32 %v1112, %v1344
    %v1526 = vmul.f32 %v1115, %v1344
    %v1527 = vmul.f32 %v1118, %v1344
    %v1528 = vmul.f32 %v1121, %v1344
    %v1529 = vmul.f32 %v1124, %v1344
    %v1530 = vmul.f32 %v1127, %v1344
    %v1531 = vmul.f32 %v1130, %v1344
    %v1532 = vmul.f32 %v1133, %v1344
    %v1533 = vmul.f32 %v1136, %v1344
    %v1534 = vmul.f32 %v1139, %v1344
    %v1535 = vmul.f32 %v1142, %v1344
    %v1536 = vmul.f32 %v1145, %v1344
    %v1537 = vmul.f32 %v1148, %v1344
    %v1538 = vmul.f32 %v1151, %v1344
    %v1539 = vmul.f32 %v1154, %v1344
    %v1540 = vmul.f32 %v1157, %v1344
    %v1541 = vmul.f32 %v1160, %v1344
    %v1542 = vmul.f32 %v1163, %v1344
    %v1543 = vmul.f32 %v1166, %v1344
    %v1544 = vmul.f32 %v1169, %v1344
    %v1545 = vmul.f32 %v1172, %v1344
    %v1546 = vmul.f32 %v1175, %v1344
    %v1547 = vmul.f32 %v1178, %v1344
    %v1548 = vmul.f32 %v1181, %v1344
    %v1549 = vmul.f32 %v1184, %v1344
    %v1550 = vmul.f32 %v1187, %v1344
    %v1551 = vmul.f32 %v1190, %v1344
    %v1552 = vmul.f32 %v1193, %v1344
    %v1553 = vmul.f32 %v1196, %v1344
    %v1554 = vmul.f32 %v1199, %v1344
    %v1555 = vmul.f32 %v1202, %v1344
    %v1556 = vmul.f32 %v1205, %v1344
    %v1557 = vmul.f32 %v1208, %v1344
    %v1558 = vmul.f32 %v1211, %v1344
    %v1559 = vmul.f32 %v1214, %v1344
    %v1560 = vmul.f32 %v1217, %v1344
    %v1561 = vmul.f32 %v1220, %v1344
    %v1562 = vmul.f32 %v1223, %v1344
    %v1563 = vmul.f32 %v1226, %v1344
    %v1564 = vmul.f32 %v1229, %v1344
    %v1565 = vmul.f32 %v1232, %v1344
    %v1566 = vmul.f32 %v1235, %v1344
    %v1567 = vmul.f32 %v1238, %v1344
    %v1568 = vmul.f32 %v1241, %v1344
    %v1569 = vmul.f32 %v1244, %v1344
    %v1570 = vmul.f32 %v1247, %v1344
    %v1571 = vmul.f32 %v1250, %v1344
    %v1572 = vmul.f32 %v1253, %v1344
    %v1573 = vmul.f32 %v1256, %v1344
    %v1574 = vmul.f32 %v1259, %v1344
    %v1575 = vmul.f32 %v1262, %v1344
    %v1576 = vmul.f32 %v1265, %v1344
    %v1577 = vmul.f32 %v1268, %v1344
    %v1578 = vmul.f32 %v1271, %v1344
    %v1579 = vmul.f32 %v1274, %v1344
    %v1580 = vmul.f32 %v1277, %v1344
    %v1581 = vmul.f32 %v1280, %v1344
    %v1582 = vmul.f32 %v1283, %v1344
    %v1583 = vmul.f32 %v1286, %v1344
    %v1584 = vmul.f32 %v1289, %v1344
    %v1585 = vmul.f32 %v1292, %v1344
    %v1586 = vmul.f32 %v1295, %v1344
    %v1587 = vmul.f32 %v1298, %v1344
    %v1588 = vmul.f32 %v1301, %v1344
    %v1589 = vmul.f32 %v1304, %v1344
    %v1590 = vmul.f32 %v1307, %v1344
    %v1591 = vmul.f32 %v1310, %v1344
    %v1592 = vmul.f32 %v1313, %v1344
    %v1593 = vmul.f32 %v1316, %v1344
    %v1594 = vmul.f32 %v1319, %v1344
    %v1595 = vmul.f32 %v1322, %v1344
    %v1596 = vmul.f32 %v1325, %v1344
    %v1597 = vmul.f32 %v1328, %v1344
    %v1598 = vmul.f32 %v1331, %v1344
    %v1599 = vmul.f32 %v1334, %v1344
    %v1600 = vmul.f32 %v1337, %v1344
    %v1601 = vsub.f32 %v58, %v1345
    %v1602 = vsub.f32 %v59, %v1345
    %v1603 = vsub.f32 %v60, %v1346
    %v1604 = vsub.f32 %v61, %v1346
    %v1605 = vsub.f32 %v62, %v1347
    %v1606 = vsub.f32 %v63, %v1347
    %v1607 = vsub.f32 %v64, %v1348
    %v1608 = vsub.f32 %v65, %v1348
    %v1609 = vsub.f32 %v66, %v1349
    %v1610 = vsub.f32 %v67, %v1349
    %v1611 = vsub.f32 %v68, %v1350
    %v1612 = vsub.f32 %v69, %v1350
    %v1613 = vsub.f32 %v70, %v1351
    %v1614 = vsub.f32 %v71, %v1351
    %v1615 = vsub.f32 %v72, %v1352
    %v1616 = vsub.f32 %v73, %v1352
    %v1617 = vsub.f32 %v74, %v1353
    %v1618 = vsub.f32 %v75, %v1353
    %v1619 = vsub.f32 %v76, %v1354
    %v1620 = vsub.f32 %v77, %v1354
    %v1621 = vsub.f32 %v78, %v1355
    %v1622 = vsub.f32 %v79, %v1355
    %v1623 = vsub.f32 %v80, %v1356
    %v1624 = vsub.f32 %v81, %v1356
    %v1625 = vsub.f32 %v82, %v1357
    %v1626 = vsub.f32 %v83, %v1357
    %v1627 = vsub.f32 %v84, %v1358
    %v1628 = vsub.f32 %v85, %v1358
    %v1629 = vsub.f32 %v86, %v1359
    %v1630 = vsub.f32 %v87, %v1359
    %v1631 = vsub.f32 %v88, %v1360
    %v1632 = vsub.f32 %v89, %v1360
    %v1633 = vsub.f32 %v90, %v1361
    %v1634 = vsub.f32 %v91, %v1361
    %v1635 = vsub.f32 %v92, %v1362
    %v1636 = vsub.f32 %v93, %v1362
    %v1637 = vsub.f32 %v94, %v1363
    %v1638 = vsub.f32 %v95, %v1363
    %v1639 = vsub.f32 %v96, %v1364
    %v1640 = vsub.f32 %v97, %v1364
    %v1641 = vsub.f32 %v98, %v1365
    %v1642 = vsub.f32 %v99, %v1365
    %v1643 = vsub.f32 %v100, %v1366
    %v1644 = vsub.f32 %v101, %v1366
    %v1645 = vsub.f32 %v102, %v1367
    %v1646 = vsub.f32 %v103, %v1367
    %v1647 = vsub.f32 %v104, %v1368
    %v1648 = vsub.f32 %v105, %v1368
    %v1649 = vsub.f32 %v106, %v1369
    %v1650 = vsub.f32 %v107, %v1369
    %v1651 = vsub.f32 %v108, %v1370
    %v1652 = vsub.f32 %v109, %v1370
    %v1653 = vsub.f32 %v110, %v1371
    %v1654 = vsub.f32 %v111, %v1371
    %v1655 = vsub.f32 %v112, %v1372
    %v1656 = vsub.f32 %v113, %v1372
    %v1657 = vsub.f32 %v114, %v1373
    %v1658 = vsub.f32 %v115, %v1373
    %v1659 = vsub.f32 %v116, %v1374
    %v1660 = vsub.f32 %v117, %v1374
    %v1661 = vsub.f32 %v118, %v1375
    %v1662 = vsub.f32 %v119, %v1375
    %v1663 = vsub.f32 %v120, %v1376
    %v1664 = vsub.f32 %v121, %v1376
    %v1665 = vsub.f32 %v122, %v1377
    %v1666 = vsub.f32 %v123, %v1377
    %v1667 = vsub.f32 %v124, %v1378
    %v1668 = vsub.f32 %v125, %v1378
    %v1669 = vsub.f32 %v126, %v1379
    %v1670 = vsub.f32 %v127, %v1379
    %v1671 = vsub.f32 %v128, %v1380
    %v1672 = vsub.f32 %v129, %v1380
    %v1673 = vsub.f32 %v130, %v1381
    %v1674 = vsub.f32 %v131, %v1381
    %v1675 = vsub.f32 %v132, %v1382
    %v1676 = vsub.f32 %v133, %v1382
    %v1677 = vsub.f32 %v134, %v1383
    %v1678 = vsub.f32 %v135, %v1383
    %v1679 = vsub.f32 %v136, %v1384
    %v1680 = vsub.f32 %v137, %v1384
    %v1681 = vsub.f32 %v138, %v1385
    %v1682 = vsub.f32 %v139, %v1385
    %v1683 = vsub.f32 %v140, %v1386
    %v1684 = vsub.f32 %v141, %v1386
    %v1685 = vsub.f32 %v142, %v1387
    %v1686 = vsub.f32 %v143, %v1387
    %v1687 = vsub.f32 %v144, %v1388
    %v1688 = vsub.f32 %v145, %v1388
    %v1689 = vsub.f32 %v146, %v1389
    %v1690 = vsub.f32 %v147, %v1389
    %v1691 = vsub.f32 %v148, %v1390
    %v1692 = vsub.f32 %v149, %v1390
    %v1693 = vsub.f32 %v150, %v1391
    %v1694 = vsub.f32 %v151, %v1391
    %v1695 = vsub.f32 %v152, %v1392
    %v1696 = vsub.f32 %v153, %v1392
    %v1697 = vsub.f32 %v154, %v1393
    %v1698 = vsub.f32 %v155, %v1393
    %v1699 = vsub.f32 %v156, %v1394
    %v1700 = vsub.f32 %v157, %v1394
    %v1701 = vsub.f32 %v158, %v1395
    %v1702 = vsub.f32 %v159, %v1395
    %v1703 = vsub.f32 %v160, %v1396
    %v1704 = vsub.f32 %v161, %v1396
    %v1705 = vsub.f32 %v162, %v1397
    %v1706 = vsub.f32 %v163, %v1397
    %v1707 = vsub.f32 %v164, %v1398
    %v1708 = vsub.f32 %v165, %v1398
    %v1709 = vsub.f32 %v166, %v1399
    %v1710 = vsub.f32 %v167, %v1399
    %v1711 = vsub.f32 %v168, %v1400
    %v1712 = vsub.f32 %v169, %v1400
    %v1713 = vsub.f32 %v170, %v1401
    %v1714 = vsub.f32 %v171, %v1401
    %v1715 = vsub.f32 %v172, %v1402
    %v1716 = vsub.f32 %v173, %v1402
    %v1717 = vsub.f32 %v174, %v1403
    %v1718 = vsub.f32 %v175, %v1403
    %v1719 = vsub.f32 %v176, %v1404
    %v1720 = vsub.f32 %v177, %v1404
    %v1721 = vsub.f32 %v178, %v1405
    %v1722 = vsub.f32 %v179, %v1405
    %v1723 = vsub.f32 %v180, %v1406
    %v1724 = vsub.f32 %v181, %v1406
    %v1725 = vsub.f32 %v182, %v1407
    %v1726 = vsub.f32 %v183, %v1407
    %v1727 = vsub.f32 %v184, %v1408
    %v1728 = vsub.f32 %v185, %v1408
    %v1729 = vsub.f32 %v186, %v1409
    %v1730 = vsub.f32 %v187, %v1409
    %v1731 = vsub.f32 %v188, %v1410
    %v1732 = vsub.f32 %v189, %v1410
    %v1733 = vsub.f32 %v190, %v1411
    %v1734 = vsub.f32 %v191, %v1411
    %v1735 = vsub.f32 %v192, %v1412
    %v1736 = vsub.f32 %v193, %v1412
    %v1737 = vsub.f32 %v194, %v1413
    %v1738 = vsub.f32 %v195, %v1413
    %v1739 = vsub.f32 %v196, %v1414
    %v1740 = vsub.f32 %v197, %v1414
    %v1741 = vsub.f32 %v198, %v1415
    %v1742 = vsub.f32 %v199, %v1415
    %v1743 = vsub.f32 %v200, %v1416
    %v1744 = vsub.f32 %v201, %v1416
    %v1745 = vsub.f32 %v202, %v1417
    %v1746 = vsub.f32 %v203, %v1417
    %v1747 = vsub.f32 %v204, %v1418
    %v1748 = vsub.f32 %v205, %v1418
    %v1749 = vsub.f32 %v206, %v1419
    %v1750 = vsub.f32 %v207, %v1419
    %v1751 = vsub.f32 %v208, %v1420
    %v1752 = vsub.f32 %v209, %v1420
    %v1753 = vsub.f32 %v210, %v1421
    %v1754 = vsub.f32 %v211, %v1421
    %v1755 = vsub.f32 %v212, %v1422
    %v1756 = vsub.f32 %v213, %v1422
    %v1757 = vsub.f32 %v214, %v1423
    %v1758 = vsub.f32 %v215, %v1423
    %v1759 = vsub.f32 %v216, %v1424
    %v1760 = vsub.f32 %v217, %v1424
    %v1761 = vsub.f32 %v218, %v1425
    %v1762 = vsub.f32 %v219, %v1425
    %v1763 = vsub.f32 %v220, %v1426
    %v1764 = vsub.f32 %v221, %v1426
    %v1765 = vsub.f32 %v222, %v1427
    %v1766 = vsub.f32 %v223, %v1427
    %v1767 = vsub.f32 %v224, %v1428
    %v1768 = vsub.f32 %v225, %v1428
    %v1769 = vsub.f32 %v226, %v1429
    %v1770 = vsub.f32 %v227, %v1429
    %v1771 = vsub.f32 %v228, %v1430
    %v1772 = vsub.f32 %v229, %v1430
    %v1773 = vsub.f32 %v230, %v1431
    %v1774 = vsub.f32 %v231, %v1431
    %v1775 = vsub.f32 %v232, %v1432
    %v1776 = vsub.f32 %v233, %v1432
    %v1777 = vsub.f32 %v234, %v1433
    %v1778 = vsub.f32 %v235, %v1433
    %v1779 = vsub.f32 %v236, %v1434
    %v1780 = vsub.f32 %v237, %v1434
    %v1781 = vsub.f32 %v238, %v1435
    %v1782 = vsub.f32 %v239, %v1435
    %v1783 = vsub.f32 %v240, %v1436
    %v1784 = vsub.f32 %v241, %v1436
    %v1785 = vsub.f32 %v242, %v1437
    %v1786 = vsub.f32 %v243, %v1437
    %v1787 = vsub.f32 %v244, %v1438
    %v1788 = vsub.f32 %v245, %v1438
    %v1789 = vsub.f32 %v246, %v1439
    %v1790 = vsub.f32 %v247, %v1439
    %v1791 = vsub.f32 %v248, %v1440
    %v1792 = vsub.f32 %v249, %v1440
    %v1793 = vsub.f32 %v250, %v1441
    %v1794 = vsub.f32 %v251, %v1441
    %v1795 = vsub.f32 %v252, %v1442
    %v1796 = vsub.f32 %v253, %v1442
    %v1797 = vsub.f32 %v254, %v1443
    %v1798 = vsub.f32 %v255, %v1443
    %v1799 = vsub.f32 %v256, %v1444
    %v1800 = vsub.f32 %v257, %v1444
    %v1801 = vsub.f32 %v258, %v1445
    %v1802 = vsub.f32 %v259, %v1445
    %v1803 = vsub.f32 %v260, %v1446
    %v1804 = vsub.f32 %v261, %v1446
    %v1805 = vsub.f32 %v262, %v1447
    %v1806 = vsub.f32 %v263, %v1447
    %v1807 = vsub.f32 %v264, %v1448
    %v1808 = vsub.f32 %v265, %v1448
    %v1809 = vsub.f32 %v266, %v1449
    %v1810 = vsub.f32 %v267, %v1449
    %v1811 = vsub.f32 %v268, %v1450
    %v1812 = vsub.f32 %v269, %v1450
    %v1813 = vsub.f32 %v270, %v1451
    %v1814 = vsub.f32 %v271, %v1451
    %v1815 = vsub.f32 %v272, %v1452
    %v1816 = vsub.f32 %v273, %v1452
    %v1817 = vsub.f32 %v274, %v1453
    %v1818 = vsub.f32 %v275, %v1453
    %v1819 = vsub.f32 %v276, %v1454
    %v1820 = vsub.f32 %v277, %v1454
    %v1821 = vsub.f32 %v278, %v1455
    %v1822 = vsub.f32 %v279, %v1455
    %v1823 = vsub.f32 %v280, %v1456
    %v1824 = vsub.f32 %v281, %v1456
    %v1825 = vsub.f32 %v282, %v1457
    %v1826 = vsub.f32 %v283, %v1457
    %v1827 = vsub.f32 %v284, %v1458
    %v1828 = vsub.f32 %v285, %v1458
    %v1829 = vsub.f32 %v286, %v1459
    %v1830 = vsub.f32 %v287, %v1459
    %v1831 = vsub.f32 %v288, %v1460
    %v1832 = vsub.f32 %v289, %v1460
    %v1833 = vsub.f32 %v290, %v1461
    %v1834 = vsub.f32 %v291, %v1461
    %v1835 = vsub.f32 %v292, %v1462
    %v1836 = vsub.f32 %v293, %v1462
    %v1837 = vsub.f32 %v294, %v1463
    %v1838 = vsub.f32 %v295, %v1463
    %v1839 = vsub.f32 %v296, %v1464
    %v1840 = vsub.f32 %v297, %v1464
    %v1841 = vsub.f32 %v298, %v1465
    %v1842 = vsub.f32 %v299, %v1465
    %v1843 = vsub.f32 %v300, %v1466
    %v1844 = vsub.f32 %v301, %v1466
    %v1845 = vsub.f32 %v302, %v1467
    %v1846 = vsub.f32 %v303, %v1467
    %v1847 = vsub.f32 %v304, %v1468
    %v1848 = vsub.f32 %v305, %v1468
    %v1849 = vsub.f32 %v306, %v1469
    %v1850 = vsub.f32 %v307, %v1469
    %v1851 = vsub.f32 %v308, %v1470
    %v1852 = vsub.f32 %v309, %v1470
    %v1853 = vsub.f32 %v310, %v1471
    %v1854 = vsub.f32 %v311, %v1471
    %v1855 = vsub.f32 %v312, %v1472
    %v1856 = vsub.f32 %v313, %v1472
    %v1857 = vsub.f32 %v314, %v1473
    %v1858 = vsub.f32 %v315, %v1473
    %v1859 = vsub.f32 %v316, %v1474
    %v1860 = vsub.f32 %v317, %v1474
    %v1861 = vsub.f32 %v318, %v1475
    %v1862 = vsub.f32 %v319, %v1475
    %v1863 = vsub.f32 %v320, %v1476
    %v1864 = vsub.f32 %v321, %v1476
    %v1865 = vsub.f32 %v322, %v1477
    %v1866 = vsub.f32 %v323, %v1477
    %v1867 = vsub.f32 %v324, %v1478
    %v1868 = vsub.f32 %v325, %v1478
    %v1869 = vsub.f32 %v326, %v1479
    %v1870 = vsub.f32 %v327, %v1479
    %v1871 = vsub.f32 %v328, %v1480
    %v1872 = vsub.f32 %v329, %v1480
    %v1873 = vsub.f32 %v330, %v1481
    %v1874 = vsub.f32 %v331, %v1481
    %v1875 = vsub.f32 %v332, %v1482
    %v1876 = vsub.f32 %v333, %v1482
    %v1877 = vsub.f32 %v334, %v1483
    %v1878 = vsub.f32 %v335, %v1483
    %v1879 = vsub.f32 %v336, %v1484
    %v1880 = vsub.f32 %v337, %v1484
    %v1881 = vsub.f32 %v338, %v1485
    %v1882 = vsub.f32 %v339, %v1485
    %v1883 = vsub.f32 %v340, %v1486
    %v1884 = vsub.f32 %v341, %v1486
    %v1885 = vsub.f32 %v342, %v1487
    %v1886 = vsub.f32 %v343, %v1487
    %v1887 = vsub.f32 %v344, %v1488
    %v1888 = vsub.f32 %v345, %v1488
    %v1889 = vsub.f32 %v346, %v1489
    %v1890 = vsub.f32 %v347, %v1489
    %v1891 = vsub.f32 %v348, %v1490
    %v1892 = vsub.f32 %v349, %v1490
    %v1893 = vsub.f32 %v350, %v1491
    %v1894 = vsub.f32 %v351, %v1491
    %v1895 = vsub.f32 %v352, %v1492
    %v1896 = vsub.f32 %v353, %v1492
    %v1897 = vsub.f32 %v354, %v1493
    %v1898 = vsub.f32 %v355, %v1493
    %v1899 = vsub.f32 %v356, %v1494
    %v1900 = vsub.f32 %v357, %v1494
    %v1901 = vsub.f32 %v358, %v1495
    %v1902 = vsub.f32 %v359, %v1495
    %v1903 = vsub.f32 %v360, %v1496
    %v1904 = vsub.f32 %v361, %v1496
    %v1905 = vsub.f32 %v362, %v1497
    %v1906 = vsub.f32 %v363, %v1497
    %v1907 = vsub.f32 %v364, %v1498
    %v1908 = vsub.f32 %v365, %v1498
    %v1909 = vsub.f32 %v366, %v1499
    %v1910 = vsub.f32 %v367, %v1499
    %v1911 = vsub.f32 %v368, %v1500
    %v1912 = vsub.f32 %v369, %v1500
    %v1913 = vsub.f32 %v370, %v1501
    %v1914 = vsub.f32 %v371, %v1501
    %v1915 = vsub.f32 %v372, %v1502
    %v1916 = vsub.f32 %v373, %v1502
    %v1917 = vsub.f32 %v374, %v1503
    %v1918 = vsub.f32 %v375, %v1503
    %v1919 = vsub.f32 %v376, %v1504
    %v1920 = vsub.f32 %v377, %v1504
    %v1921 = vsub.f32 %v378, %v1505
    %v1922 = vsub.f32 %v379, %v1505
    %v1923 = vsub.f32 %v380, %v1506
    %v1924 = vsub.f32 %v381, %v1506
    %v1925 = vsub.f32 %v382, %v1507
    %v1926 = vsub.f32 %v383, %v1507
    %v1927 = vsub.f32 %v384, %v1508
    %v1928 = vsub.f32 %v385, %v1508
    %v1929 = vsub.f32 %v386, %v1509
    %v1930 = vsub.f32 %v387, %v1509
    %v1931 = vsub.f32 %v388, %v1510
    %v1932 = vsub.f32 %v389, %v1510
    %v1933 = vsub.f32 %v390, %v1511
    %v1934 = vsub.f32 %v391, %v1511
    %v1935 = vsub.f32 %v392, %v1512
    %v1936 = vsub.f32 %v393, %v1512
    %v1937 = vsub.f32 %v394, %v1513
    %v1938 = vsub.f32 %v395, %v1513
    %v1939 = vsub.f32 %v396, %v1514
    %v1940 = vsub.f32 %v397, %v1514
    %v1941 = vsub.f32 %v398, %v1515
    %v1942 = vsub.f32 %v399, %v1515
    %v1943 = vsub.f32 %v400, %v1516
    %v1944 = vsub.f32 %v401, %v1516
    %v1945 = vsub.f32 %v402, %v1517
    %v1946 = vsub.f32 %v403, %v1517
    %v1947 = vsub.f32 %v404, %v1518
    %v1948 = vsub.f32 %v405, %v1518
    %v1949 = vsub.f32 %v406, %v1519
    %v1950 = vsub.f32 %v407, %v1519
    %v1951 = vsub.f32 %v408, %v1520
    %v1952 = vsub.f32 %v409, %v1520
    %v1953 = vsub.f32 %v410, %v1521
    %v1954 = vsub.f32 %v411, %v1521
    %v1955 = vsub.f32 %v412, %v1522
    %v1956 = vsub.f32 %v413, %v1522
    %v1957 = vsub.f32 %v414, %v1523
    %v1958 = vsub.f32 %v415, %v1523
    %v1959 = vsub.f32 %v416, %v1524
    %v1960 = vsub.f32 %v417, %v1524
    %v1961 = vsub.f32 %v418, %v1525
    %v1962 = vsub.f32 %v419, %v1525
    %v1963 = vsub.f32 %v420, %v1526
    %v1964 = vsub.f32 %v421, %v1526
    %v1965 = vsub.f32 %v422, %v1527
    %v1966 = vsub.f32 %v423, %v1527
    %v1967 = vsub.f32 %v424, %v1528
    %v1968 = vsub.f32 %v425, %v1528
    %v1969 = vsub.f32 %v426, %v1529
    %v1970 = vsub.f32 %v427, %v1529
    %v1971 = vsub.f32 %v428, %v1530
    %v1972 = vsub.f32 %v429, %v1530
    %v1973 = vsub.f32 %v430, %v1531
    %v1974 = vsub.f32 %v431, %v1531
    %v1975 = vsub.f32 %v432, %v1532
    %v1976 = vsub.f32 %v433, %v1532
    %v1977 = vsub.f32 %v434, %v1533
    %v1978 = vsub.f32 %v435, %v1533
    %v1979 = vsub.f32 %v436, %v1534
    %v1980 = vsub.f32 %v437, %v1534
    %v1981 = vsub.f32 %v438, %v1535
    %v1982 = vsub.f32 %v439, %v1535
    %v1983 = vsub.f32 %v440, %v1536
    %v1984 = vsub.f32 %v441, %v1536
    %v1985 = vsub.f32 %v442, %v1537
    %v1986 = vsub.f32 %v443, %v1537
    %v1987 = vsub.f32 %v444, %v1538
    %v1988 = vsub.f32 %v445, %v1538
    %v1989 = vsub.f32 %v446, %v1539
    %v1990 = vsub.f32 %v447, %v1539
    %v1991 = vsub.f32 %v448, %v1540
    %v1992 = vsub.f32 %v449, %v1540
    %v1993 = vsub.f32 %v450, %v1541
    %v1994 = vsub.f32 %v451, %v1541
    %v1995 = vsub.f32 %v452, %v1542
    %v1996 = vsub.f32 %v453, %v1542
    %v1997 = vsub.f32 %v454, %v1543
    %v1998 = vsub.f32 %v455, %v1543
    %v1999 = vsub.f32 %v456, %v1544
    %v2000 = vsub.f32 %v457, %v1544
    %v2001 = vsub.f32 %v458, %v1545
    %v2002 = vsub.f32 %v459, %v1545
    %v2003 = vsub.f32 %v460, %v1546
    %v2004 = vsub.f32 %v461, %v1546
    %v2005 = vsub.f32 %v462, %v1547
    %v2006 = vsub.f32 %v463, %v1547
    %v2007 = vsub.f32 %v464, %v1548
    %v2008 = vsub.f32 %v465, %v1548
    %v2009 = vsub.f32 %v466, %v1549
    %v2010 = vsub.f32 %v467, %v1549
    %v2011 = vsub.f32 %v468, %v1550
    %v2012 = vsub.f32 %v469, %v1550
    %v2013 = vsub.f32 %v470, %v1551
    %v2014 = vsub.f32 %v471, %v1551
    %v2015 = vsub.f32 %v472, %v1552
    %v2016 = vsub.f32 %v473, %v1552
    %v2017 = vsub.f32 %v474, %v1553
    %v2018 = vsub.f32 %v475, %v1553
    %v2019 = vsub.f32 %v476, %v1554
    %v2020 = vsub.f32 %v477, %v1554
    %v2021 = vsub.f32 %v478, %v1555
    %v2022 = vsub.f32 %v479, %v1555
    %v2023 = vsub.f32 %v480, %v1556
    %v2024 = vsub.f32 %v481, %v1556
    %v2025 = vsub.f32 %v482, %v1557
    %v2026 = vsub.f32 %v483, %v1557
    %v2027 = vsub.f32 %v484, %v1558
    %v2028 = vsub.f32 %v485, %v1558
    %v2029 = vsub.f32 %v486, %v1559
    %v2030 = vsub.f32 %v487, %v1559
    %v2031 = vsub.f32 %v488, %v1560
    %v2032 = vsub.f32 %v489, %v1560
    %v2033 = vsub.f32 %v490, %v1561
    %v2034 = vsub.f32 %v491, %v1561
    %v2035 = vsub.f32 %v492, %v1562
    %v2036 = vsub.f32 %v493, %v1562
    %v2037 = vsub.f32 %v494, %v1563
    %v2038 = vsub.f32 %v495, %v1563
    %v2039 = vsub.f32 %v496, %v1564
    %v2040 = vsub.f32 %v497, %v1564
    %v2041 = vsub.f32 %v498, %v1565
    %v2042 = vsub.f32 %v499, %v1565
    %v2043 = vsub.f32 %v500, %v1566
    %v2044 = vsub.f32 %v501, %v1566
    %v2045 = vsub.f32 %v502, %v1567
    %v2046 = vsub.f32 %v503, %v1567
    %v2047 = vsub.f32 %v504, %v1568
    %v2048 = vsub.f32 %v505, %v1568
    %v2049 = vsub.f32 %v506, %v1569
    %v2050 = vsub.f32 %v507, %v1569
    %v2051 = vsub.f32 %v508, %v1570
    %v2052 = vsub.f32 %v509, %v1570
    %v2053 = vsub.f32 %v510, %v1571
    %v2054 = vsub.f32 %v511, %v1571
    %v2055 = vsub.f32 %v512, %v1572
    %v2056 = vsub.f32 %v513, %v1572
    %v2057 = vsub.f32 %v514, %v1573
    %v2058 = vsub.f32 %v515, %v1573
    %v2059 = vsub.f32 %v516, %v1574
    %v2060 = vsub.f32 %v517, %v1574
    %v2061 = vsub.f32 %v518, %v1575
    %v2062 = vsub.f32 %v519, %v1575
    %v2063 = vsub.f32 %v520, %v1576
    %v2064 = vsub.f32 %v521, %v1576
    %v2065 = vsub.f32 %v522, %v1577
    %v2066 = vsub.f32 %v523, %v1577
    %v2067 = vsub.f32 %v524, %v1578
    %v2068 = vsub.f32 %v525, %v1578
    %v2069 = vsub.f32 %v526, %v1579
    %v2070 = vsub.f32 %v527, %v1579
    %v2071 = vsub.f32 %v528, %v1580
    %v2072 = vsub.f32 %v529, %v1580
    %v2073 = vsub.f32 %v530, %v1581
    %v2074 = vsub.f32 %v531, %v1581
    %v2075 = vsub.f32 %v532, %v1582
    %v2076 = vsub.f32 %v533, %v1582
    %v2077 = vsub.f32 %v534, %v1583
    %v2078 = vsub.f32 %v535, %v1583
    %v2079 = vsub.f32 %v536, %v1584
    %v2080 = vsub.f32 %v537, %v1584
    %v2081 = vsub.f32 %v538, %v1585
    %v2082 = vsub.f32 %v539, %v1585
    %v2083 = vsub.f32 %v540, %v1586
    %v2084 = vsub.f32 %v541, %v1586
    %v2085 = vsub.f32 %v542, %v1587
    %v2086 = vsub.f32 %v543, %v1587
    %v2087 = vsub.f32 %v544, %v1588
    %v2088 = vsub.f32 %v545, %v1588
    %v2089 = vsub.f32 %v546, %v1589
    %v2090 = vsub.f32 %v547, %v1589
    %v2091 = vsub.f32 %v548, %v1590
    %v2092 = vsub.f32 %v549, %v1590
    %v2093 = vsub.f32 %v550, %v1591
    %v2094 = vsub.f32 %v551, %v1591
    %v2095 = vsub.f32 %v552, %v1592
    %v2096 = vsub.f32 %v553, %v1592
    %v2097 = vsub.f32 %v554, %v1593
    %v2098 = vsub.f32 %v555, %v1593
    %v2099 = vsub.f32 %v556, %v1594
    %v2100 = vsub.f32 %v557, %v1594
    %v2101 = vsub.f32 %v558, %v1595
    %v2102 = vsub.f32 %v559, %v1595
    %v2103 = vsub.f32 %v560, %v1596
    %v2104 = vsub.f32 %v561, %v1596
    %v2105 = vsub.f32 %v562, %v1597
    %v2106 = vsub.f32 %v563, %v1597
    %v2107 = vsub.f32 %v564, %v1598
    %v2108 = vsub.f32 %v565, %v1598
    %v2109 = vsub.f32 %v566, %v1599
    %v2110 = vsub.f32 %v567, %v1599
    %v2111 = vsub.f32 %v568, %v1600
    %v2112 = vsub.f32 %v569, %v1600
    %v2113 = vmul.f32 %v1601, %v1601
    %v2114 = vmul.f32 %v1602, %v1602
    %v2115 = vmul.f32 %v1603, %v1603
    %v2116 = vmul.f32 %v1604, %v1604
    %v2117 = vmul.f32 %v1605, %v1605
    %v2118 = vmul.f32 %v1606, %v1606
    %v2119 = vmul.f32 %v1607, %v1607
    %v2120 = vmul.f32 %v1608, %v1608
    %v2121 = vmul.f32 %v1609, %v1609
    %v2122 = vmul.f32 %v1610, %v1610
    %v2123 = vmul.f32 %v1611, %v1611
    %v2124 = vmul.f32 %v1612, %v1612
    %v2125 = vmul.f32 %v1613, %v1613
    %v2126 = vmul.f32 %v1614, %v1614
    %v2127 = vmul.f32 %v1615, %v1615
    %v2128 = vmul.f32 %v1616, %v1616
    %v2129 = vmul.f32 %v1617, %v1617
    %v2130 = vmul.f32 %v1618, %v1618
    %v2131 = vmul.f32 %v1619, %v1619
    %v2132 = vmul.f32 %v1620, %v1620
    %v2133 = vmul.f32 %v1621, %v1621
    %v2134 = vmul.f32 %v1622, %v1622
    %v2135 = vmul.f32 %v1623, %v1623
    %v2136 = vmul.f32 %v1624, %v1624
    %v2137 = vmul.f32 %v1625, %v1625
    %v2138 = vmul.f32 %v1626, %v1626
    %v2139 = vmul.f32 %v1627, %v1627
    %v2140 = vmul.f32 %v1628, %v1628
    %v2141 = vmul.f32 %v1629, %v1629
    %v2142 = vmul.f32 %v1630, %v1630
    %v2143 = vmul.f32 %v1631, %v1631
    %v2144 = vmul.f32 %v1632, %v1632
    %v2145 = vmul.f32 %v1633, %v1633
    %v2146 = vmul.f32 %v1634, %v1634
    %v2147 = vmul.f32 %v1635, %v1635
    %v2148 = vmul.f32 %v1636, %v1636
    %v2149 = vmul.f32 %v1637, %v1637
    %v2150 = vmul.f32 %v1638, %v1638
    %v2151 = vmul.f32 %v1639, %v1639
    %v2152 = vmul.f32 %v1640, %v1640
    %v2153 = vmul.f32 %v1641, %v1641
    %v2154 = vmul.f32 %v1642, %v1642
    %v2155 = vmul.f32 %v1643, %v1643
    %v2156 = vmul.f32 %v1644, %v1644
    %v2157 = vmul.f32 %v1645, %v1645
    %v2158 = vmul.f32 %v1646, %v1646
    %v2159 = vmul.f32 %v1647, %v1647
    %v2160 = vmul.f32 %v1648, %v1648
    %v2161 = vmul.f32 %v1649, %v1649
    %v2162 = vmul.f32 %v1650, %v1650
    %v2163 = vmul.f32 %v1651, %v1651
    %v2164 = vmul.f32 %v1652, %v1652
    %v2165 = vmul.f32 %v1653, %v1653
    %v2166 = vmul.f32 %v1654, %v1654
    %v2167 = vmul.f32 %v1655, %v1655
    %v2168 = vmul.f32 %v1656, %v1656
    %v2169 = vmul.f32 %v1657, %v1657
    %v2170 = vmul.f32 %v1658, %v1658
    %v2171 = vmul.f32 %v1659, %v1659
    %v2172 = vmul.f32 %v1660, %v1660
    %v2173 = vmul.f32 %v1661, %v1661
    %v2174 = vmul.f32 %v1662, %v1662
    %v2175 = vmul.f32 %v1663, %v1663
    %v2176 = vmul.f32 %v1664, %v1664
    %v2177 = vmul.f32 %v1665, %v1665
    %v2178 = vmul.f32 %v1666, %v1666
    %v2179 = vmul.f32 %v1667, %v1667
    %v2180 = vmul.f32 %v1668, %v1668
    %v2181 = vmul.f32 %v1669, %v1669
    %v2182 = vmul.f32 %v1670, %v1670
    %v2183 = vmul.f32 %v1671, %v1671
    %v2184 = vmul.f32 %v1672, %v1672
    %v2185 = vmul.f32 %v1673, %v1673
    %v2186 = vmul.f32 %v1674, %v1674
    %v2187 = vmul.f32 %v1675, %v1675
    %v2188 = vmul.f32 %v1676, %v1676
    %v2189 = vmul.f32 %v1677, %v1677
    %v2190 = vmul.f32 %v1678, %v1678
    %v2191 = vmul.f32 %v1679, %v1679
    %v2192 = vmul.f32 %v1680, %v1680
    %v2193 = vmul.f32 %v1681, %v1681
    %v2194 = vmul.f32 %v1682, %v1682
    %v2195 = vmul.f32 %v1683, %v1683
    %v2196 = vmul.f32 %v1684, %v1684
    %v2197 = vmul.f32 %v1685, %v1685
    %v2198 = vmul.f32 %v1686, %v1686
    %v2199 = vmul.f32 %v1687, %v1687
    %v2200 = vmul.f32 %v1688, %v1688
    %v2201 = vmul.f32 %v1689, %v1689
    %v2202 = vmul.f32 %v1690, %v1690
    %v2203 = vmul.f32 %v1691, %v1691
    %v2204 = vmul.f32 %v1692, %v1692
    %v2205 = vmul.f32 %v1693, %v1693
    %v2206 = vmul.f32 %v1694, %v1694
    %v2207 = vmul.f32 %v1695, %v1695
    %v2208 = vmul.f32 %v1696, %v1696
    %v2209 = vmul.f32 %v1697, %v1697
    %v2210 = vmul.f32 %v1698, %v1698
    %v2211 = vmul.f32 %v1699, %v1699
    %v2212 = vmul.f32 %v1700, %v1700
    %v2213 = vmul.f32 %v1701, %v1701
    %v2214 = vmul.f32 %v1702, %v1702
    %v2215 = vmul.f32 %v1703, %v1703
    %v2216 = vmul.f32 %v1704, %v1704
    %v2217 = vmul.f32 %v1705, %v1705
    %v2218 = vmul.f32 %v1706, %v1706
    %v2219 = vmul.f32 %v1707, %v1707
    %v2220 = vmul.f32 %v1708, %v1708
    %v2221 = vmul.f32 %v1709, %v1709
    %v2222 = vmul.f32 %v1710, %v1710
    %v2223 = vmul.f32 %v1711, %v1711
    %v2224 = vmul.f32 %v1712, %v1712
    %v2225 = vmul.f32 %v1713, %v1713
    %v2226 = vmul.f32 %v1714, %v1714
    %v2227 = vmul.f32 %v1715, %v1715
    %v2228 = vmul.f32 %v1716, %v1716
    %v2229 = vmul.f32 %v1717, %v1717
    %v2230 = vmul.f32 %v1718, %v1718
    %v2231 = vmul.f32 %v1719, %v1719
    %v2232 = vmul.f32 %v1720, %v1720
    %v2233 = vmul.f32 %v1721, %v1721
    %v2234 = vmul.f32 %v1722, %v1722
    %v2235 = vmul.f32 %v1723, %v1723
    %v2236 = vmul.f32 %v1724, %v1724
    %v2237 = vmul.f32 %v1725, %v1725
    %v2238 = vmul.f32 %v1726, %v1726
    %v2239 = vmul.f32 %v1727, %v1727
    %v2240 = vmul.f32 %v1728, %v1728
    %v2241 = vmul.f32 %v1729, %v1729
    %v2242 = vmul.f32 %v1730, %v1730
    %v2243 = vmul.f32 %v1731, %v1731
    %v2244 = vmul.f32 %v1732, %v1732
    %v2245 = vmul.f32 %v1733, %v1733
    %v2246 = vmul.f32 %v1734, %v1734
    %v2247 = vmul.f32 %v1735, %v1735
    %v2248 = vmul.f32 %v1736, %v1736
    %v2249 = vmul.f32 %v1737, %v1737
    %v2250 = vmul.f32 %v1738, %v1738
    %v2251 = vmul.f32 %v1739, %v1739
    %v2252 = vmul.f32 %v1740, %v1740
    %v2253 = vmul.f32 %v1741, %v1741
    %v2254 = vmul.f32 %v1742, %v1742
    %v2255 = vmul.f32 %v1743, %v1743
    %v2256 = vmul.f32 %v1744, %v1744
    %v2257 = vmul.f32 %v1745, %v1745
    %v2258 = vmul.f32 %v1746, %v1746
    %v2259 = vmul.f32 %v1747, %v1747
    %v2260 = vmul.f32 %v1748, %v1748
    %v2261 = vmul.f32 %v1749, %v1749
    %v2262 = vmul.f32 %v1750, %v1750
    %v2263 = vmul.f32 %v1751, %v1751
    %v2264 = vmul.f32 %v1752, %v1752
    %v2265 = vmul.f32 %v1753, %v1753
    %v2266 = vmul.f32 %v1754, %v1754
    %v2267 = vmul.f32 %v1755, %v1755
    %v2268 = vmul.f32 %v1756, %v1756
    %v2269 = vmul.f32 %v1757, %v1757
    %v2270 = vmul.f32 %v1758, %v1758
    %v2271 = vmul.f32 %v1759, %v1759
    %v2272 = vmul.f32 %v1760, %v1760
    %v2273 = vmul.f32 %v1761, %v1761
    %v2274 = vmul.f32 %v1762, %v1762
    %v2275 = vmul.f32 %v1763, %v1763
    %v2276 = vmul.f32 %v1764, %v1764
    %v2277 = vmul.f32 %v1765, %v1765
    %v2278 = vmul.f32 %v1766, %v1766
    %v2279 = vmul.f32 %v1767, %v1767
    %v2280 = vmul.f32 %v1768, %v1768
    %v2281 = vmul.f32 %v1769, %v1769
    %v2282 = vmul.f32 %v1770, %v1770
    %v2283 = vmul.f32 %v1771, %v1771
    %v2284 = vmul.f32 %v1772, %v1772
    %v2285 = vmul.f32 %v1773, %v1773
    %v2286 = vmul.f32 %v1774, %v1774
    %v2287 = vmul.f32 %v1775, %v1775
    %v2288 = vmul.f32 %v1776, %v1776
    %v2289 = vmul.f32 %v1777, %v1777
    %v2290 = vmul.f32 %v1778, %v1778
    %v2291 = vmul.f32 %v1779, %v1779
    %v2292 = vmul.f32 %v1780, %v1780
    %v2293 = vmul.f32 %v1781, %v1781
    %v2294 = vmul.f32 %v1782, %v1782
    %v2295 = vmul.f32 %v1783, %v1783
    %v2296 = vmul.f32 %v1784, %v1784
    %v2297 = vmul.f32 %v1785, %v1785
    %v2298 = vmul.f32 %v1786, %v1786
    %v2299 = vmul.f32 %v1787, %v1787
    %v2300 = vmul.f32 %v1788, %v1788
    %v2301 = vmul.f32 %v1789, %v1789
    %v2302 = vmul.f32 %v1790, %v1790
    %v2303 = vmul.f32 %v1791, %v1791
    %v2304 = vmul.f32 %v1792, %v1792
    %v2305 = vmul.f32 %v1793, %v1793
    %v2306 = vmul.f32 %v1794, %v1794
    %v2307 = vmul.f32 %v1795, %v1795
    %v2308 = vmul.f32 %v1796, %v1796
    %v2309 = vmul.f32 %v1797, %v1797
    %v2310 = vmul.f32 %v1798, %v1798
    %v2311 = vmul.f32 %v1799, %v1799
    %v2312 = vmul.f32 %v1800, %v1800
    %v2313 = vmul.f32 %v1801, %v1801
    %v2314 = vmul.f32 %v1802, %v1802
    %v2315 = vmul.f32 %v1803, %v1803
    %v2316 = vmul.f32 %v1804, %v1804
    %v2317 = vmul.f32 %v1805, %v1805
    %v2318 = vmul.f32 %v1806, %v1806
    %v2319 = vmul.f32 %v1807, %v1807
    %v2320 = vmul.f32 %v1808, %v1808
    %v2321 = vmul.f32 %v1809, %v1809
    %v2322 = vmul.f32 %v1810, %v1810
    %v2323 = vmul.f32 %v1811, %v1811
    %v2324 = vmul.f32 %v1812, %v1812
    %v2325 = vmul.f32 %v1813, %v1813
    %v2326 = vmul.f32 %v1814, %v1814
    %v2327 = vmul.f32 %v1815, %v1815
    %v2328 = vmul.f32 %v1816, %v1816
    %v2329 = vmul.f32 %v1817, %v1817
    %v2330 = vmul.f32 %v1818, %v1818
    %v2331 = vmul.f32 %v1819, %v1819
    %v2332 = vmul.f32 %v1820, %v1820
    %v2333 = vmul.f32 %v1821, %v1821
    %v2334 = vmul.f32 %v1822, %v1822
    %v2335 = vmul.f32 %v1823, %v1823
    %v2336 = vmul.f32 %v1824, %v1824
    %v2337 = vmul.f32 %v1825, %v1825
    %v2338 = vmul.f32 %v1826, %v1826
    %v2339 = vmul.f32 %v1827, %v1827
    %v2340 = vmul.f32 %v1828, %v1828
    %v2341 = vmul.f32 %v1829, %v1829
    %v2342 = vmul.f32 %v1830, %v1830
    %v2343 = vmul.f32 %v1831, %v1831
    %v2344 = vmul.f32 %v1832, %v1832
    %v2345 = vmul.f32 %v1833, %v1833
    %v2346 = vmul.f32 %v1834, %v1834
    %v2347 = vmul.f32 %v1835, %v1835
    %v2348 = vmul.f32 %v1836, %v1836
    %v2349 = vmul.f32 %v1837, %v1837
    %v2350 = vmul.f32 %v1838, %v1838
    %v2351 = vmul.f32 %v1839, %v1839
    %v2352 = vmul.f32 %v1840, %v1840
    %v2353 = vmul.f32 %v1841, %v1841
    %v2354 = vmul.f32 %v1842, %v1842
    %v2355 = vmul.f32 %v1843, %v1843
    %v2356 = vmul.f32 %v1844, %v1844
    %v2357 = vmul.f32 %v1845, %v1845
    %v2358 = vmul.f32 %v1846, %v1846
    %v2359 = vmul.f32 %v1847, %v1847
    %v2360 = vmul.f32 %v1848, %v1848
    %v2361 = vmul.f32 %v1849, %v1849
    %v2362 = vmul.f32 %v1850, %v1850
    %v2363 = vmul.f32 %v1851, %v1851
    %v2364 = vmul.f32 %v1852, %v1852
    %v2365 = vmul.f32 %v1853, %v1853
    %v2366 = vmul.f32 %v1854, %v1854
    %v2367 = vmul.f32 %v1855, %v1855
    %v2368 = vmul.f32 %v1856, %v1856
    %v2369 = vmul.f32 %v1857, %v1857
    %v2370 = vmul.f32 %v1858, %v1858
    %v2371 = vmul.f32 %v1859, %v1859
    %v2372 = vmul.f32 %v1860, %v1860
    %v2373 = vmul.f32 %v1861, %v1861
    %v2374 = vmul.f32 %v1862, %v1862
    %v2375 = vmul.f32 %v1863, %v1863
    %v2376 = vmul.f32 %v1864, %v1864
    %v2377 = vmul.f32 %v1865, %v1865
    %v2378 = vmul.f32 %v1866, %v1866
    %v2379 = vmul.f32 %v1867, %v1867
    %v2380 = vmul.f32 %v1868, %v1868
    %v2381 = vmul.f32 %v1869, %v1869
    %v2382 = vmul.f32 %v1870, %v1870
    %v2383 = vmul.f32 %v1871, %v1871
    %v2384 = vmul.f32 %v1872, %v1872
    %v2385 = vmul.f32 %v1873, %v1873
    %v2386 = vmul.f32 %v1874, %v1874
    %v2387 = vmul.f32 %v1875, %v1875
    %v2388 = vmul.f32 %v1876, %v1876
    %v2389 = vmul.f32 %v1877, %v1877
    %v2390 = vmul.f32 %v1878, %v1878
    %v2391 = vmul.f32 %v1879, %v1879
    %v2392 = vmul.f32 %v1880, %v1880
    %v2393 = vmul.f32 %v1881, %v1881
    %v2394 = vmul.f32 %v1882, %v1882
    %v2395 = vmul.f32 %v1883, %v1883
    %v2396 = vmul.f32 %v1884, %v1884
    %v2397 = vmul.f32 %v1885, %v1885
    %v2398 = vmul.f32 %v1886, %v1886
    %v2399 = vmul.f32 %v1887, %v1887
    %v2400 = vmul.f32 %v1888, %v1888
    %v2401 = vmul.f32 %v1889, %v1889
    %v2402 = vmul.f32 %v1890, %v1890
    %v2403 = vmul.f32 %v1891, %v1891
    %v2404 = vmul.f32 %v1892, %v1892
    %v2405 = vmul.f32 %v1893, %v1893
    %v2406 = vmul.f32 %v1894, %v1894
    %v2407 = vmul.f32 %v1895, %v1895
    %v2408 = vmul.f32 %v1896, %v1896
    %v2409 = vmul.f32 %v1897, %v1897
    %v2410 = vmul.f32 %v1898, %v1898
    %v2411 = vmul.f32 %v1899, %v1899
    %v2412 = vmul.f32 %v1900, %v1900
    %v2413 = vmul.f32 %v1901, %v1901
    %v2414 = vmul.f32 %v1902, %v1902
    %v2415 = vmul.f32 %v1903, %v1903
    %v2416 = vmul.f32 %v1904, %v1904
    %v2417 = vmul.f32 %v1905, %v1905
    %v2418 = vmul.f32 %v1906, %v1906
    %v2419 = vmul.f32 %v1907, %v1907
    %v2420 = vmul.f32 %v1908, %v1908
    %v2421 = vmul.f32 %v1909, %v1909
    %v2422 = vmul.f32 %v1910, %v1910
    %v2423 = vmul.f32 %v1911, %v1911
    %v2424 = vmul.f32 %v1912, %v1912
    %v2425 = vmul.f32 %v1913, %v1913
    %v2426 = vmul.f32 %v1914, %v1914
    %v2427 = vmul.f32 %v1915, %v1915
    %v2428 = vmul.f32 %v1916, %v1916
    %v2429 = vmul.f32 %v1917, %v1917
    %v2430 = vmul.f32 %v1918, %v1918
    %v2431 = vmul.f32 %v1919, %v1919
    %v2432 = vmul.f32 %v1920, %v1920
    %v2433 = vmul.f32 %v1921, %v1921
    %v2434 = vmul.f32 %v1922, %v1922
    %v2435 = vmul.f32 %v1923, %v1923
    %v2436 = vmul.f32 %v1924, %v1924
    %v2437 = vmul.f32 %v1925, %v1925
    %v2438 = vmul.f32 %v1926, %v1926
    %v2439 = vmul.f32 %v1927, %v1927
    %v2440 = vmul.f32 %v1928, %v1928
    %v2441 = vmul.f32 %v1929, %v1929
    %v2442 = vmul.f32 %v1930, %v1930
    %v2443 = vmul.f32 %v1931, %v1931
    %v2444 = vmul.f32 %v1932, %v1932
    %v2445 = vmul.f32 %v1933, %v1933
    %v2446 = vmul.f32 %v1934, %v1934
    %v2447 = vmul.f32 %v1935, %v1935
    %v2448 = vmul.f32 %v1936, %v1936
    %v2449 = vmul.f32 %v1937, %v1937
    %v2450 = vmul.f32 %v1938, %v1938
    %v2451 = vmul.f32 %v1939, %v1939
    %v2452 = vmul.f32 %v1940, %v1940
    %v2453 = vmul.f32 %v1941, %v1941
    %v2454 = vmul.f32 %v1942, %v1942
    %v2455 = vmul.f32 %v1943, %v1943
    %v2456 = vmul.f32 %v1944, %v1944
    %v2457 = vmul.f32 %v1945, %v1945
    %v2458 = vmul.f32 %v1946, %v1946
    %v2459 = vmul.f32 %v1947, %v1947
    %v2460 = vmul.f32 %v1948, %v1948
    %v2461 = vmul.f32 %v1949, %v1949
    %v2462 = vmul.f32 %v1950, %v1950
    %v2463 = vmul.f32 %v1951, %v1951
    %v2464 = vmul.f32 %v1952, %v1952
    %v2465 = vmul.f32 %v1953, %v1953
    %v2466 = vmul.f32 %v1954, %v1954
    %v2467 = vmul.f32 %v1955, %v1955
    %v2468 = vmul.f32 %v1956, %v1956
    %v2469 = vmul.f32 %v1957, %v1957
    %v2470 = vmul.f32 %v1958, %v1958
    %v2471 = vmul.f32 %v1959, %v1959
    %v2472 = vmul.f32 %v1960, %v1960
    %v2473 = vmul.f32 %v1961, %v1961
    %v2474 = vmul.f32 %v1962, %v1962
    %v2475 = vmul.f32 %v1963, %v1963
    %v2476 = vmul.f32 %v1964, %v1964
    %v2477 = vmul.f32 %v1965, %v1965
    %v2478 = vmul.f32 %v1966, %v1966
    %v2479 = vmul.f32 %v1967, %v1967
    %v2480 = vmul.f32 %v1968, %v1968
    %v2481 = vmul.f32 %v1969, %v1969
    %v2482 = vmul.f32 %v1970, %v1970
    %v2483 = vmul.f32 %v1971, %v1971
    %v2484 = vmul.f32 %v1972, %v1972
    %v2485 = vmul.f32 %v1973, %v1973
    %v2486 = vmul.f32 %v1974, %v1974
    %v2487 = vmul.f32 %v1975, %v1975
    %v2488 = vmul.f32 %v1976, %v1976
    %v2489 = vmul.f32 %v1977, %v1977
    %v2490 = vmul.f32 %v1978, %v1978
    %v2491 = vmul.f32 %v1979, %v1979
    %v2492 = vmul.f32 %v1980, %v1980
    %v2493 = vmul.f32 %v1981, %v1981
    %v2494 = vmul.f32 %v1982, %v1982
    %v2495 = vmul.f32 %v1983, %v1983
    %v2496 = vmul.f32 %v1984, %v1984
    %v2497 = vmul.f32 %v1985, %v1985
    %v2498 = vmul.f32 %v1986, %v1986
    %v2499 = vmul.f32 %v1987, %v1987
    %v2500 = vmul.f32 %v1988, %v1988
    %v2501 = vmul.f32 %v1989, %v1989
    %v2502 = vmul.f32 %v1990, %v1990
    %v2503 = vmul.f32 %v1991, %v1991
    %v2504 = vmul.f32 %v1992, %v1992
    %v2505 = vmul.f32 %v1993, %v1993
    %v2506 = vmul.f32 %v1994, %v1994
    %v2507 = vmul.f32 %v1995, %v1995
    %v2508 = vmul.f32 %v1996, %v1996
    %v2509 = vmul.f32 %v1997, %v1997
    %v2510 = vmul.f32 %v1998, %v1998
    %v2511 = vmul.f32 %v1999, %v1999
    %v2512 = vmul.f32 %v2000, %v2000
    %v2513 = vmul.f32 %v2001, %v2001
    %v2514 = vmul.f32 %v2002, %v2002
    %v2515 = vmul.f32 %v2003, %v2003
    %v2516 = vmul.f32 %v2004, %v2004
    %v2517 = vmul.f32 %v2005, %v2005
    %v2518 = vmul.f32 %v2006, %v2006
    %v2519 = vmul.f32 %v2007, %v2007
    %v2520 = vmul.f32 %v2008, %v2008
    %v2521 = vmul.f32 %v2009, %v2009
    %v2522 = vmul.f32 %v2010, %v2010
    %v2523 = vmul.f32 %v2011, %v2011
    %v2524 = vmul.f32 %v2012, %v2012
    %v2525 = vmul.f32 %v2013, %v2013
    %v2526 = vmul.f32 %v2014, %v2014
    %v2527 = vmul.f32 %v2015, %v2015
    %v2528 = vmul.f32 %v2016, %v2016
    %v2529 = vmul.f32 %v2017, %v2017
    %v2530 = vmul.f32 %v2018, %v2018
    %v2531 = vmul.f32 %v2019, %v2019
    %v2532 = vmul.f32 %v2020, %v2020
    %v2533 = vmul.f32 %v2021, %v2021
    %v2534 = vmul.f32 %v2022, %v2022
    %v2535 = vmul.f32 %v2023, %v2023
    %v2536 = vmul.f32 %v2024, %v2024
    %v2537 = vmul.f32 %v2025, %v2025
    %v2538 = vmul.f32 %v2026, %v2026
    %v2539 = vmul.f32 %v2027, %v2027
    %v2540 = vmul.f32 %v2028, %v2028
    %v2541 = vmul.f32 %v2029, %v2029
    %v2542 = vmul.f32 %v2030, %v2030
    %v2543 = vmul.f32 %v2031, %v2031
    %v2544 = vmul.f32 %v2032, %v2032
    %v2545 = vmul.f32 %v2033, %v2033
    %v2546 = vmul.f32 %v2034, %v2034
    %v2547 = vmul.f32 %v2035, %v2035
    %v2548 = vmul.f32 %v2036, %v2036
    %v2549 = vmul.f32 %v2037, %v2037
    %v2550 = vmul.f32 %v2038, %v2038
    %v2551 = vmul.f32 %v2039, %v2039
    %v2552 = vmul.f32 %v2040, %v2040
    %v2553 = vmul.f32 %v2041, %v2041
    %v2554 = vmul.f32 %v2042, %v2042
    %v2555 = vmul.f32 %v2043, %v2043
    %v2556 = vmul.f32 %v2044, %v2044
    %v2557 = vmul.f32 %v2045, %v2045
    %v2558 = vmul.f32 %v2046, %v2046
    %v2559 = vmul.f32 %v2047, %v2047
    %v2560 = vmul.f32 %v2048, %v2048
    %v2561 = vmul.f32 %v2049, %v2049
    %v2562 = vmul.f32 %v2050, %v2050
    %v2563 = vmul.f32 %v2051, %v2051
    %v2564 = vmul.f32 %v2052, %v2052
    %v2565 = vmul.f32 %v2053, %v2053
    %v2566 = vmul.f32 %v2054, %v2054
    %v2567 = vmul.f32 %v2055, %v2055
    %v2568 = vmul.f32 %v2056, %v2056
    %v2569 = vmul.f32 %v2057, %v2057
    %v2570 = vmul.f32 %v2058, %v2058
    %v2571 = vmul.f32 %v2059, %v2059
    %v2572 = vmul.f32 %v2060, %v2060
    %v2573 = vmul.f32 %v2061, %v2061
    %v2574 = vmul.f32 %v2062, %v2062
    %v2575 = vmul.f32 %v2063, %v2063
    %v2576 = vmul.f32 %v2064, %v2064
    %v2577 = vmul.f32 %v2065, %v2065
    %v2578 = vmul.f32 %v2066, %v2066
    %v2579 = vmul.f32 %v2067, %v2067
    %v2580 = vmul.f32 %v2068, %v2068
    %v2581 = vmul.f32 %v2069, %v2069
    %v2582 = vmul.f32 %v2070, %v2070
    %v2583 = vmul.f32 %v2071, %v2071
    %v2584 = vmul.f32 %v2072, %v2072
    %v2585 = vmul.f32 %v2073, %v2073
    %v2586 = vmul.f32 %v2074, %v2074
    %v2587 = vmul.f32 %v2075, %v2075
    %v2588 = vmul.f32 %v2076, %v2076
    %v2589 = vmul.f32 %v2077, %v2077
    %v2590 = vmul.f32 %v2078, %v2078
    %v2591 = vmul.f32 %v2079, %v2079
    %v2592 = vmul.f32 %v2080, %v2080
    %v2593 = vmul.f32 %v2081, %v2081
    %v2594 = vmul.f32 %v2082, %v2082
    %v2595 = vmul.f32 %v2083, %v2083
    %v2596 = vmul.f32 %v2084, %v2084
    %v2597 = vmul.f32 %v2085, %v2085
    %v2598 = vmul.f32 %v2086, %v2086
    %v2599 = vmul.f32 %v2087, %v2087
    %v2600 = vmul.f32 %v2088, %v2088
    %v2601 = vmul.f32 %v2089, %v2089
    %v2602 = vmul.f32 %v2090, %v2090
    %v2603 = vmul.f32 %v2091, %v2091
    %v2604 = vmul.f32 %v2092, %v2092
    %v2605 = vmul.f32 %v2093, %v2093
    %v2606 = vmul.f32 %v2094, %v2094
    %v2607 = vmul.f32 %v2095, %v2095
    %v2608 = vmul.f32 %v2096, %v2096
    %v2609 = vmul.f32 %v2097, %v2097
    %v2610 = vmul.f32 %v2098, %v2098
    %v2611 = vmul.f32 %v2099, %v2099
    %v2612 = vmul.f32 %v2100, %v2100
    %v2613 = vmul.f32 %v2101, %v2101
    %v2614 = vmul.f32 %v2102, %v2102
    %v2615 = vmul.f32 %v2103, %v2103
    %v2616 = vmul.f32 %v2104, %v2104
    %v2617 = vmul.f32 %v2105, %v2105
    %v2618 = vmul.f32 %v2106, %v2106
    %v2619 = vmul.f32 %v2107, %v2107
    %v2620 = vmul.f32 %v2108, %v2108
    %v2621 = vmul.f32 %v2109, %v2109
    %v2622 = vmul.f32 %v2110, %v2110
    %v2623 = vmul.f32 %v2111, %v2111
    %v2624 = vmul.f32 %v2112, %v2112
    %v2625 = vadd.f32 %v2113, %v2114
    %2626 = vadd.xlane.f32.xlu0 %v2625
    %v2627 = vpop.xlane.xlu0 %2626
    %v2628 = vadd.f32 %v2115, %v2116
    %2629 = vadd.xlane.f32.xlu0 %v2628
    %v2630 = vpop.xlane.xlu0 %2629
    %v2631 = vadd.f32 %v2117, %v2118
    %2632 = vadd.xlane.f32.xlu0 %v2631
    %v2633 = vpop.xlane.xlu0 %2632
    %v2634 = vadd.f32 %v2119, %v2120
    %2635 = vadd.xlane.f32.xlu0 %v2634
    %v2636 = vpop.xlane.xlu0 %2635
    %v2637 = vadd.f32 %v2121, %v2122
    %2638 = vadd.xlane.f32.xlu0 %v2637
    %v2639 = vpop.xlane.xlu0 %2638
    %v2640 = vadd.f32 %v2123, %v2124
    %2641 = vadd.xlane.f32.xlu0 %v2640
    %v2642 = vpop.xlane.xlu0 %2641
    %v2643 = vadd.f32 %v2125, %v2126
    %2644 = vadd.xlane.f32.xlu0 %v2643
    %v2645 = vpop.xlane.xlu0 %2644
    %v2646 = vadd.f32 %v2127, %v2128
    %2647 = vadd.xlane.f32.xlu0 %v2646
    %v2648 = vpop.xlane.xlu0 %2647
    %v2649 = vadd.f32 %v2129, %v2130
    %2650 = vadd.xlane.f32.xlu0 %v2649
    %v2651 = vpop.xlane.xlu0 %2650
    %v2652 = vadd.f32 %v2131, %v2132
    %2653 = vadd.xlane.f32.xlu0 %v2652
    %v2654 = vpop.xlane.xlu0 %2653
    %v2655 = vadd.f32 %v2133, %v2134
    %2656 = vadd.xlane.f32.xlu0 %v2655
    %v2657 = vpop.xlane.xlu0 %2656
    %v2658 = vadd.f32 %v2135, %v2136
    %2659 = vadd.xlane.f32.xlu0 %v2658
    %v2660 = vpop.xlane.xlu0 %2659
    %v2661 = vadd.f32 %v2137, %v2138
    %2662 = vadd.xlane.f32.xlu0 %v2661
    %v2663 = vpop.xlane.xlu0 %2662
    %v2664 = vadd.f32 %v2139, %v2140
    %2665 = vadd.xlane.f32.xlu0 %v2664
    %v2666 = vpop.xlane.xlu0 %2665
    %v2667 = vadd.f32 %v2141, %v2142
    %2668 = vadd.xlane.f32.xlu0 %v2667
    %v2669 = vpop.xlane.xlu0 %2668
    %v2670 = vadd.f32 %v2143, %v2144
    %2671 = vadd.xlane.f32.xlu0 %v2670
    %v2672 = vpop.xlane.xlu0 %2671
    %v2673 = vadd.f32 %v2145, %v2146
    %2674 = vadd.xlane.f32.xlu0 %v2673
    %v2675 = vpop.xlane.xlu0 %2674
    %v2676 = vadd.f32 %v2147, %v2148
    %2677 = vadd.xlane.f32.xlu0 %v2676
    %v2678 = vpop.xlane.xlu0 %2677
    %v2679 = vadd.f32 %v2149, %v2150
    %2680 = vadd.xlane.f32.xlu0 %v2679
    %v2681 = vpop.xlane.xlu0 %2680
    %v2682 = vadd.f32 %v2151, %v2152
    %2683 = vadd.xlane.f32.xlu0 %v2682
    %v2684 = vpop.xlane.xlu0 %2683
    %v2685 = vadd.f32 %v2153, %v2154
    %2686 = vadd.xlane.f32.xlu0 %v2685
    %v2687 = vpop.xlane.xlu0 %2686
    %v2688 = vadd.f32 %v2155, %v2156
    %2689 = vadd.xlane.f32.xlu0 %v2688
    %v2690 = vpop.xlane.xlu0 %2689
    %v2691 = vadd.f32 %v2157, %v2158
    %2692 = vadd.xlane.f32.xlu0 %v2691
    %v2693 = vpop.xlane.xlu0 %2692
    %v2694 = vadd.f32 %v2159, %v2160
    %2695 = vadd.xlane.f32.xlu0 %v2694
    %v2696 = vpop.xlane.xlu0 %2695
    %v2697 = vadd.f32 %v2161, %v2162
    %2698 = vadd.xlane.f32.xlu0 %v2697
    %v2699 = vpop.xlane.xlu0 %2698
    %v2700 = vadd.f32 %v2163, %v2164
    %2701 = vadd.xlane.f32.xlu0 %v2700
    %v2702 = vpop.xlane.xlu0 %2701
    %v2703 = vadd.f32 %v2165, %v2166
    %2704 = vadd.xlane.f32.xlu0 %v2703
    %v2705 = vpop.xlane.xlu0 %2704
    %v2706 = vadd.f32 %v2167, %v2168
    %2707 = vadd.xlane.f32.xlu0 %v2706
    %v2708 = vpop.xlane.xlu0 %2707
    %v2709 = vadd.f32 %v2169, %v2170
    %2710 = vadd.xlane.f32.xlu0 %v2709
    %v2711 = vpop.xlane.xlu0 %2710
    %v2712 = vadd.f32 %v2171, %v2172
    %2713 = vadd.xlane.f32.xlu0 %v2712
    %v2714 = vpop.xlane.xlu0 %2713
    %v2715 = vadd.f32 %v2173, %v2174
    %2716 = vadd.xlane.f32.xlu0 %v2715
    %v2717 = vpop.xlane.xlu0 %2716
    %v2718 = vadd.f32 %v2175, %v2176
    %2719 = vadd.xlane.f32.xlu0 %v2718
    %v2720 = vpop.xlane.xlu0 %2719
    %v2721 = vadd.f32 %v2177, %v2178
    %2722 = vadd.xlane.f32.xlu0 %v2721
    %v2723 = vpop.xlane.xlu0 %2722
    %v2724 = vadd.f32 %v2179, %v2180
    %2725 = vadd.xlane.f32.xlu0 %v2724
    %v2726 = vpop.xlane.xlu0 %2725
    %v2727 = vadd.f32 %v2181, %v2182
    %2728 = vadd.xlane.f32.xlu0 %v2727
    %v2729 = vpop.xlane.xlu0 %2728
    %v2730 = vadd.f32 %v2183, %v2184
    %2731 = vadd.xlane.f32.xlu0 %v2730
    %v2732 = vpop.xlane.xlu0 %2731
    %v2733 = vadd.f32 %v2185, %v2186
    %2734 = vadd.xlane.f32.xlu0 %v2733
    %v2735 = vpop.xlane.xlu0 %2734
    %v2736 = vadd.f32 %v2187, %v2188
    %2737 = vadd.xlane.f32.xlu0 %v2736
    %v2738 = vpop.xlane.xlu0 %2737
    %v2739 = vadd.f32 %v2189, %v2190
    %2740 = vadd.xlane.f32.xlu0 %v2739
    %v2741 = vpop.xlane.xlu0 %2740
    %v2742 = vadd.f32 %v2191, %v2192
    %2743 = vadd.xlane.f32.xlu0 %v2742
    %v2744 = vpop.xlane.xlu0 %2743
    %v2745 = vadd.f32 %v2193, %v2194
    %2746 = vadd.xlane.f32.xlu0 %v2745
    %v2747 = vpop.xlane.xlu0 %2746
    %v2748 = vadd.f32 %v2195, %v2196
    %2749 = vadd.xlane.f32.xlu0 %v2748
    %v2750 = vpop.xlane.xlu0 %2749
    %v2751 = vadd.f32 %v2197, %v2198
    %2752 = vadd.xlane.f32.xlu0 %v2751
    %v2753 = vpop.xlane.xlu0 %2752
    %v2754 = vadd.f32 %v2199, %v2200
    %2755 = vadd.xlane.f32.xlu0 %v2754
    %v2756 = vpop.xlane.xlu0 %2755
    %v2757 = vadd.f32 %v2201, %v2202
    %2758 = vadd.xlane.f32.xlu0 %v2757
    %v2759 = vpop.xlane.xlu0 %2758
    %v2760 = vadd.f32 %v2203, %v2204
    %2761 = vadd.xlane.f32.xlu0 %v2760
    %v2762 = vpop.xlane.xlu0 %2761
    %v2763 = vadd.f32 %v2205, %v2206
    %2764 = vadd.xlane.f32.xlu0 %v2763
    %v2765 = vpop.xlane.xlu0 %2764
    %v2766 = vadd.f32 %v2207, %v2208
    %2767 = vadd.xlane.f32.xlu0 %v2766
    %v2768 = vpop.xlane.xlu0 %2767
    %v2769 = vadd.f32 %v2209, %v2210
    %2770 = vadd.xlane.f32.xlu0 %v2769
    %v2771 = vpop.xlane.xlu0 %2770
    %v2772 = vadd.f32 %v2211, %v2212
    %2773 = vadd.xlane.f32.xlu0 %v2772
    %v2774 = vpop.xlane.xlu0 %2773
    %v2775 = vadd.f32 %v2213, %v2214
    %2776 = vadd.xlane.f32.xlu0 %v2775
    %v2777 = vpop.xlane.xlu0 %2776
    %v2778 = vadd.f32 %v2215, %v2216
    %2779 = vadd.xlane.f32.xlu0 %v2778
    %v2780 = vpop.xlane.xlu0 %2779
    %v2781 = vadd.f32 %v2217, %v2218
    %2782 = vadd.xlane.f32.xlu0 %v2781
    %v2783 = vpop.xlane.xlu0 %2782
    %v2784 = vadd.f32 %v2219, %v2220
    %2785 = vadd.xlane.f32.xlu0 %v2784
    %v2786 = vpop.xlane.xlu0 %2785
    %v2787 = vadd.f32 %v2221, %v2222
    %2788 = vadd.xlane.f32.xlu0 %v2787
    %v2789 = vpop.xlane.xlu0 %2788
    %v2790 = vadd.f32 %v2223, %v2224
    %2791 = vadd.xlane.f32.xlu0 %v2790
    %v2792 = vpop.xlane.xlu0 %2791
    %v2793 = vadd.f32 %v2225, %v2226
    %2794 = vadd.xlane.f32.xlu0 %v2793
    %v2795 = vpop.xlane.xlu0 %2794
    %v2796 = vadd.f32 %v2227, %v2228
    %2797 = vadd.xlane.f32.xlu0 %v2796
    %v2798 = vpop.xlane.xlu0 %2797
    %v2799 = vadd.f32 %v2229, %v2230
    %2800 = vadd.xlane.f32.xlu0 %v2799
    %v2801 = vpop.xlane.xlu0 %2800
    %v2802 = vadd.f32 %v2231, %v2232
    %2803 = vadd.xlane.f32.xlu0 %v2802
    %v2804 = vpop.xlane.xlu0 %2803
    %v2805 = vadd.f32 %v2233, %v2234
    %2806 = vadd.xlane.f32.xlu0 %v2805
    %v2807 = vpop.xlane.xlu0 %2806
    %v2808 = vadd.f32 %v2235, %v2236
    %2809 = vadd.xlane.f32.xlu0 %v2808
    %v2810 = vpop.xlane.xlu0 %2809
    %v2811 = vadd.f32 %v2237, %v2238
    %2812 = vadd.xlane.f32.xlu0 %v2811
    %v2813 = vpop.xlane.xlu0 %2812
    %v2814 = vadd.f32 %v2239, %v2240
    %2815 = vadd.xlane.f32.xlu0 %v2814
    %v2816 = vpop.xlane.xlu0 %2815
    %v2817 = vadd.f32 %v2241, %v2242
    %2818 = vadd.xlane.f32.xlu0 %v2817
    %v2819 = vpop.xlane.xlu0 %2818
    %v2820 = vadd.f32 %v2243, %v2244
    %2821 = vadd.xlane.f32.xlu0 %v2820
    %v2822 = vpop.xlane.xlu0 %2821
    %v2823 = vadd.f32 %v2245, %v2246
    %2824 = vadd.xlane.f32.xlu0 %v2823
    %v2825 = vpop.xlane.xlu0 %2824
    %v2826 = vadd.f32 %v2247, %v2248
    %2827 = vadd.xlane.f32.xlu0 %v2826
    %v2828 = vpop.xlane.xlu0 %2827
    %v2829 = vadd.f32 %v2249, %v2250
    %2830 = vadd.xlane.f32.xlu0 %v2829
    %v2831 = vpop.xlane.xlu0 %2830
    %v2832 = vadd.f32 %v2251, %v2252
    %2833 = vadd.xlane.f32.xlu0 %v2832
    %v2834 = vpop.xlane.xlu0 %2833
    %v2835 = vadd.f32 %v2253, %v2254
    %2836 = vadd.xlane.f32.xlu0 %v2835
    %v2837 = vpop.xlane.xlu0 %2836
    %v2838 = vadd.f32 %v2255, %v2256
    %2839 = vadd.xlane.f32.xlu0 %v2838
    %v2840 = vpop.xlane.xlu0 %2839
    %v2841 = vadd.f32 %v2257, %v2258
    %2842 = vadd.xlane.f32.xlu0 %v2841
    %v2843 = vpop.xlane.xlu0 %2842
    %v2844 = vadd.f32 %v2259, %v2260
    %2845 = vadd.xlane.f32.xlu0 %v2844
    %v2846 = vpop.xlane.xlu0 %2845
    %v2847 = vadd.f32 %v2261, %v2262
    %2848 = vadd.xlane.f32.xlu0 %v2847
    %v2849 = vpop.xlane.xlu0 %2848
    %v2850 = vadd.f32 %v2263, %v2264
    %2851 = vadd.xlane.f32.xlu0 %v2850
    %v2852 = vpop.xlane.xlu0 %2851
    %v2853 = vadd.f32 %v2265, %v2266
    %2854 = vadd.xlane.f32.xlu0 %v2853
    %v2855 = vpop.xlane.xlu0 %2854
    %v2856 = vadd.f32 %v2267, %v2268
    %2857 = vadd.xlane.f32.xlu0 %v2856
    %v2858 = vpop.xlane.xlu0 %2857
    %v2859 = vadd.f32 %v2269, %v2270
    %2860 = vadd.xlane.f32.xlu0 %v2859
    %v2861 = vpop.xlane.xlu0 %2860
    %v2862 = vadd.f32 %v2271, %v2272
    %2863 = vadd.xlane.f32.xlu0 %v2862
    %v2864 = vpop.xlane.xlu0 %2863
    %v2865 = vadd.f32 %v2273, %v2274
    %2866 = vadd.xlane.f32.xlu0 %v2865
    %v2867 = vpop.xlane.xlu0 %2866
    %v2868 = vadd.f32 %v2275, %v2276
    %2869 = vadd.xlane.f32.xlu0 %v2868
    %v2870 = vpop.xlane.xlu0 %2869
    %v2871 = vadd.f32 %v2277, %v2278
    %2872 = vadd.xlane.f32.xlu0 %v2871
    %v2873 = vpop.xlane.xlu0 %2872
    %v2874 = vadd.f32 %v2279, %v2280
    %2875 = vadd.xlane.f32.xlu0 %v2874
    %v2876 = vpop.xlane.xlu0 %2875
    %v2877 = vadd.f32 %v2281, %v2282
    %2878 = vadd.xlane.f32.xlu0 %v2877
    %v2879 = vpop.xlane.xlu0 %2878
    %v2880 = vadd.f32 %v2283, %v2284
    %2881 = vadd.xlane.f32.xlu0 %v2880
    %v2882 = vpop.xlane.xlu0 %2881
    %v2883 = vadd.f32 %v2285, %v2286
    %2884 = vadd.xlane.f32.xlu0 %v2883
    %v2885 = vpop.xlane.xlu0 %2884
    %v2886 = vadd.f32 %v2287, %v2288
    %2887 = vadd.xlane.f32.xlu0 %v2886
    %v2888 = vpop.xlane.xlu0 %2887
    %v2889 = vadd.f32 %v2289, %v2290
    %2890 = vadd.xlane.f32.xlu0 %v2889
    %v2891 = vpop.xlane.xlu0 %2890
    %v2892 = vadd.f32 %v2291, %v2292
    %2893 = vadd.xlane.f32.xlu0 %v2892
    %v2894 = vpop.xlane.xlu0 %2893
    %v2895 = vadd.f32 %v2293, %v2294
    %2896 = vadd.xlane.f32.xlu0 %v2895
    %v2897 = vpop.xlane.xlu0 %2896
    %v2898 = vadd.f32 %v2295, %v2296
    %2899 = vadd.xlane.f32.xlu0 %v2898
    %v2900 = vpop.xlane.xlu0 %2899
    %v2901 = vadd.f32 %v2297, %v2298
    %2902 = vadd.xlane.f32.xlu0 %v2901
    %v2903 = vpop.xlane.xlu0 %2902
    %v2904 = vadd.f32 %v2299, %v2300
    %2905 = vadd.xlane.f32.xlu0 %v2904
    %v2906 = vpop.xlane.xlu0 %2905
    %v2907 = vadd.f32 %v2301, %v2302
    %2908 = vadd.xlane.f32.xlu0 %v2907
    %v2909 = vpop.xlane.xlu0 %2908
    %v2910 = vadd.f32 %v2303, %v2304
    %2911 = vadd.xlane.f32.xlu0 %v2910
    %v2912 = vpop.xlane.xlu0 %2911
    %v2913 = vadd.f32 %v2305, %v2306
    %2914 = vadd.xlane.f32.xlu0 %v2913
    %v2915 = vpop.xlane.xlu0 %2914
    %v2916 = vadd.f32 %v2307, %v2308
    %2917 = vadd.xlane.f32.xlu0 %v2916
    %v2918 = vpop.xlane.xlu0 %2917
    %v2919 = vadd.f32 %v2309, %v2310
    %2920 = vadd.xlane.f32.xlu0 %v2919
    %v2921 = vpop.xlane.xlu0 %2920
    %v2922 = vadd.f32 %v2311, %v2312
    %2923 = vadd.xlane.f32.xlu0 %v2922
    %v2924 = vpop.xlane.xlu0 %2923
    %v2925 = vadd.f32 %v2313, %v2314
    %2926 = vadd.xlane.f32.xlu0 %v2925
    %v2927 = vpop.xlane.xlu0 %2926
    %v2928 = vadd.f32 %v2315, %v2316
    %2929 = vadd.xlane.f32.xlu0 %v2928
    %v2930 = vpop.xlane.xlu0 %2929
    %v2931 = vadd.f32 %v2317, %v2318
    %2932 = vadd.xlane.f32.xlu0 %v2931
    %v2933 = vpop.xlane.xlu0 %2932
    %v2934 = vadd.f32 %v2319, %v2320
    %2935 = vadd.xlane.f32.xlu0 %v2934
    %v2936 = vpop.xlane.xlu0 %2935
    %v2937 = vadd.f32 %v2321, %v2322
    %2938 = vadd.xlane.f32.xlu0 %v2937
    %v2939 = vpop.xlane.xlu0 %2938
    %v2940 = vadd.f32 %v2323, %v2324
    %2941 = vadd.xlane.f32.xlu0 %v2940
    %v2942 = vpop.xlane.xlu0 %2941
    %v2943 = vadd.f32 %v2325, %v2326
    %2944 = vadd.xlane.f32.xlu0 %v2943
    %v2945 = vpop.xlane.xlu0 %2944
    %v2946 = vadd.f32 %v2327, %v2328
    %2947 = vadd.xlane.f32.xlu0 %v2946
    %v2948 = vpop.xlane.xlu0 %2947
    %v2949 = vadd.f32 %v2329, %v2330
    %2950 = vadd.xlane.f32.xlu0 %v2949
    %v2951 = vpop.xlane.xlu0 %2950
    %v2952 = vadd.f32 %v2331, %v2332
    %2953 = vadd.xlane.f32.xlu0 %v2952
    %v2954 = vpop.xlane.xlu0 %2953
    %v2955 = vadd.f32 %v2333, %v2334
    %2956 = vadd.xlane.f32.xlu0 %v2955
    %v2957 = vpop.xlane.xlu0 %2956
    %v2958 = vadd.f32 %v2335, %v2336
    %2959 = vadd.xlane.f32.xlu0 %v2958
    %v2960 = vpop.xlane.xlu0 %2959
    %v2961 = vadd.f32 %v2337, %v2338
    %2962 = vadd.xlane.f32.xlu0 %v2961
    %v2963 = vpop.xlane.xlu0 %2962
    %v2964 = vadd.f32 %v2339, %v2340
    %2965 = vadd.xlane.f32.xlu0 %v2964
    %v2966 = vpop.xlane.xlu0 %2965
    %v2967 = vadd.f32 %v2341, %v2342
    %2968 = vadd.xlane.f32.xlu0 %v2967
    %v2969 = vpop.xlane.xlu0 %2968
    %v2970 = vadd.f32 %v2343, %v2344
    %2971 = vadd.xlane.f32.xlu0 %v2970
    %v2972 = vpop.xlane.xlu0 %2971
    %v2973 = vadd.f32 %v2345, %v2346
    %2974 = vadd.xlane.f32.xlu0 %v2973
    %v2975 = vpop.xlane.xlu0 %2974
    %v2976 = vadd.f32 %v2347, %v2348
    %2977 = vadd.xlane.f32.xlu0 %v2976
    %v2978 = vpop.xlane.xlu0 %2977
    %v2979 = vadd.f32 %v2349, %v2350
    %2980 = vadd.xlane.f32.xlu0 %v2979
    %v2981 = vpop.xlane.xlu0 %2980
    %v2982 = vadd.f32 %v2351, %v2352
    %2983 = vadd.xlane.f32.xlu0 %v2982
    %v2984 = vpop.xlane.xlu0 %2983
    %v2985 = vadd.f32 %v2353, %v2354
    %2986 = vadd.xlane.f32.xlu0 %v2985
    %v2987 = vpop.xlane.xlu0 %2986
    %v2988 = vadd.f32 %v2355, %v2356
    %2989 = vadd.xlane.f32.xlu0 %v2988
    %v2990 = vpop.xlane.xlu0 %2989
    %v2991 = vadd.f32 %v2357, %v2358
    %2992 = vadd.xlane.f32.xlu0 %v2991
    %v2993 = vpop.xlane.xlu0 %2992
    %v2994 = vadd.f32 %v2359, %v2360
    %2995 = vadd.xlane.f32.xlu0 %v2994
    %v2996 = vpop.xlane.xlu0 %2995
    %v2997 = vadd.f32 %v2361, %v2362
    %2998 = vadd.xlane.f32.xlu0 %v2997
    %v2999 = vpop.xlane.xlu0 %2998
    %v3000 = vadd.f32 %v2363, %v2364
    %3001 = vadd.xlane.f32.xlu0 %v3000
    %v3002 = vpop.xlane.xlu0 %3001
    %v3003 = vadd.f32 %v2365, %v2366
    %3004 = vadd.xlane.f32.xlu0 %v3003
    %v3005 = vpop.xlane.xlu0 %3004
    %v3006 = vadd.f32 %v2367, %v2368
    %3007 = vadd.xlane.f32.xlu0 %v3006
    %v3008 = vpop.xlane.xlu0 %3007
    %v3009 = vadd.f32 %v2369, %v2370
    %3010 = vadd.xlane.f32.xlu0 %v3009
    %v3011 = vpop.xlane.xlu0 %3010
    %v3012 = vadd.f32 %v2371, %v2372
    %3013 = vadd.xlane.f32.xlu0 %v3012
    %v3014 = vpop.xlane.xlu0 %3013
    %v3015 = vadd.f32 %v2373, %v2374
    %3016 = vadd.xlane.f32.xlu0 %v3015
    %v3017 = vpop.xlane.xlu0 %3016
    %v3018 = vadd.f32 %v2375, %v2376
    %3019 = vadd.xlane.f32.xlu0 %v3018
    %v3020 = vpop.xlane.xlu0 %3019
    %v3021 = vadd.f32 %v2377, %v2378
    %3022 = vadd.xlane.f32.xlu0 %v3021
    %v3023 = vpop.xlane.xlu0 %3022
    %v3024 = vadd.f32 %v2379, %v2380
    %3025 = vadd.xlane.f32.xlu0 %v3024
    %v3026 = vpop.xlane.xlu0 %3025
    %v3027 = vadd.f32 %v2381, %v2382
    %3028 = vadd.xlane.f32.xlu0 %v3027
    %v3029 = vpop.xlane.xlu0 %3028
    %v3030 = vadd.f32 %v2383, %v2384
    %3031 = vadd.xlane.f32.xlu0 %v3030
    %v3032 = vpop.xlane.xlu0 %3031
    %v3033 = vadd.f32 %v2385, %v2386
    %3034 = vadd.xlane.f32.xlu0 %v3033
    %v3035 = vpop.xlane.xlu0 %3034
    %v3036 = vadd.f32 %v2387, %v2388
    %3037 = vadd.xlane.f32.xlu0 %v3036
    %v3038 = vpop.xlane.xlu0 %3037
    %v3039 = vadd.f32 %v2389, %v2390
    %3040 = vadd.xlane.f32.xlu0 %v3039
    %v3041 = vpop.xlane.xlu0 %3040
    %v3042 = vadd.f32 %v2391, %v2392
    %3043 = vadd.xlane.f32.xlu0 %v3042
    %v3044 = vpop.xlane.xlu0 %3043
    %v3045 = vadd.f32 %v2393, %v2394
    %3046 = vadd.xlane.f32.xlu0 %v3045
    %v3047 = vpop.xlane.xlu0 %3046
    %v3048 = vadd.f32 %v2395, %v2396
    %3049 = vadd.xlane.f32.xlu0 %v3048
    %v3050 = vpop.xlane.xlu0 %3049
    %v3051 = vadd.f32 %v2397, %v2398
    %3052 = vadd.xlane.f32.xlu0 %v3051
    %v3053 = vpop.xlane.xlu0 %3052
    %v3054 = vadd.f32 %v2399, %v2400
    %3055 = vadd.xlane.f32.xlu0 %v3054
    %v3056 = vpop.xlane.xlu0 %3055
    %v3057 = vadd.f32 %v2401, %v2402
    %3058 = vadd.xlane.f32.xlu0 %v3057
    %v3059 = vpop.xlane.xlu0 %3058
    %v3060 = vadd.f32 %v2403, %v2404
    %3061 = vadd.xlane.f32.xlu0 %v3060
    %v3062 = vpop.xlane.xlu0 %3061
    %v3063 = vadd.f32 %v2405, %v2406
    %3064 = vadd.xlane.f32.xlu0 %v3063
    %v3065 = vpop.xlane.xlu0 %3064
    %v3066 = vadd.f32 %v2407, %v2408
    %3067 = vadd.xlane.f32.xlu0 %v3066
    %v3068 = vpop.xlane.xlu0 %3067
    %v3069 = vadd.f32 %v2409, %v2410
    %3070 = vadd.xlane.f32.xlu0 %v3069
    %v3071 = vpop.xlane.xlu0 %3070
    %v3072 = vadd.f32 %v2411, %v2412
    %3073 = vadd.xlane.f32.xlu0 %v3072
    %v3074 = vpop.xlane.xlu0 %3073
    %v3075 = vadd.f32 %v2413, %v2414
    %3076 = vadd.xlane.f32.xlu0 %v3075
    %v3077 = vpop.xlane.xlu0 %3076
    %v3078 = vadd.f32 %v2415, %v2416
    %3079 = vadd.xlane.f32.xlu0 %v3078
    %v3080 = vpop.xlane.xlu0 %3079
    %v3081 = vadd.f32 %v2417, %v2418
    %3082 = vadd.xlane.f32.xlu0 %v3081
    %v3083 = vpop.xlane.xlu0 %3082
    %v3084 = vadd.f32 %v2419, %v2420
    %3085 = vadd.xlane.f32.xlu0 %v3084
    %v3086 = vpop.xlane.xlu0 %3085
    %v3087 = vadd.f32 %v2421, %v2422
    %3088 = vadd.xlane.f32.xlu0 %v3087
    %v3089 = vpop.xlane.xlu0 %3088
    %v3090 = vadd.f32 %v2423, %v2424
    %3091 = vadd.xlane.f32.xlu0 %v3090
    %v3092 = vpop.xlane.xlu0 %3091
    %v3093 = vadd.f32 %v2425, %v2426
    %3094 = vadd.xlane.f32.xlu0 %v3093
    %v3095 = vpop.xlane.xlu0 %3094
    %v3096 = vadd.f32 %v2427, %v2428
    %3097 = vadd.xlane.f32.xlu0 %v3096
    %v3098 = vpop.xlane.xlu0 %3097
    %v3099 = vadd.f32 %v2429, %v2430
    %3100 = vadd.xlane.f32.xlu0 %v3099
    %v3101 = vpop.xlane.xlu0 %3100
    %v3102 = vadd.f32 %v2431, %v2432
    %3103 = vadd.xlane.f32.xlu0 %v3102
    %v3104 = vpop.xlane.xlu0 %3103
    %v3105 = vadd.f32 %v2433, %v2434
    %3106 = vadd.xlane.f32.xlu0 %v3105
    %v3107 = vpop.xlane.xlu0 %3106
    %v3108 = vadd.f32 %v2435, %v2436
    %3109 = vadd.xlane.f32.xlu0 %v3108
    %v3110 = vpop.xlane.xlu0 %3109
    %v3111 = vadd.f32 %v2437, %v2438
    %3112 = vadd.xlane.f32.xlu0 %v3111
    %v3113 = vpop.xlane.xlu0 %3112
    %v3114 = vadd.f32 %v2439, %v2440
    %3115 = vadd.xlane.f32.xlu0 %v3114
    %v3116 = vpop.xlane.xlu0 %3115
    %v3117 = vadd.f32 %v2441, %v2442
    %3118 = vadd.xlane.f32.xlu0 %v3117
    %v3119 = vpop.xlane.xlu0 %3118
    %v3120 = vadd.f32 %v2443, %v2444
    %3121 = vadd.xlane.f32.xlu0 %v3120
    %v3122 = vpop.xlane.xlu0 %3121
    %v3123 = vadd.f32 %v2445, %v2446
    %3124 = vadd.xlane.f32.xlu0 %v3123
    %v3125 = vpop.xlane.xlu0 %3124
    %v3126 = vadd.f32 %v2447, %v2448
    %3127 = vadd.xlane.f32.xlu0 %v3126
    %v3128 = vpop.xlane.xlu0 %3127
    %v3129 = vadd.f32 %v2449, %v2450
    %3130 = vadd.xlane.f32.xlu0 %v3129
    %v3131 = vpop.xlane.xlu0 %3130
    %v3132 = vadd.f32 %v2451, %v2452
    %3133 = vadd.xlane.f32.xlu0 %v3132
    %v3134 = vpop.xlane.xlu0 %3133
    %v3135 = vadd.f32 %v2453, %v2454
    %3136 = vadd.xlane.f32.xlu0 %v3135
    %v3137 = vpop.xlane.xlu0 %3136
    %v3138 = vadd.f32 %v2455, %v2456
    %3139 = vadd.xlane.f32.xlu0 %v3138
    %v3140 = vpop.xlane.xlu0 %3139
    %v3141 = vadd.f32 %v2457, %v2458
    %3142 = vadd.xlane.f32.xlu0 %v3141
    %v3143 = vpop.xlane.xlu0 %3142
    %v3144 = vadd.f32 %v2459, %v2460
    %3145 = vadd.xlane.f32.xlu0 %v3144
    %v3146 = vpop.xlane.xlu0 %3145
    %v3147 = vadd.f32 %v2461, %v2462
    %3148 = vadd.xlane.f32.xlu0 %v3147
    %v3149 = vpop.xlane.xlu0 %3148
    %v3150 = vadd.f32 %v2463, %v2464
    %3151 = vadd.xlane.f32.xlu0 %v3150
    %v3152 = vpop.xlane.xlu0 %3151
    %v3153 = vadd.f32 %v2465, %v2466
    %3154 = vadd.xlane.f32.xlu0 %v3153
    %v3155 = vpop.xlane.xlu0 %3154
    %v3156 = vadd.f32 %v2467, %v2468
    %3157 = vadd.xlane.f32.xlu0 %v3156
    %v3158 = vpop.xlane.xlu0 %3157
    %v3159 = vadd.f32 %v2469, %v2470
    %3160 = vadd.xlane.f32.xlu0 %v3159
    %v3161 = vpop.xlane.xlu0 %3160
    %v3162 = vadd.f32 %v2471, %v2472
    %3163 = vadd.xlane.f32.xlu0 %v3162
    %v3164 = vpop.xlane.xlu0 %3163
    %v3165 = vadd.f32 %v2473, %v2474
    %3166 = vadd.xlane.f32.xlu0 %v3165
    %v3167 = vpop.xlane.xlu0 %3166
    %v3168 = vadd.f32 %v2475, %v2476
    %3169 = vadd.xlane.f32.xlu0 %v3168
    %v3170 = vpop.xlane.xlu0 %3169
    %v3171 = vadd.f32 %v2477, %v2478
    %3172 = vadd.xlane.f32.xlu0 %v3171
    %v3173 = vpop.xlane.xlu0 %3172
    %v3174 = vadd.f32 %v2479, %v2480
    %3175 = vadd.xlane.f32.xlu0 %v3174
    %v3176 = vpop.xlane.xlu0 %3175
    %v3177 = vadd.f32 %v2481, %v2482
    %3178 = vadd.xlane.f32.xlu0 %v3177
    %v3179 = vpop.xlane.xlu0 %3178
    %v3180 = vadd.f32 %v2483, %v2484
    %3181 = vadd.xlane.f32.xlu0 %v3180
    %v3182 = vpop.xlane.xlu0 %3181
    %v3183 = vadd.f32 %v2485, %v2486
    %3184 = vadd.xlane.f32.xlu0 %v3183
    %v3185 = vpop.xlane.xlu0 %3184
    %v3186 = vadd.f32 %v2487, %v2488
    %3187 = vadd.xlane.f32.xlu0 %v3186
    %v3188 = vpop.xlane.xlu0 %3187
    %v3189 = vadd.f32 %v2489, %v2490
    %3190 = vadd.xlane.f32.xlu0 %v3189
    %v3191 = vpop.xlane.xlu0 %3190
    %v3192 = vadd.f32 %v2491, %v2492
    %3193 = vadd.xlane.f32.xlu0 %v3192
    %v3194 = vpop.xlane.xlu0 %3193
    %v3195 = vadd.f32 %v2493, %v2494
    %3196 = vadd.xlane.f32.xlu0 %v3195
    %v3197 = vpop.xlane.xlu0 %3196
    %v3198 = vadd.f32 %v2495, %v2496
    %3199 = vadd.xlane.f32.xlu0 %v3198
    %v3200 = vpop.xlane.xlu0 %3199
    %v3201 = vadd.f32 %v2497, %v2498
    %3202 = vadd.xlane.f32.xlu0 %v3201
    %v3203 = vpop.xlane.xlu0 %3202
    %v3204 = vadd.f32 %v2499, %v2500
    %3205 = vadd.xlane.f32.xlu0 %v3204
    %v3206 = vpop.xlane.xlu0 %3205
    %v3207 = vadd.f32 %v2501, %v2502
    %3208 = vadd.xlane.f32.xlu0 %v3207
    %v3209 = vpop.xlane.xlu0 %3208
    %v3210 = vadd.f32 %v2503, %v2504
    %3211 = vadd.xlane.f32.xlu0 %v3210
    %v3212 = vpop.xlane.xlu0 %3211
    %v3213 = vadd.f32 %v2505, %v2506
    %3214 = vadd.xlane.f32.xlu0 %v3213
    %v3215 = vpop.xlane.xlu0 %3214
    %v3216 = vadd.f32 %v2507, %v2508
    %3217 = vadd.xlane.f32.xlu0 %v3216
    %v3218 = vpop.xlane.xlu0 %3217
    %v3219 = vadd.f32 %v2509, %v2510
    %3220 = vadd.xlane.f32.xlu0 %v3219
    %v3221 = vpop.xlane.xlu0 %3220
    %v3222 = vadd.f32 %v2511, %v2512
    %3223 = vadd.xlane.f32.xlu0 %v3222
    %v3224 = vpop.xlane.xlu0 %3223
    %v3225 = vadd.f32 %v2513, %v2514
    %3226 = vadd.xlane.f32.xlu0 %v3225
    %v3227 = vpop.xlane.xlu0 %3226
    %v3228 = vadd.f32 %v2515, %v2516
    %3229 = vadd.xlane.f32.xlu0 %v3228
    %v3230 = vpop.xlane.xlu0 %3229
    %v3231 = vadd.f32 %v2517, %v2518
    %3232 = vadd.xlane.f32.xlu0 %v3231
    %v3233 = vpop.xlane.xlu0 %3232
    %v3234 = vadd.f32 %v2519, %v2520
    %3235 = vadd.xlane.f32.xlu0 %v3234
    %v3236 = vpop.xlane.xlu0 %3235
    %v3237 = vadd.f32 %v2521, %v2522
    %3238 = vadd.xlane.f32.xlu0 %v3237
    %v3239 = vpop.xlane.xlu0 %3238
    %v3240 = vadd.f32 %v2523, %v2524
    %3241 = vadd.xlane.f32.xlu0 %v3240
    %v3242 = vpop.xlane.xlu0 %3241
    %v3243 = vadd.f32 %v2525, %v2526
    %3244 = vadd.xlane.f32.xlu0 %v3243
    %v3245 = vpop.xlane.xlu0 %3244
    %v3246 = vadd.f32 %v2527, %v2528
    %3247 = vadd.xlane.f32.xlu0 %v3246
    %v3248 = vpop.xlane.xlu0 %3247
    %v3249 = vadd.f32 %v2529, %v2530
    %3250 = vadd.xlane.f32.xlu0 %v3249
    %v3251 = vpop.xlane.xlu0 %3250
    %v3252 = vadd.f32 %v2531, %v2532
    %3253 = vadd.xlane.f32.xlu0 %v3252
    %v3254 = vpop.xlane.xlu0 %3253
    %v3255 = vadd.f32 %v2533, %v2534
    %3256 = vadd.xlane.f32.xlu0 %v3255
    %v3257 = vpop.xlane.xlu0 %3256
    %v3258 = vadd.f32 %v2535, %v2536
    %3259 = vadd.xlane.f32.xlu0 %v3258
    %v3260 = vpop.xlane.xlu0 %3259
    %v3261 = vadd.f32 %v2537, %v2538
    %3262 = vadd.xlane.f32.xlu0 %v3261
    %v3263 = vpop.xlane.xlu0 %3262
    %v3264 = vadd.f32 %v2539, %v2540
    %3265 = vadd.xlane.f32.xlu0 %v3264
    %v3266 = vpop.xlane.xlu0 %3265
    %v3267 = vadd.f32 %v2541, %v2542
    %3268 = vadd.xlane.f32.xlu0 %v3267
    %v3269 = vpop.xlane.xlu0 %3268
    %v3270 = vadd.f32 %v2543, %v2544
    %3271 = vadd.xlane.f32.xlu0 %v3270
    %v3272 = vpop.xlane.xlu0 %3271
    %v3273 = vadd.f32 %v2545, %v2546
    %3274 = vadd.xlane.f32.xlu0 %v3273
    %v3275 = vpop.xlane.xlu0 %3274
    %v3276 = vadd.f32 %v2547, %v2548
    %3277 = vadd.xlane.f32.xlu0 %v3276
    %v3278 = vpop.xlane.xlu0 %3277
    %v3279 = vadd.f32 %v2549, %v2550
    %3280 = vadd.xlane.f32.xlu0 %v3279
    %v3281 = vpop.xlane.xlu0 %3280
    %v3282 = vadd.f32 %v2551, %v2552
    %3283 = vadd.xlane.f32.xlu0 %v3282
    %v3284 = vpop.xlane.xlu0 %3283
    %v3285 = vadd.f32 %v2553, %v2554
    %3286 = vadd.xlane.f32.xlu0 %v3285
    %v3287 = vpop.xlane.xlu0 %3286
    %v3288 = vadd.f32 %v2555, %v2556
    %3289 = vadd.xlane.f32.xlu0 %v3288
    %v3290 = vpop.xlane.xlu0 %3289
    %v3291 = vadd.f32 %v2557, %v2558
    %3292 = vadd.xlane.f32.xlu0 %v3291
    %v3293 = vpop.xlane.xlu0 %3292
    %v3294 = vadd.f32 %v2559, %v2560
    %3295 = vadd.xlane.f32.xlu0 %v3294
    %v3296 = vpop.xlane.xlu0 %3295
    %v3297 = vadd.f32 %v2561, %v2562
    %3298 = vadd.xlane.f32.xlu0 %v3297
    %v3299 = vpop.xlane.xlu0 %3298
    %v3300 = vadd.f32 %v2563, %v2564
    %3301 = vadd.xlane.f32.xlu0 %v3300
    %v3302 = vpop.xlane.xlu0 %3301
    %v3303 = vadd.f32 %v2565, %v2566
    %3304 = vadd.xlane.f32.xlu0 %v3303
    %v3305 = vpop.xlane.xlu0 %3304
    %v3306 = vadd.f32 %v2567, %v2568
    %3307 = vadd.xlane.f32.xlu0 %v3306
    %v3308 = vpop.xlane.xlu0 %3307
    %v3309 = vadd.f32 %v2569, %v2570
    %3310 = vadd.xlane.f32.xlu0 %v3309
    %v3311 = vpop.xlane.xlu0 %3310
    %v3312 = vadd.f32 %v2571, %v2572
    %3313 = vadd.xlane.f32.xlu0 %v3312
    %v3314 = vpop.xlane.xlu0 %3313
    %v3315 = vadd.f32 %v2573, %v2574
    %3316 = vadd.xlane.f32.xlu0 %v3315
    %v3317 = vpop.xlane.xlu0 %3316
    %v3318 = vadd.f32 %v2575, %v2576
    %3319 = vadd.xlane.f32.xlu0 %v3318
    %v3320 = vpop.xlane.xlu0 %3319
    %v3321 = vadd.f32 %v2577, %v2578
    %3322 = vadd.xlane.f32.xlu0 %v3321
    %v3323 = vpop.xlane.xlu0 %3322
    %v3324 = vadd.f32 %v2579, %v2580
    %3325 = vadd.xlane.f32.xlu0 %v3324
    %v3326 = vpop.xlane.xlu0 %3325
    %v3327 = vadd.f32 %v2581, %v2582
    %3328 = vadd.xlane.f32.xlu0 %v3327
    %v3329 = vpop.xlane.xlu0 %3328
    %v3330 = vadd.f32 %v2583, %v2584
    %3331 = vadd.xlane.f32.xlu0 %v3330
    %v3332 = vpop.xlane.xlu0 %3331
    %v3333 = vadd.f32 %v2585, %v2586
    %3334 = vadd.xlane.f32.xlu0 %v3333
    %v3335 = vpop.xlane.xlu0 %3334
    %v3336 = vadd.f32 %v2587, %v2588
    %3337 = vadd.xlane.f32.xlu0 %v3336
    %v3338 = vpop.xlane.xlu0 %3337
    %v3339 = vadd.f32 %v2589, %v2590
    %3340 = vadd.xlane.f32.xlu0 %v3339
    %v3341 = vpop.xlane.xlu0 %3340
    %v3342 = vadd.f32 %v2591, %v2592
    %3343 = vadd.xlane.f32.xlu0 %v3342
    %v3344 = vpop.xlane.xlu0 %3343
    %v3345 = vadd.f32 %v2593, %v2594
    %3346 = vadd.xlane.f32.xlu0 %v3345
    %v3347 = vpop.xlane.xlu0 %3346
    %v3348 = vadd.f32 %v2595, %v2596
    %3349 = vadd.xlane.f32.xlu0 %v3348
    %v3350 = vpop.xlane.xlu0 %3349
    %v3351 = vadd.f32 %v2597, %v2598
    %3352 = vadd.xlane.f32.xlu0 %v3351
    %v3353 = vpop.xlane.xlu0 %3352
    %v3354 = vadd.f32 %v2599, %v2600
    %3355 = vadd.xlane.f32.xlu0 %v3354
    %v3356 = vpop.xlane.xlu0 %3355
    %v3357 = vadd.f32 %v2601, %v2602
    %3358 = vadd.xlane.f32.xlu0 %v3357
    %v3359 = vpop.xlane.xlu0 %3358
    %v3360 = vadd.f32 %v2603, %v2604
    %3361 = vadd.xlane.f32.xlu0 %v3360
    %v3362 = vpop.xlane.xlu0 %3361
    %v3363 = vadd.f32 %v2605, %v2606
    %3364 = vadd.xlane.f32.xlu0 %v3363
    %v3365 = vpop.xlane.xlu0 %3364
    %v3366 = vadd.f32 %v2607, %v2608
    %3367 = vadd.xlane.f32.xlu0 %v3366
    %v3368 = vpop.xlane.xlu0 %3367
    %v3369 = vadd.f32 %v2609, %v2610
    %3370 = vadd.xlane.f32.xlu0 %v3369
    %v3371 = vpop.xlane.xlu0 %3370
    %v3372 = vadd.f32 %v2611, %v2612
    %3373 = vadd.xlane.f32.xlu0 %v3372
    %v3374 = vpop.xlane.xlu0 %3373
    %v3375 = vadd.f32 %v2613, %v2614
    %3376 = vadd.xlane.f32.xlu0 %v3375
    %v3377 = vpop.xlane.xlu0 %3376
    %v3378 = vadd.f32 %v2615, %v2616
    %3379 = vadd.xlane.f32.xlu0 %v3378
    %v3380 = vpop.xlane.xlu0 %3379
    %v3381 = vadd.f32 %v2617, %v2618
    %3382 = vadd.xlane.f32.xlu0 %v3381
    %v3383 = vpop.xlane.xlu0 %3382
    %v3384 = vadd.f32 %v2619, %v2620
    %3385 = vadd.xlane.f32.xlu0 %v3384
    %v3386 = vpop.xlane.xlu0 %3385
    %v3387 = vadd.f32 %v2621, %v2622
    %3388 = vadd.xlane.f32.xlu0 %v3387
    %v3389 = vpop.xlane.xlu0 %3388
    %v3390 = vadd.f32 %v2623, %v2624
    %3391 = vadd.xlane.f32.xlu0 %v3390
    %v3392 = vpop.xlane.xlu0 %3391
    %v3393 = vmul.f32 %v2627, 0.003921569
    %v3394 = vmul.f32 %v2630, 0.003921569
    %v3395 = vmul.f32 %v2633, 0.003921569
    %v3396 = vmul.f32 %v2636, 0.003921569
    %v3397 = vmul.f32 %v2639, 0.003921569
    %v3398 = vmul.f32 %v2642, 0.003921569
    %v3399 = vmul.f32 %v2645, 0.003921569
    %v3400 = vmul.f32 %v2648, 0.003921569
    %v3401 = vmul.f32 %v2651, 0.003921569
    %v3402 = vmul.f32 %v2654, 0.003921569
    %v3403 = vmul.f32 %v2657, 0.003921569
    %v3404 = vmul.f32 %v2660, 0.003921569
    %v3405 = vmul.f32 %v2663, 0.003921569
    %v3406 = vmul.f32 %v2666, 0.003921569
    %v3407 = vmul.f32 %v2669, 0.003921569
    %v3408 = vmul.f32 %v2672, 0.003921569
    %v3409 = vmul.f32 %v2675, 0.003921569
    %v3410 = vmul.f32 %v2678, 0.003921569
    %v3411 = vmul.f32 %v2681, 0.003921569
    %v3412 = vmul.f32 %v2684, 0.003921569
    %v3413 = vmul.f32 %v2687, 0.003921569
    %v3414 = vmul.f32 %v2690, 0.003921569
    %v3415 = vmul.f32 %v2693, 0.003921569
    %v3416 = vmul.f32 %v2696, 0.003921569
    %v3417 = vmul.f32 %v2699, 0.003921569
    %v3418 = vmul.f32 %v2702, 0.003921569
    %v3419 = vmul.f32 %v2705, 0.003921569
    %v3420 = vmul.f32 %v2708, 0.003921569
    %v3421 = vmul.f32 %v2711, 0.003921569
    %v3422 = vmul.f32 %v2714, 0.003921569
    %v3423 = vmul.f32 %v2717, 0.003921569
    %v3424 = vmul.f32 %v2720, 0.003921569
    %v3425 = vmul.f32 %v2723, 0.003921569
    %v3426 = vmul.f32 %v2726, 0.003921569
    %v3427 = vmul.f32 %v2729, 0.003921569
    %v3428 = vmul.f32 %v2732, 0.003921569
    %v3429 = vmul.f32 %v2735, 0.003921569
    %v3430 = vmul.f32 %v2738, 0.003921569
    %v3431 = vmul.f32 %v2741, 0.003921569
    %v3432 = vmul.f32 %v2744, 0.003921569
    %v3433 = vmul.f32 %v2747, 0.003921569
    %v3434 = vmul.f32 %v2750, 0.003921569
    %v3435 = vmul.f32 %v2753, 0.003921569
    %v3436 = vmul.f32 %v2756, 0.003921569
    %v3437 = vmul.f32 %v2759, 0.003921569
    %v3438 = vmul.f32 %v2762, 0.003921569
    %v3439 = vmul.f32 %v2765, 0.003921569
    %v3440 = vmul.f32 %v2768, 0.003921569
    %v3441 = vmul.f32 %v2771, 0.003921569
    %v3442 = vmul.f32 %v2774, 0.003921569
    %v3443 = vmul.f32 %v2777, 0.003921569
    %v3444 = vmul.f32 %v2780, 0.003921569
    %v3445 = vmul.f32 %v2783, 0.003921569
    %v3446 = vmul.f32 %v2786, 0.003921569
    %v3447 = vmul.f32 %v2789, 0.003921569
    %v3448 = vmul.f32 %v2792, 0.003921569
    %v3449 = vmul.f32 %v2795, 0.003921569
    %v3450 = vmul.f32 %v2798, 0.003921569
    %v3451 = vmul.f32 %v2801, 0.003921569
    %v3452 = vmul.f32 %v2804, 0.003921569
    %v3453 = vmul.f32 %v2807, 0.003921569
    %v3454 = vmul.f32 %v2810, 0.003921569
    %v3455 = vmul.f32 %v2813, 0.003921569
    %v3456 = vmul.f32 %v2816, 0.003921569
    %v3457 = vmul.f32 %v2819, 0.003921569
    %v3458 = vmul.f32 %v2822, 0.003921569
    %v3459 = vmul.f32 %v2825, 0.003921569
    %v3460 = vmul.f32 %v2828, 0.003921569
    %v3461 = vmul.f32 %v2831, 0.003921569
    %v3462 = vmul.f32 %v2834, 0.003921569
    %v3463 = vmul.f32 %v2837, 0.003921569
    %v3464 = vmul.f32 %v2840, 0.003921569
    %v3465 = vmul.f32 %v2843, 0.003921569
    %v3466 = vmul.f32 %v2846, 0.003921569
    %v3467 = vmul.f32 %v2849, 0.003921569
    %v3468 = vmul.f32 %v2852, 0.003921569
    %v3469 = vmul.f32 %v2855, 0.003921569
    %v3470 = vmul.f32 %v2858, 0.003921569
    %v3471 = vmul.f32 %v2861, 0.003921569
    %v3472 = vmul.f32 %v2864, 0.003921569
    %v3473 = vmul.f32 %v2867, 0.003921569
    %v3474 = vmul.f32 %v2870, 0.003921569
    %v3475 = vmul.f32 %v2873, 0.003921569
    %v3476 = vmul.f32 %v2876, 0.003921569
    %v3477 = vmul.f32 %v2879, 0.003921569
    %v3478 = vmul.f32 %v2882, 0.003921569
    %v3479 = vmul.f32 %v2885, 0.003921569
    %v3480 = vmul.f32 %v2888, 0.003921569
    %v3481 = vmul.f32 %v2891, 0.003921569
    %v3482 = vmul.f32 %v2894, 0.003921569
    %v3483 = vmul.f32 %v2897, 0.003921569
    %v3484 = vmul.f32 %v2900, 0.003921569
    %v3485 = vmul.f32 %v2903, 0.003921569
    %v3486 = vmul.f32 %v2906, 0.003921569
    %v3487 = vmul.f32 %v2909, 0.003921569
    %v3488 = vmul.f32 %v2912, 0.003921569
    %v3489 = vmul.f32 %v2915, 0.003921569
    %v3490 = vmul.f32 %v2918, 0.003921569
    %v3491 = vmul.f32 %v2921, 0.003921569
    %v3492 = vmul.f32 %v2924, 0.003921569
    %v3493 = vmul.f32 %v2927, 0.003921569
    %v3494 = vmul.f32 %v2930, 0.003921569
    %v3495 = vmul.f32 %v2933, 0.003921569
    %v3496 = vmul.f32 %v2936, 0.003921569
    %v3497 = vmul.f32 %v2939, 0.003921569
    %v3498 = vmul.f32 %v2942, 0.003921569
    %v3499 = vmul.f32 %v2945, 0.003921569
    %v3500 = vmul.f32 %v2948, 0.003921569
    %v3501 = vmul.f32 %v2951, 0.003921569
    %v3502 = vmul.f32 %v2954, 0.003921569
    %v3503 = vmul.f32 %v2957, 0.003921569
    %v3504 = vmul.f32 %v2960, 0.003921569
    %v3505 = vmul.f32 %v2963, 0.003921569
    %v3506 = vmul.f32 %v2966, 0.003921569
    %v3507 = vmul.f32 %v2969, 0.003921569
    %v3508 = vmul.f32 %v2972, 0.003921569
    %v3509 = vmul.f32 %v2975, 0.003921569
    %v3510 = vmul.f32 %v2978, 0.003921569
    %v3511 = vmul.f32 %v2981, 0.003921569
    %v3512 = vmul.f32 %v2984, 0.003921569
    %v3513 = vmul.f32 %v2987, 0.003921569
    %v3514 = vmul.f32 %v2990, 0.003921569
    %v3515 = vmul.f32 %v2993, 0.003921569
    %v3516 = vmul.f32 %v2996, 0.003921569
    %v3517 = vmul.f32 %v2999, 0.003921569
    %v3518 = vmul.f32 %v3002, 0.003921569
    %v3519 = vmul.f32 %v3005, 0.003921569
    %v3520 = vmul.f32 %v3008, 0.003921569
    %v3521 = vmul.f32 %v3011, 0.003921569
    %v3522 = vmul.f32 %v3014, 0.003921569
    %v3523 = vmul.f32 %v3017, 0.003921569
    %v3524 = vmul.f32 %v3020, 0.003921569
    %v3525 = vmul.f32 %v3023, 0.003921569
    %v3526 = vmul.f32 %v3026, 0.003921569
    %v3527 = vmul.f32 %v3029, 0.003921569
    %v3528 = vmul.f32 %v3032, 0.003921569
    %v3529 = vmul.f32 %v3035, 0.003921569
    %v3530 = vmul.f32 %v3038, 0.003921569
    %v3531 = vmul.f32 %v3041, 0.003921569
    %v3532 = vmul.f32 %v3044, 0.003921569
    %v3533 = vmul.f32 %v3047, 0.003921569
    %v3534 = vmul.f32 %v3050, 0.003921569
    %v3535 = vmul.f32 %v3053, 0.003921569
    %v3536 = vmul.f32 %v3056, 0.003921569
    %v3537 = vmul.f32 %v3059, 0.003921569
    %v3538 = vmul.f32 %v3062, 0.003921569
    %v3539 = vmul.f32 %v3065, 0.003921569
    %v3540 = vmul.f32 %v3068, 0.003921569
    %v3541 = vmul.f32 %v3071, 0.003921569
    %v3542 = vmul.f32 %v3074, 0.003921569
    %v3543 = vmul.f32 %v3077, 0.003921569
    %v3544 = vmul.f32 %v3080, 0.003921569
    %v3545 = vmul.f32 %v3083, 0.003921569
    %v3546 = vmul.f32 %v3086, 0.003921569
    %v3547 = vmul.f32 %v3089, 0.003921569
    %v3548 = vmul.f32 %v3092, 0.003921569
    %v3549 = vmul.f32 %v3095, 0.003921569
    %v3550 = vmul.f32 %v3098, 0.003921569
    %v3551 = vmul.f32 %v3101, 0.003921569
    %v3552 = vmul.f32 %v3104, 0.003921569
    %v3553 = vmul.f32 %v3107, 0.003921569
    %v3554 = vmul.f32 %v3110, 0.003921569
    %v3555 = vmul.f32 %v3113, 0.003921569
    %v3556 = vmul.f32 %v3116, 0.003921569
    %v3557 = vmul.f32 %v3119, 0.003921569
    %v3558 = vmul.f32 %v3122, 0.003921569
    %v3559 = vmul.f32 %v3125, 0.003921569
    %v3560 = vmul.f32 %v3128, 0.003921569
    %v3561 = vmul.f32 %v3131, 0.003921569
    %v3562 = vmul.f32 %v3134, 0.003921569
    %v3563 = vmul.f32 %v3137, 0.003921569
    %v3564 = vmul.f32 %v3140, 0.003921569
    %v3565 = vmul.f32 %v3143, 0.003921569
    %v3566 = vmul.f32 %v3146, 0.003921569
    %v3567 = vmul.f32 %v3149, 0.003921569
    %v3568 = vmul.f32 %v3152, 0.003921569
    %v3569 = vmul.f32 %v3155, 0.003921569
    %v3570 = vmul.f32 %v3158, 0.003921569
    %v3571 = vmul.f32 %v3161, 0.003921569
    %v3572 = vmul.f32 %v3164, 0.003921569
    %v3573 = vmul.f32 %v3167, 0.003921569
    %v3574 = vmul.f32 %v3170, 0.003921569
    %v3575 = vmul.f32 %v3173, 0.003921569
    %v3576 = vmul.f32 %v3176, 0.003921569
    %v3577 = vmul.f32 %v3179, 0.003921569
    %v3578 = vmul.f32 %v3182, 0.003921569
    %v3579 = vmul.f32 %v3185, 0.003921569
    %v3580 = vmul.f32 %v3188, 0.003921569
    %v3581 = vmul.f32 %v3191, 0.003921569
    %v3582 = vmul.f32 %v3194, 0.003921569
    %v3583 = vmul.f32 %v3197, 0.003921569
    %v3584 = vmul.f32 %v3200, 0.003921569
    %v3585 = vmul.f32 %v3203, 0.003921569
    %v3586 = vmul.f32 %v3206, 0.003921569
    %v3587 = vmul.f32 %v3209, 0.003921569
    %v3588 = vmul.f32 %v3212, 0.003921569
    %v3589 = vmul.f32 %v3215, 0.003921569
    %v3590 = vmul.f32 %v3218, 0.003921569
    %v3591 = vmul.f32 %v3221, 0.003921569
    %v3592 = vmul.f32 %v3224, 0.003921569
    %v3593 = vmul.f32 %v3227, 0.003921569
    %v3594 = vmul.f32 %v3230, 0.003921569
    %v3595 = vmul.f32 %v3233, 0.003921569
    %v3596 = vmul.f32 %v3236, 0.003921569
    %v3597 = vmul.f32 %v3239, 0.003921569
    %v3598 = vmul.f32 %v3242, 0.003921569
    %v3599 = vmul.f32 %v3245, 0.003921569
    %v3600 = vmul.f32 %v3248, 0.003921569
    %v3601 = vmul.f32 %v3251, 0.003921569
    %v3602 = vmul.f32 %v3254, 0.003921569
    %v3603 = vmul.f32 %v3257, 0.003921569
    %v3604 = vmul.f32 %v3260, 0.003921569
    %v3605 = vmul.f32 %v3263, 0.003921569
    %v3606 = vmul.f32 %v3266, 0.003921569
    %v3607 = vmul.f32 %v3269, 0.003921569
    %v3608 = vmul.f32 %v3272, 0.003921569
    %v3609 = vmul.f32 %v3275, 0.003921569
    %v3610 = vmul.f32 %v3278, 0.003921569
    %v3611 = vmul.f32 %v3281, 0.003921569
    %v3612 = vmul.f32 %v3284, 0.003921569
    %v3613 = vmul.f32 %v3287, 0.003921569
    %v3614 = vmul.f32 %v3290, 0.003921569
    %v3615 = vmul.f32 %v3293, 0.003921569
    %v3616 = vmul.f32 %v3296, 0.003921569
    %v3617 = vmul.f32 %v3299, 0.003921569
    %v3618 = vmul.f32 %v3302, 0.003921569
    %v3619 = vmul.f32 %v3305, 0.003921569
    %v3620 = vmul.f32 %v3308, 0.003921569
    %v3621 = vmul.f32 %v3311, 0.003921569
    %v3622 = vmul.f32 %v3314, 0.003921569
    %v3623 = vmul.f32 %v3317, 0.003921569
    %v3624 = vmul.f32 %v3320, 0.003921569
    %v3625 = vmul.f32 %v3323, 0.003921569
    %v3626 = vmul.f32 %v3326, 0.003921569
    %v3627 = vmul.f32 %v3329, 0.003921569
    %v3628 = vmul.f32 %v3332, 0.003921569
    %v3629 = vmul.f32 %v3335, 0.003921569
    %v3630 = vmul.f32 %v3338, 0.003921569
    %v3631 = vmul.f32 %v3341, 0.003921569
    %v3632 = vmul.f32 %v3344, 0.003921569
    %v3633 = vmul.f32 %v3347, 0.003921569
    %v3634 = vmul.f32 %v3350, 0.003921569
    %v3635 = vmul.f32 %v3353, 0.003921569
    %v3636 = vmul.f32 %v3356, 0.003921569
    %v3637 = vmul.f32 %v3359, 0.003921569
    %v3638 = vmul.f32 %v3362, 0.003921569
    %v3639 = vmul.f32 %v3365, 0.003921569
    %v3640 = vmul.f32 %v3368, 0.003921569
    %v3641 = vmul.f32 %v3371, 0.003921569
    %v3642 = vmul.f32 %v3374, 0.003921569
    %v3643 = vmul.f32 %v3377, 0.003921569
    %v3644 = vmul.f32 %v3380, 0.003921569
    %v3645 = vmul.f32 %v3383, 0.003921569
    %v3646 = vmul.f32 %v3386, 0.003921569
    %v3647 = vmul.f32 %v3389, 0.003921569
    %v3648 = vmul.f32 %v3392, 0.003921569
    %v3649 = vrsqrt.pop %v3393
    %v3650 = vmul.f32 %v3649, %v3393
    %v3651 = vmul.f32 %v3650, %v3649
    %v3652 = vmul.f32 0.5, %v3651
    %v3653 = vsub.f32 1.5, %v3652
    %v3654 = vmul.f32 %v3649, %v3653
    %vm3655 = vweird.f32 %v3393
    %vm3656 = vweird.f32 %v3649
    %vm3657 = vmor %vm3655, %vm3656
    %v3658 = vsel %vm3657, %v3649, %v3654
    %v3659 = vrsqrt.pop %v3394
    %v3660 = vmul.f32 %v3659, %v3394
    %v3661 = vmul.f32 %v3660, %v3659
    %v3662 = vmul.f32 0.5, %v3661
    %v3663 = vsub.f32 1.5, %v3662
    %v3664 = vmul.f32 %v3659, %v3663
    %vm3665 = vweird.f32 %v3394
    %vm3666 = vweird.f32 %v3659
    %vm3667 = vmor %vm3665, %vm3666
    %v3668 = vsel %vm3667, %v3659, %v3664
    %v3669 = vrsqrt.pop %v3395
    %v3670 = vmul.f32 %v3669, %v3395
    %v3671 = vmul.f32 %v3670, %v3669
    %v3672 = vmul.f32 0.5, %v3671
    %v3673 = vsub.f32 1.5, %v3672
    %v3674 = vmul.f32 %v3669, %v3673
    %vm3675 = vweird.f32 %v3395
    %vm3676 = vweird.f32 %v3669
    %vm3677 = vmor %vm3675, %vm3676
    %v3678 = vsel %vm3677, %v3669, %v3674
    %v3679 = vrsqrt.pop %v3396
    %v3680 = vmul.f32 %v3679, %v3396
    %v3681 = vmul.f32 %v3680, %v3679
    %v3682 = vmul.f32 0.5, %v3681
    %v3683 = vsub.f32 1.5, %v3682
    %v3684 = vmul.f32 %v3679, %v3683
    %vm3685 = vweird.f32 %v3396
    %vm3686 = vweird.f32 %v3679
    %vm3687 = vmor %vm3685, %vm3686
    %v3688 = vsel %vm3687, %v3679, %v3684
    %v3689 = vrsqrt.pop %v3397
    %v3690 = vmul.f32 %v3689, %v3397
    %v3691 = vmul.f32 %v3690, %v3689
    %v3692 = vmul.f32 0.5, %v3691
    %v3693 = vsub.f32 1.5, %v3692
    %v3694 = vmul.f32 %v3689, %v3693
    %vm3695 = vweird.f32 %v3397
    %vm3696 = vweird.f32 %v3689
    %vm3697 = vmor %vm3695, %vm3696
    %v3698 = vsel %vm3697, %v3689, %v3694
    %v3699 = vrsqrt.pop %v3398
    %v3700 = vmul.f32 %v3699, %v3398
    %v3701 = vmul.f32 %v3700, %v3699
    %v3702 = vmul.f32 0.5, %v3701
    %v3703 = vsub.f32 1.5, %v3702
    %v3704 = vmul.f32 %v3699, %v3703
    %vm3705 = vweird.f32 %v3398
    %vm3706 = vweird.f32 %v3699
    %vm3707 = vmor %vm3705, %vm3706
    %v3708 = vsel %vm3707, %v3699, %v3704
    %v3709 = vrsqrt.pop %v3399
    %v3710 = vmul.f32 %v3709, %v3399
    %v3711 = vmul.f32 %v3710, %v3709
    %v3712 = vmul.f32 0.5, %v3711
    %v3713 = vsub.f32 1.5, %v3712
    %v3714 = vmul.f32 %v3709, %v3713
    %vm3715 = vweird.f32 %v3399
    %vm3716 = vweird.f32 %v3709
    %vm3717 = vmor %vm3715, %vm3716
    %v3718 = vsel %vm3717, %v3709, %v3714
    %v3719 = vrsqrt.pop %v3400
    %v3720 = vmul.f32 %v3719, %v3400
    %v3721 = vmul.f32 %v3720, %v3719
    %v3722 = vmul.f32 0.5, %v3721
    %v3723 = vsub.f32 1.5, %v3722
    %v3724 = vmul.f32 %v3719, %v3723
    %vm3725 = vweird.f32 %v3400
    %vm3726 = vweird.f32 %v3719
    %vm3727 = vmor %vm3725, %vm3726
    %v3728 = vsel %vm3727, %v3719, %v3724
    %v3729 = vrsqrt.pop %v3401
    %v3730 = vmul.f32 %v3729, %v3401
    %v3731 = vmul.f32 %v3730, %v3729
    %v3732 = vmul.f32 0.5, %v3731
    %v3733 = vsub.f32 1.5, %v3732
    %v3734 = vmul.f32 %v3729, %v3733
    %vm3735 = vweird.f32 %v3401
    %vm3736 = vweird.f32 %v3729
    %vm3737 = vmor %vm3735, %vm3736
    %v3738 = vsel %vm3737, %v3729, %v3734
    %v3739 = vrsqrt.pop %v3402
    %v3740 = vmul.f32 %v3739, %v3402
    %v3741 = vmul.f32 %v3740, %v3739
    %v3742 = vmul.f32 0.5, %v3741
    %v3743 = vsub.f32 1.5, %v3742
    %v3744 = vmul.f32 %v3739, %v3743
    %vm3745 = vweird.f32 %v3402
    %vm3746 = vweird.f32 %v3739
    %vm3747 = vmor %vm3745, %vm3746
    %v3748 = vsel %vm3747, %v3739, %v3744
    %v3749 = vrsqrt.pop %v3403
    %v3750 = vmul.f32 %v3749, %v3403
    %v3751 = vmul.f32 %v3750, %v3749
    %v3752 = vmul.f32 0.5, %v3751
    %v3753 = vsub.f32 1.5, %v3752
    %v3754 = vmul.f32 %v3749, %v3753
    %vm3755 = vweird.f32 %v3403
    %vm3756 = vweird.f32 %v3749
    %vm3757 = vmor %vm3755, %vm3756
    %v3758 = vsel %vm3757, %v3749, %v3754
    %v3759 = vrsqrt.pop %v3404
    %v3760 = vmul.f32 %v3759, %v3404
    %v3761 = vmul.f32 %v3760, %v3759
    %v3762 = vmul.f32 0.5, %v3761
    %v3763 = vsub.f32 1.5, %v3762
    %v3764 = vmul.f32 %v3759, %v3763
    %vm3765 = vweird.f32 %v3404
    %vm3766 = vweird.f32 %v3759
    %vm3767 = vmor %vm3765, %vm3766
    %v3768 = vsel %vm3767, %v3759, %v3764
    %v3769 = vrsqrt.pop %v3405
    %v3770 = vmul.f32 %v3769, %v3405
    %v3771 = vmul.f32 %v3770, %v3769
    %v3772 = vmul.f32 0.5, %v3771
    %v3773 = vsub.f32 1.5, %v3772
    %v3774 = vmul.f32 %v3769, %v3773
    %vm3775 = vweird.f32 %v3405
    %vm3776 = vweird.f32 %v3769
    %vm3777 = vmor %vm3775, %vm3776
    %v3778 = vsel %vm3777, %v3769, %v3774
    %v3779 = vrsqrt.pop %v3406
    %v3780 = vmul.f32 %v3779, %v3406
    %v3781 = vmul.f32 %v3780, %v3779
    %v3782 = vmul.f32 0.5, %v3781
    %v3783 = vsub.f32 1.5, %v3782
    %v3784 = vmul.f32 %v3779, %v3783
    %vm3785 = vweird.f32 %v3406
    %vm3786 = vweird.f32 %v3779
    %vm3787 = vmor %vm3785, %vm3786
    %v3788 = vsel %vm3787, %v3779, %v3784
    %v3789 = vrsqrt.pop %v3407
    %v3790 = vmul.f32 %v3789, %v3407
    %v3791 = vmul.f32 %v3790, %v3789
    %v3792 = vmul.f32 0.5, %v3791
    %v3793 = vsub.f32 1.5, %v3792
    %v3794 = vmul.f32 %v3789, %v3793
    %vm3795 = vweird.f32 %v3407
    %vm3796 = vweird.f32 %v3789
    %vm3797 = vmor %vm3795, %vm3796
    %v3798 = vsel %vm3797, %v3789, %v3794
    %v3799 = vrsqrt.pop %v3408
    %v3800 = vmul.f32 %v3799, %v3408
    %v3801 = vmul.f32 %v3800, %v3799
    %v3802 = vmul.f32 0.5, %v3801
    %v3803 = vsub.f32 1.5, %v3802
    %v3804 = vmul.f32 %v3799, %v3803
    %vm3805 = vweird.f32 %v3408
    %vm3806 = vweird.f32 %v3799
    %vm3807 = vmor %vm3805, %vm3806
    %v3808 = vsel %vm3807, %v3799, %v3804
    %v3809 = vrsqrt.pop %v3409
    %v3810 = vmul.f32 %v3809, %v3409
    %v3811 = vmul.f32 %v3810, %v3809
    %v3812 = vmul.f32 0.5, %v3811
    %v3813 = vsub.f32 1.5, %v3812
    %v3814 = vmul.f32 %v3809, %v3813
    %vm3815 = vweird.f32 %v3409
    %vm3816 = vweird.f32 %v3809
    %vm3817 = vmor %vm3815, %vm3816
    %v3818 = vsel %vm3817, %v3809, %v3814
    %v3819 = vrsqrt.pop %v3410
    %v3820 = vmul.f32 %v3819, %v3410
    %v3821 = vmul.f32 %v3820, %v3819
    %v3822 = vmul.f32 0.5, %v3821
    %v3823 = vsub.f32 1.5, %v3822
    %v3824 = vmul.f32 %v3819, %v3823
    %vm3825 = vweird.f32 %v3410
    %vm3826 = vweird.f32 %v3819
    %vm3827 = vmor %vm3825, %vm3826
    %v3828 = vsel %vm3827, %v3819, %v3824
    %v3829 = vrsqrt.pop %v3411
    %v3830 = vmul.f32 %v3829, %v3411
    %v3831 = vmul.f32 %v3830, %v3829
    %v3832 = vmul.f32 0.5, %v3831
    %v3833 = vsub.f32 1.5, %v3832
    %v3834 = vmul.f32 %v3829, %v3833
    %vm3835 = vweird.f32 %v3411
    %vm3836 = vweird.f32 %v3829
    %vm3837 = vmor %vm3835, %vm3836
    %v3838 = vsel %vm3837, %v3829, %v3834
    %v3839 = vrsqrt.pop %v3412
    %v3840 = vmul.f32 %v3839, %v3412
    %v3841 = vmul.f32 %v3840, %v3839
    %v3842 = vmul.f32 0.5, %v3841
    %v3843 = vsub.f32 1.5, %v3842
    %v3844 = vmul.f32 %v3839, %v3843
    %vm3845 = vweird.f32 %v3412
    %vm3846 = vweird.f32 %v3839
    %vm3847 = vmor %vm3845, %vm3846
    %v3848 = vsel %vm3847, %v3839, %v3844
    %v3849 = vrsqrt.pop %v3413
    %v3850 = vmul.f32 %v3849, %v3413
    %v3851 = vmul.f32 %v3850, %v3849
    %v3852 = vmul.f32 0.5, %v3851
    %v3853 = vsub.f32 1.5, %v3852
    %v3854 = vmul.f32 %v3849, %v3853
    %vm3855 = vweird.f32 %v3413
    %vm3856 = vweird.f32 %v3849
    %vm3857 = vmor %vm3855, %vm3856
    %v3858 = vsel %vm3857, %v3849, %v3854
    %v3859 = vrsqrt.pop %v3414
    %v3860 = vmul.f32 %v3859, %v3414
    %v3861 = vmul.f32 %v3860, %v3859
    %v3862 = vmul.f32 0.5, %v3861
    %v3863 = vsub.f32 1.5, %v3862
    %v3864 = vmul.f32 %v3859, %v3863
    %vm3865 = vweird.f32 %v3414
    %vm3866 = vweird.f32 %v3859
    %vm3867 = vmor %vm3865, %vm3866
    %v3868 = vsel %vm3867, %v3859, %v3864
    %v3869 = vrsqrt.pop %v3415
    %v3870 = vmul.f32 %v3869, %v3415
    %v3871 = vmul.f32 %v3870, %v3869
    %v3872 = vmul.f32 0.5, %v3871
    %v3873 = vsub.f32 1.5, %v3872
    %v3874 = vmul.f32 %v3869, %v3873
    %vm3875 = vweird.f32 %v3415
    %vm3876 = vweird.f32 %v3869
    %vm3877 = vmor %vm3875, %vm3876
    %v3878 = vsel %vm3877, %v3869, %v3874
    %v3879 = vrsqrt.pop %v3416
    %v3880 = vmul.f32 %v3879, %v3416
    %v3881 = vmul.f32 %v3880, %v3879
    %v3882 = vmul.f32 0.5, %v3881
    %v3883 = vsub.f32 1.5, %v3882
    %v3884 = vmul.f32 %v3879, %v3883
    %vm3885 = vweird.f32 %v3416
    %vm3886 = vweird.f32 %v3879
    %vm3887 = vmor %vm3885, %vm3886
    %v3888 = vsel %vm3887, %v3879, %v3884
    %v3889 = vrsqrt.pop %v3417
    %v3890 = vmul.f32 %v3889, %v3417
    %v3891 = vmul.f32 %v3890, %v3889
    %v3892 = vmul.f32 0.5, %v3891
    %v3893 = vsub.f32 1.5, %v3892
    %v3894 = vmul.f32 %v3889, %v3893
    %vm3895 = vweird.f32 %v3417
    %vm3896 = vweird.f32 %v3889
    %vm3897 = vmor %vm3895, %vm3896
    %v3898 = vsel %vm3897, %v3889, %v3894
    %v3899 = vrsqrt.pop %v3418
    %v3900 = vmul.f32 %v3899, %v3418
    %v3901 = vmul.f32 %v3900, %v3899
    %v3902 = vmul.f32 0.5, %v3901
    %v3903 = vsub.f32 1.5, %v3902
    %v3904 = vmul.f32 %v3899, %v3903
    %vm3905 = vweird.f32 %v3418
    %vm3906 = vweird.f32 %v3899
    %vm3907 = vmor %vm3905, %vm3906
    %v3908 = vsel %vm3907, %v3899, %v3904
    %v3909 = vrsqrt.pop %v3419
    %v3910 = vmul.f32 %v3909, %v3419
    %v3911 = vmul.f32 %v3910, %v3909
    %v3912 = vmul.f32 0.5, %v3911
    %v3913 = vsub.f32 1.5, %v3912
    %v3914 = vmul.f32 %v3909, %v3913
    %vm3915 = vweird.f32 %v3419
    %vm3916 = vweird.f32 %v3909
    %vm3917 = vmor %vm3915, %vm3916
    %v3918 = vsel %vm3917, %v3909, %v3914
    %v3919 = vrsqrt.pop %v3420
    %v3920 = vmul.f32 %v3919, %v3420
    %v3921 = vmul.f32 %v3920, %v3919
    %v3922 = vmul.f32 0.5, %v3921
    %v3923 = vsub.f32 1.5, %v3922
    %v3924 = vmul.f32 %v3919, %v3923
    %vm3925 = vweird.f32 %v3420
    %vm3926 = vweird.f32 %v3919
    %vm3927 = vmor %vm3925, %vm3926
    %v3928 = vsel %vm3927, %v3919, %v3924
    %v3929 = vrsqrt.pop %v3421
    %v3930 = vmul.f32 %v3929, %v3421
    %v3931 = vmul.f32 %v3930, %v3929
    %v3932 = vmul.f32 0.5, %v3931
    %v3933 = vsub.f32 1.5, %v3932
    %v3934 = vmul.f32 %v3929, %v3933
    %vm3935 = vweird.f32 %v3421
    %vm3936 = vweird.f32 %v3929
    %vm3937 = vmor %vm3935, %vm3936
    %v3938 = vsel %vm3937, %v3929, %v3934
    %v3939 = vrsqrt.pop %v3422
    %v3940 = vmul.f32 %v3939, %v3422
    %v3941 = vmul.f32 %v3940, %v3939
    %v3942 = vmul.f32 0.5, %v3941
    %v3943 = vsub.f32 1.5, %v3942
    %v3944 = vmul.f32 %v3939, %v3943
    %vm3945 = vweird.f32 %v3422
    %vm3946 = vweird.f32 %v3939
    %vm3947 = vmor %vm3945, %vm3946
    %v3948 = vsel %vm3947, %v3939, %v3944
    %v3949 = vrsqrt.pop %v3423
    %v3950 = vmul.f32 %v3949, %v3423
    %v3951 = vmul.f32 %v3950, %v3949
    %v3952 = vmul.f32 0.5, %v3951
    %v3953 = vsub.f32 1.5, %v3952
    %v3954 = vmul.f32 %v3949, %v3953
    %vm3955 = vweird.f32 %v3423
    %vm3956 = vweird.f32 %v3949
    %vm3957 = vmor %vm3955, %vm3956
    %v3958 = vsel %vm3957, %v3949, %v3954
    %v3959 = vrsqrt.pop %v3424
    %v3960 = vmul.f32 %v3959, %v3424
    %v3961 = vmul.f32 %v3960, %v3959
    %v3962 = vmul.f32 0.5, %v3961
    %v3963 = vsub.f32 1.5, %v3962
    %v3964 = vmul.f32 %v3959, %v3963
    %vm3965 = vweird.f32 %v3424
    %vm3966 = vweird.f32 %v3959
    %vm3967 = vmor %vm3965, %vm3966
    %v3968 = vsel %vm3967, %v3959, %v3964
    %v3969 = vrsqrt.pop %v3425
    %v3970 = vmul.f32 %v3969, %v3425
    %v3971 = vmul.f32 %v3970, %v3969
    %v3972 = vmul.f32 0.5, %v3971
    %v3973 = vsub.f32 1.5, %v3972
    %v3974 = vmul.f32 %v3969, %v3973
    %vm3975 = vweird.f32 %v3425
    %vm3976 = vweird.f32 %v3969
    %vm3977 = vmor %vm3975, %vm3976
    %v3978 = vsel %vm3977, %v3969, %v3974
    %v3979 = vrsqrt.pop %v3426
    %v3980 = vmul.f32 %v3979, %v3426
    %v3981 = vmul.f32 %v3980, %v3979
    %v3982 = vmul.f32 0.5, %v3981
    %v3983 = vsub.f32 1.5, %v3982
    %v3984 = vmul.f32 %v3979, %v3983
    %vm3985 = vweird.f32 %v3426
    %vm3986 = vweird.f32 %v3979
    %vm3987 = vmor %vm3985, %vm3986
    %v3988 = vsel %vm3987, %v3979, %v3984
    %v3989 = vrsqrt.pop %v3427
    %v3990 = vmul.f32 %v3989, %v3427
    %v3991 = vmul.f32 %v3990, %v3989
    %v3992 = vmul.f32 0.5, %v3991
    %v3993 = vsub.f32 1.5, %v3992
    %v3994 = vmul.f32 %v3989, %v3993
    %vm3995 = vweird.f32 %v3427
    %vm3996 = vweird.f32 %v3989
    %vm3997 = vmor %vm3995, %vm3996
    %v3998 = vsel %vm3997, %v3989, %v3994
    %v3999 = vrsqrt.pop %v3428
    %v4000 = vmul.f32 %v3999, %v3428
    %v4001 = vmul.f32 %v4000, %v3999
    %v4002 = vmul.f32 0.5, %v4001
    %v4003 = vsub.f32 1.5, %v4002
    %v4004 = vmul.f32 %v3999, %v4003
    %vm4005 = vweird.f32 %v3428
    %vm4006 = vweird.f32 %v3999
    %vm4007 = vmor %vm4005, %vm4006
    %v4008 = vsel %vm4007, %v3999, %v4004
    %v4009 = vrsqrt.pop %v3429
    %v4010 = vmul.f32 %v4009, %v3429
    %v4011 = vmul.f32 %v4010, %v4009
    %v4012 = vmul.f32 0.5, %v4011
    %v4013 = vsub.f32 1.5, %v4012
    %v4014 = vmul.f32 %v4009, %v4013
    %vm4015 = vweird.f32 %v3429
    %vm4016 = vweird.f32 %v4009
    %vm4017 = vmor %vm4015, %vm4016
    %v4018 = vsel %vm4017, %v4009, %v4014
    %v4019 = vrsqrt.pop %v3430
    %v4020 = vmul.f32 %v4019, %v3430
    %v4021 = vmul.f32 %v4020, %v4019
    %v4022 = vmul.f32 0.5, %v4021
    %v4023 = vsub.f32 1.5, %v4022
    %v4024 = vmul.f32 %v4019, %v4023
    %vm4025 = vweird.f32 %v3430
    %vm4026 = vweird.f32 %v4019
    %vm4027 = vmor %vm4025, %vm4026
    %v4028 = vsel %vm4027, %v4019, %v4024
    %v4029 = vrsqrt.pop %v3431
    %v4030 = vmul.f32 %v4029, %v3431
    %v4031 = vmul.f32 %v4030, %v4029
    %v4032 = vmul.f32 0.5, %v4031
    %v4033 = vsub.f32 1.5, %v4032
    %v4034 = vmul.f32 %v4029, %v4033
    %vm4035 = vweird.f32 %v3431
    %vm4036 = vweird.f32 %v4029
    %vm4037 = vmor %vm4035, %vm4036
    %v4038 = vsel %vm4037, %v4029, %v4034
    %v4039 = vrsqrt.pop %v3432
    %v4040 = vmul.f32 %v4039, %v3432
    %v4041 = vmul.f32 %v4040, %v4039
    %v4042 = vmul.f32 0.5, %v4041
    %v4043 = vsub.f32 1.5, %v4042
    %v4044 = vmul.f32 %v4039, %v4043
    %vm4045 = vweird.f32 %v3432
    %vm4046 = vweird.f32 %v4039
    %vm4047 = vmor %vm4045, %vm4046
    %v4048 = vsel %vm4047, %v4039, %v4044
    %v4049 = vrsqrt.pop %v3433
    %v4050 = vmul.f32 %v4049, %v3433
    %v4051 = vmul.f32 %v4050, %v4049
    %v4052 = vmul.f32 0.5, %v4051
    %v4053 = vsub.f32 1.5, %v4052
    %v4054 = vmul.f32 %v4049, %v4053
    %vm4055 = vweird.f32 %v3433
    %vm4056 = vweird.f32 %v4049
    %vm4057 = vmor %vm4055, %vm4056
    %v4058 = vsel %vm4057, %v4049, %v4054
    %v4059 = vrsqrt.pop %v3434
    %v4060 = vmul.f32 %v4059, %v3434
    %v4061 = vmul.f32 %v4060, %v4059
    %v4062 = vmul.f32 0.5, %v4061
    %v4063 = vsub.f32 1.5, %v4062
    %v4064 = vmul.f32 %v4059, %v4063
    %vm4065 = vweird.f32 %v3434
    %vm4066 = vweird.f32 %v4059
    %vm4067 = vmor %vm4065, %vm4066
    %v4068 = vsel %vm4067, %v4059, %v4064
    %v4069 = vrsqrt.pop %v3435
    %v4070 = vmul.f32 %v4069, %v3435
    %v4071 = vmul.f32 %v4070, %v4069
    %v4072 = vmul.f32 0.5, %v4071
    %v4073 = vsub.f32 1.5, %v4072
    %v4074 = vmul.f32 %v4069, %v4073
    %vm4075 = vweird.f32 %v3435
    %vm4076 = vweird.f32 %v4069
    %vm4077 = vmor %vm4075, %vm4076
    %v4078 = vsel %vm4077, %v4069, %v4074
    %v4079 = vrsqrt.pop %v3436
    %v4080 = vmul.f32 %v4079, %v3436
    %v4081 = vmul.f32 %v4080, %v4079
    %v4082 = vmul.f32 0.5, %v4081
    %v4083 = vsub.f32 1.5, %v4082
    %v4084 = vmul.f32 %v4079, %v4083
    %vm4085 = vweird.f32 %v3436
    %vm4086 = vweird.f32 %v4079
    %vm4087 = vmor %vm4085, %vm4086
    %v4088 = vsel %vm4087, %v4079, %v4084
    %v4089 = vrsqrt.pop %v3437
    %v4090 = vmul.f32 %v4089, %v3437
    %v4091 = vmul.f32 %v4090, %v4089
    %v4092 = vmul.f32 0.5, %v4091
    %v4093 = vsub.f32 1.5, %v4092
    %v4094 = vmul.f32 %v4089, %v4093
    %vm4095 = vweird.f32 %v3437
    %vm4096 = vweird.f32 %v4089
    %vm4097 = vmor %vm4095, %vm4096
    %v4098 = vsel %vm4097, %v4089, %v4094
    %v4099 = vrsqrt.pop %v3438
    %v4100 = vmul.f32 %v4099, %v3438
    %v4101 = vmul.f32 %v4100, %v4099
    %v4102 = vmul.f32 0.5, %v4101
    %v4103 = vsub.f32 1.5, %v4102
    %v4104 = vmul.f32 %v4099, %v4103
    %vm4105 = vweird.f32 %v3438
    %vm4106 = vweird.f32 %v4099
    %vm4107 = vmor %vm4105, %vm4106
    %v4108 = vsel %vm4107, %v4099, %v4104
    %v4109 = vrsqrt.pop %v3439
    %v4110 = vmul.f32 %v4109, %v3439
    %v4111 = vmul.f32 %v4110, %v4109
    %v4112 = vmul.f32 0.5, %v4111
    %v4113 = vsub.f32 1.5, %v4112
    %v4114 = vmul.f32 %v4109, %v4113
    %vm4115 = vweird.f32 %v3439
    %vm4116 = vweird.f32 %v4109
    %vm4117 = vmor %vm4115, %vm4116
    %v4118 = vsel %vm4117, %v4109, %v4114
    %v4119 = vrsqrt.pop %v3440
    %v4120 = vmul.f32 %v4119, %v3440
    %v4121 = vmul.f32 %v4120, %v4119
    %v4122 = vmul.f32 0.5, %v4121
    %v4123 = vsub.f32 1.5, %v4122
    %v4124 = vmul.f32 %v4119, %v4123
    %vm4125 = vweird.f32 %v3440
    %vm4126 = vweird.f32 %v4119
    %vm4127 = vmor %vm4125, %vm4126
    %v4128 = vsel %vm4127, %v4119, %v4124
    %v4129 = vrsqrt.pop %v3441
    %v4130 = vmul.f32 %v4129, %v3441
    %v4131 = vmul.f32 %v4130, %v4129
    %v4132 = vmul.f32 0.5, %v4131
    %v4133 = vsub.f32 1.5, %v4132
    %v4134 = vmul.f32 %v4129, %v4133
    %vm4135 = vweird.f32 %v3441
    %vm4136 = vweird.f32 %v4129
    %vm4137 = vmor %vm4135, %vm4136
    %v4138 = vsel %vm4137, %v4129, %v4134
    %v4139 = vrsqrt.pop %v3442
    %v4140 = vmul.f32 %v4139, %v3442
    %v4141 = vmul.f32 %v4140, %v4139
    %v4142 = vmul.f32 0.5, %v4141
    %v4143 = vsub.f32 1.5, %v4142
    %v4144 = vmul.f32 %v4139, %v4143
    %vm4145 = vweird.f32 %v3442
    %vm4146 = vweird.f32 %v4139
    %vm4147 = vmor %vm4145, %vm4146
    %v4148 = vsel %vm4147, %v4139, %v4144
    %v4149 = vrsqrt.pop %v3443
    %v4150 = vmul.f32 %v4149, %v3443
    %v4151 = vmul.f32 %v4150, %v4149
    %v4152 = vmul.f32 0.5, %v4151
    %v4153 = vsub.f32 1.5, %v4152
    %v4154 = vmul.f32 %v4149, %v4153
    %vm4155 = vweird.f32 %v3443
    %vm4156 = vweird.f32 %v4149
    %vm4157 = vmor %vm4155, %vm4156
    %v4158 = vsel %vm4157, %v4149, %v4154
    %v4159 = vrsqrt.pop %v3444
    %v4160 = vmul.f32 %v4159, %v3444
    %v4161 = vmul.f32 %v4160, %v4159
    %v4162 = vmul.f32 0.5, %v4161
    %v4163 = vsub.f32 1.5, %v4162
    %v4164 = vmul.f32 %v4159, %v4163
    %vm4165 = vweird.f32 %v3444
    %vm4166 = vweird.f32 %v4159
    %vm4167 = vmor %vm4165, %vm4166
    %v4168 = vsel %vm4167, %v4159, %v4164
    %v4169 = vrsqrt.pop %v3445
    %v4170 = vmul.f32 %v4169, %v3445
    %v4171 = vmul.f32 %v4170, %v4169
    %v4172 = vmul.f32 0.5, %v4171
    %v4173 = vsub.f32 1.5, %v4172
    %v4174 = vmul.f32 %v4169, %v4173
    %vm4175 = vweird.f32 %v3445
    %vm4176 = vweird.f32 %v4169
    %vm4177 = vmor %vm4175, %vm4176
    %v4178 = vsel %vm4177, %v4169, %v4174
    %v4179 = vrsqrt.pop %v3446
    %v4180 = vmul.f32 %v4179, %v3446
    %v4181 = vmul.f32 %v4180, %v4179
    %v4182 = vmul.f32 0.5, %v4181
    %v4183 = vsub.f32 1.5, %v4182
    %v4184 = vmul.f32 %v4179, %v4183
    %vm4185 = vweird.f32 %v3446
    %vm4186 = vweird.f32 %v4179
    %vm4187 = vmor %vm4185, %vm4186
    %v4188 = vsel %vm4187, %v4179, %v4184
    %v4189 = vrsqrt.pop %v3447
    %v4190 = vmul.f32 %v4189, %v3447
    %v4191 = vmul.f32 %v4190, %v4189
    %v4192 = vmul.f32 0.5, %v4191
    %v4193 = vsub.f32 1.5, %v4192
    %v4194 = vmul.f32 %v4189, %v4193
    %vm4195 = vweird.f32 %v3447
    %vm4196 = vweird.f32 %v4189
    %vm4197 = vmor %vm4195, %vm4196
    %v4198 = vsel %vm4197, %v4189, %v4194
    %v4199 = vrsqrt.pop %v3448
    %v4200 = vmul.f32 %v4199, %v3448
    %v4201 = vmul.f32 %v4200, %v4199
    %v4202 = vmul.f32 0.5, %v4201
    %v4203 = vsub.f32 1.5, %v4202
    %v4204 = vmul.f32 %v4199, %v4203
    %vm4205 = vweird.f32 %v3448
    %vm4206 = vweird.f32 %v4199
    %vm4207 = vmor %vm4205, %vm4206
    %v4208 = vsel %vm4207, %v4199, %v4204
    %v4209 = vrsqrt.pop %v3449
    %v4210 = vmul.f32 %v4209, %v3449
    %v4211 = vmul.f32 %v4210, %v4209
    %v4212 = vmul.f32 0.5, %v4211
    %v4213 = vsub.f32 1.5, %v4212
    %v4214 = vmul.f32 %v4209, %v4213
    %vm4215 = vweird.f32 %v3449
    %vm4216 = vweird.f32 %v4209
    %vm4217 = vmor %vm4215, %vm4216
    %v4218 = vsel %vm4217, %v4209, %v4214
    %v4219 = vrsqrt.pop %v3450
    %v4220 = vmul.f32 %v4219, %v3450
    %v4221 = vmul.f32 %v4220, %v4219
    %v4222 = vmul.f32 0.5, %v4221
    %v4223 = vsub.f32 1.5, %v4222
    %v4224 = vmul.f32 %v4219, %v4223
    %vm4225 = vweird.f32 %v3450
    %vm4226 = vweird.f32 %v4219
    %vm4227 = vmor %vm4225, %vm4226
    %v4228 = vsel %vm4227, %v4219, %v4224
    %v4229 = vrsqrt.pop %v3451
    %v4230 = vmul.f32 %v4229, %v3451
    %v4231 = vmul.f32 %v4230, %v4229
    %v4232 = vmul.f32 0.5, %v4231
    %v4233 = vsub.f32 1.5, %v4232
    %v4234 = vmul.f32 %v4229, %v4233
    %vm4235 = vweird.f32 %v3451
    %vm4236 = vweird.f32 %v4229
    %vm4237 = vmor %vm4235, %vm4236
    %v4238 = vsel %vm4237, %v4229, %v4234
    %v4239 = vrsqrt.pop %v3452
    %v4240 = vmul.f32 %v4239, %v3452
    %v4241 = vmul.f32 %v4240, %v4239
    %v4242 = vmul.f32 0.5, %v4241
    %v4243 = vsub.f32 1.5, %v4242
    %v4244 = vmul.f32 %v4239, %v4243
    %vm4245 = vweird.f32 %v3452
    %vm4246 = vweird.f32 %v4239
    %vm4247 = vmor %vm4245, %vm4246
    %v4248 = vsel %vm4247, %v4239, %v4244
    %v4249 = vrsqrt.pop %v3453
    %v4250 = vmul.f32 %v4249, %v3453
    %v4251 = vmul.f32 %v4250, %v4249
    %v4252 = vmul.f32 0.5, %v4251
    %v4253 = vsub.f32 1.5, %v4252
    %v4254 = vmul.f32 %v4249, %v4253
    %vm4255 = vweird.f32 %v3453
    %vm4256 = vweird.f32 %v4249
    %vm4257 = vmor %vm4255, %vm4256
    %v4258 = vsel %vm4257, %v4249, %v4254
    %v4259 = vrsqrt.pop %v3454
    %v4260 = vmul.f32 %v4259, %v3454
    %v4261 = vmul.f32 %v4260, %v4259
    %v4262 = vmul.f32 0.5, %v4261
    %v4263 = vsub.f32 1.5, %v4262
    %v4264 = vmul.f32 %v4259, %v4263
    %vm4265 = vweird.f32 %v3454
    %vm4266 = vweird.f32 %v4259
    %vm4267 = vmor %vm4265, %vm4266
    %v4268 = vsel %vm4267, %v4259, %v4264
    %v4269 = vrsqrt.pop %v3455
    %v4270 = vmul.f32 %v4269, %v3455
    %v4271 = vmul.f32 %v4270, %v4269
    %v4272 = vmul.f32 0.5, %v4271
    %v4273 = vsub.f32 1.5, %v4272
    %v4274 = vmul.f32 %v4269, %v4273
    %vm4275 = vweird.f32 %v3455
    %vm4276 = vweird.f32 %v4269
    %vm4277 = vmor %vm4275, %vm4276
    %v4278 = vsel %vm4277, %v4269, %v4274
    %v4279 = vrsqrt.pop %v3456
    %v4280 = vmul.f32 %v4279, %v3456
    %v4281 = vmul.f32 %v4280, %v4279
    %v4282 = vmul.f32 0.5, %v4281
    %v4283 = vsub.f32 1.5, %v4282
    %v4284 = vmul.f32 %v4279, %v4283
    %vm4285 = vweird.f32 %v3456
    %vm4286 = vweird.f32 %v4279
    %vm4287 = vmor %vm4285, %vm4286
    %v4288 = vsel %vm4287, %v4279, %v4284
    %v4289 = vrsqrt.pop %v3457
    %v4290 = vmul.f32 %v4289, %v3457
    %v4291 = vmul.f32 %v4290, %v4289
    %v4292 = vmul.f32 0.5, %v4291
    %v4293 = vsub.f32 1.5, %v4292
    %v4294 = vmul.f32 %v4289, %v4293
    %vm4295 = vweird.f32 %v3457
    %vm4296 = vweird.f32 %v4289
    %vm4297 = vmor %vm4295, %vm4296
    %v4298 = vsel %vm4297, %v4289, %v4294
    %v4299 = vrsqrt.pop %v3458
    %v4300 = vmul.f32 %v4299, %v3458
    %v4301 = vmul.f32 %v4300, %v4299
    %v4302 = vmul.f32 0.5, %v4301
    %v4303 = vsub.f32 1.5, %v4302
    %v4304 = vmul.f32 %v4299, %v4303
    %vm4305 = vweird.f32 %v3458
    %vm4306 = vweird.f32 %v4299
    %vm4307 = vmor %vm4305, %vm4306
    %v4308 = vsel %vm4307, %v4299, %v4304
    %v4309 = vrsqrt.pop %v3459
    %v4310 = vmul.f32 %v4309, %v3459
    %v4311 = vmul.f32 %v4310, %v4309
    %v4312 = vmul.f32 0.5, %v4311
    %v4313 = vsub.f32 1.5, %v4312
    %v4314 = vmul.f32 %v4309, %v4313
    %vm4315 = vweird.f32 %v3459
    %vm4316 = vweird.f32 %v4309
    %vm4317 = vmor %vm4315, %vm4316
    %v4318 = vsel %vm4317, %v4309, %v4314
    %v4319 = vrsqrt.pop %v3460
    %v4320 = vmul.f32 %v4319, %v3460
    %v4321 = vmul.f32 %v4320, %v4319
    %v4322 = vmul.f32 0.5, %v4321
    %v4323 = vsub.f32 1.5, %v4322
    %v4324 = vmul.f32 %v4319, %v4323
    %vm4325 = vweird.f32 %v3460
    %vm4326 = vweird.f32 %v4319
    %vm4327 = vmor %vm4325, %vm4326
    %v4328 = vsel %vm4327, %v4319, %v4324
    %v4329 = vrsqrt.pop %v3461
    %v4330 = vmul.f32 %v4329, %v3461
    %v4331 = vmul.f32 %v4330, %v4329
    %v4332 = vmul.f32 0.5, %v4331
    %v4333 = vsub.f32 1.5, %v4332
    %v4334 = vmul.f32 %v4329, %v4333
    %vm4335 = vweird.f32 %v3461
    %vm4336 = vweird.f32 %v4329
    %vm4337 = vmor %vm4335, %vm4336
    %v4338 = vsel %vm4337, %v4329, %v4334
    %v4339 = vrsqrt.pop %v3462
    %v4340 = vmul.f32 %v4339, %v3462
    %v4341 = vmul.f32 %v4340, %v4339
    %v4342 = vmul.f32 0.5, %v4341
    %v4343 = vsub.f32 1.5, %v4342
    %v4344 = vmul.f32 %v4339, %v4343
    %vm4345 = vweird.f32 %v3462
    %vm4346 = vweird.f32 %v4339
    %vm4347 = vmor %vm4345, %vm4346
    %v4348 = vsel %vm4347, %v4339, %v4344
    %v4349 = vrsqrt.pop %v3463
    %v4350 = vmul.f32 %v4349, %v3463
    %v4351 = vmul.f32 %v4350, %v4349
    %v4352 = vmul.f32 0.5, %v4351
    %v4353 = vsub.f32 1.5, %v4352
    %v4354 = vmul.f32 %v4349, %v4353
    %vm4355 = vweird.f32 %v3463
    %vm4356 = vweird.f32 %v4349
    %vm4357 = vmor %vm4355, %vm4356
    %v4358 = vsel %vm4357, %v4349, %v4354
    %v4359 = vrsqrt.pop %v3464
    %v4360 = vmul.f32 %v4359, %v3464
    %v4361 = vmul.f32 %v4360, %v4359
    %v4362 = vmul.f32 0.5, %v4361
    %v4363 = vsub.f32 1.5, %v4362
    %v4364 = vmul.f32 %v4359, %v4363
    %vm4365 = vweird.f32 %v3464
    %vm4366 = vweird.f32 %v4359
    %vm4367 = vmor %vm4365, %vm4366
    %v4368 = vsel %vm4367, %v4359, %v4364
    %v4369 = vrsqrt.pop %v3465
    %v4370 = vmul.f32 %v4369, %v3465
    %v4371 = vmul.f32 %v4370, %v4369
    %v4372 = vmul.f32 0.5, %v4371
    %v4373 = vsub.f32 1.5, %v4372
    %v4374 = vmul.f32 %v4369, %v4373
    %vm4375 = vweird.f32 %v3465
    %vm4376 = vweird.f32 %v4369
    %vm4377 = vmor %vm4375, %vm4376
    %v4378 = vsel %vm4377, %v4369, %v4374
    %v4379 = vrsqrt.pop %v3466
    %v4380 = vmul.f32 %v4379, %v3466
    %v4381 = vmul.f32 %v4380, %v4379
    %v4382 = vmul.f32 0.5, %v4381
    %v4383 = vsub.f32 1.5, %v4382
    %v4384 = vmul.f32 %v4379, %v4383
    %vm4385 = vweird.f32 %v3466
    %vm4386 = vweird.f32 %v4379
    %vm4387 = vmor %vm4385, %vm4386
    %v4388 = vsel %vm4387, %v4379, %v4384
    %v4389 = vrsqrt.pop %v3467
    %v4390 = vmul.f32 %v4389, %v3467
    %v4391 = vmul.f32 %v4390, %v4389
    %v4392 = vmul.f32 0.5, %v4391
    %v4393 = vsub.f32 1.5, %v4392
    %v4394 = vmul.f32 %v4389, %v4393
    %vm4395 = vweird.f32 %v3467
    %vm4396 = vweird.f32 %v4389
    %vm4397 = vmor %vm4395, %vm4396
    %v4398 = vsel %vm4397, %v4389, %v4394
    %v4399 = vrsqrt.pop %v3468
    %v4400 = vmul.f32 %v4399, %v3468
    %v4401 = vmul.f32 %v4400, %v4399
    %v4402 = vmul.f32 0.5, %v4401
    %v4403 = vsub.f32 1.5, %v4402
    %v4404 = vmul.f32 %v4399, %v4403
    %vm4405 = vweird.f32 %v3468
    %vm4406 = vweird.f32 %v4399
    %vm4407 = vmor %vm4405, %vm4406
    %v4408 = vsel %vm4407, %v4399, %v4404
    %v4409 = vrsqrt.pop %v3469
    %v4410 = vmul.f32 %v4409, %v3469
    %v4411 = vmul.f32 %v4410, %v4409
    %v4412 = vmul.f32 0.5, %v4411
    %v4413 = vsub.f32 1.5, %v4412
    %v4414 = vmul.f32 %v4409, %v4413
    %vm4415 = vweird.f32 %v3469
    %vm4416 = vweird.f32 %v4409
    %vm4417 = vmor %vm4415, %vm4416
    %v4418 = vsel %vm4417, %v4409, %v4414
    %v4419 = vrsqrt.pop %v3470
    %v4420 = vmul.f32 %v4419, %v3470
    %v4421 = vmul.f32 %v4420, %v4419
    %v4422 = vmul.f32 0.5, %v4421
    %v4423 = vsub.f32 1.5, %v4422
    %v4424 = vmul.f32 %v4419, %v4423
    %vm4425 = vweird.f32 %v3470
    %vm4426 = vweird.f32 %v4419
    %vm4427 = vmor %vm4425, %vm4426
    %v4428 = vsel %vm4427, %v4419, %v4424
    %v4429 = vrsqrt.pop %v3471
    %v4430 = vmul.f32 %v4429, %v3471
    %v4431 = vmul.f32 %v4430, %v4429
    %v4432 = vmul.f32 0.5, %v4431
    %v4433 = vsub.f32 1.5, %v4432
    %v4434 = vmul.f32 %v4429, %v4433
    %vm4435 = vweird.f32 %v3471
    %vm4436 = vweird.f32 %v4429
    %vm4437 = vmor %vm4435, %vm4436
    %v4438 = vsel %vm4437, %v4429, %v4434
    %v4439 = vrsqrt.pop %v3472
    %v4440 = vmul.f32 %v4439, %v3472
    %v4441 = vmul.f32 %v4440, %v4439
    %v4442 = vmul.f32 0.5, %v4441
    %v4443 = vsub.f32 1.5, %v4442
    %v4444 = vmul.f32 %v4439, %v4443
    %vm4445 = vweird.f32 %v3472
    %vm4446 = vweird.f32 %v4439
    %vm4447 = vmor %vm4445, %vm4446
    %v4448 = vsel %vm4447, %v4439, %v4444
    %v4449 = vrsqrt.pop %v3473
    %v4450 = vmul.f32 %v4449, %v3473
    %v4451 = vmul.f32 %v4450, %v4449
    %v4452 = vmul.f32 0.5, %v4451
    %v4453 = vsub.f32 1.5, %v4452
    %v4454 = vmul.f32 %v4449, %v4453
    %vm4455 = vweird.f32 %v3473
    %vm4456 = vweird.f32 %v4449
    %vm4457 = vmor %vm4455, %vm4456
    %v4458 = vsel %vm4457, %v4449, %v4454
    %v4459 = vrsqrt.pop %v3474
    %v4460 = vmul.f32 %v4459, %v3474
    %v4461 = vmul.f32 %v4460, %v4459
    %v4462 = vmul.f32 0.5, %v4461
    %v4463 = vsub.f32 1.5, %v4462
    %v4464 = vmul.f32 %v4459, %v4463
    %vm4465 = vweird.f32 %v3474
    %vm4466 = vweird.f32 %v4459
    %vm4467 = vmor %vm4465, %vm4466
    %v4468 = vsel %vm4467, %v4459, %v4464
    %v4469 = vrsqrt.pop %v3475
    %v4470 = vmul.f32 %v4469, %v3475
    %v4471 = vmul.f32 %v4470, %v4469
    %v4472 = vmul.f32 0.5, %v4471
    %v4473 = vsub.f32 1.5, %v4472
    %v4474 = vmul.f32 %v4469, %v4473
    %vm4475 = vweird.f32 %v3475
    %vm4476 = vweird.f32 %v4469
    %vm4477 = vmor %vm4475, %vm4476
    %v4478 = vsel %vm4477, %v4469, %v4474
    %v4479 = vrsqrt.pop %v3476
    %v4480 = vmul.f32 %v4479, %v3476
    %v4481 = vmul.f32 %v4480, %v4479
    %v4482 = vmul.f32 0.5, %v4481
    %v4483 = vsub.f32 1.5, %v4482
    %v4484 = vmul.f32 %v4479, %v4483
    %vm4485 = vweird.f32 %v3476
    %vm4486 = vweird.f32 %v4479
    %vm4487 = vmor %vm4485, %vm4486
    %v4488 = vsel %vm4487, %v4479, %v4484
    %v4489 = vrsqrt.pop %v3477
    %v4490 = vmul.f32 %v4489, %v3477
    %v4491 = vmul.f32 %v4490, %v4489
    %v4492 = vmul.f32 0.5, %v4491
    %v4493 = vsub.f32 1.5, %v4492
    %v4494 = vmul.f32 %v4489, %v4493
    %vm4495 = vweird.f32 %v3477
    %vm4496 = vweird.f32 %v4489
    %vm4497 = vmor %vm4495, %vm4496
    %v4498 = vsel %vm4497, %v4489, %v4494
    %v4499 = vrsqrt.pop %v3478
    %v4500 = vmul.f32 %v4499, %v3478
    %v4501 = vmul.f32 %v4500, %v4499
    %v4502 = vmul.f32 0.5, %v4501
    %v4503 = vsub.f32 1.5, %v4502
    %v4504 = vmul.f32 %v4499, %v4503
    %vm4505 = vweird.f32 %v3478
    %vm4506 = vweird.f32 %v4499
    %vm4507 = vmor %vm4505, %vm4506
    %v4508 = vsel %vm4507, %v4499, %v4504
    %v4509 = vrsqrt.pop %v3479
    %v4510 = vmul.f32 %v4509, %v3479
    %v4511 = vmul.f32 %v4510, %v4509
    %v4512 = vmul.f32 0.5, %v4511
    %v4513 = vsub.f32 1.5, %v4512
    %v4514 = vmul.f32 %v4509, %v4513
    %vm4515 = vweird.f32 %v3479
    %vm4516 = vweird.f32 %v4509
    %vm4517 = vmor %vm4515, %vm4516
    %v4518 = vsel %vm4517, %v4509, %v4514
    %v4519 = vrsqrt.pop %v3480
    %v4520 = vmul.f32 %v4519, %v3480
    %v4521 = vmul.f32 %v4520, %v4519
    %v4522 = vmul.f32 0.5, %v4521
    %v4523 = vsub.f32 1.5, %v4522
    %v4524 = vmul.f32 %v4519, %v4523
    %vm4525 = vweird.f32 %v3480
    %vm4526 = vweird.f32 %v4519
    %vm4527 = vmor %vm4525, %vm4526
    %v4528 = vsel %vm4527, %v4519, %v4524
    %v4529 = vrsqrt.pop %v3481
    %v4530 = vmul.f32 %v4529, %v3481
    %v4531 = vmul.f32 %v4530, %v4529
    %v4532 = vmul.f32 0.5, %v4531
    %v4533 = vsub.f32 1.5, %v4532
    %v4534 = vmul.f32 %v4529, %v4533
    %vm4535 = vweird.f32 %v3481
    %vm4536 = vweird.f32 %v4529
    %vm4537 = vmor %vm4535, %vm4536
    %v4538 = vsel %vm4537, %v4529, %v4534
    %v4539 = vrsqrt.pop %v3482
    %v4540 = vmul.f32 %v4539, %v3482
    %v4541 = vmul.f32 %v4540, %v4539
    %v4542 = vmul.f32 0.5, %v4541
    %v4543 = vsub.f32 1.5, %v4542
    %v4544 = vmul.f32 %v4539, %v4543
    %vm4545 = vweird.f32 %v3482
    %vm4546 = vweird.f32 %v4539
    %vm4547 = vmor %vm4545, %vm4546
    %v4548 = vsel %vm4547, %v4539, %v4544
    %v4549 = vrsqrt.pop %v3483
    %v4550 = vmul.f32 %v4549, %v3483
    %v4551 = vmul.f32 %v4550, %v4549
    %v4552 = vmul.f32 0.5, %v4551
    %v4553 = vsub.f32 1.5, %v4552
    %v4554 = vmul.f32 %v4549, %v4553
    %vm4555 = vweird.f32 %v3483
    %vm4556 = vweird.f32 %v4549
    %vm4557 = vmor %vm4555, %vm4556
    %v4558 = vsel %vm4557, %v4549, %v4554
    %v4559 = vrsqrt.pop %v3484
    %v4560 = vmul.f32 %v4559, %v3484
    %v4561 = vmul.f32 %v4560, %v4559
    %v4562 = vmul.f32 0.5, %v4561
    %v4563 = vsub.f32 1.5, %v4562
    %v4564 = vmul.f32 %v4559, %v4563
    %vm4565 = vweird.f32 %v3484
    %vm4566 = vweird.f32 %v4559
    %vm4567 = vmor %vm4565, %vm4566
    %v4568 = vsel %vm4567, %v4559, %v4564
    %v4569 = vrsqrt.pop %v3485
    %v4570 = vmul.f32 %v4569, %v3485
    %v4571 = vmul.f32 %v4570, %v4569
    %v4572 = vmul.f32 0.5, %v4571
    %v4573 = vsub.f32 1.5, %v4572
    %v4574 = vmul.f32 %v4569, %v4573
    %vm4575 = vweird.f32 %v3485
    %vm4576 = vweird.f32 %v4569
    %vm4577 = vmor %vm4575, %vm4576
    %v4578 = vsel %vm4577, %v4569, %v4574
    %v4579 = vrsqrt.pop %v3486
    %v4580 = vmul.f32 %v4579, %v3486
    %v4581 = vmul.f32 %v4580, %v4579
    %v4582 = vmul.f32 0.5, %v4581
    %v4583 = vsub.f32 1.5, %v4582
    %v4584 = vmul.f32 %v4579, %v4583
    %vm4585 = vweird.f32 %v3486
    %vm4586 = vweird.f32 %v4579
    %vm4587 = vmor %vm4585, %vm4586
    %v4588 = vsel %vm4587, %v4579, %v4584
    %v4589 = vrsqrt.pop %v3487
    %v4590 = vmul.f32 %v4589, %v3487
    %v4591 = vmul.f32 %v4590, %v4589
    %v4592 = vmul.f32 0.5, %v4591
    %v4593 = vsub.f32 1.5, %v4592
    %v4594 = vmul.f32 %v4589, %v4593
    %vm4595 = vweird.f32 %v3487
    %vm4596 = vweird.f32 %v4589
    %vm4597 = vmor %vm4595, %vm4596
    %v4598 = vsel %vm4597, %v4589, %v4594
    %v4599 = vrsqrt.pop %v3488
    %v4600 = vmul.f32 %v4599, %v3488
    %v4601 = vmul.f32 %v4600, %v4599
    %v4602 = vmul.f32 0.5, %v4601
    %v4603 = vsub.f32 1.5, %v4602
    %v4604 = vmul.f32 %v4599, %v4603
    %vm4605 = vweird.f32 %v3488
    %vm4606 = vweird.f32 %v4599
    %vm4607 = vmor %vm4605, %vm4606
    %v4608 = vsel %vm4607, %v4599, %v4604
    %v4609 = vrsqrt.pop %v3489
    %v4610 = vmul.f32 %v4609, %v3489
    %v4611 = vmul.f32 %v4610, %v4609
    %v4612 = vmul.f32 0.5, %v4611
    %v4613 = vsub.f32 1.5, %v4612
    %v4614 = vmul.f32 %v4609, %v4613
    %vm4615 = vweird.f32 %v3489
    %vm4616 = vweird.f32 %v4609
    %vm4617 = vmor %vm4615, %vm4616
    %v4618 = vsel %vm4617, %v4609, %v4614
    %v4619 = vrsqrt.pop %v3490
    %v4620 = vmul.f32 %v4619, %v3490
    %v4621 = vmul.f32 %v4620, %v4619
    %v4622 = vmul.f32 0.5, %v4621
    %v4623 = vsub.f32 1.5, %v4622
    %v4624 = vmul.f32 %v4619, %v4623
    %vm4625 = vweird.f32 %v3490
    %vm4626 = vweird.f32 %v4619
    %vm4627 = vmor %vm4625, %vm4626
    %v4628 = vsel %vm4627, %v4619, %v4624
    %v4629 = vrsqrt.pop %v3491
    %v4630 = vmul.f32 %v4629, %v3491
    %v4631 = vmul.f32 %v4630, %v4629
    %v4632 = vmul.f32 0.5, %v4631
    %v4633 = vsub.f32 1.5, %v4632
    %v4634 = vmul.f32 %v4629, %v4633
    %vm4635 = vweird.f32 %v3491
    %vm4636 = vweird.f32 %v4629
    %vm4637 = vmor %vm4635, %vm4636
    %v4638 = vsel %vm4637, %v4629, %v4634
    %v4639 = vrsqrt.pop %v3492
    %v4640 = vmul.f32 %v4639, %v3492
    %v4641 = vmul.f32 %v4640, %v4639
    %v4642 = vmul.f32 0.5, %v4641
    %v4643 = vsub.f32 1.5, %v4642
    %v4644 = vmul.f32 %v4639, %v4643
    %vm4645 = vweird.f32 %v3492
    %vm4646 = vweird.f32 %v4639
    %vm4647 = vmor %vm4645, %vm4646
    %v4648 = vsel %vm4647, %v4639, %v4644
    %v4649 = vrsqrt.pop %v3493
    %v4650 = vmul.f32 %v4649, %v3493
    %v4651 = vmul.f32 %v4650, %v4649
    %v4652 = vmul.f32 0.5, %v4651
    %v4653 = vsub.f32 1.5, %v4652
    %v4654 = vmul.f32 %v4649, %v4653
    %vm4655 = vweird.f32 %v3493
    %vm4656 = vweird.f32 %v4649
    %vm4657 = vmor %vm4655, %vm4656
    %v4658 = vsel %vm4657, %v4649, %v4654
    %v4659 = vrsqrt.pop %v3494
    %v4660 = vmul.f32 %v4659, %v3494
    %v4661 = vmul.f32 %v4660, %v4659
    %v4662 = vmul.f32 0.5, %v4661
    %v4663 = vsub.f32 1.5, %v4662
    %v4664 = vmul.f32 %v4659, %v4663
    %vm4665 = vweird.f32 %v3494
    %vm4666 = vweird.f32 %v4659
    %vm4667 = vmor %vm4665, %vm4666
    %v4668 = vsel %vm4667, %v4659, %v4664
    %v4669 = vrsqrt.pop %v3495
    %v4670 = vmul.f32 %v4669, %v3495
    %v4671 = vmul.f32 %v4670, %v4669
    %v4672 = vmul.f32 0.5, %v4671
    %v4673 = vsub.f32 1.5, %v4672
    %v4674 = vmul.f32 %v4669, %v4673
    %vm4675 = vweird.f32 %v3495
    %vm4676 = vweird.f32 %v4669
    %vm4677 = vmor %vm4675, %vm4676
    %v4678 = vsel %vm4677, %v4669, %v4674
    %v4679 = vrsqrt.pop %v3496
    %v4680 = vmul.f32 %v4679, %v3496
    %v4681 = vmul.f32 %v4680, %v4679
    %v4682 = vmul.f32 0.5, %v4681
    %v4683 = vsub.f32 1.5, %v4682
    %v4684 = vmul.f32 %v4679, %v4683
    %vm4685 = vweird.f32 %v3496
    %vm4686 = vweird.f32 %v4679
    %vm4687 = vmor %vm4685, %vm4686
    %v4688 = vsel %vm4687, %v4679, %v4684
    %v4689 = vrsqrt.pop %v3497
    %v4690 = vmul.f32 %v4689, %v3497
    %v4691 = vmul.f32 %v4690, %v4689
    %v4692 = vmul.f32 0.5, %v4691
    %v4693 = vsub.f32 1.5, %v4692
    %v4694 = vmul.f32 %v4689, %v4693
    %vm4695 = vweird.f32 %v3497
    %vm4696 = vweird.f32 %v4689
    %vm4697 = vmor %vm4695, %vm4696
    %v4698 = vsel %vm4697, %v4689, %v4694
    %v4699 = vrsqrt.pop %v3498
    %v4700 = vmul.f32 %v4699, %v3498
    %v4701 = vmul.f32 %v4700, %v4699
    %v4702 = vmul.f32 0.5, %v4701
    %v4703 = vsub.f32 1.5, %v4702
    %v4704 = vmul.f32 %v4699, %v4703
    %vm4705 = vweird.f32 %v3498
    %vm4706 = vweird.f32 %v4699
    %vm4707 = vmor %vm4705, %vm4706
    %v4708 = vsel %vm4707, %v4699, %v4704
    %v4709 = vrsqrt.pop %v3499
    %v4710 = vmul.f32 %v4709, %v3499
    %v4711 = vmul.f32 %v4710, %v4709
    %v4712 = vmul.f32 0.5, %v4711
    %v4713 = vsub.f32 1.5, %v4712
    %v4714 = vmul.f32 %v4709, %v4713
    %vm4715 = vweird.f32 %v3499
    %vm4716 = vweird.f32 %v4709
    %vm4717 = vmor %vm4715, %vm4716
    %v4718 = vsel %vm4717, %v4709, %v4714
    %v4719 = vrsqrt.pop %v3500
    %v4720 = vmul.f32 %v4719, %v3500
    %v4721 = vmul.f32 %v4720, %v4719
    %v4722 = vmul.f32 0.5, %v4721
    %v4723 = vsub.f32 1.5, %v4722
    %v4724 = vmul.f32 %v4719, %v4723
    %vm4725 = vweird.f32 %v3500
    %vm4726 = vweird.f32 %v4719
    %vm4727 = vmor %vm4725, %vm4726
    %v4728 = vsel %vm4727, %v4719, %v4724
    %v4729 = vrsqrt.pop %v3501
    %v4730 = vmul.f32 %v4729, %v3501
    %v4731 = vmul.f32 %v4730, %v4729
    %v4732 = vmul.f32 0.5, %v4731
    %v4733 = vsub.f32 1.5, %v4732
    %v4734 = vmul.f32 %v4729, %v4733
    %vm4735 = vweird.f32 %v3501
    %vm4736 = vweird.f32 %v4729
    %vm4737 = vmor %vm4735, %vm4736
    %v4738 = vsel %vm4737, %v4729, %v4734
    %v4739 = vrsqrt.pop %v3502
    %v4740 = vmul.f32 %v4739, %v3502
    %v4741 = vmul.f32 %v4740, %v4739
    %v4742 = vmul.f32 0.5, %v4741
    %v4743 = vsub.f32 1.5, %v4742
    %v4744 = vmul.f32 %v4739, %v4743
    %vm4745 = vweird.f32 %v3502
    %vm4746 = vweird.f32 %v4739
    %vm4747 = vmor %vm4745, %vm4746
    %v4748 = vsel %vm4747, %v4739, %v4744
    %v4749 = vrsqrt.pop %v3503
    %v4750 = vmul.f32 %v4749, %v3503
    %v4751 = vmul.f32 %v4750, %v4749
    %v4752 = vmul.f32 0.5, %v4751
    %v4753 = vsub.f32 1.5, %v4752
    %v4754 = vmul.f32 %v4749, %v4753
    %vm4755 = vweird.f32 %v3503
    %vm4756 = vweird.f32 %v4749
    %vm4757 = vmor %vm4755, %vm4756
    %v4758 = vsel %vm4757, %v4749, %v4754
    %v4759 = vrsqrt.pop %v3504
    %v4760 = vmul.f32 %v4759, %v3504
    %v4761 = vmul.f32 %v4760, %v4759
    %v4762 = vmul.f32 0.5, %v4761
    %v4763 = vsub.f32 1.5, %v4762
    %v4764 = vmul.f32 %v4759, %v4763
    %vm4765 = vweird.f32 %v3504
    %vm4766 = vweird.f32 %v4759
    %vm4767 = vmor %vm4765, %vm4766
    %v4768 = vsel %vm4767, %v4759, %v4764
    %v4769 = vrsqrt.pop %v3505
    %v4770 = vmul.f32 %v4769, %v3505
    %v4771 = vmul.f32 %v4770, %v4769
    %v4772 = vmul.f32 0.5, %v4771
    %v4773 = vsub.f32 1.5, %v4772
    %v4774 = vmul.f32 %v4769, %v4773
    %vm4775 = vweird.f32 %v3505
    %vm4776 = vweird.f32 %v4769
    %vm4777 = vmor %vm4775, %vm4776
    %v4778 = vsel %vm4777, %v4769, %v4774
    %v4779 = vrsqrt.pop %v3506
    %v4780 = vmul.f32 %v4779, %v3506
    %v4781 = vmul.f32 %v4780, %v4779
    %v4782 = vmul.f32 0.5, %v4781
    %v4783 = vsub.f32 1.5, %v4782
    %v4784 = vmul.f32 %v4779, %v4783
    %vm4785 = vweird.f32 %v3506
    %vm4786 = vweird.f32 %v4779
    %vm4787 = vmor %vm4785, %vm4786
    %v4788 = vsel %vm4787, %v4779, %v4784
    %v4789 = vrsqrt.pop %v3507
    %v4790 = vmul.f32 %v4789, %v3507
    %v4791 = vmul.f32 %v4790, %v4789
    %v4792 = vmul.f32 0.5, %v4791
    %v4793 = vsub.f32 1.5, %v4792
    %v4794 = vmul.f32 %v4789, %v4793
    %vm4795 = vweird.f32 %v3507
    %vm4796 = vweird.f32 %v4789
    %vm4797 = vmor %vm4795, %vm4796
    %v4798 = vsel %vm4797, %v4789, %v4794
    %v4799 = vrsqrt.pop %v3508
    %v4800 = vmul.f32 %v4799, %v3508
    %v4801 = vmul.f32 %v4800, %v4799
    %v4802 = vmul.f32 0.5, %v4801
    %v4803 = vsub.f32 1.5, %v4802
    %v4804 = vmul.f32 %v4799, %v4803
    %vm4805 = vweird.f32 %v3508
    %vm4806 = vweird.f32 %v4799
    %vm4807 = vmor %vm4805, %vm4806
    %v4808 = vsel %vm4807, %v4799, %v4804
    %v4809 = vrsqrt.pop %v3509
    %v4810 = vmul.f32 %v4809, %v3509
    %v4811 = vmul.f32 %v4810, %v4809
    %v4812 = vmul.f32 0.5, %v4811
    %v4813 = vsub.f32 1.5, %v4812
    %v4814 = vmul.f32 %v4809, %v4813
    %vm4815 = vweird.f32 %v3509
    %vm4816 = vweird.f32 %v4809
    %vm4817 = vmor %vm4815, %vm4816
    %v4818 = vsel %vm4817, %v4809, %v4814
    %v4819 = vrsqrt.pop %v3510
    %v4820 = vmul.f32 %v4819, %v3510
    %v4821 = vmul.f32 %v4820, %v4819
    %v4822 = vmul.f32 0.5, %v4821
    %v4823 = vsub.f32 1.5, %v4822
    %v4824 = vmul.f32 %v4819, %v4823
    %vm4825 = vweird.f32 %v3510
    %vm4826 = vweird.f32 %v4819
    %vm4827 = vmor %vm4825, %vm4826
    %v4828 = vsel %vm4827, %v4819, %v4824
    %v4829 = vrsqrt.pop %v3511
    %v4830 = vmul.f32 %v4829, %v3511
    %v4831 = vmul.f32 %v4830, %v4829
    %v4832 = vmul.f32 0.5, %v4831
    %v4833 = vsub.f32 1.5, %v4832
    %v4834 = vmul.f32 %v4829, %v4833
    %vm4835 = vweird.f32 %v3511
    %vm4836 = vweird.f32 %v4829
    %vm4837 = vmor %vm4835, %vm4836
    %v4838 = vsel %vm4837, %v4829, %v4834
    %v4839 = vrsqrt.pop %v3512
    %v4840 = vmul.f32 %v4839, %v3512
    %v4841 = vmul.f32 %v4840, %v4839
    %v4842 = vmul.f32 0.5, %v4841
    %v4843 = vsub.f32 1.5, %v4842
    %v4844 = vmul.f32 %v4839, %v4843
    %vm4845 = vweird.f32 %v3512
    %vm4846 = vweird.f32 %v4839
    %vm4847 = vmor %vm4845, %vm4846
    %v4848 = vsel %vm4847, %v4839, %v4844
    %v4849 = vrsqrt.pop %v3513
    %v4850 = vmul.f32 %v4849, %v3513
    %v4851 = vmul.f32 %v4850, %v4849
    %v4852 = vmul.f32 0.5, %v4851
    %v4853 = vsub.f32 1.5, %v4852
    %v4854 = vmul.f32 %v4849, %v4853
    %vm4855 = vweird.f32 %v3513
    %vm4856 = vweird.f32 %v4849
    %vm4857 = vmor %vm4855, %vm4856
    %v4858 = vsel %vm4857, %v4849, %v4854
    %v4859 = vrsqrt.pop %v3514
    %v4860 = vmul.f32 %v4859, %v3514
    %v4861 = vmul.f32 %v4860, %v4859
    %v4862 = vmul.f32 0.5, %v4861
    %v4863 = vsub.f32 1.5, %v4862
    %v4864 = vmul.f32 %v4859, %v4863
    %vm4865 = vweird.f32 %v3514
    %vm4866 = vweird.f32 %v4859
    %vm4867 = vmor %vm4865, %vm4866
    %v4868 = vsel %vm4867, %v4859, %v4864
    %v4869 = vrsqrt.pop %v3515
    %v4870 = vmul.f32 %v4869, %v3515
    %v4871 = vmul.f32 %v4870, %v4869
    %v4872 = vmul.f32 0.5, %v4871
    %v4873 = vsub.f32 1.5, %v4872
    %v4874 = vmul.f32 %v4869, %v4873
    %vm4875 = vweird.f32 %v3515
    %vm4876 = vweird.f32 %v4869
    %vm4877 = vmor %vm4875, %vm4876
    %v4878 = vsel %vm4877, %v4869, %v4874
    %v4879 = vrsqrt.pop %v3516
    %v4880 = vmul.f32 %v4879, %v3516
    %v4881 = vmul.f32 %v4880, %v4879
    %v4882 = vmul.f32 0.5, %v4881
    %v4883 = vsub.f32 1.5, %v4882
    %v4884 = vmul.f32 %v4879, %v4883
    %vm4885 = vweird.f32 %v3516
    %vm4886 = vweird.f32 %v4879
    %vm4887 = vmor %vm4885, %vm4886
    %v4888 = vsel %vm4887, %v4879, %v4884
    %v4889 = vrsqrt.pop %v3517
    %v4890 = vmul.f32 %v4889, %v3517
    %v4891 = vmul.f32 %v4890, %v4889
    %v4892 = vmul.f32 0.5, %v4891
    %v4893 = vsub.f32 1.5, %v4892
    %v4894 = vmul.f32 %v4889, %v4893
    %vm4895 = vweird.f32 %v3517
    %vm4896 = vweird.f32 %v4889
    %vm4897 = vmor %vm4895, %vm4896
    %v4898 = vsel %vm4897, %v4889, %v4894
    %v4899 = vrsqrt.pop %v3518
    %v4900 = vmul.f32 %v4899, %v3518
    %v4901 = vmul.f32 %v4900, %v4899
    %v4902 = vmul.f32 0.5, %v4901
    %v4903 = vsub.f32 1.5, %v4902
    %v4904 = vmul.f32 %v4899, %v4903
    %vm4905 = vweird.f32 %v3518
    %vm4906 = vweird.f32 %v4899
    %vm4907 = vmor %vm4905, %vm4906
    %v4908 = vsel %vm4907, %v4899, %v4904
    %v4909 = vrsqrt.pop %v3519
    %v4910 = vmul.f32 %v4909, %v3519
    %v4911 = vmul.f32 %v4910, %v4909
    %v4912 = vmul.f32 0.5, %v4911
    %v4913 = vsub.f32 1.5, %v4912
    %v4914 = vmul.f32 %v4909, %v4913
    %vm4915 = vweird.f32 %v3519
    %vm4916 = vweird.f32 %v4909
    %vm4917 = vmor %vm4915, %vm4916
    %v4918 = vsel %vm4917, %v4909, %v4914
    %v4919 = vrsqrt.pop %v3520
    %v4920 = vmul.f32 %v4919, %v3520
    %v4921 = vmul.f32 %v4920, %v4919
    %v4922 = vmul.f32 0.5, %v4921
    %v4923 = vsub.f32 1.5, %v4922
    %v4924 = vmul.f32 %v4919, %v4923
    %vm4925 = vweird.f32 %v3520
    %vm4926 = vweird.f32 %v4919
    %vm4927 = vmor %vm4925, %vm4926
    %v4928 = vsel %vm4927, %v4919, %v4924
    %v4929 = vrsqrt.pop %v3521
    %v4930 = vmul.f32 %v4929, %v3521
    %v4931 = vmul.f32 %v4930, %v4929
    %v4932 = vmul.f32 0.5, %v4931
    %v4933 = vsub.f32 1.5, %v4932
    %v4934 = vmul.f32 %v4929, %v4933
    %vm4935 = vweird.f32 %v3521
    %vm4936 = vweird.f32 %v4929
    %vm4937 = vmor %vm4935, %vm4936
    %v4938 = vsel %vm4937, %v4929, %v4934
    %v4939 = vrsqrt.pop %v3522
    %v4940 = vmul.f32 %v4939, %v3522
    %v4941 = vmul.f32 %v4940, %v4939
    %v4942 = vmul.f32 0.5, %v4941
    %v4943 = vsub.f32 1.5, %v4942
    %v4944 = vmul.f32 %v4939, %v4943
    %vm4945 = vweird.f32 %v3522
    %vm4946 = vweird.f32 %v4939
    %vm4947 = vmor %vm4945, %vm4946
    %v4948 = vsel %vm4947, %v4939, %v4944
    %v4949 = vrsqrt.pop %v3523
    %v4950 = vmul.f32 %v4949, %v3523
    %v4951 = vmul.f32 %v4950, %v4949
    %v4952 = vmul.f32 0.5, %v4951
    %v4953 = vsub.f32 1.5, %v4952
    %v4954 = vmul.f32 %v4949, %v4953
    %vm4955 = vweird.f32 %v3523
    %vm4956 = vweird.f32 %v4949
    %vm4957 = vmor %vm4955, %vm4956
    %v4958 = vsel %vm4957, %v4949, %v4954
    %v4959 = vrsqrt.pop %v3524
    %v4960 = vmul.f32 %v4959, %v3524
    %v4961 = vmul.f32 %v4960, %v4959
    %v4962 = vmul.f32 0.5, %v4961
    %v4963 = vsub.f32 1.5, %v4962
    %v4964 = vmul.f32 %v4959, %v4963
    %vm4965 = vweird.f32 %v3524
    %vm4966 = vweird.f32 %v4959
    %vm4967 = vmor %vm4965, %vm4966
    %v4968 = vsel %vm4967, %v4959, %v4964
    %v4969 = vrsqrt.pop %v3525
    %v4970 = vmul.f32 %v4969, %v3525
    %v4971 = vmul.f32 %v4970, %v4969
    %v4972 = vmul.f32 0.5, %v4971
    %v4973 = vsub.f32 1.5, %v4972
    %v4974 = vmul.f32 %v4969, %v4973
    %vm4975 = vweird.f32 %v3525
    %vm4976 = vweird.f32 %v4969
    %vm4977 = vmor %vm4975, %vm4976
    %v4978 = vsel %vm4977, %v4969, %v4974
    %v4979 = vrsqrt.pop %v3526
    %v4980 = vmul.f32 %v4979, %v3526
    %v4981 = vmul.f32 %v4980, %v4979
    %v4982 = vmul.f32 0.5, %v4981
    %v4983 = vsub.f32 1.5, %v4982
    %v4984 = vmul.f32 %v4979, %v4983
    %vm4985 = vweird.f32 %v3526
    %vm4986 = vweird.f32 %v4979
    %vm4987 = vmor %vm4985, %vm4986
    %v4988 = vsel %vm4987, %v4979, %v4984
    %v4989 = vrsqrt.pop %v3527
    %v4990 = vmul.f32 %v4989, %v3527
    %v4991 = vmul.f32 %v4990, %v4989
    %v4992 = vmul.f32 0.5, %v4991
    %v4993 = vsub.f32 1.5, %v4992
    %v4994 = vmul.f32 %v4989, %v4993
    %vm4995 = vweird.f32 %v3527
    %vm4996 = vweird.f32 %v4989
    %vm4997 = vmor %vm4995, %vm4996
    %v4998 = vsel %vm4997, %v4989, %v4994
    %v4999 = vrsqrt.pop %v3528
    %v5000 = vmul.f32 %v4999, %v3528
    %v5001 = vmul.f32 %v5000, %v4999
    %v5002 = vmul.f32 0.5, %v5001
    %v5003 = vsub.f32 1.5, %v5002
    %v5004 = vmul.f32 %v4999, %v5003
    %vm5005 = vweird.f32 %v3528
    %vm5006 = vweird.f32 %v4999
    %vm5007 = vmor %vm5005, %vm5006
    %v5008 = vsel %vm5007, %v4999, %v5004
    %v5009 = vrsqrt.pop %v3529
    %v5010 = vmul.f32 %v5009, %v3529
    %v5011 = vmul.f32 %v5010, %v5009
    %v5012 = vmul.f32 0.5, %v5011
    %v5013 = vsub.f32 1.5, %v5012
    %v5014 = vmul.f32 %v5009, %v5013
    %vm5015 = vweird.f32 %v3529
    %vm5016 = vweird.f32 %v5009
    %vm5017 = vmor %vm5015, %vm5016
    %v5018 = vsel %vm5017, %v5009, %v5014
    %v5019 = vrsqrt.pop %v3530
    %v5020 = vmul.f32 %v5019, %v3530
    %v5021 = vmul.f32 %v5020, %v5019
    %v5022 = vmul.f32 0.5, %v5021
    %v5023 = vsub.f32 1.5, %v5022
    %v5024 = vmul.f32 %v5019, %v5023
    %vm5025 = vweird.f32 %v3530
    %vm5026 = vweird.f32 %v5019
    %vm5027 = vmor %vm5025, %vm5026
    %v5028 = vsel %vm5027, %v5019, %v5024
    %v5029 = vrsqrt.pop %v3531
    %v5030 = vmul.f32 %v5029, %v3531
    %v5031 = vmul.f32 %v5030, %v5029
    %v5032 = vmul.f32 0.5, %v5031
    %v5033 = vsub.f32 1.5, %v5032
    %v5034 = vmul.f32 %v5029, %v5033
    %vm5035 = vweird.f32 %v3531
    %vm5036 = vweird.f32 %v5029
    %vm5037 = vmor %vm5035, %vm5036
    %v5038 = vsel %vm5037, %v5029, %v5034
    %v5039 = vrsqrt.pop %v3532
    %v5040 = vmul.f32 %v5039, %v3532
    %v5041 = vmul.f32 %v5040, %v5039
    %v5042 = vmul.f32 0.5, %v5041
    %v5043 = vsub.f32 1.5, %v5042
    %v5044 = vmul.f32 %v5039, %v5043
    %vm5045 = vweird.f32 %v3532
    %vm5046 = vweird.f32 %v5039
    %vm5047 = vmor %vm5045, %vm5046
    %v5048 = vsel %vm5047, %v5039, %v5044
    %v5049 = vrsqrt.pop %v3533
    %v5050 = vmul.f32 %v5049, %v3533
    %v5051 = vmul.f32 %v5050, %v5049
    %v5052 = vmul.f32 0.5, %v5051
    %v5053 = vsub.f32 1.5, %v5052
    %v5054 = vmul.f32 %v5049, %v5053
    %vm5055 = vweird.f32 %v3533
    %vm5056 = vweird.f32 %v5049
    %vm5057 = vmor %vm5055, %vm5056
    %v5058 = vsel %vm5057, %v5049, %v5054
    %v5059 = vrsqrt.pop %v3534
    %v5060 = vmul.f32 %v5059, %v3534
    %v5061 = vmul.f32 %v5060, %v5059
    %v5062 = vmul.f32 0.5, %v5061
    %v5063 = vsub.f32 1.5, %v5062
    %v5064 = vmul.f32 %v5059, %v5063
    %vm5065 = vweird.f32 %v3534
    %vm5066 = vweird.f32 %v5059
    %vm5067 = vmor %vm5065, %vm5066
    %v5068 = vsel %vm5067, %v5059, %v5064
    %v5069 = vrsqrt.pop %v3535
    %v5070 = vmul.f32 %v5069, %v3535
    %v5071 = vmul.f32 %v5070, %v5069
    %v5072 = vmul.f32 0.5, %v5071
    %v5073 = vsub.f32 1.5, %v5072
    %v5074 = vmul.f32 %v5069, %v5073
    %vm5075 = vweird.f32 %v3535
    %vm5076 = vweird.f32 %v5069
    %vm5077 = vmor %vm5075, %vm5076
    %v5078 = vsel %vm5077, %v5069, %v5074
    %v5079 = vrsqrt.pop %v3536
    %v5080 = vmul.f32 %v5079, %v3536
    %v5081 = vmul.f32 %v5080, %v5079
    %v5082 = vmul.f32 0.5, %v5081
    %v5083 = vsub.f32 1.5, %v5082
    %v5084 = vmul.f32 %v5079, %v5083
    %vm5085 = vweird.f32 %v3536
    %vm5086 = vweird.f32 %v5079
    %vm5087 = vmor %vm5085, %vm5086
    %v5088 = vsel %vm5087, %v5079, %v5084
    %v5089 = vrsqrt.pop %v3537
    %v5090 = vmul.f32 %v5089, %v3537
    %v5091 = vmul.f32 %v5090, %v5089
    %v5092 = vmul.f32 0.5, %v5091
    %v5093 = vsub.f32 1.5, %v5092
    %v5094 = vmul.f32 %v5089, %v5093
    %vm5095 = vweird.f32 %v3537
    %vm5096 = vweird.f32 %v5089
    %vm5097 = vmor %vm5095, %vm5096
    %v5098 = vsel %vm5097, %v5089, %v5094
    %v5099 = vrsqrt.pop %v3538
    %v5100 = vmul.f32 %v5099, %v3538
    %v5101 = vmul.f32 %v5100, %v5099
    %v5102 = vmul.f32 0.5, %v5101
    %v5103 = vsub.f32 1.5, %v5102
    %v5104 = vmul.f32 %v5099, %v5103
    %vm5105 = vweird.f32 %v3538
    %vm5106 = vweird.f32 %v5099
    %vm5107 = vmor %vm5105, %vm5106
    %v5108 = vsel %vm5107, %v5099, %v5104
    %v5109 = vrsqrt.pop %v3539
    %v5110 = vmul.f32 %v5109, %v3539
    %v5111 = vmul.f32 %v5110, %v5109
    %v5112 = vmul.f32 0.5, %v5111
    %v5113 = vsub.f32 1.5, %v5112
    %v5114 = vmul.f32 %v5109, %v5113
    %vm5115 = vweird.f32 %v3539
    %vm5116 = vweird.f32 %v5109
    %vm5117 = vmor %vm5115, %vm5116
    %v5118 = vsel %vm5117, %v5109, %v5114
    %v5119 = vrsqrt.pop %v3540
    %v5120 = vmul.f32 %v5119, %v3540
    %v5121 = vmul.f32 %v5120, %v5119
    %v5122 = vmul.f32 0.5, %v5121
    %v5123 = vsub.f32 1.5, %v5122
    %v5124 = vmul.f32 %v5119, %v5123
    %vm5125 = vweird.f32 %v3540
    %vm5126 = vweird.f32 %v5119
    %vm5127 = vmor %vm5125, %vm5126
    %v5128 = vsel %vm5127, %v5119, %v5124
    %v5129 = vrsqrt.pop %v3541
    %v5130 = vmul.f32 %v5129, %v3541
    %v5131 = vmul.f32 %v5130, %v5129
    %v5132 = vmul.f32 0.5, %v5131
    %v5133 = vsub.f32 1.5, %v5132
    %v5134 = vmul.f32 %v5129, %v5133
    %vm5135 = vweird.f32 %v3541
    %vm5136 = vweird.f32 %v5129
    %vm5137 = vmor %vm5135, %vm5136
    %v5138 = vsel %vm5137, %v5129, %v5134
    %v5139 = vrsqrt.pop %v3542
    %v5140 = vmul.f32 %v5139, %v3542
    %v5141 = vmul.f32 %v5140, %v5139
    %v5142 = vmul.f32 0.5, %v5141
    %v5143 = vsub.f32 1.5, %v5142
    %v5144 = vmul.f32 %v5139, %v5143
    %vm5145 = vweird.f32 %v3542
    %vm5146 = vweird.f32 %v5139
    %vm5147 = vmor %vm5145, %vm5146
    %v5148 = vsel %vm5147, %v5139, %v5144
    %v5149 = vrsqrt.pop %v3543
    %v5150 = vmul.f32 %v5149, %v3543
    %v5151 = vmul.f32 %v5150, %v5149
    %v5152 = vmul.f32 0.5, %v5151
    %v5153 = vsub.f32 1.5, %v5152
    %v5154 = vmul.f32 %v5149, %v5153
    %vm5155 = vweird.f32 %v3543
    %vm5156 = vweird.f32 %v5149
    %vm5157 = vmor %vm5155, %vm5156
    %v5158 = vsel %vm5157, %v5149, %v5154
    %v5159 = vrsqrt.pop %v3544
    %v5160 = vmul.f32 %v5159, %v3544
    %v5161 = vmul.f32 %v5160, %v5159
    %v5162 = vmul.f32 0.5, %v5161
    %v5163 = vsub.f32 1.5, %v5162
    %v5164 = vmul.f32 %v5159, %v5163
    %vm5165 = vweird.f32 %v3544
    %vm5166 = vweird.f32 %v5159
    %vm5167 = vmor %vm5165, %vm5166
    %v5168 = vsel %vm5167, %v5159, %v5164
    %v5169 = vrsqrt.pop %v3545
    %v5170 = vmul.f32 %v5169, %v3545
    %v5171 = vmul.f32 %v5170, %v5169
    %v5172 = vmul.f32 0.5, %v5171
    %v5173 = vsub.f32 1.5, %v5172
    %v5174 = vmul.f32 %v5169, %v5173
    %vm5175 = vweird.f32 %v3545
    %vm5176 = vweird.f32 %v5169
    %vm5177 = vmor %vm5175, %vm5176
    %v5178 = vsel %vm5177, %v5169, %v5174
    %v5179 = vrsqrt.pop %v3546
    %v5180 = vmul.f32 %v5179, %v3546
    %v5181 = vmul.f32 %v5180, %v5179
    %v5182 = vmul.f32 0.5, %v5181
    %v5183 = vsub.f32 1.5, %v5182
    %v5184 = vmul.f32 %v5179, %v5183
    %vm5185 = vweird.f32 %v3546
    %vm5186 = vweird.f32 %v5179
    %vm5187 = vmor %vm5185, %vm5186
    %v5188 = vsel %vm5187, %v5179, %v5184
    %v5189 = vrsqrt.pop %v3547
    %v5190 = vmul.f32 %v5189, %v3547
    %v5191 = vmul.f32 %v5190, %v5189
    %v5192 = vmul.f32 0.5, %v5191
    %v5193 = vsub.f32 1.5, %v5192
    %v5194 = vmul.f32 %v5189, %v5193
    %vm5195 = vweird.f32 %v3547
    %vm5196 = vweird.f32 %v5189
    %vm5197 = vmor %vm5195, %vm5196
    %v5198 = vsel %vm5197, %v5189, %v5194
    %v5199 = vrsqrt.pop %v3548
    %v5200 = vmul.f32 %v5199, %v3548
    %v5201 = vmul.f32 %v5200, %v5199
    %v5202 = vmul.f32 0.5, %v5201
    %v5203 = vsub.f32 1.5, %v5202
    %v5204 = vmul.f32 %v5199, %v5203
    %vm5205 = vweird.f32 %v3548
    %vm5206 = vweird.f32 %v5199
    %vm5207 = vmor %vm5205, %vm5206
    %v5208 = vsel %vm5207, %v5199, %v5204
    %v5209 = vrsqrt.pop %v3549
    %v5210 = vmul.f32 %v5209, %v3549
    %v5211 = vmul.f32 %v5210, %v5209
    %v5212 = vmul.f32 0.5, %v5211
    %v5213 = vsub.f32 1.5, %v5212
    %v5214 = vmul.f32 %v5209, %v5213
    %vm5215 = vweird.f32 %v3549
    %vm5216 = vweird.f32 %v5209
    %vm5217 = vmor %vm5215, %vm5216
    %v5218 = vsel %vm5217, %v5209, %v5214
    %v5219 = vrsqrt.pop %v3550
    %v5220 = vmul.f32 %v5219, %v3550
    %v5221 = vmul.f32 %v5220, %v5219
    %v5222 = vmul.f32 0.5, %v5221
    %v5223 = vsub.f32 1.5, %v5222
    %v5224 = vmul.f32 %v5219, %v5223
    %vm5225 = vweird.f32 %v3550
    %vm5226 = vweird.f32 %v5219
    %vm5227 = vmor %vm5225, %vm5226
    %v5228 = vsel %vm5227, %v5219, %v5224
    %v5229 = vrsqrt.pop %v3551
    %v5230 = vmul.f32 %v5229, %v3551
    %v5231 = vmul.f32 %v5230, %v5229
    %v5232 = vmul.f32 0.5, %v5231
    %v5233 = vsub.f32 1.5, %v5232
    %v5234 = vmul.f32 %v5229, %v5233
    %vm5235 = vweird.f32 %v3551
    %vm5236 = vweird.f32 %v5229
    %vm5237 = vmor %vm5235, %vm5236
    %v5238 = vsel %vm5237, %v5229, %v5234
    %v5239 = vrsqrt.pop %v3552
    %v5240 = vmul.f32 %v5239, %v3552
    %v5241 = vmul.f32 %v5240, %v5239
    %v5242 = vmul.f32 0.5, %v5241
    %v5243 = vsub.f32 1.5, %v5242
    %v5244 = vmul.f32 %v5239, %v5243
    %vm5245 = vweird.f32 %v3552
    %vm5246 = vweird.f32 %v5239
    %vm5247 = vmor %vm5245, %vm5246
    %v5248 = vsel %vm5247, %v5239, %v5244
    %v5249 = vrsqrt.pop %v3553
    %v5250 = vmul.f32 %v5249, %v3553
    %v5251 = vmul.f32 %v5250, %v5249
    %v5252 = vmul.f32 0.5, %v5251
    %v5253 = vsub.f32 1.5, %v5252
    %v5254 = vmul.f32 %v5249, %v5253
    %vm5255 = vweird.f32 %v3553
    %vm5256 = vweird.f32 %v5249
    %vm5257 = vmor %vm5255, %vm5256
    %v5258 = vsel %vm5257, %v5249, %v5254
    %v5259 = vrsqrt.pop %v3554
    %v5260 = vmul.f32 %v5259, %v3554
    %v5261 = vmul.f32 %v5260, %v5259
    %v5262 = vmul.f32 0.5, %v5261
    %v5263 = vsub.f32 1.5, %v5262
    %v5264 = vmul.f32 %v5259, %v5263
    %vm5265 = vweird.f32 %v3554
    %vm5266 = vweird.f32 %v5259
    %vm5267 = vmor %vm5265, %vm5266
    %v5268 = vsel %vm5267, %v5259, %v5264
    %v5269 = vrsqrt.pop %v3555
    %v5270 = vmul.f32 %v5269, %v3555
    %v5271 = vmul.f32 %v5270, %v5269
    %v5272 = vmul.f32 0.5, %v5271
    %v5273 = vsub.f32 1.5, %v5272
    %v5274 = vmul.f32 %v5269, %v5273
    %vm5275 = vweird.f32 %v3555
    %vm5276 = vweird.f32 %v5269
    %vm5277 = vmor %vm5275, %vm5276
    %v5278 = vsel %vm5277, %v5269, %v5274
    %v5279 = vrsqrt.pop %v3556
    %v5280 = vmul.f32 %v5279, %v3556
    %v5281 = vmul.f32 %v5280, %v5279
    %v5282 = vmul.f32 0.5, %v5281
    %v5283 = vsub.f32 1.5, %v5282
    %v5284 = vmul.f32 %v5279, %v5283
    %vm5285 = vweird.f32 %v3556
    %vm5286 = vweird.f32 %v5279
    %vm5287 = vmor %vm5285, %vm5286
    %v5288 = vsel %vm5287, %v5279, %v5284
    %v5289 = vrsqrt.pop %v3557
    %v5290 = vmul.f32 %v5289, %v3557
    %v5291 = vmul.f32 %v5290, %v5289
    %v5292 = vmul.f32 0.5, %v5291
    %v5293 = vsub.f32 1.5, %v5292
    %v5294 = vmul.f32 %v5289, %v5293
    %vm5295 = vweird.f32 %v3557
    %vm5296 = vweird.f32 %v5289
    %vm5297 = vmor %vm5295, %vm5296
    %v5298 = vsel %vm5297, %v5289, %v5294
    %v5299 = vrsqrt.pop %v3558
    %v5300 = vmul.f32 %v5299, %v3558
    %v5301 = vmul.f32 %v5300, %v5299
    %v5302 = vmul.f32 0.5, %v5301
    %v5303 = vsub.f32 1.5, %v5302
    %v5304 = vmul.f32 %v5299, %v5303
    %vm5305 = vweird.f32 %v3558
    %vm5306 = vweird.f32 %v5299
    %vm5307 = vmor %vm5305, %vm5306
    %v5308 = vsel %vm5307, %v5299, %v5304
    %v5309 = vrsqrt.pop %v3559
    %v5310 = vmul.f32 %v5309, %v3559
    %v5311 = vmul.f32 %v5310, %v5309
    %v5312 = vmul.f32 0.5, %v5311
    %v5313 = vsub.f32 1.5, %v5312
    %v5314 = vmul.f32 %v5309, %v5313
    %vm5315 = vweird.f32 %v3559
    %vm5316 = vweird.f32 %v5309
    %vm5317 = vmor %vm5315, %vm5316
    %v5318 = vsel %vm5317, %v5309, %v5314
    %v5319 = vrsqrt.pop %v3560
    %v5320 = vmul.f32 %v5319, %v3560
    %v5321 = vmul.f32 %v5320, %v5319
    %v5322 = vmul.f32 0.5, %v5321
    %v5323 = vsub.f32 1.5, %v5322
    %v5324 = vmul.f32 %v5319, %v5323
    %vm5325 = vweird.f32 %v3560
    %vm5326 = vweird.f32 %v5319
    %vm5327 = vmor %vm5325, %vm5326
    %v5328 = vsel %vm5327, %v5319, %v5324
    %v5329 = vrsqrt.pop %v3561
    %v5330 = vmul.f32 %v5329, %v3561
    %v5331 = vmul.f32 %v5330, %v5329
    %v5332 = vmul.f32 0.5, %v5331
    %v5333 = vsub.f32 1.5, %v5332
    %v5334 = vmul.f32 %v5329, %v5333
    %vm5335 = vweird.f32 %v3561
    %vm5336 = vweird.f32 %v5329
    %vm5337 = vmor %vm5335, %vm5336
    %v5338 = vsel %vm5337, %v5329, %v5334
    %v5339 = vrsqrt.pop %v3562
    %v5340 = vmul.f32 %v5339, %v3562
    %v5341 = vmul.f32 %v5340, %v5339
    %v5342 = vmul.f32 0.5, %v5341
    %v5343 = vsub.f32 1.5, %v5342
    %v5344 = vmul.f32 %v5339, %v5343
    %vm5345 = vweird.f32 %v3562
    %vm5346 = vweird.f32 %v5339
    %vm5347 = vmor %vm5345, %vm5346
    %v5348 = vsel %vm5347, %v5339, %v5344
    %v5349 = vrsqrt.pop %v3563
    %v5350 = vmul.f32 %v5349, %v3563
    %v5351 = vmul.f32 %v5350, %v5349
    %v5352 = vmul.f32 0.5, %v5351
    %v5353 = vsub.f32 1.5, %v5352
    %v5354 = vmul.f32 %v5349, %v5353
    %vm5355 = vweird.f32 %v3563
    %vm5356 = vweird.f32 %v5349
    %vm5357 = vmor %vm5355, %vm5356
    %v5358 = vsel %vm5357, %v5349, %v5354
    %v5359 = vrsqrt.pop %v3564
    %v5360 = vmul.f32 %v5359, %v3564
    %v5361 = vmul.f32 %v5360, %v5359
    %v5362 = vmul.f32 0.5, %v5361
    %v5363 = vsub.f32 1.5, %v5362
    %v5364 = vmul.f32 %v5359, %v5363
    %vm5365 = vweird.f32 %v3564
    %vm5366 = vweird.f32 %v5359
    %vm5367 = vmor %vm5365, %vm5366
    %v5368 = vsel %vm5367, %v5359, %v5364
    %v5369 = vrsqrt.pop %v3565
    %v5370 = vmul.f32 %v5369, %v3565
    %v5371 = vmul.f32 %v5370, %v5369
    %v5372 = vmul.f32 0.5, %v5371
    %v5373 = vsub.f32 1.5, %v5372
    %v5374 = vmul.f32 %v5369, %v5373
    %vm5375 = vweird.f32 %v3565
    %vm5376 = vweird.f32 %v5369
    %vm5377 = vmor %vm5375, %vm5376
    %v5378 = vsel %vm5377, %v5369, %v5374
    %v5379 = vrsqrt.pop %v3566
    %v5380 = vmul.f32 %v5379, %v3566
    %v5381 = vmul.f32 %v5380, %v5379
    %v5382 = vmul.f32 0.5, %v5381
    %v5383 = vsub.f32 1.5, %v5382
    %v5384 = vmul.f32 %v5379, %v5383
    %vm5385 = vweird.f32 %v3566
    %vm5386 = vweird.f32 %v5379
    %vm5387 = vmor %vm5385, %vm5386
    %v5388 = vsel %vm5387, %v5379, %v5384
    %v5389 = vrsqrt.pop %v3567
    %v5390 = vmul.f32 %v5389, %v3567
    %v5391 = vmul.f32 %v5390, %v5389
    %v5392 = vmul.f32 0.5, %v5391
    %v5393 = vsub.f32 1.5, %v5392
    %v5394 = vmul.f32 %v5389, %v5393
    %vm5395 = vweird.f32 %v3567
    %vm5396 = vweird.f32 %v5389
    %vm5397 = vmor %vm5395, %vm5396
    %v5398 = vsel %vm5397, %v5389, %v5394
    %v5399 = vrsqrt.pop %v3568
    %v5400 = vmul.f32 %v5399, %v3568
    %v5401 = vmul.f32 %v5400, %v5399
    %v5402 = vmul.f32 0.5, %v5401
    %v5403 = vsub.f32 1.5, %v5402
    %v5404 = vmul.f32 %v5399, %v5403
    %vm5405 = vweird.f32 %v3568
    %vm5406 = vweird.f32 %v5399
    %vm5407 = vmor %vm5405, %vm5406
    %v5408 = vsel %vm5407, %v5399, %v5404
    %v5409 = vrsqrt.pop %v3569
    %v5410 = vmul.f32 %v5409, %v3569
    %v5411 = vmul.f32 %v5410, %v5409
    %v5412 = vmul.f32 0.5, %v5411
    %v5413 = vsub.f32 1.5, %v5412
    %v5414 = vmul.f32 %v5409, %v5413
    %vm5415 = vweird.f32 %v3569
    %vm5416 = vweird.f32 %v5409
    %vm5417 = vmor %vm5415, %vm5416
    %v5418 = vsel %vm5417, %v5409, %v5414
    %v5419 = vrsqrt.pop %v3570
    %v5420 = vmul.f32 %v5419, %v3570
    %v5421 = vmul.f32 %v5420, %v5419
    %v5422 = vmul.f32 0.5, %v5421
    %v5423 = vsub.f32 1.5, %v5422
    %v5424 = vmul.f32 %v5419, %v5423
    %vm5425 = vweird.f32 %v3570
    %vm5426 = vweird.f32 %v5419
    %vm5427 = vmor %vm5425, %vm5426
    %v5428 = vsel %vm5427, %v5419, %v5424
    %v5429 = vrsqrt.pop %v3571
    %v5430 = vmul.f32 %v5429, %v3571
    %v5431 = vmul.f32 %v5430, %v5429
    %v5432 = vmul.f32 0.5, %v5431
    %v5433 = vsub.f32 1.5, %v5432
    %v5434 = vmul.f32 %v5429, %v5433
    %vm5435 = vweird.f32 %v3571
    %vm5436 = vweird.f32 %v5429
    %vm5437 = vmor %vm5435, %vm5436
    %v5438 = vsel %vm5437, %v5429, %v5434
    %v5439 = vrsqrt.pop %v3572
    %v5440 = vmul.f32 %v5439, %v3572
    %v5441 = vmul.f32 %v5440, %v5439
    %v5442 = vmul.f32 0.5, %v5441
    %v5443 = vsub.f32 1.5, %v5442
    %v5444 = vmul.f32 %v5439, %v5443
    %vm5445 = vweird.f32 %v3572
    %vm5446 = vweird.f32 %v5439
    %vm5447 = vmor %vm5445, %vm5446
    %v5448 = vsel %vm5447, %v5439, %v5444
    %v5449 = vrsqrt.pop %v3573
    %v5450 = vmul.f32 %v5449, %v3573
    %v5451 = vmul.f32 %v5450, %v5449
    %v5452 = vmul.f32 0.5, %v5451
    %v5453 = vsub.f32 1.5, %v5452
    %v5454 = vmul.f32 %v5449, %v5453
    %vm5455 = vweird.f32 %v3573
    %vm5456 = vweird.f32 %v5449
    %vm5457 = vmor %vm5455, %vm5456
    %v5458 = vsel %vm5457, %v5449, %v5454
    %v5459 = vrsqrt.pop %v3574
    %v5460 = vmul.f32 %v5459, %v3574
    %v5461 = vmul.f32 %v5460, %v5459
    %v5462 = vmul.f32 0.5, %v5461
    %v5463 = vsub.f32 1.5, %v5462
    %v5464 = vmul.f32 %v5459, %v5463
    %vm5465 = vweird.f32 %v3574
    %vm5466 = vweird.f32 %v5459
    %vm5467 = vmor %vm5465, %vm5466
    %v5468 = vsel %vm5467, %v5459, %v5464
    %v5469 = vrsqrt.pop %v3575
    %v5470 = vmul.f32 %v5469, %v3575
    %v5471 = vmul.f32 %v5470, %v5469
    %v5472 = vmul.f32 0.5, %v5471
    %v5473 = vsub.f32 1.5, %v5472
    %v5474 = vmul.f32 %v5469, %v5473
    %vm5475 = vweird.f32 %v3575
    %vm5476 = vweird.f32 %v5469
    %vm5477 = vmor %vm5475, %vm5476
    %v5478 = vsel %vm5477, %v5469, %v5474
    %v5479 = vrsqrt.pop %v3576
    %v5480 = vmul.f32 %v5479, %v3576
    %v5481 = vmul.f32 %v5480, %v5479
    %v5482 = vmul.f32 0.5, %v5481
    %v5483 = vsub.f32 1.5, %v5482
    %v5484 = vmul.f32 %v5479, %v5483
    %vm5485 = vweird.f32 %v3576
    %vm5486 = vweird.f32 %v5479
    %vm5487 = vmor %vm5485, %vm5486
    %v5488 = vsel %vm5487, %v5479, %v5484
    %v5489 = vrsqrt.pop %v3577
    %v5490 = vmul.f32 %v5489, %v3577
    %v5491 = vmul.f32 %v5490, %v5489
    %v5492 = vmul.f32 0.5, %v5491
    %v5493 = vsub.f32 1.5, %v5492
    %v5494 = vmul.f32 %v5489, %v5493
    %vm5495 = vweird.f32 %v3577
    %vm5496 = vweird.f32 %v5489
    %vm5497 = vmor %vm5495, %vm5496
    %v5498 = vsel %vm5497, %v5489, %v5494
    %v5499 = vrsqrt.pop %v3578
    %v5500 = vmul.f32 %v5499, %v3578
    %v5501 = vmul.f32 %v5500, %v5499
    %v5502 = vmul.f32 0.5, %v5501
    %v5503 = vsub.f32 1.5, %v5502
    %v5504 = vmul.f32 %v5499, %v5503
    %vm5505 = vweird.f32 %v3578
    %vm5506 = vweird.f32 %v5499
    %vm5507 = vmor %vm5505, %vm5506
    %v5508 = vsel %vm5507, %v5499, %v5504
    %v5509 = vrsqrt.pop %v3579
    %v5510 = vmul.f32 %v5509, %v3579
    %v5511 = vmul.f32 %v5510, %v5509
    %v5512 = vmul.f32 0.5, %v5511
    %v5513 = vsub.f32 1.5, %v5512
    %v5514 = vmul.f32 %v5509, %v5513
    %vm5515 = vweird.f32 %v3579
    %vm5516 = vweird.f32 %v5509
    %vm5517 = vmor %vm5515, %vm5516
    %v5518 = vsel %vm5517, %v5509, %v5514
    %v5519 = vrsqrt.pop %v3580
    %v5520 = vmul.f32 %v5519, %v3580
    %v5521 = vmul.f32 %v5520, %v5519
    %v5522 = vmul.f32 0.5, %v5521
    %v5523 = vsub.f32 1.5, %v5522
    %v5524 = vmul.f32 %v5519, %v5523
    %vm5525 = vweird.f32 %v3580
    %vm5526 = vweird.f32 %v5519
    %vm5527 = vmor %vm5525, %vm5526
    %v5528 = vsel %vm5527, %v5519, %v5524
    %v5529 = vrsqrt.pop %v3581
    %v5530 = vmul.f32 %v5529, %v3581
    %v5531 = vmul.f32 %v5530, %v5529
    %v5532 = vmul.f32 0.5, %v5531
    %v5533 = vsub.f32 1.5, %v5532
    %v5534 = vmul.f32 %v5529, %v5533
    %vm5535 = vweird.f32 %v3581
    %vm5536 = vweird.f32 %v5529
    %vm5537 = vmor %vm5535, %vm5536
    %v5538 = vsel %vm5537, %v5529, %v5534
    %v5539 = vrsqrt.pop %v3582
    %v5540 = vmul.f32 %v5539, %v3582
    %v5541 = vmul.f32 %v5540, %v5539
    %v5542 = vmul.f32 0.5, %v5541
    %v5543 = vsub.f32 1.5, %v5542
    %v5544 = vmul.f32 %v5539, %v5543
    %vm5545 = vweird.f32 %v3582
    %vm5546 = vweird.f32 %v5539
    %vm5547 = vmor %vm5545, %vm5546
    %v5548 = vsel %vm5547, %v5539, %v5544
    %v5549 = vrsqrt.pop %v3583
    %v5550 = vmul.f32 %v5549, %v3583
    %v5551 = vmul.f32 %v5550, %v5549
    %v5552 = vmul.f32 0.5, %v5551
    %v5553 = vsub.f32 1.5, %v5552
    %v5554 = vmul.f32 %v5549, %v5553
    %vm5555 = vweird.f32 %v3583
    %vm5556 = vweird.f32 %v5549
    %vm5557 = vmor %vm5555, %vm5556
    %v5558 = vsel %vm5557, %v5549, %v5554
    %v5559 = vrsqrt.pop %v3584
    %v5560 = vmul.f32 %v5559, %v3584
    %v5561 = vmul.f32 %v5560, %v5559
    %v5562 = vmul.f32 0.5, %v5561
    %v5563 = vsub.f32 1.5, %v5562
    %v5564 = vmul.f32 %v5559, %v5563
    %vm5565 = vweird.f32 %v3584
    %vm5566 = vweird.f32 %v5559
    %vm5567 = vmor %vm5565, %vm5566
    %v5568 = vsel %vm5567, %v5559, %v5564
    %v5569 = vrsqrt.pop %v3585
    %v5570 = vmul.f32 %v5569, %v3585
    %v5571 = vmul.f32 %v5570, %v5569
    %v5572 = vmul.f32 0.5, %v5571
    %v5573 = vsub.f32 1.5, %v5572
    %v5574 = vmul.f32 %v5569, %v5573
    %vm5575 = vweird.f32 %v3585
    %vm5576 = vweird.f32 %v5569
    %vm5577 = vmor %vm5575, %vm5576
    %v5578 = vsel %vm5577, %v5569, %v5574
    %v5579 = vrsqrt.pop %v3586
    %v5580 = vmul.f32 %v5579, %v3586
    %v5581 = vmul.f32 %v5580, %v5579
    %v5582 = vmul.f32 0.5, %v5581
    %v5583 = vsub.f32 1.5, %v5582
    %v5584 = vmul.f32 %v5579, %v5583
    %vm5585 = vweird.f32 %v3586
    %vm5586 = vweird.f32 %v5579
    %vm5587 = vmor %vm5585, %vm5586
    %v5588 = vsel %vm5587, %v5579, %v5584
    %v5589 = vrsqrt.pop %v3587
    %v5590 = vmul.f32 %v5589, %v3587
    %v5591 = vmul.f32 %v5590, %v5589
    %v5592 = vmul.f32 0.5, %v5591
    %v5593 = vsub.f32 1.5, %v5592
    %v5594 = vmul.f32 %v5589, %v5593
    %vm5595 = vweird.f32 %v3587
    %vm5596 = vweird.f32 %v5589
    %vm5597 = vmor %vm5595, %vm5596
    %v5598 = vsel %vm5597, %v5589, %v5594
    %v5599 = vrsqrt.pop %v3588
    %v5600 = vmul.f32 %v5599, %v3588
    %v5601 = vmul.f32 %v5600, %v5599
    %v5602 = vmul.f32 0.5, %v5601
    %v5603 = vsub.f32 1.5, %v5602
    %v5604 = vmul.f32 %v5599, %v5603
    %vm5605 = vweird.f32 %v3588
    %vm5606 = vweird.f32 %v5599
    %vm5607 = vmor %vm5605, %vm5606
    %v5608 = vsel %vm5607, %v5599, %v5604
    %v5609 = vrsqrt.pop %v3589
    %v5610 = vmul.f32 %v5609, %v3589
    %v5611 = vmul.f32 %v5610, %v5609
    %v5612 = vmul.f32 0.5, %v5611
    %v5613 = vsub.f32 1.5, %v5612
    %v5614 = vmul.f32 %v5609, %v5613
    %vm5615 = vweird.f32 %v3589
    %vm5616 = vweird.f32 %v5609
    %vm5617 = vmor %vm5615, %vm5616
    %v5618 = vsel %vm5617, %v5609, %v5614
    %v5619 = vrsqrt.pop %v3590
    %v5620 = vmul.f32 %v5619, %v3590
    %v5621 = vmul.f32 %v5620, %v5619
    %v5622 = vmul.f32 0.5, %v5621
    %v5623 = vsub.f32 1.5, %v5622
    %v5624 = vmul.f32 %v5619, %v5623
    %vm5625 = vweird.f32 %v3590
    %vm5626 = vweird.f32 %v5619
    %vm5627 = vmor %vm5625, %vm5626
    %v5628 = vsel %vm5627, %v5619, %v5624
    %v5629 = vrsqrt.pop %v3591
    %v5630 = vmul.f32 %v5629, %v3591
    %v5631 = vmul.f32 %v5630, %v5629
    %v5632 = vmul.f32 0.5, %v5631
    %v5633 = vsub.f32 1.5, %v5632
    %v5634 = vmul.f32 %v5629, %v5633
    %vm5635 = vweird.f32 %v3591
    %vm5636 = vweird.f32 %v5629
    %vm5637 = vmor %vm5635, %vm5636
    %v5638 = vsel %vm5637, %v5629, %v5634
    %v5639 = vrsqrt.pop %v3592
    %v5640 = vmul.f32 %v5639, %v3592
    %v5641 = vmul.f32 %v5640, %v5639
    %v5642 = vmul.f32 0.5, %v5641
    %v5643 = vsub.f32 1.5, %v5642
    %v5644 = vmul.f32 %v5639, %v5643
    %vm5645 = vweird.f32 %v3592
    %vm5646 = vweird.f32 %v5639
    %vm5647 = vmor %vm5645, %vm5646
    %v5648 = vsel %vm5647, %v5639, %v5644
    %v5649 = vrsqrt.pop %v3593
    %v5650 = vmul.f32 %v5649, %v3593
    %v5651 = vmul.f32 %v5650, %v5649
    %v5652 = vmul.f32 0.5, %v5651
    %v5653 = vsub.f32 1.5, %v5652
    %v5654 = vmul.f32 %v5649, %v5653
    %vm5655 = vweird.f32 %v3593
    %vm5656 = vweird.f32 %v5649
    %vm5657 = vmor %vm5655, %vm5656
    %v5658 = vsel %vm5657, %v5649, %v5654
    %v5659 = vrsqrt.pop %v3594
    %v5660 = vmul.f32 %v5659, %v3594
    %v5661 = vmul.f32 %v5660, %v5659
    %v5662 = vmul.f32 0.5, %v5661
    %v5663 = vsub.f32 1.5, %v5662
    %v5664 = vmul.f32 %v5659, %v5663
    %vm5665 = vweird.f32 %v3594
    %vm5666 = vweird.f32 %v5659
    %vm5667 = vmor %vm5665, %vm5666
    %v5668 = vsel %vm5667, %v5659, %v5664
    %v5669 = vrsqrt.pop %v3595
    %v5670 = vmul.f32 %v5669, %v3595
    %v5671 = vmul.f32 %v5670, %v5669
    %v5672 = vmul.f32 0.5, %v5671
    %v5673 = vsub.f32 1.5, %v5672
    %v5674 = vmul.f32 %v5669, %v5673
    %vm5675 = vweird.f32 %v3595
    %vm5676 = vweird.f32 %v5669
    %vm5677 = vmor %vm5675, %vm5676
    %v5678 = vsel %vm5677, %v5669, %v5674
    %v5679 = vrsqrt.pop %v3596
    %v5680 = vmul.f32 %v5679, %v3596
    %v5681 = vmul.f32 %v5680, %v5679
    %v5682 = vmul.f32 0.5, %v5681
    %v5683 = vsub.f32 1.5, %v5682
    %v5684 = vmul.f32 %v5679, %v5683
    %vm5685 = vweird.f32 %v3596
    %vm5686 = vweird.f32 %v5679
    %vm5687 = vmor %vm5685, %vm5686
    %v5688 = vsel %vm5687, %v5679, %v5684
    %v5689 = vrsqrt.pop %v3597
    %v5690 = vmul.f32 %v5689, %v3597
    %v5691 = vmul.f32 %v5690, %v5689
    %v5692 = vmul.f32 0.5, %v5691
    %v5693 = vsub.f32 1.5, %v5692
    %v5694 = vmul.f32 %v5689, %v5693
    %vm5695 = vweird.f32 %v3597
    %vm5696 = vweird.f32 %v5689
    %vm5697 = vmor %vm5695, %vm5696
    %v5698 = vsel %vm5697, %v5689, %v5694
    %v5699 = vrsqrt.pop %v3598
    %v5700 = vmul.f32 %v5699, %v3598
    %v5701 = vmul.f32 %v5700, %v5699
    %v5702 = vmul.f32 0.5, %v5701
    %v5703 = vsub.f32 1.5, %v5702
    %v5704 = vmul.f32 %v5699, %v5703
    %vm5705 = vweird.f32 %v3598
    %vm5706 = vweird.f32 %v5699
    %vm5707 = vmor %vm5705, %vm5706
    %v5708 = vsel %vm5707, %v5699, %v5704
    %v5709 = vrsqrt.pop %v3599
    %v5710 = vmul.f32 %v5709, %v3599
    %v5711 = vmul.f32 %v5710, %v5709
    %v5712 = vmul.f32 0.5, %v5711
    %v5713 = vsub.f32 1.5, %v5712
    %v5714 = vmul.f32 %v5709, %v5713
    %vm5715 = vweird.f32 %v3599
    %vm5716 = vweird.f32 %v5709
    %vm5717 = vmor %vm5715, %vm5716
    %v5718 = vsel %vm5717, %v5709, %v5714
    %v5719 = vrsqrt.pop %v3600
    %v5720 = vmul.f32 %v5719, %v3600
    %v5721 = vmul.f32 %v5720, %v5719
    %v5722 = vmul.f32 0.5, %v5721
    %v5723 = vsub.f32 1.5, %v5722
    %v5724 = vmul.f32 %v5719, %v5723
    %vm5725 = vweird.f32 %v3600
    %vm5726 = vweird.f32 %v5719
    %vm5727 = vmor %vm5725, %vm5726
    %v5728 = vsel %vm5727, %v5719, %v5724
    %v5729 = vrsqrt.pop %v3601
    %v5730 = vmul.f32 %v5729, %v3601
    %v5731 = vmul.f32 %v5730, %v5729
    %v5732 = vmul.f32 0.5, %v5731
    %v5733 = vsub.f32 1.5, %v5732
    %v5734 = vmul.f32 %v5729, %v5733
    %vm5735 = vweird.f32 %v3601
    %vm5736 = vweird.f32 %v5729
    %vm5737 = vmor %vm5735, %vm5736
    %v5738 = vsel %vm5737, %v5729, %v5734
    %v5739 = vrsqrt.pop %v3602
    %v5740 = vmul.f32 %v5739, %v3602
    %v5741 = vmul.f32 %v5740, %v5739
    %v5742 = vmul.f32 0.5, %v5741
    %v5743 = vsub.f32 1.5, %v5742
    %v5744 = vmul.f32 %v5739, %v5743
    %vm5745 = vweird.f32 %v3602
    %vm5746 = vweird.f32 %v5739
    %vm5747 = vmor %vm5745, %vm5746
    %v5748 = vsel %vm5747, %v5739, %v5744
    %v5749 = vrsqrt.pop %v3603
    %v5750 = vmul.f32 %v5749, %v3603
    %v5751 = vmul.f32 %v5750, %v5749
    %v5752 = vmul.f32 0.5, %v5751
    %v5753 = vsub.f32 1.5, %v5752
    %v5754 = vmul.f32 %v5749, %v5753
    %vm5755 = vweird.f32 %v3603
    %vm5756 = vweird.f32 %v5749
    %vm5757 = vmor %vm5755, %vm5756
    %v5758 = vsel %vm5757, %v5749, %v5754
    %v5759 = vrsqrt.pop %v3604
    %v5760 = vmul.f32 %v5759, %v3604
    %v5761 = vmul.f32 %v5760, %v5759
    %v5762 = vmul.f32 0.5, %v5761
    %v5763 = vsub.f32 1.5, %v5762
    %v5764 = vmul.f32 %v5759, %v5763
    %vm5765 = vweird.f32 %v3604
    %vm5766 = vweird.f32 %v5759
    %vm5767 = vmor %vm5765, %vm5766
    %v5768 = vsel %vm5767, %v5759, %v5764
    %v5769 = vrsqrt.pop %v3605
    %v5770 = vmul.f32 %v5769, %v3605
    %v5771 = vmul.f32 %v5770, %v5769
    %v5772 = vmul.f32 0.5, %v5771
    %v5773 = vsub.f32 1.5, %v5772
    %v5774 = vmul.f32 %v5769, %v5773
    %vm5775 = vweird.f32 %v3605
    %vm5776 = vweird.f32 %v5769
    %vm5777 = vmor %vm5775, %vm5776
    %v5778 = vsel %vm5777, %v5769, %v5774
    %v5779 = vrsqrt.pop %v3606
    %v5780 = vmul.f32 %v5779, %v3606
    %v5781 = vmul.f32 %v5780, %v5779
    %v5782 = vmul.f32 0.5, %v5781
    %v5783 = vsub.f32 1.5, %v5782
    %v5784 = vmul.f32 %v5779, %v5783
    %vm5785 = vweird.f32 %v3606
    %vm5786 = vweird.f32 %v5779
    %vm5787 = vmor %vm5785, %vm5786
    %v5788 = vsel %vm5787, %v5779, %v5784
    %v5789 = vrsqrt.pop %v3607
    %v5790 = vmul.f32 %v5789, %v3607
    %v5791 = vmul.f32 %v5790, %v5789
    %v5792 = vmul.f32 0.5, %v5791
    %v5793 = vsub.f32 1.5, %v5792
    %v5794 = vmul.f32 %v5789, %v5793
    %vm5795 = vweird.f32 %v3607
    %vm5796 = vweird.f32 %v5789
    %vm5797 = vmor %vm5795, %vm5796
    %v5798 = vsel %vm5797, %v5789, %v5794
    %v5799 = vrsqrt.pop %v3608
    %v5800 = vmul.f32 %v5799, %v3608
    %v5801 = vmul.f32 %v5800, %v5799
    %v5802 = vmul.f32 0.5, %v5801
    %v5803 = vsub.f32 1.5, %v5802
    %v5804 = vmul.f32 %v5799, %v5803
    %vm5805 = vweird.f32 %v3608
    %vm5806 = vweird.f32 %v5799
    %vm5807 = vmor %vm5805, %vm5806
    %v5808 = vsel %vm5807, %v5799, %v5804
    %v5809 = vrsqrt.pop %v3609
    %v5810 = vmul.f32 %v5809, %v3609
    %v5811 = vmul.f32 %v5810, %v5809
    %v5812 = vmul.f32 0.5, %v5811
    %v5813 = vsub.f32 1.5, %v5812
    %v5814 = vmul.f32 %v5809, %v5813
    %vm5815 = vweird.f32 %v3609
    %vm5816 = vweird.f32 %v5809
    %vm5817 = vmor %vm5815, %vm5816
    %v5818 = vsel %vm5817, %v5809, %v5814
    %v5819 = vrsqrt.pop %v3610
    %v5820 = vmul.f32 %v5819, %v3610
    %v5821 = vmul.f32 %v5820, %v5819
    %v5822 = vmul.f32 0.5, %v5821
    %v5823 = vsub.f32 1.5, %v5822
    %v5824 = vmul.f32 %v5819, %v5823
    %vm5825 = vweird.f32 %v3610
    %vm5826 = vweird.f32 %v5819
    %vm5827 = vmor %vm5825, %vm5826
    %v5828 = vsel %vm5827, %v5819, %v5824
    %v5829 = vrsqrt.pop %v3611
    %v5830 = vmul.f32 %v5829, %v3611
    %v5831 = vmul.f32 %v5830, %v5829
    %v5832 = vmul.f32 0.5, %v5831
    %v5833 = vsub.f32 1.5, %v5832
    %v5834 = vmul.f32 %v5829, %v5833
    %vm5835 = vweird.f32 %v3611
    %vm5836 = vweird.f32 %v5829
    %vm5837 = vmor %vm5835, %vm5836
    %v5838 = vsel %vm5837, %v5829, %v5834
    %v5839 = vrsqrt.pop %v3612
    %v5840 = vmul.f32 %v5839, %v3612
    %v5841 = vmul.f32 %v5840, %v5839
    %v5842 = vmul.f32 0.5, %v5841
    %v5843 = vsub.f32 1.5, %v5842
    %v5844 = vmul.f32 %v5839, %v5843
    %vm5845 = vweird.f32 %v3612
    %vm5846 = vweird.f32 %v5839
    %vm5847 = vmor %vm5845, %vm5846
    %v5848 = vsel %vm5847, %v5839, %v5844
    %v5849 = vrsqrt.pop %v3613
    %v5850 = vmul.f32 %v5849, %v3613
    %v5851 = vmul.f32 %v5850, %v5849
    %v5852 = vmul.f32 0.5, %v5851
    %v5853 = vsub.f32 1.5, %v5852
    %v5854 = vmul.f32 %v5849, %v5853
    %vm5855 = vweird.f32 %v3613
    %vm5856 = vweird.f32 %v5849
    %vm5857 = vmor %vm5855, %vm5856
    %v5858 = vsel %vm5857, %v5849, %v5854
    %v5859 = vrsqrt.pop %v3614
    %v5860 = vmul.f32 %v5859, %v3614
    %v5861 = vmul.f32 %v5860, %v5859
    %v5862 = vmul.f32 0.5, %v5861
    %v5863 = vsub.f32 1.5, %v5862
    %v5864 = vmul.f32 %v5859, %v5863
    %vm5865 = vweird.f32 %v3614
    %vm5866 = vweird.f32 %v5859
    %vm5867 = vmor %vm5865, %vm5866
    %v5868 = vsel %vm5867, %v5859, %v5864
    %v5869 = vrsqrt.pop %v3615
    %v5870 = vmul.f32 %v5869, %v3615
    %v5871 = vmul.f32 %v5870, %v5869
    %v5872 = vmul.f32 0.5, %v5871
    %v5873 = vsub.f32 1.5, %v5872
    %v5874 = vmul.f32 %v5869, %v5873
    %vm5875 = vweird.f32 %v3615
    %vm5876 = vweird.f32 %v5869
    %vm5877 = vmor %vm5875, %vm5876
    %v5878 = vsel %vm5877, %v5869, %v5874
    %v5879 = vrsqrt.pop %v3616
    %v5880 = vmul.f32 %v5879, %v3616
    %v5881 = vmul.f32 %v5880, %v5879
    %v5882 = vmul.f32 0.5, %v5881
    %v5883 = vsub.f32 1.5, %v5882
    %v5884 = vmul.f32 %v5879, %v5883
    %vm5885 = vweird.f32 %v3616
    %vm5886 = vweird.f32 %v5879
    %vm5887 = vmor %vm5885, %vm5886
    %v5888 = vsel %vm5887, %v5879, %v5884
    %v5889 = vrsqrt.pop %v3617
    %v5890 = vmul.f32 %v5889, %v3617
    %v5891 = vmul.f32 %v5890, %v5889
    %v5892 = vmul.f32 0.5, %v5891
    %v5893 = vsub.f32 1.5, %v5892
    %v5894 = vmul.f32 %v5889, %v5893
    %vm5895 = vweird.f32 %v3617
    %vm5896 = vweird.f32 %v5889
    %vm5897 = vmor %vm5895, %vm5896
    %v5898 = vsel %vm5897, %v5889, %v5894
    %v5899 = vrsqrt.pop %v3618
    %v5900 = vmul.f32 %v5899, %v3618
    %v5901 = vmul.f32 %v5900, %v5899
    %v5902 = vmul.f32 0.5, %v5901
    %v5903 = vsub.f32 1.5, %v5902
    %v5904 = vmul.f32 %v5899, %v5903
    %vm5905 = vweird.f32 %v3618
    %vm5906 = vweird.f32 %v5899
    %vm5907 = vmor %vm5905, %vm5906
    %v5908 = vsel %vm5907, %v5899, %v5904
    %v5909 = vrsqrt.pop %v3619
    %v5910 = vmul.f32 %v5909, %v3619
    %v5911 = vmul.f32 %v5910, %v5909
    %v5912 = vmul.f32 0.5, %v5911
    %v5913 = vsub.f32 1.5, %v5912
    %v5914 = vmul.f32 %v5909, %v5913
    %vm5915 = vweird.f32 %v3619
    %vm5916 = vweird.f32 %v5909
    %vm5917 = vmor %vm5915, %vm5916
    %v5918 = vsel %vm5917, %v5909, %v5914
    %v5919 = vrsqrt.pop %v3620
    %v5920 = vmul.f32 %v5919, %v3620
    %v5921 = vmul.f32 %v5920, %v5919
    %v5922 = vmul.f32 0.5, %v5921
    %v5923 = vsub.f32 1.5, %v5922
    %v5924 = vmul.f32 %v5919, %v5923
    %vm5925 = vweird.f32 %v3620
    %vm5926 = vweird.f32 %v5919
    %vm5927 = vmor %vm5925, %vm5926
    %v5928 = vsel %vm5927, %v5919, %v5924
    %v5929 = vrsqrt.pop %v3621
    %v5930 = vmul.f32 %v5929, %v3621
    %v5931 = vmul.f32 %v5930, %v5929
    %v5932 = vmul.f32 0.5, %v5931
    %v5933 = vsub.f32 1.5, %v5932
    %v5934 = vmul.f32 %v5929, %v5933
    %vm5935 = vweird.f32 %v3621
    %vm5936 = vweird.f32 %v5929
    %vm5937 = vmor %vm5935, %vm5936
    %v5938 = vsel %vm5937, %v5929, %v5934
    %v5939 = vrsqrt.pop %v3622
    %v5940 = vmul.f32 %v5939, %v3622
    %v5941 = vmul.f32 %v5940, %v5939
    %v5942 = vmul.f32 0.5, %v5941
    %v5943 = vsub.f32 1.5, %v5942
    %v5944 = vmul.f32 %v5939, %v5943
    %vm5945 = vweird.f32 %v3622
    %vm5946 = vweird.f32 %v5939
    %vm5947 = vmor %vm5945, %vm5946
    %v5948 = vsel %vm5947, %v5939, %v5944
    %v5949 = vrsqrt.pop %v3623
    %v5950 = vmul.f32 %v5949, %v3623
    %v5951 = vmul.f32 %v5950, %v5949
    %v5952 = vmul.f32 0.5, %v5951
    %v5953 = vsub.f32 1.5, %v5952
    %v5954 = vmul.f32 %v5949, %v5953
    %vm5955 = vweird.f32 %v3623
    %vm5956 = vweird.f32 %v5949
    %vm5957 = vmor %vm5955, %vm5956
    %v5958 = vsel %vm5957, %v5949, %v5954
    %v5959 = vrsqrt.pop %v3624
    %v5960 = vmul.f32 %v5959, %v3624
    %v5961 = vmul.f32 %v5960, %v5959
    %v5962 = vmul.f32 0.5, %v5961
    %v5963 = vsub.f32 1.5, %v5962
    %v5964 = vmul.f32 %v5959, %v5963
    %vm5965 = vweird.f32 %v3624
    %vm5966 = vweird.f32 %v5959
    %vm5967 = vmor %vm5965, %vm5966
    %v5968 = vsel %vm5967, %v5959, %v5964
    %v5969 = vrsqrt.pop %v3625
    %v5970 = vmul.f32 %v5969, %v3625
    %v5971 = vmul.f32 %v5970, %v5969
    %v5972 = vmul.f32 0.5, %v5971
    %v5973 = vsub.f32 1.5, %v5972
    %v5974 = vmul.f32 %v5969, %v5973
    %vm5975 = vweird.f32 %v3625
    %vm5976 = vweird.f32 %v5969
    %vm5977 = vmor %vm5975, %vm5976
    %v5978 = vsel %vm5977, %v5969, %v5974
    %v5979 = vrsqrt.pop %v3626
    %v5980 = vmul.f32 %v5979, %v3626
    %v5981 = vmul.f32 %v5980, %v5979
    %v5982 = vmul.f32 0.5, %v5981
    %v5983 = vsub.f32 1.5, %v5982
    %v5984 = vmul.f32 %v5979, %v5983
    %vm5985 = vweird.f32 %v3626
    %vm5986 = vweird.f32 %v5979
    %vm5987 = vmor %vm5985, %vm5986
    %v5988 = vsel %vm5987, %v5979, %v5984
    %v5989 = vrsqrt.pop %v3627
    %v5990 = vmul.f32 %v5989, %v3627
    %v5991 = vmul.f32 %v5990, %v5989
    %v5992 = vmul.f32 0.5, %v5991
    %v5993 = vsub.f32 1.5, %v5992
    %v5994 = vmul.f32 %v5989, %v5993
    %vm5995 = vweird.f32 %v3627
    %vm5996 = vweird.f32 %v5989
    %vm5997 = vmor %vm5995, %vm5996
    %v5998 = vsel %vm5997, %v5989, %v5994
    %v5999 = vrsqrt.pop %v3628
    %v6000 = vmul.f32 %v5999, %v3628
    %v6001 = vmul.f32 %v6000, %v5999
    %v6002 = vmul.f32 0.5, %v6001
    %v6003 = vsub.f32 1.5, %v6002
    %v6004 = vmul.f32 %v5999, %v6003
    %vm6005 = vweird.f32 %v3628
    %vm6006 = vweird.f32 %v5999
    %vm6007 = vmor %vm6005, %vm6006
    %v6008 = vsel %vm6007, %v5999, %v6004
    %v6009 = vrsqrt.pop %v3629
    %v6010 = vmul.f32 %v6009, %v3629
    %v6011 = vmul.f32 %v6010, %v6009
    %v6012 = vmul.f32 0.5, %v6011
    %v6013 = vsub.f32 1.5, %v6012
    %v6014 = vmul.f32 %v6009, %v6013
    %vm6015 = vweird.f32 %v3629
    %vm6016 = vweird.f32 %v6009
    %vm6017 = vmor %vm6015, %vm6016
    %v6018 = vsel %vm6017, %v6009, %v6014
    %v6019 = vrsqrt.pop %v3630
    %v6020 = vmul.f32 %v6019, %v3630
    %v6021 = vmul.f32 %v6020, %v6019
    %v6022 = vmul.f32 0.5, %v6021
    %v6023 = vsub.f32 1.5, %v6022
    %v6024 = vmul.f32 %v6019, %v6023
    %vm6025 = vweird.f32 %v3630
    %vm6026 = vweird.f32 %v6019
    %vm6027 = vmor %vm6025, %vm6026
    %v6028 = vsel %vm6027, %v6019, %v6024
    %v6029 = vrsqrt.pop %v3631
    %v6030 = vmul.f32 %v6029, %v3631
    %v6031 = vmul.f32 %v6030, %v6029
    %v6032 = vmul.f32 0.5, %v6031
    %v6033 = vsub.f32 1.5, %v6032
    %v6034 = vmul.f32 %v6029, %v6033
    %vm6035 = vweird.f32 %v3631
    %vm6036 = vweird.f32 %v6029
    %vm6037 = vmor %vm6035, %vm6036
    %v6038 = vsel %vm6037, %v6029, %v6034
    %v6039 = vrsqrt.pop %v3632
    %v6040 = vmul.f32 %v6039, %v3632
    %v6041 = vmul.f32 %v6040, %v6039
    %v6042 = vmul.f32 0.5, %v6041
    %v6043 = vsub.f32 1.5, %v6042
    %v6044 = vmul.f32 %v6039, %v6043
    %vm6045 = vweird.f32 %v3632
    %vm6046 = vweird.f32 %v6039
    %vm6047 = vmor %vm6045, %vm6046
    %v6048 = vsel %vm6047, %v6039, %v6044
    %v6049 = vrsqrt.pop %v3633
    %v6050 = vmul.f32 %v6049, %v3633
    %v6051 = vmul.f32 %v6050, %v6049
    %v6052 = vmul.f32 0.5, %v6051
    %v6053 = vsub.f32 1.5, %v6052
    %v6054 = vmul.f32 %v6049, %v6053
    %vm6055 = vweird.f32 %v3633
    %vm6056 = vweird.f32 %v6049
    %vm6057 = vmor %vm6055, %vm6056
    %v6058 = vsel %vm6057, %v6049, %v6054
    %v6059 = vrsqrt.pop %v3634
    %v6060 = vmul.f32 %v6059, %v3634
    %v6061 = vmul.f32 %v6060, %v6059
    %v6062 = vmul.f32 0.5, %v6061
    %v6063 = vsub.f32 1.5, %v6062
    %v6064 = vmul.f32 %v6059, %v6063
    %vm6065 = vweird.f32 %v3634
    %vm6066 = vweird.f32 %v6059
    %vm6067 = vmor %vm6065, %vm6066
    %v6068 = vsel %vm6067, %v6059, %v6064
    %v6069 = vrsqrt.pop %v3635
    %v6070 = vmul.f32 %v6069, %v3635
    %v6071 = vmul.f32 %v6070, %v6069
    %v6072 = vmul.f32 0.5, %v6071
    %v6073 = vsub.f32 1.5, %v6072
    %v6074 = vmul.f32 %v6069, %v6073
    %vm6075 = vweird.f32 %v3635
    %vm6076 = vweird.f32 %v6069
    %vm6077 = vmor %vm6075, %vm6076
    %v6078 = vsel %vm6077, %v6069, %v6074
    %v6079 = vrsqrt.pop %v3636
    %v6080 = vmul.f32 %v6079, %v3636
    %v6081 = vmul.f32 %v6080, %v6079
    %v6082 = vmul.f32 0.5, %v6081
    %v6083 = vsub.f32 1.5, %v6082
    %v6084 = vmul.f32 %v6079, %v6083
    %vm6085 = vweird.f32 %v3636
    %vm6086 = vweird.f32 %v6079
    %vm6087 = vmor %vm6085, %vm6086
    %v6088 = vsel %vm6087, %v6079, %v6084
    %v6089 = vrsqrt.pop %v3637
    %v6090 = vmul.f32 %v6089, %v3637
    %v6091 = vmul.f32 %v6090, %v6089
    %v6092 = vmul.f32 0.5, %v6091
    %v6093 = vsub.f32 1.5, %v6092
    %v6094 = vmul.f32 %v6089, %v6093
    %vm6095 = vweird.f32 %v3637
    %vm6096 = vweird.f32 %v6089
    %vm6097 = vmor %vm6095, %vm6096
    %v6098 = vsel %vm6097, %v6089, %v6094
    %v6099 = vrsqrt.pop %v3638
    %v6100 = vmul.f32 %v6099, %v3638
    %v6101 = vmul.f32 %v6100, %v6099
    %v6102 = vmul.f32 0.5, %v6101
    %v6103 = vsub.f32 1.5, %v6102
    %v6104 = vmul.f32 %v6099, %v6103
    %vm6105 = vweird.f32 %v3638
    %vm6106 = vweird.f32 %v6099
    %vm6107 = vmor %vm6105, %vm6106
    %v6108 = vsel %vm6107, %v6099, %v6104
    %v6109 = vrsqrt.pop %v3639
    %v6110 = vmul.f32 %v6109, %v3639
    %v6111 = vmul.f32 %v6110, %v6109
    %v6112 = vmul.f32 0.5, %v6111
    %v6113 = vsub.f32 1.5, %v6112
    %v6114 = vmul.f32 %v6109, %v6113
    %vm6115 = vweird.f32 %v3639
    %vm6116 = vweird.f32 %v6109
    %vm6117 = vmor %vm6115, %vm6116
    %v6118 = vsel %vm6117, %v6109, %v6114
    %v6119 = vrsqrt.pop %v3640
    %v6120 = vmul.f32 %v6119, %v3640
    %v6121 = vmul.f32 %v6120, %v6119
    %v6122 = vmul.f32 0.5, %v6121
    %v6123 = vsub.f32 1.5, %v6122
    %v6124 = vmul.f32 %v6119, %v6123
    %vm6125 = vweird.f32 %v3640
    %vm6126 = vweird.f32 %v6119
    %vm6127 = vmor %vm6125, %vm6126
    %v6128 = vsel %vm6127, %v6119, %v6124
    %v6129 = vrsqrt.pop %v3641
    %v6130 = vmul.f32 %v6129, %v3641
    %v6131 = vmul.f32 %v6130, %v6129
    %v6132 = vmul.f32 0.5, %v6131
    %v6133 = vsub.f32 1.5, %v6132
    %v6134 = vmul.f32 %v6129, %v6133
    %vm6135 = vweird.f32 %v3641
    %vm6136 = vweird.f32 %v6129
    %vm6137 = vmor %vm6135, %vm6136
    %v6138 = vsel %vm6137, %v6129, %v6134
    %v6139 = vrsqrt.pop %v3642
    %v6140 = vmul.f32 %v6139, %v3642
    %v6141 = vmul.f32 %v6140, %v6139
    %v6142 = vmul.f32 0.5, %v6141
    %v6143 = vsub.f32 1.5, %v6142
    %v6144 = vmul.f32 %v6139, %v6143
    %vm6145 = vweird.f32 %v3642
    %vm6146 = vweird.f32 %v6139
    %vm6147 = vmor %vm6145, %vm6146
    %v6148 = vsel %vm6147, %v6139, %v6144
    %v6149 = vrsqrt.pop %v3643
    %v6150 = vmul.f32 %v6149, %v3643
    %v6151 = vmul.f32 %v6150, %v6149
    %v6152 = vmul.f32 0.5, %v6151
    %v6153 = vsub.f32 1.5, %v6152
    %v6154 = vmul.f32 %v6149, %v6153
    %vm6155 = vweird.f32 %v3643
    %vm6156 = vweird.f32 %v6149
    %vm6157 = vmor %vm6155, %vm6156
    %v6158 = vsel %vm6157, %v6149, %v6154
    %v6159 = vrsqrt.pop %v3644
    %v6160 = vmul.f32 %v6159, %v3644
    %v6161 = vmul.f32 %v6160, %v6159
    %v6162 = vmul.f32 0.5, %v6161
    %v6163 = vsub.f32 1.5, %v6162
    %v6164 = vmul.f32 %v6159, %v6163
    %vm6165 = vweird.f32 %v3644
    %vm6166 = vweird.f32 %v6159
    %vm6167 = vmor %vm6165, %vm6166
    %v6168 = vsel %vm6167, %v6159, %v6164
    %v6169 = vrsqrt.pop %v3645
    %v6170 = vmul.f32 %v6169, %v3645
    %v6171 = vmul.f32 %v6170, %v6169
    %v6172 = vmul.f32 0.5, %v6171
    %v6173 = vsub.f32 1.5, %v6172
    %v6174 = vmul.f32 %v6169, %v6173
    %vm6175 = vweird.f32 %v3645
    %vm6176 = vweird.f32 %v6169
    %vm6177 = vmor %vm6175, %vm6176
    %v6178 = vsel %vm6177, %v6169, %v6174
    %v6179 = vrsqrt.pop %v3646
    %v6180 = vmul.f32 %v6179, %v3646
    %v6181 = vmul.f32 %v6180, %v6179
    %v6182 = vmul.f32 0.5, %v6181
    %v6183 = vsub.f32 1.5, %v6182
    %v6184 = vmul.f32 %v6179, %v6183
    %vm6185 = vweird.f32 %v3646
    %vm6186 = vweird.f32 %v6179
    %vm6187 = vmor %vm6185, %vm6186
    %v6188 = vsel %vm6187, %v6179, %v6184
    %v6189 = vrsqrt.pop %v3647
    %v6190 = vmul.f32 %v6189, %v3647
    %v6191 = vmul.f32 %v6190, %v6189
    %v6192 = vmul.f32 0.5, %v6191
    %v6193 = vsub.f32 1.5, %v6192
    %v6194 = vmul.f32 %v6189, %v6193
    %vm6195 = vweird.f32 %v3647
    %vm6196 = vweird.f32 %v6189
    %vm6197 = vmor %vm6195, %vm6196
    %v6198 = vsel %vm6197, %v6189, %v6194
    %v6199 = vrsqrt.pop %v3648
    %v6200 = vmul.f32 %v6199, %v3648
    %v6201 = vmul.f32 %v6200, %v6199
    %v6202 = vmul.f32 0.5, %v6201
    %v6203 = vsub.f32 1.5, %v6202
    %v6204 = vmul.f32 %v6199, %v6203
    %vm6205 = vweird.f32 %v3648
    %vm6206 = vweird.f32 %v6199
    %vm6207 = vmor %vm6205, %vm6206
    %v6208 = vsel %vm6207, %v6199, %v6204
    %v6209 = vmin.f32 %v3658, 1000000.0
    %v6210 = vmin.f32 %v3668, 1000000.0
    %v6211 = vmin.f32 %v3678, 1000000.0
    %v6212 = vmin.f32 %v3688, 1000000.0
    %v6213 = vmin.f32 %v3698, 1000000.0
    %v6214 = vmin.f32 %v3708, 1000000.0
    %v6215 = vmin.f32 %v3718, 1000000.0
    %v6216 = vmin.f32 %v3728, 1000000.0
    %v6217 = vmin.f32 %v3738, 1000000.0
    %v6218 = vmin.f32 %v3748, 1000000.0
    %v6219 = vmin.f32 %v3758, 1000000.0
    %v6220 = vmin.f32 %v3768, 1000000.0
    %v6221 = vmin.f32 %v3778, 1000000.0
    %v6222 = vmin.f32 %v3788, 1000000.0
    %v6223 = vmin.f32 %v3798, 1000000.0
    %v6224 = vmin.f32 %v3808, 1000000.0
    %v6225 = vmin.f32 %v3818, 1000000.0
    %v6226 = vmin.f32 %v3828, 1000000.0
    %v6227 = vmin.f32 %v3838, 1000000.0
    %v6228 = vmin.f32 %v3848, 1000000.0
    %v6229 = vmin.f32 %v3858, 1000000.0
    %v6230 = vmin.f32 %v3868, 1000000.0
    %v6231 = vmin.f32 %v3878, 1000000.0
    %v6232 = vmin.f32 %v3888, 1000000.0
    %v6233 = vmin.f32 %v3898, 1000000.0
    %v6234 = vmin.f32 %v3908, 1000000.0
    %v6235 = vmin.f32 %v3918, 1000000.0
    %v6236 = vmin.f32 %v3928, 1000000.0
    %v6237 = vmin.f32 %v3938, 1000000.0
    %v6238 = vmin.f32 %v3948, 1000000.0
    %v6239 = vmin.f32 %v3958, 1000000.0
    %v6240 = vmin.f32 %v3968, 1000000.0
    %v6241 = vmin.f32 %v3978, 1000000.0
    %v6242 = vmin.f32 %v3988, 1000000.0
    %v6243 = vmin.f32 %v3998, 1000000.0
    %v6244 = vmin.f32 %v4008, 1000000.0
    %v6245 = vmin.f32 %v4018, 1000000.0
    %v6246 = vmin.f32 %v4028, 1000000.0
    %v6247 = vmin.f32 %v4038, 1000000.0
    %v6248 = vmin.f32 %v4048, 1000000.0
    %v6249 = vmin.f32 %v4058, 1000000.0
    %v6250 = vmin.f32 %v4068, 1000000.0
    %v6251 = vmin.f32 %v4078, 1000000.0
    %v6252 = vmin.f32 %v4088, 1000000.0
    %v6253 = vmin.f32 %v4098, 1000000.0
    %v6254 = vmin.f32 %v4108, 1000000.0
    %v6255 = vmin.f32 %v4118, 1000000.0
    %v6256 = vmin.f32 %v4128, 1000000.0
    %v6257 = vmin.f32 %v4138, 1000000.0
    %v6258 = vmin.f32 %v4148, 1000000.0
    %v6259 = vmin.f32 %v4158, 1000000.0
    %v6260 = vmin.f32 %v4168, 1000000.0
    %v6261 = vmin.f32 %v4178, 1000000.0
    %v6262 = vmin.f32 %v4188, 1000000.0
    %v6263 = vmin.f32 %v4198, 1000000.0
    %v6264 = vmin.f32 %v4208, 1000000.0
    %v6265 = vmin.f32 %v4218, 1000000.0
    %v6266 = vmin.f32 %v4228, 1000000.0
    %v6267 = vmin.f32 %v4238, 1000000.0
    %v6268 = vmin.f32 %v4248, 1000000.0
    %v6269 = vmin.f32 %v4258, 1000000.0
    %v6270 = vmin.f32 %v4268, 1000000.0
    %v6271 = vmin.f32 %v4278, 1000000.0
    %v6272 = vmin.f32 %v4288, 1000000.0
    %v6273 = vmin.f32 %v4298, 1000000.0
    %v6274 = vmin.f32 %v4308, 1000000.0
    %v6275 = vmin.f32 %v4318, 1000000.0
    %v6276 = vmin.f32 %v4328, 1000000.0
    %v6277 = vmin.f32 %v4338, 1000000.0
    %v6278 = vmin.f32 %v4348, 1000000.0
    %v6279 = vmin.f32 %v4358, 1000000.0
    %v6280 = vmin.f32 %v4368, 1000000.0
    %v6281 = vmin.f32 %v4378, 1000000.0
    %v6282 = vmin.f32 %v4388, 1000000.0
    %v6283 = vmin.f32 %v4398, 1000000.0
    %v6284 = vmin.f32 %v4408, 1000000.0
    %v6285 = vmin.f32 %v4418, 1000000.0
    %v6286 = vmin.f32 %v4428, 1000000.0
    %v6287 = vmin.f32 %v4438, 1000000.0
    %v6288 = vmin.f32 %v4448, 1000000.0
    %v6289 = vmin.f32 %v4458, 1000000.0
    %v6290 = vmin.f32 %v4468, 1000000.0
    %v6291 = vmin.f32 %v4478, 1000000.0
    %v6292 = vmin.f32 %v4488, 1000000.0
    %v6293 = vmin.f32 %v4498, 1000000.0
    %v6294 = vmin.f32 %v4508, 1000000.0
    %v6295 = vmin.f32 %v4518, 1000000.0
    %v6296 = vmin.f32 %v4528, 1000000.0
    %v6297 = vmin.f32 %v4538, 1000000.0
    %v6298 = vmin.f32 %v4548, 1000000.0
    %v6299 = vmin.f32 %v4558, 1000000.0
    %v6300 = vmin.f32 %v4568, 1000000.0
    %v6301 = vmin.f32 %v4578, 1000000.0
    %v6302 = vmin.f32 %v4588, 1000000.0
    %v6303 = vmin.f32 %v4598, 1000000.0
    %v6304 = vmin.f32 %v4608, 1000000.0
    %v6305 = vmin.f32 %v4618, 1000000.0
    %v6306 = vmin.f32 %v4628, 1000000.0
    %v6307 = vmin.f32 %v4638, 1000000.0
    %v6308 = vmin.f32 %v4648, 1000000.0
    %v6309 = vmin.f32 %v4658, 1000000.0
    %v6310 = vmin.f32 %v4668, 1000000.0
    %v6311 = vmin.f32 %v4678, 1000000.0
    %v6312 = vmin.f32 %v4688, 1000000.0
    %v6313 = vmin.f32 %v4698, 1000000.0
    %v6314 = vmin.f32 %v4708, 1000000.0
    %v6315 = vmin.f32 %v4718, 1000000.0
    %v6316 = vmin.f32 %v4728, 1000000.0
    %v6317 = vmin.f32 %v4738, 1000000.0
    %v6318 = vmin.f32 %v4748, 1000000.0
    %v6319 = vmin.f32 %v4758, 1000000.0
    %v6320 = vmin.f32 %v4768, 1000000.0
    %v6321 = vmin.f32 %v4778, 1000000.0
    %v6322 = vmin.f32 %v4788, 1000000.0
    %v6323 = vmin.f32 %v4798, 1000000.0
    %v6324 = vmin.f32 %v4808, 1000000.0
    %v6325 = vmin.f32 %v4818, 1000000.0
    %v6326 = vmin.f32 %v4828, 1000000.0
    %v6327 = vmin.f32 %v4838, 1000000.0
    %v6328 = vmin.f32 %v4848, 1000000.0
    %v6329 = vmin.f32 %v4858, 1000000.0
    %v6330 = vmin.f32 %v4868, 1000000.0
    %v6331 = vmin.f32 %v4878, 1000000.0
    %v6332 = vmin.f32 %v4888, 1000000.0
    %v6333 = vmin.f32 %v4898, 1000000.0
    %v6334 = vmin.f32 %v4908, 1000000.0
    %v6335 = vmin.f32 %v4918, 1000000.0
    %v6336 = vmin.f32 %v4928, 1000000.0
    %v6337 = vmin.f32 %v4938, 1000000.0
    %v6338 = vmin.f32 %v4948, 1000000.0
    %v6339 = vmin.f32 %v4958, 1000000.0
    %v6340 = vmin.f32 %v4968, 1000000.0
    %v6341 = vmin.f32 %v4978, 1000000.0
    %v6342 = vmin.f32 %v4988, 1000000.0
    %v6343 = vmin.f32 %v4998, 1000000.0
    %v6344 = vmin.f32 %v5008, 1000000.0
    %v6345 = vmin.f32 %v5018, 1000000.0
    %v6346 = vmin.f32 %v5028, 1000000.0
    %v6347 = vmin.f32 %v5038, 1000000.0
    %v6348 = vmin.f32 %v5048, 1000000.0
    %v6349 = vmin.f32 %v5058, 1000000.0
    %v6350 = vmin.f32 %v5068, 1000000.0
    %v6351 = vmin.f32 %v5078, 1000000.0
    %v6352 = vmin.f32 %v5088, 1000000.0
    %v6353 = vmin.f32 %v5098, 1000000.0
    %v6354 = vmin.f32 %v5108, 1000000.0
    %v6355 = vmin.f32 %v5118, 1000000.0
    %v6356 = vmin.f32 %v5128, 1000000.0
    %v6357 = vmin.f32 %v5138, 1000000.0
    %v6358 = vmin.f32 %v5148, 1000000.0
    %v6359 = vmin.f32 %v5158, 1000000.0
    %v6360 = vmin.f32 %v5168, 1000000.0
    %v6361 = vmin.f32 %v5178, 1000000.0
    %v6362 = vmin.f32 %v5188, 1000000.0
    %v6363 = vmin.f32 %v5198, 1000000.0
    %v6364 = vmin.f32 %v5208, 1000000.0
    %v6365 = vmin.f32 %v5218, 1000000.0
    %v6366 = vmin.f32 %v5228, 1000000.0
    %v6367 = vmin.f32 %v5238, 1000000.0
    %v6368 = vmin.f32 %v5248, 1000000.0
    %v6369 = vmin.f32 %v5258, 1000000.0
    %v6370 = vmin.f32 %v5268, 1000000.0
    %v6371 = vmin.f32 %v5278, 1000000.0
    %v6372 = vmin.f32 %v5288, 1000000.0
    %v6373 = vmin.f32 %v5298, 1000000.0
    %v6374 = vmin.f32 %v5308, 1000000.0
    %v6375 = vmin.f32 %v5318, 1000000.0
    %v6376 = vmin.f32 %v5328, 1000000.0
    %v6377 = vmin.f32 %v5338, 1000000.0
    %v6378 = vmin.f32 %v5348, 1000000.0
    %v6379 = vmin.f32 %v5358, 1000000.0
    %v6380 = vmin.f32 %v5368, 1000000.0
    %v6381 = vmin.f32 %v5378, 1000000.0
    %v6382 = vmin.f32 %v5388, 1000000.0
    %v6383 = vmin.f32 %v5398, 1000000.0
    %v6384 = vmin.f32 %v5408, 1000000.0
    %v6385 = vmin.f32 %v5418, 1000000.0
    %v6386 = vmin.f32 %v5428, 1000000.0
    %v6387 = vmin.f32 %v5438, 1000000.0
    %v6388 = vmin.f32 %v5448, 1000000.0
    %v6389 = vmin.f32 %v5458, 1000000.0
    %v6390 = vmin.f32 %v5468, 1000000.0
    %v6391 = vmin.f32 %v5478, 1000000.0
    %v6392 = vmin.f32 %v5488, 1000000.0
    %v6393 = vmin.f32 %v5498, 1000000.0
    %v6394 = vmin.f32 %v5508, 1000000.0
    %v6395 = vmin.f32 %v5518, 1000000.0
    %v6396 = vmin.f32 %v5528, 1000000.0
    %v6397 = vmin.f32 %v5538, 1000000.0
    %v6398 = vmin.f32 %v5548, 1000000.0
    %v6399 = vmin.f32 %v5558, 1000000.0
    %v6400 = vmin.f32 %v5568, 1000000.0
    %v6401 = vmin.f32 %v5578, 1000000.0
    %v6402 = vmin.f32 %v5588, 1000000.0
    %v6403 = vmin.f32 %v5598, 1000000.0
    %v6404 = vmin.f32 %v5608, 1000000.0
    %v6405 = vmin.f32 %v5618, 1000000.0
    %v6406 = vmin.f32 %v5628, 1000000.0
    %v6407 = vmin.f32 %v5638, 1000000.0
    %v6408 = vmin.f32 %v5648, 1000000.0
    %v6409 = vmin.f32 %v5658, 1000000.0
    %v6410 = vmin.f32 %v5668, 1000000.0
    %v6411 = vmin.f32 %v5678, 1000000.0
    %v6412 = vmin.f32 %v5688, 1000000.0
    %v6413 = vmin.f32 %v5698, 1000000.0
    %v6414 = vmin.f32 %v5708, 1000000.0
    %v6415 = vmin.f32 %v5718, 1000000.0
    %v6416 = vmin.f32 %v5728, 1000000.0
    %v6417 = vmin.f32 %v5738, 1000000.0
    %v6418 = vmin.f32 %v5748, 1000000.0
    %v6419 = vmin.f32 %v5758, 1000000.0
    %v6420 = vmin.f32 %v5768, 1000000.0
    %v6421 = vmin.f32 %v5778, 1000000.0
    %v6422 = vmin.f32 %v5788, 1000000.0
    %v6423 = vmin.f32 %v5798, 1000000.0
    %v6424 = vmin.f32 %v5808, 1000000.0
    %v6425 = vmin.f32 %v5818, 1000000.0
    %v6426 = vmin.f32 %v5828, 1000000.0
    %v6427 = vmin.f32 %v5838, 1000000.0
    %v6428 = vmin.f32 %v5848, 1000000.0
    %v6429 = vmin.f32 %v5858, 1000000.0
    %v6430 = vmin.f32 %v5868, 1000000.0
    %v6431 = vmin.f32 %v5878, 1000000.0
    %v6432 = vmin.f32 %v5888, 1000000.0
    %v6433 = vmin.f32 %v5898, 1000000.0
    %v6434 = vmin.f32 %v5908, 1000000.0
    %v6435 = vmin.f32 %v5918, 1000000.0
    %v6436 = vmin.f32 %v5928, 1000000.0
    %v6437 = vmin.f32 %v5938, 1000000.0
    %v6438 = vmin.f32 %v5948, 1000000.0
    %v6439 = vmin.f32 %v5958, 1000000.0
    %v6440 = vmin.f32 %v5968, 1000000.0
    %v6441 = vmin.f32 %v5978, 1000000.0
    %v6442 = vmin.f32 %v5988, 1000000.0
    %v6443 = vmin.f32 %v5998, 1000000.0
    %v6444 = vmin.f32 %v6008, 1000000.0
    %v6445 = vmin.f32 %v6018, 1000000.0
    %v6446 = vmin.f32 %v6028, 1000000.0
    %v6447 = vmin.f32 %v6038, 1000000.0
    %v6448 = vmin.f32 %v6048, 1000000.0
    %v6449 = vmin.f32 %v6058, 1000000.0
    %v6450 = vmin.f32 %v6068, 1000000.0
    %v6451 = vmin.f32 %v6078, 1000000.0
    %v6452 = vmin.f32 %v6088, 1000000.0
    %v6453 = vmin.f32 %v6098, 1000000.0
    %v6454 = vmin.f32 %v6108, 1000000.0
    %v6455 = vmin.f32 %v6118, 1000000.0
    %v6456 = vmin.f32 %v6128, 1000000.0
    %v6457 = vmin.f32 %v6138, 1000000.0
    %v6458 = vmin.f32 %v6148, 1000000.0
    %v6459 = vmin.f32 %v6158, 1000000.0
    %v6460 = vmin.f32 %v6168, 1000000.0
    %v6461 = vmin.f32 %v6178, 1000000.0
    %v6462 = vmin.f32 %v6188, 1000000.0
    %v6463 = vmin.f32 %v6198, 1000000.0
    %v6464 = vmin.f32 %v6208, 1000000.0
    %v6465 = vmul.f32 %v1601, %v6209
    %v6466 = vmul.f32 %v1602, %v6209
    %v6467 = vmul.f32 %v1603, %v6210
    %v6468 = vmul.f32 %v1604, %v6210
    %v6469 = vmul.f32 %v1605, %v6211
    %v6470 = vmul.f32 %v1606, %v6211
    %v6471 = vmul.f32 %v1607, %v6212
    %v6472 = vmul.f32 %v1608, %v6212
    %v6473 = vmul.f32 %v1609, %v6213
    %v6474 = vmul.f32 %v1610, %v6213
    %v6475 = vmul.f32 %v1611, %v6214
    %v6476 = vmul.f32 %v1612, %v6214
    %v6477 = vmul.f32 %v1613, %v6215
    %v6478 = vmul.f32 %v1614, %v6215
    %v6479 = vmul.f32 %v1615, %v6216
    %v6480 = vmul.f32 %v1616, %v6216
    %v6481 = vmul.f32 %v1617, %v6217
    %v6482 = vmul.f32 %v1618, %v6217
    %v6483 = vmul.f32 %v1619, %v6218
    %v6484 = vmul.f32 %v1620, %v6218
    %v6485 = vmul.f32 %v1621, %v6219
    %v6486 = vmul.f32 %v1622, %v6219
    %v6487 = vmul.f32 %v1623, %v6220
    %v6488 = vmul.f32 %v1624, %v6220
    %v6489 = vmul.f32 %v1625, %v6221
    %v6490 = vmul.f32 %v1626, %v6221
    %v6491 = vmul.f32 %v1627, %v6222
    %v6492 = vmul.f32 %v1628, %v6222
    %v6493 = vmul.f32 %v1629, %v6223
    %v6494 = vmul.f32 %v1630, %v6223
    %v6495 = vmul.f32 %v1631, %v6224
    %v6496 = vmul.f32 %v1632, %v6224
    %v6497 = vmul.f32 %v1633, %v6225
    %v6498 = vmul.f32 %v1634, %v6225
    %v6499 = vmul.f32 %v1635, %v6226
    %v6500 = vmul.f32 %v1636, %v6226
    %v6501 = vmul.f32 %v1637, %v6227
    %v6502 = vmul.f32 %v1638, %v6227
    %v6503 = vmul.f32 %v1639, %v6228
    %v6504 = vmul.f32 %v1640, %v6228
    %v6505 = vmul.f32 %v1641, %v6229
    %v6506 = vmul.f32 %v1642, %v6229
    %v6507 = vmul.f32 %v1643, %v6230
    %v6508 = vmul.f32 %v1644, %v6230
    %v6509 = vmul.f32 %v1645, %v6231
    %v6510 = vmul.f32 %v1646, %v6231
    %v6511 = vmul.f32 %v1647, %v6232
    %v6512 = vmul.f32 %v1648, %v6232
    %v6513 = vmul.f32 %v1649, %v6233
    %v6514 = vmul.f32 %v1650, %v6233
    %v6515 = vmul.f32 %v1651, %v6234
    %v6516 = vmul.f32 %v1652, %v6234
    %v6517 = vmul.f32 %v1653, %v6235
    %v6518 = vmul.f32 %v1654, %v6235
    %v6519 = vmul.f32 %v1655, %v6236
    %v6520 = vmul.f32 %v1656, %v6236
    %v6521 = vmul.f32 %v1657, %v6237
    %v6522 = vmul.f32 %v1658, %v6237
    %v6523 = vmul.f32 %v1659, %v6238
    %v6524 = vmul.f32 %v1660, %v6238
    %v6525 = vmul.f32 %v1661, %v6239
    %v6526 = vmul.f32 %v1662, %v6239
    %v6527 = vmul.f32 %v1663, %v6240
    %v6528 = vmul.f32 %v1664, %v6240
    %v6529 = vmul.f32 %v1665, %v6241
    %v6530 = vmul.f32 %v1666, %v6241
    %v6531 = vmul.f32 %v1667, %v6242
    %v6532 = vmul.f32 %v1668, %v6242
    %v6533 = vmul.f32 %v1669, %v6243
    %v6534 = vmul.f32 %v1670, %v6243
    %v6535 = vmul.f32 %v1671, %v6244
    %v6536 = vmul.f32 %v1672, %v6244
    %v6537 = vmul.f32 %v1673, %v6245
    %v6538 = vmul.f32 %v1674, %v6245
    %v6539 = vmul.f32 %v1675, %v6246
    %v6540 = vmul.f32 %v1676, %v6246
    %v6541 = vmul.f32 %v1677, %v6247
    %v6542 = vmul.f32 %v1678, %v6247
    %v6543 = vmul.f32 %v1679, %v6248
    %v6544 = vmul.f32 %v1680, %v6248
    %v6545 = vmul.f32 %v1681, %v6249
    %v6546 = vmul.f32 %v1682, %v6249
    %v6547 = vmul.f32 %v1683, %v6250
    %v6548 = vmul.f32 %v1684, %v6250
    %v6549 = vmul.f32 %v1685, %v6251
    %v6550 = vmul.f32 %v1686, %v6251
    %v6551 = vmul.f32 %v1687, %v6252
    %v6552 = vmul.f32 %v1688, %v6252
    %v6553 = vmul.f32 %v1689, %v6253
    %v6554 = vmul.f32 %v1690, %v6253
    %v6555 = vmul.f32 %v1691, %v6254
    %v6556 = vmul.f32 %v1692, %v6254
    %v6557 = vmul.f32 %v1693, %v6255
    %v6558 = vmul.f32 %v1694, %v6255
    %v6559 = vmul.f32 %v1695, %v6256
    %v6560 = vmul.f32 %v1696, %v6256
    %v6561 = vmul.f32 %v1697, %v6257
    %v6562 = vmul.f32 %v1698, %v6257
    %v6563 = vmul.f32 %v1699, %v6258
    %v6564 = vmul.f32 %v1700, %v6258
    %v6565 = vmul.f32 %v1701, %v6259
    %v6566 = vmul.f32 %v1702, %v6259
    %v6567 = vmul.f32 %v1703, %v6260
    %v6568 = vmul.f32 %v1704, %v6260
    %v6569 = vmul.f32 %v1705, %v6261
    %v6570 = vmul.f32 %v1706, %v6261
    %v6571 = vmul.f32 %v1707, %v6262
    %v6572 = vmul.f32 %v1708, %v6262
    %v6573 = vmul.f32 %v1709, %v6263
    %v6574 = vmul.f32 %v1710, %v6263
    %v6575 = vmul.f32 %v1711, %v6264
    %v6576 = vmul.f32 %v1712, %v6264
    %v6577 = vmul.f32 %v1713, %v6265
    %v6578 = vmul.f32 %v1714, %v6265
    %v6579 = vmul.f32 %v1715, %v6266
    %v6580 = vmul.f32 %v1716, %v6266
    %v6581 = vmul.f32 %v1717, %v6267
    %v6582 = vmul.f32 %v1718, %v6267
    %v6583 = vmul.f32 %v1719, %v6268
    %v6584 = vmul.f32 %v1720, %v6268
    %v6585 = vmul.f32 %v1721, %v6269
    %v6586 = vmul.f32 %v1722, %v6269
    %v6587 = vmul.f32 %v1723, %v6270
    %v6588 = vmul.f32 %v1724, %v6270
    %v6589 = vmul.f32 %v1725, %v6271
    %v6590 = vmul.f32 %v1726, %v6271
    %v6591 = vmul.f32 %v1727, %v6272
    %v6592 = vmul.f32 %v1728, %v6272
    %v6593 = vmul.f32 %v1729, %v6273
    %v6594 = vmul.f32 %v1730, %v6273
    %v6595 = vmul.f32 %v1731, %v6274
    %v6596 = vmul.f32 %v1732, %v6274
    %v6597 = vmul.f32 %v1733, %v6275
    %v6598 = vmul.f32 %v1734, %v6275
    %v6599 = vmul.f32 %v1735, %v6276
    %v6600 = vmul.f32 %v1736, %v6276
    %v6601 = vmul.f32 %v1737, %v6277
    %v6602 = vmul.f32 %v1738, %v6277
    %v6603 = vmul.f32 %v1739, %v6278
    %v6604 = vmul.f32 %v1740, %v6278
    %v6605 = vmul.f32 %v1741, %v6279
    %v6606 = vmul.f32 %v1742, %v6279
    %v6607 = vmul.f32 %v1743, %v6280
    %v6608 = vmul.f32 %v1744, %v6280
    %v6609 = vmul.f32 %v1745, %v6281
    %v6610 = vmul.f32 %v1746, %v6281
    %v6611 = vmul.f32 %v1747, %v6282
    %v6612 = vmul.f32 %v1748, %v6282
    %v6613 = vmul.f32 %v1749, %v6283
    %v6614 = vmul.f32 %v1750, %v6283
    %v6615 = vmul.f32 %v1751, %v6284
    %v6616 = vmul.f32 %v1752, %v6284
    %v6617 = vmul.f32 %v1753, %v6285
    %v6618 = vmul.f32 %v1754, %v6285
    %v6619 = vmul.f32 %v1755, %v6286
    %v6620 = vmul.f32 %v1756, %v6286
    %v6621 = vmul.f32 %v1757, %v6287
    %v6622 = vmul.f32 %v1758, %v6287
    %v6623 = vmul.f32 %v1759, %v6288
    %v6624 = vmul.f32 %v1760, %v6288
    %v6625 = vmul.f32 %v1761, %v6289
    %v6626 = vmul.f32 %v1762, %v6289
    %v6627 = vmul.f32 %v1763, %v6290
    %v6628 = vmul.f32 %v1764, %v6290
    %v6629 = vmul.f32 %v1765, %v6291
    %v6630 = vmul.f32 %v1766, %v6291
    %v6631 = vmul.f32 %v1767, %v6292
    %v6632 = vmul.f32 %v1768, %v6292
    %v6633 = vmul.f32 %v1769, %v6293
    %v6634 = vmul.f32 %v1770, %v6293
    %v6635 = vmul.f32 %v1771, %v6294
    %v6636 = vmul.f32 %v1772, %v6294
    %v6637 = vmul.f32 %v1773, %v6295
    %v6638 = vmul.f32 %v1774, %v6295
    %v6639 = vmul.f32 %v1775, %v6296
    %v6640 = vmul.f32 %v1776, %v6296
    %v6641 = vmul.f32 %v1777, %v6297
    %v6642 = vmul.f32 %v1778, %v6297
    %v6643 = vmul.f32 %v1779, %v6298
    %v6644 = vmul.f32 %v1780, %v6298
    %v6645 = vmul.f32 %v1781, %v6299
    %v6646 = vmul.f32 %v1782, %v6299
    %v6647 = vmul.f32 %v1783, %v6300
    %v6648 = vmul.f32 %v1784, %v6300
    %v6649 = vmul.f32 %v1785, %v6301
    %v6650 = vmul.f32 %v1786, %v6301
    %v6651 = vmul.f32 %v1787, %v6302
    %v6652 = vmul.f32 %v1788, %v6302
    %v6653 = vmul.f32 %v1789, %v6303
    %v6654 = vmul.f32 %v1790, %v6303
    %v6655 = vmul.f32 %v1791, %v6304
    %v6656 = vmul.f32 %v1792, %v6304
    %v6657 = vmul.f32 %v1793, %v6305
    %v6658 = vmul.f32 %v1794, %v6305
    %v6659 = vmul.f32 %v1795, %v6306
    %v6660 = vmul.f32 %v1796, %v6306
    %v6661 = vmul.f32 %v1797, %v6307
    %v6662 = vmul.f32 %v1798, %v6307
    %v6663 = vmul.f32 %v1799, %v6308
    %v6664 = vmul.f32 %v1800, %v6308
    %v6665 = vmul.f32 %v1801, %v6309
    %v6666 = vmul.f32 %v1802, %v6309
    %v6667 = vmul.f32 %v1803, %v6310
    %v6668 = vmul.f32 %v1804, %v6310
    %v6669 = vmul.f32 %v1805, %v6311
    %v6670 = vmul.f32 %v1806, %v6311
    %v6671 = vmul.f32 %v1807, %v6312
    %v6672 = vmul.f32 %v1808, %v6312
    %v6673 = vmul.f32 %v1809, %v6313
    %v6674 = vmul.f32 %v1810, %v6313
    %v6675 = vmul.f32 %v1811, %v6314
    %v6676 = vmul.f32 %v1812, %v6314
    %v6677 = vmul.f32 %v1813, %v6315
    %v6678 = vmul.f32 %v1814, %v6315
    %v6679 = vmul.f32 %v1815, %v6316
    %v6680 = vmul.f32 %v1816, %v6316
    %v6681 = vmul.f32 %v1817, %v6317
    %v6682 = vmul.f32 %v1818, %v6317
    %v6683 = vmul.f32 %v1819, %v6318
    %v6684 = vmul.f32 %v1820, %v6318
    %v6685 = vmul.f32 %v1821, %v6319
    %v6686 = vmul.f32 %v1822, %v6319
    %v6687 = vmul.f32 %v1823, %v6320
    %v6688 = vmul.f32 %v1824, %v6320
    %v6689 = vmul.f32 %v1825, %v6321
    %v6690 = vmul.f32 %v1826, %v6321
    %v6691 = vmul.f32 %v1827, %v6322
    %v6692 = vmul.f32 %v1828, %v6322
    %v6693 = vmul.f32 %v1829, %v6323
    %v6694 = vmul.f32 %v1830, %v6323
    %v6695 = vmul.f32 %v1831, %v6324
    %v6696 = vmul.f32 %v1832, %v6324
    %v6697 = vmul.f32 %v1833, %v6325
    %v6698 = vmul.f32 %v1834, %v6325
    %v6699 = vmul.f32 %v1835, %v6326
    %v6700 = vmul.f32 %v1836, %v6326
    %v6701 = vmul.f32 %v1837, %v6327
    %v6702 = vmul.f32 %v1838, %v6327
    %v6703 = vmul.f32 %v1839, %v6328
    %v6704 = vmul.f32 %v1840, %v6328
    %v6705 = vmul.f32 %v1841, %v6329
    %v6706 = vmul.f32 %v1842, %v6329
    %v6707 = vmul.f32 %v1843, %v6330
    %v6708 = vmul.f32 %v1844, %v6330
    %v6709 = vmul.f32 %v1845, %v6331
    %v6710 = vmul.f32 %v1846, %v6331
    %v6711 = vmul.f32 %v1847, %v6332
    %v6712 = vmul.f32 %v1848, %v6332
    %v6713 = vmul.f32 %v1849, %v6333
    %v6714 = vmul.f32 %v1850, %v6333
    %v6715 = vmul.f32 %v1851, %v6334
    %v6716 = vmul.f32 %v1852, %v6334
    %v6717 = vmul.f32 %v1853, %v6335
    %v6718 = vmul.f32 %v1854, %v6335
    %v6719 = vmul.f32 %v1855, %v6336
    %v6720 = vmul.f32 %v1856, %v6336
    %v6721 = vmul.f32 %v1857, %v6337
    %v6722 = vmul.f32 %v1858, %v6337
    %v6723 = vmul.f32 %v1859, %v6338
    %v6724 = vmul.f32 %v1860, %v6338
    %v6725 = vmul.f32 %v1861, %v6339
    %v6726 = vmul.f32 %v1862, %v6339
    %v6727 = vmul.f32 %v1863, %v6340
    %v6728 = vmul.f32 %v1864, %v6340
    %v6729 = vmul.f32 %v1865, %v6341
    %v6730 = vmul.f32 %v1866, %v6341
    %v6731 = vmul.f32 %v1867, %v6342
    %v6732 = vmul.f32 %v1868, %v6342
    %v6733 = vmul.f32 %v1869, %v6343
    %v6734 = vmul.f32 %v1870, %v6343
    %v6735 = vmul.f32 %v1871, %v6344
    %v6736 = vmul.f32 %v1872, %v6344
    %v6737 = vmul.f32 %v1873, %v6345
    %v6738 = vmul.f32 %v1874, %v6345
    %v6739 = vmul.f32 %v1875, %v6346
    %v6740 = vmul.f32 %v1876, %v6346
    %v6741 = vmul.f32 %v1877, %v6347
    %v6742 = vmul.f32 %v1878, %v6347
    %v6743 = vmul.f32 %v1879, %v6348
    %v6744 = vmul.f32 %v1880, %v6348
    %v6745 = vmul.f32 %v1881, %v6349
    %v6746 = vmul.f32 %v1882, %v6349
    %v6747 = vmul.f32 %v1883, %v6350
    %v6748 = vmul.f32 %v1884, %v6350
    %v6749 = vmul.f32 %v1885, %v6351
    %v6750 = vmul.f32 %v1886, %v6351
    %v6751 = vmul.f32 %v1887, %v6352
    %v6752 = vmul.f32 %v1888, %v6352
    %v6753 = vmul.f32 %v1889, %v6353
    %v6754 = vmul.f32 %v1890, %v6353
    %v6755 = vmul.f32 %v1891, %v6354
    %v6756 = vmul.f32 %v1892, %v6354
    %v6757 = vmul.f32 %v1893, %v6355
    %v6758 = vmul.f32 %v1894, %v6355
    %v6759 = vmul.f32 %v1895, %v6356
    %v6760 = vmul.f32 %v1896, %v6356
    %v6761 = vmul.f32 %v1897, %v6357
    %v6762 = vmul.f32 %v1898, %v6357
    %v6763 = vmul.f32 %v1899, %v6358
    %v6764 = vmul.f32 %v1900, %v6358
    %v6765 = vmul.f32 %v1901, %v6359
    %v6766 = vmul.f32 %v1902, %v6359
    %v6767 = vmul.f32 %v1903, %v6360
    %v6768 = vmul.f32 %v1904, %v6360
    %v6769 = vmul.f32 %v1905, %v6361
    %v6770 = vmul.f32 %v1906, %v6361
    %v6771 = vmul.f32 %v1907, %v6362
    %v6772 = vmul.f32 %v1908, %v6362
    %v6773 = vmul.f32 %v1909, %v6363
    %v6774 = vmul.f32 %v1910, %v6363
    %v6775 = vmul.f32 %v1911, %v6364
    %v6776 = vmul.f32 %v1912, %v6364
    %v6777 = vmul.f32 %v1913, %v6365
    %v6778 = vmul.f32 %v1914, %v6365
    %v6779 = vmul.f32 %v1915, %v6366
    %v6780 = vmul.f32 %v1916, %v6366
    %v6781 = vmul.f32 %v1917, %v6367
    %v6782 = vmul.f32 %v1918, %v6367
    %v6783 = vmul.f32 %v1919, %v6368
    %v6784 = vmul.f32 %v1920, %v6368
    %v6785 = vmul.f32 %v1921, %v6369
    %v6786 = vmul.f32 %v1922, %v6369
    %v6787 = vmul.f32 %v1923, %v6370
    %v6788 = vmul.f32 %v1924, %v6370
    %v6789 = vmul.f32 %v1925, %v6371
    %v6790 = vmul.f32 %v1926, %v6371
    %v6791 = vmul.f32 %v1927, %v6372
    %v6792 = vmul.f32 %v1928, %v6372
    %v6793 = vmul.f32 %v1929, %v6373
    %v6794 = vmul.f32 %v1930, %v6373
    %v6795 = vmul.f32 %v1931, %v6374
    %v6796 = vmul.f32 %v1932, %v6374
    %v6797 = vmul.f32 %v1933, %v6375
    %v6798 = vmul.f32 %v1934, %v6375
    %v6799 = vmul.f32 %v1935, %v6376
    %v6800 = vmul.f32 %v1936, %v6376
    %v6801 = vmul.f32 %v1937, %v6377
    %v6802 = vmul.f32 %v1938, %v6377
    %v6803 = vmul.f32 %v1939, %v6378
    %v6804 = vmul.f32 %v1940, %v6378
    %v6805 = vmul.f32 %v1941, %v6379
    %v6806 = vmul.f32 %v1942, %v6379
    %v6807 = vmul.f32 %v1943, %v6380
    %v6808 = vmul.f32 %v1944, %v6380
    %v6809 = vmul.f32 %v1945, %v6381
    %v6810 = vmul.f32 %v1946, %v6381
    %v6811 = vmul.f32 %v1947, %v6382
    %v6812 = vmul.f32 %v1948, %v6382
    %v6813 = vmul.f32 %v1949, %v6383
    %v6814 = vmul.f32 %v1950, %v6383
    %v6815 = vmul.f32 %v1951, %v6384
    %v6816 = vmul.f32 %v1952, %v6384
    %v6817 = vmul.f32 %v1953, %v6385
    %v6818 = vmul.f32 %v1954, %v6385
    %v6819 = vmul.f32 %v1955, %v6386
    %v6820 = vmul.f32 %v1956, %v6386
    %v6821 = vmul.f32 %v1957, %v6387
    %v6822 = vmul.f32 %v1958, %v6387
    %v6823 = vmul.f32 %v1959, %v6388
    %v6824 = vmul.f32 %v1960, %v6388
    %v6825 = vmul.f32 %v1961, %v6389
    %v6826 = vmul.f32 %v1962, %v6389
    %v6827 = vmul.f32 %v1963, %v6390
    %v6828 = vmul.f32 %v1964, %v6390
    %v6829 = vmul.f32 %v1965, %v6391
    %v6830 = vmul.f32 %v1966, %v6391
    %v6831 = vmul.f32 %v1967, %v6392
    %v6832 = vmul.f32 %v1968, %v6392
    %v6833 = vmul.f32 %v1969, %v6393
    %v6834 = vmul.f32 %v1970, %v6393
    %v6835 = vmul.f32 %v1971, %v6394
    %v6836 = vmul.f32 %v1972, %v6394
    %v6837 = vmul.f32 %v1973, %v6395
    %v6838 = vmul.f32 %v1974, %v6395
    %v6839 = vmul.f32 %v1975, %v6396
    %v6840 = vmul.f32 %v1976, %v6396
    %v6841 = vmul.f32 %v1977, %v6397
    %v6842 = vmul.f32 %v1978, %v6397
    %v6843 = vmul.f32 %v1979, %v6398
    %v6844 = vmul.f32 %v1980, %v6398
    %v6845 = vmul.f32 %v1981, %v6399
    %v6846 = vmul.f32 %v1982, %v6399
    %v6847 = vmul.f32 %v1983, %v6400
    %v6848 = vmul.f32 %v1984, %v6400
    %v6849 = vmul.f32 %v1985, %v6401
    %v6850 = vmul.f32 %v1986, %v6401
    %v6851 = vmul.f32 %v1987, %v6402
    %v6852 = vmul.f32 %v1988, %v6402
    %v6853 = vmul.f32 %v1989, %v6403
    %v6854 = vmul.f32 %v1990, %v6403
    %v6855 = vmul.f32 %v1991, %v6404
    %v6856 = vmul.f32 %v1992, %v6404
    %v6857 = vmul.f32 %v1993, %v6405
    %v6858 = vmul.f32 %v1994, %v6405
    %v6859 = vmul.f32 %v1995, %v6406
    %v6860 = vmul.f32 %v1996, %v6406
    %v6861 = vmul.f32 %v1997, %v6407
    %v6862 = vmul.f32 %v1998, %v6407
    %v6863 = vmul.f32 %v1999, %v6408
    %v6864 = vmul.f32 %v2000, %v6408
    %v6865 = vmul.f32 %v2001, %v6409
    %v6866 = vmul.f32 %v2002, %v6409
    %v6867 = vmul.f32 %v2003, %v6410
    %v6868 = vmul.f32 %v2004, %v6410
    %v6869 = vmul.f32 %v2005, %v6411
    %v6870 = vmul.f32 %v2006, %v6411
    %v6871 = vmul.f32 %v2007, %v6412
    %v6872 = vmul.f32 %v2008, %v6412
    %v6873 = vmul.f32 %v2009, %v6413
    %v6874 = vmul.f32 %v2010, %v6413
    %v6875 = vmul.f32 %v2011, %v6414
    %v6876 = vmul.f32 %v2012, %v6414
    %v6877 = vmul.f32 %v2013, %v6415
    %v6878 = vmul.f32 %v2014, %v6415
    %v6879 = vmul.f32 %v2015, %v6416
    %v6880 = vmul.f32 %v2016, %v6416
    %v6881 = vmul.f32 %v2017, %v6417
    %v6882 = vmul.f32 %v2018, %v6417
    %v6883 = vmul.f32 %v2019, %v6418
    %v6884 = vmul.f32 %v2020, %v6418
    %v6885 = vmul.f32 %v2021, %v6419
    %v6886 = vmul.f32 %v2022, %v6419
    %v6887 = vmul.f32 %v2023, %v6420
    %v6888 = vmul.f32 %v2024, %v6420
    %v6889 = vmul.f32 %v2025, %v6421
    %v6890 = vmul.f32 %v2026, %v6421
    %v6891 = vmul.f32 %v2027, %v6422
    %v6892 = vmul.f32 %v2028, %v6422
    %v6893 = vmul.f32 %v2029, %v6423
    %v6894 = vmul.f32 %v2030, %v6423
    %v6895 = vmul.f32 %v2031, %v6424
    %v6896 = vmul.f32 %v2032, %v6424
    %v6897 = vmul.f32 %v2033, %v6425
    %v6898 = vmul.f32 %v2034, %v6425
    %v6899 = vmul.f32 %v2035, %v6426
    %v6900 = vmul.f32 %v2036, %v6426
    %v6901 = vmul.f32 %v2037, %v6427
    %v6902 = vmul.f32 %v2038, %v6427
    %v6903 = vmul.f32 %v2039, %v6428
    %v6904 = vmul.f32 %v2040, %v6428
    %v6905 = vmul.f32 %v2041, %v6429
    %v6906 = vmul.f32 %v2042, %v6429
    %v6907 = vmul.f32 %v2043, %v6430
    %v6908 = vmul.f32 %v2044, %v6430
    %v6909 = vmul.f32 %v2045, %v6431
    %v6910 = vmul.f32 %v2046, %v6431
    %v6911 = vmul.f32 %v2047, %v6432
    %v6912 = vmul.f32 %v2048, %v6432
    %v6913 = vmul.f32 %v2049, %v6433
    %v6914 = vmul.f32 %v2050, %v6433
    %v6915 = vmul.f32 %v2051, %v6434
    %v6916 = vmul.f32 %v2052, %v6434
    %v6917 = vmul.f32 %v2053, %v6435
    %v6918 = vmul.f32 %v2054, %v6435
    %v6919 = vmul.f32 %v2055, %v6436
    %v6920 = vmul.f32 %v2056, %v6436
    %v6921 = vmul.f32 %v2057, %v6437
    %v6922 = vmul.f32 %v2058, %v6437
    %v6923 = vmul.f32 %v2059, %v6438
    %v6924 = vmul.f32 %v2060, %v6438
    %v6925 = vmul.f32 %v2061, %v6439
    %v6926 = vmul.f32 %v2062, %v6439
    %v6927 = vmul.f32 %v2063, %v6440
    %v6928 = vmul.f32 %v2064, %v6440
    %v6929 = vmul.f32 %v2065, %v6441
    %v6930 = vmul.f32 %v2066, %v6441
    %v6931 = vmul.f32 %v2067, %v6442
    %v6932 = vmul.f32 %v2068, %v6442
    %v6933 = vmul.f32 %v2069, %v6443
    %v6934 = vmul.f32 %v2070, %v6443
    %v6935 = vmul.f32 %v2071, %v6444
    %v6936 = vmul.f32 %v2072, %v6444
    %v6937 = vmul.f32 %v2073, %v6445
    %v6938 = vmul.f32 %v2074, %v6445
    %v6939 = vmul.f32 %v2075, %v6446
    %v6940 = vmul.f32 %v2076, %v6446
    %v6941 = vmul.f32 %v2077, %v6447
    %v6942 = vmul.f32 %v2078, %v6447
    %v6943 = vmul.f32 %v2079, %v6448
    %v6944 = vmul.f32 %v2080, %v6448
    %v6945 = vmul.f32 %v2081, %v6449
    %v6946 = vmul.f32 %v2082, %v6449
    %v6947 = vmul.f32 %v2083, %v6450
    %v6948 = vmul.f32 %v2084, %v6450
    %v6949 = vmul.f32 %v2085, %v6451
    %v6950 = vmul.f32 %v2086, %v6451
    %v6951 = vmul.f32 %v2087, %v6452
    %v6952 = vmul.f32 %v2088, %v6452
    %v6953 = vmul.f32 %v2089, %v6453
    %v6954 = vmul.f32 %v2090, %v6453
    %v6955 = vmul.f32 %v2091, %v6454
    %v6956 = vmul.f32 %v2092, %v6454
    %v6957 = vmul.f32 %v2093, %v6455
    %v6958 = vmul.f32 %v2094, %v6455
    %v6959 = vmul.f32 %v2095, %v6456
    %v6960 = vmul.f32 %v2096, %v6456
    %v6961 = vmul.f32 %v2097, %v6457
    %v6962 = vmul.f32 %v2098, %v6457
    %v6963 = vmul.f32 %v2099, %v6458
    %v6964 = vmul.f32 %v2100, %v6458
    %v6965 = vmul.f32 %v2101, %v6459
    %v6966 = vmul.f32 %v2102, %v6459
    %v6967 = vmul.f32 %v2103, %v6460
    %v6968 = vmul.f32 %v2104, %v6460
    %v6969 = vmul.f32 %v2105, %v6461
    %v6970 = vmul.f32 %v2106, %v6461
    %v6971 = vmul.f32 %v2107, %v6462
    %v6972 = vmul.f32 %v2108, %v6462
    %v6973 = vmul.f32 %v2109, %v6463
    %v6974 = vmul.f32 %v2110, %v6463
    %v6975 = vmul.f32 %v2111, %v6464
    %v6976 = vmul.f32 %v2112, %v6464
    %v6977 = vld [vmem:[#allocation5] sm:$0x3]
    %v6979 = vperm.slane %v6977, 0
    %v6980 = vperm.slane %v6977, 1
    %v6983 = vmul.f32 %v6465, %v6979
    %v6984 = vmul.f32 %v6466, %v6980
    %v6985 = vmul.f32 %v6467, %v6979
    %v6986 = vmul.f32 %v6468, %v6980
    %v6987 = vmul.f32 %v6469, %v6979
    %v6988 = vmul.f32 %v6470, %v6980
    %v6989 = vmul.f32 %v6471, %v6979
    %v6990 = vmul.f32 %v6472, %v6980
    %v6991 = vmul.f32 %v6473, %v6979
    %v6992 = vmul.f32 %v6474, %v6980
    %v6993 = vmul.f32 %v6475, %v6979
    %v6994 = vmul.f32 %v6476, %v6980
    %v6995 = vmul.f32 %v6477, %v6979
    %v6996 = vmul.f32 %v6478, %v6980
    %v6997 = vmul.f32 %v6479, %v6979
    %v6998 = vmul.f32 %v6480, %v6980
    %v6999 = vmul.f32 %v6481, %v6979
    %v7000 = vmul.f32 %v6482, %v6980
    %v7001 = vmul.f32 %v6483, %v6979
    %v7002 = vmul.f32 %v6484, %v6980
    %v7003 = vmul.f32 %v6485, %v6979
    %v7004 = vmul.f32 %v6486, %v6980
    %v7005 = vmul.f32 %v6487, %v6979
    %v7006 = vmul.f32 %v6488, %v6980
    %v7007 = vmul.f32 %v6489, %v6979
    %v7008 = vmul.f32 %v6490, %v6980
    %v7009 = vmul.f32 %v6491, %v6979
    %v7010 = vmul.f32 %v6492, %v6980
    %v7011 = vmul.f32 %v6493, %v6979
    %v7012 = vmul.f32 %v6494, %v6980
    %v7013 = vmul.f32 %v6495, %v6979
    %v7014 = vmul.f32 %v6496, %v6980
    %v7015 = vmul.f32 %v6497, %v6979
    %v7016 = vmul.f32 %v6498, %v6980
    %v7017 = vmul.f32 %v6499, %v6979
    %v7018 = vmul.f32 %v6500, %v6980
    %v7019 = vmul.f32 %v6501, %v6979
    %v7020 = vmul.f32 %v6502, %v6980
    %v7021 = vmul.f32 %v6503, %v6979
    %v7022 = vmul.f32 %v6504, %v6980
    %v7023 = vmul.f32 %v6505, %v6979
    %v7024 = vmul.f32 %v6506, %v6980
    %v7025 = vmul.f32 %v6507, %v6979
    %v7026 = vmul.f32 %v6508, %v6980
    %v7027 = vmul.f32 %v6509, %v6979
    %v7028 = vmul.f32 %v6510, %v6980
    %v7029 = vmul.f32 %v6511, %v6979
    %v7030 = vmul.f32 %v6512, %v6980
    %v7031 = vmul.f32 %v6513, %v6979
    %v7032 = vmul.f32 %v6514, %v6980
    %v7033 = vmul.f32 %v6515, %v6979
    %v7034 = vmul.f32 %v6516, %v6980
    %v7035 = vmul.f32 %v6517, %v6979
    %v7036 = vmul.f32 %v6518, %v6980
    %v7037 = vmul.f32 %v6519, %v6979
    %v7038 = vmul.f32 %v6520, %v6980
    %v7039 = vmul.f32 %v6521, %v6979
    %v7040 = vmul.f32 %v6522, %v6980
    %v7041 = vmul.f32 %v6523, %v6979
    %v7042 = vmul.f32 %v6524, %v6980
    %v7043 = vmul.f32 %v6525, %v6979
    %v7044 = vmul.f32 %v6526, %v6980
    %v7045 = vmul.f32 %v6527, %v6979
    %v7046 = vmul.f32 %v6528, %v6980
    %v7047 = vmul.f32 %v6529, %v6979
    %v7048 = vmul.f32 %v6530, %v6980
    %v7049 = vmul.f32 %v6531, %v6979
    %v7050 = vmul.f32 %v6532, %v6980
    %v7051 = vmul.f32 %v6533, %v6979
    %v7052 = vmul.f32 %v6534, %v6980
    %v7053 = vmul.f32 %v6535, %v6979
    %v7054 = vmul.f32 %v6536, %v6980
    %v7055 = vmul.f32 %v6537, %v6979
    %v7056 = vmul.f32 %v6538, %v6980
    %v7057 = vmul.f32 %v6539, %v6979
    %v7058 = vmul.f32 %v6540, %v6980
    %v7059 = vmul.f32 %v6541, %v6979
    %v7060 = vmul.f32 %v6542, %v6980
    %v7061 = vmul.f32 %v6543, %v6979
    %v7062 = vmul.f32 %v6544, %v6980
    %v7063 = vmul.f32 %v6545, %v6979
    %v7064 = vmul.f32 %v6546, %v6980
    %v7065 = vmul.f32 %v6547, %v6979
    %v7066 = vmul.f32 %v6548, %v6980
    %v7067 = vmul.f32 %v6549, %v6979
    %v7068 = vmul.f32 %v6550, %v6980
    %v7069 = vmul.f32 %v6551, %v6979
    %v7070 = vmul.f32 %v6552, %v6980
    %v7071 = vmul.f32 %v6553, %v6979
    %v7072 = vmul.f32 %v6554, %v6980
    %v7073 = vmul.f32 %v6555, %v6979
    %v7074 = vmul.f32 %v6556, %v6980
    %v7075 = vmul.f32 %v6557, %v6979
    %v7076 = vmul.f32 %v6558, %v6980
    %v7077 = vmul.f32 %v6559, %v6979
    %v7078 = vmul.f32 %v6560, %v6980
    %v7079 = vmul.f32 %v6561, %v6979
    %v7080 = vmul.f32 %v6562, %v6980
    %v7081 = vmul.f32 %v6563, %v6979
    %v7082 = vmul.f32 %v6564, %v6980
    %v7083 = vmul.f32 %v6565, %v6979
    %v7084 = vmul.f32 %v6566, %v6980
    %v7085 = vmul.f32 %v6567, %v6979
    %v7086 = vmul.f32 %v6568, %v6980
    %v7087 = vmul.f32 %v6569, %v6979
    %v7088 = vmul.f32 %v6570, %v6980
    %v7089 = vmul.f32 %v6571, %v6979
    %v7090 = vmul.f32 %v6572, %v6980
    %v7091 = vmul.f32 %v6573, %v6979
    %v7092 = vmul.f32 %v6574, %v6980
    %v7093 = vmul.f32 %v6575, %v6979
    %v7094 = vmul.f32 %v6576, %v6980
    %v7095 = vmul.f32 %v6577, %v6979
    %v7096 = vmul.f32 %v6578, %v6980
    %v7097 = vmul.f32 %v6579, %v6979
    %v7098 = vmul.f32 %v6580, %v6980
    %v7099 = vmul.f32 %v6581, %v6979
    %v7100 = vmul.f32 %v6582, %v6980
    %v7101 = vmul.f32 %v6583, %v6979
    %v7102 = vmul.f32 %v6584, %v6980
    %v7103 = vmul.f32 %v6585, %v6979
    %v7104 = vmul.f32 %v6586, %v6980
    %v7105 = vmul.f32 %v6587, %v6979
    %v7106 = vmul.f32 %v6588, %v6980
    %v7107 = vmul.f32 %v6589, %v6979
    %v7108 = vmul.f32 %v6590, %v6980
    %v7109 = vmul.f32 %v6591, %v6979
    %v7110 = vmul.f32 %v6592, %v6980
    %v7111 = vmul.f32 %v6593, %v6979
    %v7112 = vmul.f32 %v6594, %v6980
    %v7113 = vmul.f32 %v6595, %v6979
    %v7114 = vmul.f32 %v6596, %v6980
    %v7115 = vmul.f32 %v6597, %v6979
    %v7116 = vmul.f32 %v6598, %v6980
    %v7117 = vmul.f32 %v6599, %v6979
    %v7118 = vmul.f32 %v6600, %v6980
    %v7119 = vmul.f32 %v6601, %v6979
    %v7120 = vmul.f32 %v6602, %v6980
    %v7121 = vmul.f32 %v6603, %v6979
    %v7122 = vmul.f32 %v6604, %v6980
    %v7123 = vmul.f32 %v6605, %v6979
    %v7124 = vmul.f32 %v6606, %v6980
    %v7125 = vmul.f32 %v6607, %v6979
    %v7126 = vmul.f32 %v6608, %v6980
    %v7127 = vmul.f32 %v6609, %v6979
    %v7128 = vmul.f32 %v6610, %v6980
    %v7129 = vmul.f32 %v6611, %v6979
    %v7130 = vmul.f32 %v6612, %v6980
    %v7131 = vmul.f32 %v6613, %v6979
    %v7132 = vmul.f32 %v6614, %v6980
    %v7133 = vmul.f32 %v6615, %v6979
    %v7134 = vmul.f32 %v6616, %v6980
    %v7135 = vmul.f32 %v6617, %v6979
    %v7136 = vmul.f32 %v6618, %v6980
    %v7137 = vmul.f32 %v6619, %v6979
    %v7138 = vmul.f32 %v6620, %v6980
    %v7139 = vmul.f32 %v6621, %v6979
    %v7140 = vmul.f32 %v6622, %v6980
    %v7141 = vmul.f32 %v6623, %v6979
    %v7142 = vmul.f32 %v6624, %v6980
    %v7143 = vmul.f32 %v6625, %v6979
    %v7144 = vmul.f32 %v6626, %v6980
    %v7145 = vmul.f32 %v6627, %v6979
    %v7146 = vmul.f32 %v6628, %v6980
    %v7147 = vmul.f32 %v6629, %v6979
    %v7148 = vmul.f32 %v6630, %v6980
    %v7149 = vmul.f32 %v6631, %v6979
    %v7150 = vmul.f32 %v6632, %v6980
    %v7151 = vmul.f32 %v6633, %v6979
    %v7152 = vmul.f32 %v6634, %v6980
    %v7153 = vmul.f32 %v6635, %v6979
    %v7154 = vmul.f32 %v6636, %v6980
    %v7155 = vmul.f32 %v6637, %v6979
    %v7156 = vmul.f32 %v6638, %v6980
    %v7157 = vmul.f32 %v6639, %v6979
    %v7158 = vmul.f32 %v6640, %v6980
    %v7159 = vmul.f32 %v6641, %v6979
    %v7160 = vmul.f32 %v6642, %v6980
    %v7161 = vmul.f32 %v6643, %v6979
    %v7162 = vmul.f32 %v6644, %v6980
    %v7163 = vmul.f32 %v6645, %v6979
    %v7164 = vmul.f32 %v6646, %v6980
    %v7165 = vmul.f32 %v6647, %v6979
    %v7166 = vmul.f32 %v6648, %v6980
    %v7167 = vmul.f32 %v6649, %v6979
    %v7168 = vmul.f32 %v6650, %v6980
    %v7169 = vmul.f32 %v6651, %v6979
    %v7170 = vmul.f32 %v6652, %v6980
    %v7171 = vmul.f32 %v6653, %v6979
    %v7172 = vmul.f32 %v6654, %v6980
    %v7173 = vmul.f32 %v6655, %v6979
    %v7174 = vmul.f32 %v6656, %v6980
    %v7175 = vmul.f32 %v6657, %v6979
    %v7176 = vmul.f32 %v6658, %v6980
    %v7177 = vmul.f32 %v6659, %v6979
    %v7178 = vmul.f32 %v6660, %v6980
    %v7179 = vmul.f32 %v6661, %v6979
    %v7180 = vmul.f32 %v6662, %v6980
    %v7181 = vmul.f32 %v6663, %v6979
    %v7182 = vmul.f32 %v6664, %v6980
    %v7183 = vmul.f32 %v6665, %v6979
    %v7184 = vmul.f32 %v6666, %v6980
    %v7185 = vmul.f32 %v6667, %v6979
    %v7186 = vmul.f32 %v6668, %v6980
    %v7187 = vmul.f32 %v6669, %v6979
    %v7188 = vmul.f32 %v6670, %v6980
    %v7189 = vmul.f32 %v6671, %v6979
    %v7190 = vmul.f32 %v6672, %v6980
    %v7191 = vmul.f32 %v6673, %v6979
    %v7192 = vmul.f32 %v6674, %v6980
    %v7193 = vmul.f32 %v6675, %v6979
    %v7194 = vmul.f32 %v6676, %v6980
    %v7195 = vmul.f32 %v6677, %v6979
    %v7196 = vmul.f32 %v6678, %v6980
    %v7197 = vmul.f32 %v6679, %v6979
    %v7198 = vmul.f32 %v6680, %v6980
    %v7199 = vmul.f32 %v6681, %v6979
    %v7200 = vmul.f32 %v6682, %v6980
    %v7201 = vmul.f32 %v6683, %v6979
    %v7202 = vmul.f32 %v6684, %v6980
    %v7203 = vmul.f32 %v6685, %v6979
    %v7204 = vmul.f32 %v6686, %v6980
    %v7205 = vmul.f32 %v6687, %v6979
    %v7206 = vmul.f32 %v6688, %v6980
    %v7207 = vmul.f32 %v6689, %v6979
    %v7208 = vmul.f32 %v6690, %v6980
    %v7209 = vmul.f32 %v6691, %v6979
    %v7210 = vmul.f32 %v6692, %v6980
    %v7211 = vmul.f32 %v6693, %v6979
    %v7212 = vmul.f32 %v6694, %v6980
    %v7213 = vmul.f32 %v6695, %v6979
    %v7214 = vmul.f32 %v6696, %v6980
    %v7215 = vmul.f32 %v6697, %v6979
    %v7216 = vmul.f32 %v6698, %v6980
    %v7217 = vmul.f32 %v6699, %v6979
    %v7218 = vmul.f32 %v6700, %v6980
    %v7219 = vmul.f32 %v6701, %v6979
    %v7220 = vmul.f32 %v6702, %v6980
    %v7221 = vmul.f32 %v6703, %v6979
    %v7222 = vmul.f32 %v6704, %v6980
    %v7223 = vmul.f32 %v6705, %v6979
    %v7224 = vmul.f32 %v6706, %v6980
    %v7225 = vmul.f32 %v6707, %v6979
    %v7226 = vmul.f32 %v6708, %v6980
    %v7227 = vmul.f32 %v6709, %v6979
    %v7228 = vmul.f32 %v6710, %v6980
    %v7229 = vmul.f32 %v6711, %v6979
    %v7230 = vmul.f32 %v6712, %v6980
    %v7231 = vmul.f32 %v6713, %v6979
    %v7232 = vmul.f32 %v6714, %v6980
    %v7233 = vmul.f32 %v6715, %v6979
    %v7234 = vmul.f32 %v6716, %v6980
    %v7235 = vmul.f32 %v6717, %v6979
    %v7236 = vmul.f32 %v6718, %v6980
    %v7237 = vmul.f32 %v6719, %v6979
    %v7238 = vmul.f32 %v6720, %v6980
    %v7239 = vmul.f32 %v6721, %v6979
    %v7240 = vmul.f32 %v6722, %v6980
    %v7241 = vmul.f32 %v6723, %v6979
    %v7242 = vmul.f32 %v6724, %v6980
    %v7243 = vmul.f32 %v6725, %v6979
    %v7244 = vmul.f32 %v6726, %v6980
    %v7245 = vmul.f32 %v6727, %v6979
    %v7246 = vmul.f32 %v6728, %v6980
    %v7247 = vmul.f32 %v6729, %v6979
    %v7248 = vmul.f32 %v6730, %v6980
    %v7249 = vmul.f32 %v6731, %v6979
    %v7250 = vmul.f32 %v6732, %v6980
    %v7251 = vmul.f32 %v6733, %v6979
    %v7252 = vmul.f32 %v6734, %v6980
    %v7253 = vmul.f32 %v6735, %v6979
    %v7254 = vmul.f32 %v6736, %v6980
    %v7255 = vmul.f32 %v6737, %v6979
    %v7256 = vmul.f32 %v6738, %v6980
    %v7257 = vmul.f32 %v6739, %v6979
    %v7258 = vmul.f32 %v6740, %v6980
    %v7259 = vmul.f32 %v6741, %v6979
    %v7260 = vmul.f32 %v6742, %v6980
    %v7261 = vmul.f32 %v6743, %v6979
    %v7262 = vmul.f32 %v6744, %v6980
    %v7263 = vmul.f32 %v6745, %v6979
    %v7264 = vmul.f32 %v6746, %v6980
    %v7265 = vmul.f32 %v6747, %v6979
    %v7266 = vmul.f32 %v6748, %v6980
    %v7267 = vmul.f32 %v6749, %v6979
    %v7268 = vmul.f32 %v6750, %v6980
    %v7269 = vmul.f32 %v6751, %v6979
    %v7270 = vmul.f32 %v6752, %v6980
    %v7271 = vmul.f32 %v6753, %v6979
    %v7272 = vmul.f32 %v6754, %v6980
    %v7273 = vmul.f32 %v6755, %v6979
    %v7274 = vmul.f32 %v6756, %v6980
    %v7275 = vmul.f32 %v6757, %v6979
    %v7276 = vmul.f32 %v6758, %v6980
    %v7277 = vmul.f32 %v6759, %v6979
    %v7278 = vmul.f32 %v6760, %v6980
    %v7279 = vmul.f32 %v6761, %v6979
    %v7280 = vmul.f32 %v6762, %v6980
    %v7281 = vmul.f32 %v6763, %v6979
    %v7282 = vmul.f32 %v6764, %v6980
    %v7283 = vmul.f32 %v6765, %v6979
    %v7284 = vmul.f32 %v6766, %v6980
    %v7285 = vmul.f32 %v6767, %v6979
    %v7286 = vmul.f32 %v6768, %v6980
    %v7287 = vmul.f32 %v6769, %v6979
    %v7288 = vmul.f32 %v6770, %v6980
    %v7289 = vmul.f32 %v6771, %v6979
    %v7290 = vmul.f32 %v6772, %v6980
    %v7291 = vmul.f32 %v6773, %v6979
    %v7292 = vmul.f32 %v6774, %v6980
    %v7293 = vmul.f32 %v6775, %v6979
    %v7294 = vmul.f32 %v6776, %v6980
    %v7295 = vmul.f32 %v6777, %v6979
    %v7296 = vmul.f32 %v6778, %v6980
    %v7297 = vmul.f32 %v6779, %v6979
    %v7298 = vmul.f32 %v6780, %v6980
    %v7299 = vmul.f32 %v6781, %v6979
    %v7300 = vmul.f32 %v6782, %v6980
    %v7301 = vmul.f32 %v6783, %v6979
    %v7302 = vmul.f32 %v6784, %v6980
    %v7303 = vmul.f32 %v6785, %v6979
    %v7304 = vmul.f32 %v6786, %v6980
    %v7305 = vmul.f32 %v6787, %v6979
    %v7306 = vmul.f32 %v6788, %v6980
    %v7307 = vmul.f32 %v6789, %v6979
    %v7308 = vmul.f32 %v6790, %v6980
    %v7309 = vmul.f32 %v6791, %v6979
    %v7310 = vmul.f32 %v6792, %v6980
    %v7311 = vmul.f32 %v6793, %v6979
    %v7312 = vmul.f32 %v6794, %v6980
    %v7313 = vmul.f32 %v6795, %v6979
    %v7314 = vmul.f32 %v6796, %v6980
    %v7315 = vmul.f32 %v6797, %v6979
    %v7316 = vmul.f32 %v6798, %v6980
    %v7317 = vmul.f32 %v6799, %v6979
    %v7318 = vmul.f32 %v6800, %v6980
    %v7319 = vmul.f32 %v6801, %v6979
    %v7320 = vmul.f32 %v6802, %v6980
    %v7321 = vmul.f32 %v6803, %v6979
    %v7322 = vmul.f32 %v6804, %v6980
    %v7323 = vmul.f32 %v6805, %v6979
    %v7324 = vmul.f32 %v6806, %v6980
    %v7325 = vmul.f32 %v6807, %v6979
    %v7326 = vmul.f32 %v6808, %v6980
    %v7327 = vmul.f32 %v6809, %v6979
    %v7328 = vmul.f32 %v6810, %v6980
    %v7329 = vmul.f32 %v6811, %v6979
    %v7330 = vmul.f32 %v6812, %v6980
    %v7331 = vmul.f32 %v6813, %v6979
    %v7332 = vmul.f32 %v6814, %v6980
    %v7333 = vmul.f32 %v6815, %v6979
    %v7334 = vmul.f32 %v6816, %v6980
    %v7335 = vmul.f32 %v6817, %v6979
    %v7336 = vmul.f32 %v6818, %v6980
    %v7337 = vmul.f32 %v6819, %v6979
    %v7338 = vmul.f32 %v6820, %v6980
    %v7339 = vmul.f32 %v6821, %v6979
    %v7340 = vmul.f32 %v6822, %v6980
    %v7341 = vmul.f32 %v6823, %v6979
    %v7342 = vmul.f32 %v6824, %v6980
    %v7343 = vmul.f32 %v6825, %v6979
    %v7344 = vmul.f32 %v6826, %v6980
    %v7345 = vmul.f32 %v6827, %v6979
    %v7346 = vmul.f32 %v6828, %v6980
    %v7347 = vmul.f32 %v6829, %v6979
    %v7348 = vmul.f32 %v6830, %v6980
    %v7349 = vmul.f32 %v6831, %v6979
    %v7350 = vmul.f32 %v6832, %v6980
    %v7351 = vmul.f32 %v6833, %v6979
    %v7352 = vmul.f32 %v6834, %v6980
    %v7353 = vmul.f32 %v6835, %v6979
    %v7354 = vmul.f32 %v6836, %v6980
    %v7355 = vmul.f32 %v6837, %v6979
    %v7356 = vmul.f32 %v6838, %v6980
    %v7357 = vmul.f32 %v6839, %v6979
    %v7358 = vmul.f32 %v6840, %v6980
    %v7359 = vmul.f32 %v6841, %v6979
    %v7360 = vmul.f32 %v6842, %v6980
    %v7361 = vmul.f32 %v6843, %v6979
    %v7362 = vmul.f32 %v6844, %v6980
    %v7363 = vmul.f32 %v6845, %v6979
    %v7364 = vmul.f32 %v6846, %v6980
    %v7365 = vmul.f32 %v6847, %v6979
    %v7366 = vmul.f32 %v6848, %v6980
    %v7367 = vmul.f32 %v6849, %v6979
    %v7368 = vmul.f32 %v6850, %v6980
    %v7369 = vmul.f32 %v6851, %v6979
    %v7370 = vmul.f32 %v6852, %v6980
    %v7371 = vmul.f32 %v6853, %v6979
    %v7372 = vmul.f32 %v6854, %v6980
    %v7373 = vmul.f32 %v6855, %v6979
    %v7374 = vmul.f32 %v6856, %v6980
    %v7375 = vmul.f32 %v6857, %v6979
    %v7376 = vmul.f32 %v6858, %v6980
    %v7377 = vmul.f32 %v6859, %v6979
    %v7378 = vmul.f32 %v6860, %v6980
    %v7379 = vmul.f32 %v6861, %v6979
    %v7380 = vmul.f32 %v6862, %v6980
    %v7381 = vmul.f32 %v6863, %v6979
    %v7382 = vmul.f32 %v6864, %v6980
    %v7383 = vmul.f32 %v6865, %v6979
    %v7384 = vmul.f32 %v6866, %v6980
    %v7385 = vmul.f32 %v6867, %v6979
    %v7386 = vmul.f32 %v6868, %v6980
    %v7387 = vmul.f32 %v6869, %v6979
    %v7388 = vmul.f32 %v6870, %v6980
    %v7389 = vmul.f32 %v6871, %v6979
    %v7390 = vmul.f32 %v6872, %v6980
    %v7391 = vmul.f32 %v6873, %v6979
    %v7392 = vmul.f32 %v6874, %v6980
    %v7393 = vmul.f32 %v6875, %v6979
    %v7394 = vmul.f32 %v6876, %v6980
    %v7395 = vmul.f32 %v6877, %v6979
    %v7396 = vmul.f32 %v6878, %v6980
    %v7397 = vmul.f32 %v6879, %v6979
    %v7398 = vmul.f32 %v6880, %v6980
    %v7399 = vmul.f32 %v6881, %v6979
    %v7400 = vmul.f32 %v6882, %v6980
    %v7401 = vmul.f32 %v6883, %v6979
    %v7402 = vmul.f32 %v6884, %v6980
    %v7403 = vmul.f32 %v6885, %v6979
    %v7404 = vmul.f32 %v6886, %v6980
    %v7405 = vmul.f32 %v6887, %v6979
    %v7406 = vmul.f32 %v6888, %v6980
    %v7407 = vmul.f32 %v6889, %v6979
    %v7408 = vmul.f32 %v6890, %v6980
    %v7409 = vmul.f32 %v6891, %v6979
    %v7410 = vmul.f32 %v6892, %v6980
    %v7411 = vmul.f32 %v6893, %v6979
    %v7412 = vmul.f32 %v6894, %v6980
    %v7413 = vmul.f32 %v6895, %v6979
    %v7414 = vmul.f32 %v6896, %v6980
    %v7415 = vmul.f32 %v6897, %v6979
    %v7416 = vmul.f32 %v6898, %v6980
    %v7417 = vmul.f32 %v6899, %v6979
    %v7418 = vmul.f32 %v6900, %v6980
    %v7419 = vmul.f32 %v6901, %v6979
    %v7420 = vmul.f32 %v6902, %v6980
    %v7421 = vmul.f32 %v6903, %v6979
    %v7422 = vmul.f32 %v6904, %v6980
    %v7423 = vmul.f32 %v6905, %v6979
    %v7424 = vmul.f32 %v6906, %v6980
    %v7425 = vmul.f32 %v6907, %v6979
    %v7426 = vmul.f32 %v6908, %v6980
    %v7427 = vmul.f32 %v6909, %v6979
    %v7428 = vmul.f32 %v6910, %v6980
    %v7429 = vmul.f32 %v6911, %v6979
    %v7430 = vmul.f32 %v6912, %v6980
    %v7431 = vmul.f32 %v6913, %v6979
    %v7432 = vmul.f32 %v6914, %v6980
    %v7433 = vmul.f32 %v6915, %v6979
    %v7434 = vmul.f32 %v6916, %v6980
    %v7435 = vmul.f32 %v6917, %v6979
    %v7436 = vmul.f32 %v6918, %v6980
    %v7437 = vmul.f32 %v6919, %v6979
    %v7438 = vmul.f32 %v6920, %v6980
    %v7439 = vmul.f32 %v6921, %v6979
    %v7440 = vmul.f32 %v6922, %v6980
    %v7441 = vmul.f32 %v6923, %v6979
    %v7442 = vmul.f32 %v6924, %v6980
    %v7443 = vmul.f32 %v6925, %v6979
    %v7444 = vmul.f32 %v6926, %v6980
    %v7445 = vmul.f32 %v6927, %v6979
    %v7446 = vmul.f32 %v6928, %v6980
    %v7447 = vmul.f32 %v6929, %v6979
    %v7448 = vmul.f32 %v6930, %v6980
    %v7449 = vmul.f32 %v6931, %v6979
    %v7450 = vmul.f32 %v6932, %v6980
    %v7451 = vmul.f32 %v6933, %v6979
    %v7452 = vmul.f32 %v6934, %v6980
    %v7453 = vmul.f32 %v6935, %v6979
    %v7454 = vmul.f32 %v6936, %v6980
    %v7455 = vmul.f32 %v6937, %v6979
    %v7456 = vmul.f32 %v6938, %v6980
    %v7457 = vmul.f32 %v6939, %v6979
    %v7458 = vmul.f32 %v6940, %v6980
    %v7459 = vmul.f32 %v6941, %v6979
    %v7460 = vmul.f32 %v6942, %v6980
    %v7461 = vmul.f32 %v6943, %v6979
    %v7462 = vmul.f32 %v6944, %v6980
    %v7463 = vmul.f32 %v6945, %v6979
    %v7464 = vmul.f32 %v6946, %v6980
    %v7465 = vmul.f32 %v6947, %v6979
    %v7466 = vmul.f32 %v6948, %v6980
    %v7467 = vmul.f32 %v6949, %v6979
    %v7468 = vmul.f32 %v6950, %v6980
    %v7469 = vmul.f32 %v6951, %v6979
    %v7470 = vmul.f32 %v6952, %v6980
    %v7471 = vmul.f32 %v6953, %v6979
    %v7472 = vmul.f32 %v6954, %v6980
    %v7473 = vmul.f32 %v6955, %v6979
    %v7474 = vmul.f32 %v6956, %v6980
    %v7475 = vmul.f32 %v6957, %v6979
    %v7476 = vmul.f32 %v6958, %v6980
    %v7477 = vmul.f32 %v6959, %v6979
    %v7478 = vmul.f32 %v6960, %v6980
    %v7479 = vmul.f32 %v6961, %v6979
    %v7480 = vmul.f32 %v6962, %v6980
    %v7481 = vmul.f32 %v6963, %v6979
    %v7482 = vmul.f32 %v6964, %v6980
    %v7483 = vmul.f32 %v6965, %v6979
    %v7484 = vmul.f32 %v6966, %v6980
    %v7485 = vmul.f32 %v6967, %v6979
    %v7486 = vmul.f32 %v6968, %v6980
    %v7487 = vmul.f32 %v6969, %v6979
    %v7488 = vmul.f32 %v6970, %v6980
    %v7489 = vmul.f32 %v6971, %v6979
    %v7490 = vmul.f32 %v6972, %v6980
    %v7491 = vmul.f32 %v6973, %v6979
    %v7492 = vmul.f32 %v6974, %v6980
    %v7493 = vmul.f32 %v6975, %v6979
    %v7494 = vmul.f32 %v6976, %v6980
    %v7495 = vld [vmem:[#allocation7] sm:$0x3]
    %v7497 = vperm.slane %v7495, 0
    %v7498 = vperm.slane %v7495, 1
    %v7501 = vadd.f32 %v6983, %v7497
    %v7502 = vadd.f32 %v6984, %v7498
    %v7503 = vadd.f32 %v6985, %v7497
    %v7504 = vadd.f32 %v6986, %v7498
    %v7505 = vadd.f32 %v6987, %v7497
    %v7506 = vadd.f32 %v6988, %v7498
    %v7507 = vadd.f32 %v6989, %v7497
    %v7508 = vadd.f32 %v6990, %v7498
    %v7509 = vadd.f32 %v6991, %v7497
    %v7510 = vadd.f32 %v6992, %v7498
    %v7511 = vadd.f32 %v6993, %v7497
    %v7512 = vadd.f32 %v6994, %v7498
    %v7513 = vadd.f32 %v6995, %v7497
    %v7514 = vadd.f32 %v6996, %v7498
    %v7515 = vadd.f32 %v6997, %v7497
    %v7516 = vadd.f32 %v6998, %v7498
    %v7517 = vadd.f32 %v6999, %v7497
    %v7518 = vadd.f32 %v7000, %v7498
    %v7519 = vadd.f32 %v7001, %v7497
    %v7520 = vadd.f32 %v7002, %v7498
    %v7521 = vadd.f32 %v7003, %v7497
    %v7522 = vadd.f32 %v7004, %v7498
    %v7523 = vadd.f32 %v7005, %v7497
    %v7524 = vadd.f32 %v7006, %v7498
    %v7525 = vadd.f32 %v7007, %v7497
    %v7526 = vadd.f32 %v7008, %v7498
    %v7527 = vadd.f32 %v7009, %v7497
    %v7528 = vadd.f32 %v7010, %v7498
    %v7529 = vadd.f32 %v7011, %v7497
    %v7530 = vadd.f32 %v7012, %v7498
    %v7531 = vadd.f32 %v7013, %v7497
    %v7532 = vadd.f32 %v7014, %v7498
    %v7533 = vadd.f32 %v7015, %v7497
    %v7534 = vadd.f32 %v7016, %v7498
    %v7535 = vadd.f32 %v7017, %v7497
    %v7536 = vadd.f32 %v7018, %v7498
    %v7537 = vadd.f32 %v7019, %v7497
    %v7538 = vadd.f32 %v7020, %v7498
    %v7539 = vadd.f32 %v7021, %v7497
    %v7540 = vadd.f32 %v7022, %v7498
    %v7541 = vadd.f32 %v7023, %v7497
    %v7542 = vadd.f32 %v7024, %v7498
    %v7543 = vadd.f32 %v7025, %v7497
    %v7544 = vadd.f32 %v7026, %v7498
    %v7545 = vadd.f32 %v7027, %v7497
    %v7546 = vadd.f32 %v7028, %v7498
    %v7547 = vadd.f32 %v7029, %v7497
    %v7548 = vadd.f32 %v7030, %v7498
    %v7549 = vadd.f32 %v7031, %v7497
    %v7550 = vadd.f32 %v7032, %v7498
    %v7551 = vadd.f32 %v7033, %v7497
    %v7552 = vadd.f32 %v7034, %v7498
    %v7553 = vadd.f32 %v7035, %v7497
    %v7554 = vadd.f32 %v7036, %v7498
    %v7555 = vadd.f32 %v7037, %v7497
    %v7556 = vadd.f32 %v7038, %v7498
    %v7557 = vadd.f32 %v7039, %v7497
    %v7558 = vadd.f32 %v7040, %v7498
    %v7559 = vadd.f32 %v7041, %v7497
    %v7560 = vadd.f32 %v7042, %v7498
    %v7561 = vadd.f32 %v7043, %v7497
    %v7562 = vadd.f32 %v7044, %v7498
    %v7563 = vadd.f32 %v7045, %v7497
    %v7564 = vadd.f32 %v7046, %v7498
    %v7565 = vadd.f32 %v7047, %v7497
    %v7566 = vadd.f32 %v7048, %v7498
    %v7567 = vadd.f32 %v7049, %v7497
    %v7568 = vadd.f32 %v7050, %v7498
    %v7569 = vadd.f32 %v7051, %v7497
    %v7570 = vadd.f32 %v7052, %v7498
    %v7571 = vadd.f32 %v7053, %v7497
    %v7572 = vadd.f32 %v7054, %v7498
    %v7573 = vadd.f32 %v7055, %v7497
    %v7574 = vadd.f32 %v7056, %v7498
    %v7575 = vadd.f32 %v7057, %v7497
    %v7576 = vadd.f32 %v7058, %v7498
    %v7577 = vadd.f32 %v7059, %v7497
    %v7578 = vadd.f32 %v7060, %v7498
    %v7579 = vadd.f32 %v7061, %v7497
    %v7580 = vadd.f32 %v7062, %v7498
    %v7581 = vadd.f32 %v7063, %v7497
    %v7582 = vadd.f32 %v7064, %v7498
    %v7583 = vadd.f32 %v7065, %v7497
    %v7584 = vadd.f32 %v7066, %v7498
    %v7585 = vadd.f32 %v7067, %v7497
    %v7586 = vadd.f32 %v7068, %v7498
    %v7587 = vadd.f32 %v7069, %v7497
    %v7588 = vadd.f32 %v7070, %v7498
    %v7589 = vadd.f32 %v7071, %v7497
    %v7590 = vadd.f32 %v7072, %v7498
    %v7591 = vadd.f32 %v7073, %v7497
    %v7592 = vadd.f32 %v7074, %v7498
    %v7593 = vadd.f32 %v7075, %v7497
    %v7594 = vadd.f32 %v7076, %v7498
    %v7595 = vadd.f32 %v7077, %v7497
    %v7596 = vadd.f32 %v7078, %v7498
    %v7597 = vadd.f32 %v7079, %v7497
    %v7598 = vadd.f32 %v7080, %v7498
    %v7599 = vadd.f32 %v7081, %v7497
    %v7600 = vadd.f32 %v7082, %v7498
    %v7601 = vadd.f32 %v7083, %v7497
    %v7602 = vadd.f32 %v7084, %v7498
    %v7603 = vadd.f32 %v7085, %v7497
    %v7604 = vadd.f32 %v7086, %v7498
    %v7605 = vadd.f32 %v7087, %v7497
    %v7606 = vadd.f32 %v7088, %v7498
    %v7607 = vadd.f32 %v7089, %v7497
    %v7608 = vadd.f32 %v7090, %v7498
    %v7609 = vadd.f32 %v7091, %v7497
    %v7610 = vadd.f32 %v7092, %v7498
    %v7611 = vadd.f32 %v7093, %v7497
    %v7612 = vadd.f32 %v7094, %v7498
    %v7613 = vadd.f32 %v7095, %v7497
    %v7614 = vadd.f32 %v7096, %v7498
    %v7615 = vadd.f32 %v7097, %v7497
    %v7616 = vadd.f32 %v7098, %v7498
    %v7617 = vadd.f32 %v7099, %v7497
    %v7618 = vadd.f32 %v7100, %v7498
    %v7619 = vadd.f32 %v7101, %v7497
    %v7620 = vadd.f32 %v7102, %v7498
    %v7621 = vadd.f32 %v7103, %v7497
    %v7622 = vadd.f32 %v7104, %v7498
    %v7623 = vadd.f32 %v7105, %v7497
    %v7624 = vadd.f32 %v7106, %v7498
    %v7625 = vadd.f32 %v7107, %v7497
    %v7626 = vadd.f32 %v7108, %v7498
    %v7627 = vadd.f32 %v7109, %v7497
    %v7628 = vadd.f32 %v7110, %v7498
    %v7629 = vadd.f32 %v7111, %v7497
    %v7630 = vadd.f32 %v7112, %v7498
    %v7631 = vadd.f32 %v7113, %v7497
    %v7632 = vadd.f32 %v7114, %v7498
    %v7633 = vadd.f32 %v7115, %v7497
    %v7634 = vadd.f32 %v7116, %v7498
    %v7635 = vadd.f32 %v7117, %v7497
    %v7636 = vadd.f32 %v7118, %v7498
    %v7637 = vadd.f32 %v7119, %v7497
    %v7638 = vadd.f32 %v7120, %v7498
    %v7639 = vadd.f32 %v7121, %v7497
    %v7640 = vadd.f32 %v7122, %v7498
    %v7641 = vadd.f32 %v7123, %v7497
    %v7642 = vadd.f32 %v7124, %v7498
    %v7643 = vadd.f32 %v7125, %v7497
    %v7644 = vadd.f32 %v7126, %v7498
    %v7645 = vadd.f32 %v7127, %v7497
    %v7646 = vadd.f32 %v7128, %v7498
    %v7647 = vadd.f32 %v7129, %v7497
    %v7648 = vadd.f32 %v7130, %v7498
    %v7649 = vadd.f32 %v7131, %v7497
    %v7650 = vadd.f32 %v7132, %v7498
    %v7651 = vadd.f32 %v7133, %v7497
    %v7652 = vadd.f32 %v7134, %v7498
    %v7653 = vadd.f32 %v7135, %v7497
    %v7654 = vadd.f32 %v7136, %v7498
    %v7655 = vadd.f32 %v7137, %v7497
    %v7656 = vadd.f32 %v7138, %v7498
    %v7657 = vadd.f32 %v7139, %v7497
    %v7658 = vadd.f32 %v7140, %v7498
    %v7659 = vadd.f32 %v7141, %v7497
    %v7660 = vadd.f32 %v7142, %v7498
    %v7661 = vadd.f32 %v7143, %v7497
    %v7662 = vadd.f32 %v7144, %v7498
    %v7663 = vadd.f32 %v7145, %v7497
    %v7664 = vadd.f32 %v7146, %v7498
    %v7665 = vadd.f32 %v7147, %v7497
    %v7666 = vadd.f32 %v7148, %v7498
    %v7667 = vadd.f32 %v7149, %v7497
    %v7668 = vadd.f32 %v7150, %v7498
    %v7669 = vadd.f32 %v7151, %v7497
    %v7670 = vadd.f32 %v7152, %v7498
    %v7671 = vadd.f32 %v7153, %v7497
    %v7672 = vadd.f32 %v7154, %v7498
    %v7673 = vadd.f32 %v7155, %v7497
    %v7674 = vadd.f32 %v7156, %v7498
    %v7675 = vadd.f32 %v7157, %v7497
    %v7676 = vadd.f32 %v7158, %v7498
    %v7677 = vadd.f32 %v7159, %v7497
    %v7678 = vadd.f32 %v7160, %v7498
    %v7679 = vadd.f32 %v7161, %v7497
    %v7680 = vadd.f32 %v7162, %v7498
    %v7681 = vadd.f32 %v7163, %v7497
    %v7682 = vadd.f32 %v7164, %v7498
    %v7683 = vadd.f32 %v7165, %v7497
    %v7684 = vadd.f32 %v7166, %v7498
    %v7685 = vadd.f32 %v7167, %v7497
    %v7686 = vadd.f32 %v7168, %v7498
    %v7687 = vadd.f32 %v7169, %v7497
    %v7688 = vadd.f32 %v7170, %v7498
    %v7689 = vadd.f32 %v7171, %v7497
    %v7690 = vadd.f32 %v7172, %v7498
    %v7691 = vadd.f32 %v7173, %v7497
    %v7692 = vadd.f32 %v7174, %v7498
    %v7693 = vadd.f32 %v7175, %v7497
    %v7694 = vadd.f32 %v7176, %v7498
    %v7695 = vadd.f32 %v7177, %v7497
    %v7696 = vadd.f32 %v7178, %v7498
    %v7697 = vadd.f32 %v7179, %v7497
    %v7698 = vadd.f32 %v7180, %v7498
    %v7699 = vadd.f32 %v7181, %v7497
    %v7700 = vadd.f32 %v7182, %v7498
    %v7701 = vadd.f32 %v7183, %v7497
    %v7702 = vadd.f32 %v7184, %v7498
    %v7703 = vadd.f32 %v7185, %v7497
    %v7704 = vadd.f32 %v7186, %v7498
    %v7705 = vadd.f32 %v7187, %v7497
    %v7706 = vadd.f32 %v7188, %v7498
    %v7707 = vadd.f32 %v7189, %v7497
    %v7708 = vadd.f32 %v7190, %v7498
    %v7709 = vadd.f32 %v7191, %v7497
    %v7710 = vadd.f32 %v7192, %v7498
    %v7711 = vadd.f32 %v7193, %v7497
    %v7712 = vadd.f32 %v7194, %v7498
    %v7713 = vadd.f32 %v7195, %v7497
    %v7714 = vadd.f32 %v7196, %v7498
    %v7715 = vadd.f32 %v7197, %v7497
    %v7716 = vadd.f32 %v7198, %v7498
    %v7717 = vadd.f32 %v7199, %v7497
    %v7718 = vadd.f32 %v7200, %v7498
    %v7719 = vadd.f32 %v7201, %v7497
    %v7720 = vadd.f32 %v7202, %v7498
    %v7721 = vadd.f32 %v7203, %v7497
    %v7722 = vadd.f32 %v7204, %v7498
    %v7723 = vadd.f32 %v7205, %v7497
    %v7724 = vadd.f32 %v7206, %v7498
    %v7725 = vadd.f32 %v7207, %v7497
    %v7726 = vadd.f32 %v7208, %v7498
    %v7727 = vadd.f32 %v7209, %v7497
    %v7728 = vadd.f32 %v7210, %v7498
    %v7729 = vadd.f32 %v7211, %v7497
    %v7730 = vadd.f32 %v7212, %v7498
    %v7731 = vadd.f32 %v7213, %v7497
    %v7732 = vadd.f32 %v7214, %v7498
    %v7733 = vadd.f32 %v7215, %v7497
    %v7734 = vadd.f32 %v7216, %v7498
    %v7735 = vadd.f32 %v7217, %v7497
    %v7736 = vadd.f32 %v7218, %v7498
    %v7737 = vadd.f32 %v7219, %v7497
    %v7738 = vadd.f32 %v7220, %v7498
    %v7739 = vadd.f32 %v7221, %v7497
    %v7740 = vadd.f32 %v7222, %v7498
    %v7741 = vadd.f32 %v7223, %v7497
    %v7742 = vadd.f32 %v7224, %v7498
    %v7743 = vadd.f32 %v7225, %v7497
    %v7744 = vadd.f32 %v7226, %v7498
    %v7745 = vadd.f32 %v7227, %v7497
    %v7746 = vadd.f32 %v7228, %v7498
    %v7747 = vadd.f32 %v7229, %v7497
    %v7748 = vadd.f32 %v7230, %v7498
    %v7749 = vadd.f32 %v7231, %v7497
    %v7750 = vadd.f32 %v7232, %v7498
    %v7751 = vadd.f32 %v7233, %v7497
    %v7752 = vadd.f32 %v7234, %v7498
    %v7753 = vadd.f32 %v7235, %v7497
    %v7754 = vadd.f32 %v7236, %v7498
    %v7755 = vadd.f32 %v7237, %v7497
    %v7756 = vadd.f32 %v7238, %v7498
    %v7757 = vadd.f32 %v7239, %v7497
    %v7758 = vadd.f32 %v7240, %v7498
    %v7759 = vadd.f32 %v7241, %v7497
    %v7760 = vadd.f32 %v7242, %v7498
    %v7761 = vadd.f32 %v7243, %v7497
    %v7762 = vadd.f32 %v7244, %v7498
    %v7763 = vadd.f32 %v7245, %v7497
    %v7764 = vadd.f32 %v7246, %v7498
    %v7765 = vadd.f32 %v7247, %v7497
    %v7766 = vadd.f32 %v7248, %v7498
    %v7767 = vadd.f32 %v7249, %v7497
    %v7768 = vadd.f32 %v7250, %v7498
    %v7769 = vadd.f32 %v7251, %v7497
    %v7770 = vadd.f32 %v7252, %v7498
    %v7771 = vadd.f32 %v7253, %v7497
    %v7772 = vadd.f32 %v7254, %v7498
    %v7773 = vadd.f32 %v7255, %v7497
    %v7774 = vadd.f32 %v7256, %v7498
    %v7775 = vadd.f32 %v7257, %v7497
    %v7776 = vadd.f32 %v7258, %v7498
    %v7777 = vadd.f32 %v7259, %v7497
    %v7778 = vadd.f32 %v7260, %v7498
    %v7779 = vadd.f32 %v7261, %v7497
    %v7780 = vadd.f32 %v7262, %v7498
    %v7781 = vadd.f32 %v7263, %v7497
    %v7782 = vadd.f32 %v7264, %v7498
    %v7783 = vadd.f32 %v7265, %v7497
    %v7784 = vadd.f32 %v7266, %v7498
    %v7785 = vadd.f32 %v7267, %v7497
    %v7786 = vadd.f32 %v7268, %v7498
    %v7787 = vadd.f32 %v7269, %v7497
    %v7788 = vadd.f32 %v7270, %v7498
    %v7789 = vadd.f32 %v7271, %v7497
    %v7790 = vadd.f32 %v7272, %v7498
    %v7791 = vadd.f32 %v7273, %v7497
    %v7792 = vadd.f32 %v7274, %v7498
    %v7793 = vadd.f32 %v7275, %v7497
    %v7794 = vadd.f32 %v7276, %v7498
    %v7795 = vadd.f32 %v7277, %v7497
    %v7796 = vadd.f32 %v7278, %v7498
    %v7797 = vadd.f32 %v7279, %v7497
    %v7798 = vadd.f32 %v7280, %v7498
    %v7799 = vadd.f32 %v7281, %v7497
    %v7800 = vadd.f32 %v7282, %v7498
    %v7801 = vadd.f32 %v7283, %v7497
    %v7802 = vadd.f32 %v7284, %v7498
    %v7803 = vadd.f32 %v7285, %v7497
    %v7804 = vadd.f32 %v7286, %v7498
    %v7805 = vadd.f32 %v7287, %v7497
    %v7806 = vadd.f32 %v7288, %v7498
    %v7807 = vadd.f32 %v7289, %v7497
    %v7808 = vadd.f32 %v7290, %v7498
    %v7809 = vadd.f32 %v7291, %v7497
    %v7810 = vadd.f32 %v7292, %v7498
    %v7811 = vadd.f32 %v7293, %v7497
    %v7812 = vadd.f32 %v7294, %v7498
    %v7813 = vadd.f32 %v7295, %v7497
    %v7814 = vadd.f32 %v7296, %v7498
    %v7815 = vadd.f32 %v7297, %v7497
    %v7816 = vadd.f32 %v7298, %v7498
    %v7817 = vadd.f32 %v7299, %v7497
    %v7818 = vadd.f32 %v7300, %v7498
    %v7819 = vadd.f32 %v7301, %v7497
    %v7820 = vadd.f32 %v7302, %v7498
    %v7821 = vadd.f32 %v7303, %v7497
    %v7822 = vadd.f32 %v7304, %v7498
    %v7823 = vadd.f32 %v7305, %v7497
    %v7824 = vadd.f32 %v7306, %v7498
    %v7825 = vadd.f32 %v7307, %v7497
    %v7826 = vadd.f32 %v7308, %v7498
    %v7827 = vadd.f32 %v7309, %v7497
    %v7828 = vadd.f32 %v7310, %v7498
    %v7829 = vadd.f32 %v7311, %v7497
    %v7830 = vadd.f32 %v7312, %v7498
    %v7831 = vadd.f32 %v7313, %v7497
    %v7832 = vadd.f32 %v7314, %v7498
    %v7833 = vadd.f32 %v7315, %v7497
    %v7834 = vadd.f32 %v7316, %v7498
    %v7835 = vadd.f32 %v7317, %v7497
    %v7836 = vadd.f32 %v7318, %v7498
    %v7837 = vadd.f32 %v7319, %v7497
    %v7838 = vadd.f32 %v7320, %v7498
    %v7839 = vadd.f32 %v7321, %v7497
    %v7840 = vadd.f32 %v7322, %v7498
    %v7841 = vadd.f32 %v7323, %v7497
    %v7842 = vadd.f32 %v7324, %v7498
    %v7843 = vadd.f32 %v7325, %v7497
    %v7844 = vadd.f32 %v7326, %v7498
    %v7845 = vadd.f32 %v7327, %v7497
    %v7846 = vadd.f32 %v7328, %v7498
    %v7847 = vadd.f32 %v7329, %v7497
    %v7848 = vadd.f32 %v7330, %v7498
    %v7849 = vadd.f32 %v7331, %v7497
    %v7850 = vadd.f32 %v7332, %v7498
    %v7851 = vadd.f32 %v7333, %v7497
    %v7852 = vadd.f32 %v7334, %v7498
    %v7853 = vadd.f32 %v7335, %v7497
    %v7854 = vadd.f32 %v7336, %v7498
    %v7855 = vadd.f32 %v7337, %v7497
    %v7856 = vadd.f32 %v7338, %v7498
    %v7857 = vadd.f32 %v7339, %v7497
    %v7858 = vadd.f32 %v7340, %v7498
    %v7859 = vadd.f32 %v7341, %v7497
    %v7860 = vadd.f32 %v7342, %v7498
    %v7861 = vadd.f32 %v7343, %v7497
    %v7862 = vadd.f32 %v7344, %v7498
    %v7863 = vadd.f32 %v7345, %v7497
    %v7864 = vadd.f32 %v7346, %v7498
    %v7865 = vadd.f32 %v7347, %v7497
    %v7866 = vadd.f32 %v7348, %v7498
    %v7867 = vadd.f32 %v7349, %v7497
    %v7868 = vadd.f32 %v7350, %v7498
    %v7869 = vadd.f32 %v7351, %v7497
    %v7870 = vadd.f32 %v7352, %v7498
    %v7871 = vadd.f32 %v7353, %v7497
    %v7872 = vadd.f32 %v7354, %v7498
    %v7873 = vadd.f32 %v7355, %v7497
    %v7874 = vadd.f32 %v7356, %v7498
    %v7875 = vadd.f32 %v7357, %v7497
    %v7876 = vadd.f32 %v7358, %v7498
    %v7877 = vadd.f32 %v7359, %v7497
    %v7878 = vadd.f32 %v7360, %v7498
    %v7879 = vadd.f32 %v7361, %v7497
    %v7880 = vadd.f32 %v7362, %v7498
    %v7881 = vadd.f32 %v7363, %v7497
    %v7882 = vadd.f32 %v7364, %v7498
    %v7883 = vadd.f32 %v7365, %v7497
    %v7884 = vadd.f32 %v7366, %v7498
    %v7885 = vadd.f32 %v7367, %v7497
    %v7886 = vadd.f32 %v7368, %v7498
    %v7887 = vadd.f32 %v7369, %v7497
    %v7888 = vadd.f32 %v7370, %v7498
    %v7889 = vadd.f32 %v7371, %v7497
    %v7890 = vadd.f32 %v7372, %v7498
    %v7891 = vadd.f32 %v7373, %v7497
    %v7892 = vadd.f32 %v7374, %v7498
    %v7893 = vadd.f32 %v7375, %v7497
    %v7894 = vadd.f32 %v7376, %v7498
    %v7895 = vadd.f32 %v7377, %v7497
    %v7896 = vadd.f32 %v7378, %v7498
    %v7897 = vadd.f32 %v7379, %v7497
    %v7898 = vadd.f32 %v7380, %v7498
    %v7899 = vadd.f32 %v7381, %v7497
    %v7900 = vadd.f32 %v7382, %v7498
    %v7901 = vadd.f32 %v7383, %v7497
    %v7902 = vadd.f32 %v7384, %v7498
    %v7903 = vadd.f32 %v7385, %v7497
    %v7904 = vadd.f32 %v7386, %v7498
    %v7905 = vadd.f32 %v7387, %v7497
    %v7906 = vadd.f32 %v7388, %v7498
    %v7907 = vadd.f32 %v7389, %v7497
    %v7908 = vadd.f32 %v7390, %v7498
    %v7909 = vadd.f32 %v7391, %v7497
    %v7910 = vadd.f32 %v7392, %v7498
    %v7911 = vadd.f32 %v7393, %v7497
    %v7912 = vadd.f32 %v7394, %v7498
    %v7913 = vadd.f32 %v7395, %v7497
    %v7914 = vadd.f32 %v7396, %v7498
    %v7915 = vadd.f32 %v7397, %v7497
    %v7916 = vadd.f32 %v7398, %v7498
    %v7917 = vadd.f32 %v7399, %v7497
    %v7918 = vadd.f32 %v7400, %v7498
    %v7919 = vadd.f32 %v7401, %v7497
    %v7920 = vadd.f32 %v7402, %v7498
    %v7921 = vadd.f32 %v7403, %v7497
    %v7922 = vadd.f32 %v7404, %v7498
    %v7923 = vadd.f32 %v7405, %v7497
    %v7924 = vadd.f32 %v7406, %v7498
    %v7925 = vadd.f32 %v7407, %v7497
    %v7926 = vadd.f32 %v7408, %v7498
    %v7927 = vadd.f32 %v7409, %v7497
    %v7928 = vadd.f32 %v7410, %v7498
    %v7929 = vadd.f32 %v7411, %v7497
    %v7930 = vadd.f32 %v7412, %v7498
    %v7931 = vadd.f32 %v7413, %v7497
    %v7932 = vadd.f32 %v7414, %v7498
    %v7933 = vadd.f32 %v7415, %v7497
    %v7934 = vadd.f32 %v7416, %v7498
    %v7935 = vadd.f32 %v7417, %v7497
    %v7936 = vadd.f32 %v7418, %v7498
    %v7937 = vadd.f32 %v7419, %v7497
    %v7938 = vadd.f32 %v7420, %v7498
    %v7939 = vadd.f32 %v7421, %v7497
    %v7940 = vadd.f32 %v7422, %v7498
    %v7941 = vadd.f32 %v7423, %v7497
    %v7942 = vadd.f32 %v7424, %v7498
    %v7943 = vadd.f32 %v7425, %v7497
    %v7944 = vadd.f32 %v7426, %v7498
    %v7945 = vadd.f32 %v7427, %v7497
    %v7946 = vadd.f32 %v7428, %v7498
    %v7947 = vadd.f32 %v7429, %v7497
    %v7948 = vadd.f32 %v7430, %v7498
    %v7949 = vadd.f32 %v7431, %v7497
    %v7950 = vadd.f32 %v7432, %v7498
    %v7951 = vadd.f32 %v7433, %v7497
    %v7952 = vadd.f32 %v7434, %v7498
    %v7953 = vadd.f32 %v7435, %v7497
    %v7954 = vadd.f32 %v7436, %v7498
    %v7955 = vadd.f32 %v7437, %v7497
    %v7956 = vadd.f32 %v7438, %v7498
    %v7957 = vadd.f32 %v7439, %v7497
    %v7958 = vadd.f32 %v7440, %v7498
    %v7959 = vadd.f32 %v7441, %v7497
    %v7960 = vadd.f32 %v7442, %v7498
    %v7961 = vadd.f32 %v7443, %v7497
    %v7962 = vadd.f32 %v7444, %v7498
    %v7963 = vadd.f32 %v7445, %v7497
    %v7964 = vadd.f32 %v7446, %v7498
    %v7965 = vadd.f32 %v7447, %v7497
    %v7966 = vadd.f32 %v7448, %v7498
    %v7967 = vadd.f32 %v7449, %v7497
    %v7968 = vadd.f32 %v7450, %v7498
    %v7969 = vadd.f32 %v7451, %v7497
    %v7970 = vadd.f32 %v7452, %v7498
    %v7971 = vadd.f32 %v7453, %v7497
    %v7972 = vadd.f32 %v7454, %v7498
    %v7973 = vadd.f32 %v7455, %v7497
    %v7974 = vadd.f32 %v7456, %v7498
    %v7975 = vadd.f32 %v7457, %v7497
    %v7976 = vadd.f32 %v7458, %v7498
    %v7977 = vadd.f32 %v7459, %v7497
    %v7978 = vadd.f32 %v7460, %v7498
    %v7979 = vadd.f32 %v7461, %v7497
    %v7980 = vadd.f32 %v7462, %v7498
    %v7981 = vadd.f32 %v7463, %v7497
    %v7982 = vadd.f32 %v7464, %v7498
    %v7983 = vadd.f32 %v7465, %v7497
    %v7984 = vadd.f32 %v7466, %v7498
    %v7985 = vadd.f32 %v7467, %v7497
    %v7986 = vadd.f32 %v7468, %v7498
    %v7987 = vadd.f32 %v7469, %v7497
    %v7988 = vadd.f32 %v7470, %v7498
    %v7989 = vadd.f32 %v7471, %v7497
    %v7990 = vadd.f32 %v7472, %v7498
    %v7991 = vadd.f32 %v7473, %v7497
    %v7992 = vadd.f32 %v7474, %v7498
    %v7993 = vadd.f32 %v7475, %v7497
    %v7994 = vadd.f32 %v7476, %v7498
    %v7995 = vadd.f32 %v7477, %v7497
    %v7996 = vadd.f32 %v7478, %v7498
    %v7997 = vadd.f32 %v7479, %v7497
    %v7998 = vadd.f32 %v7480, %v7498
    %v7999 = vadd.f32 %v7481, %v7497
    %v8000 = vadd.f32 %v7482, %v7498
    %v8001 = vadd.f32 %v7483, %v7497
    %v8002 = vadd.f32 %v7484, %v7498
    %v8003 = vadd.f32 %v7485, %v7497
    %v8004 = vadd.f32 %v7486, %v7498
    %v8005 = vadd.f32 %v7487, %v7497
    %v8006 = vadd.f32 %v7488, %v7498
    %v8007 = vadd.f32 %v7489, %v7497
    %v8008 = vadd.f32 %v7490, %v7498
    %v8009 = vadd.f32 %v7491, %v7497
    %v8010 = vadd.f32 %v7492, %v7498
    %v8011 = vadd.f32 %v7493, %v7497
    %v8012 = vadd.f32 %v7494, %v7498
    %8013 = vst [vmem:[#allocation8] sm:$0xff] %v7501
    %8014 = vst [vmem:[#allocation8 + $0x8] sm:$0xff] %v7502
    %8015 = vst [vmem:[#allocation8 + $0x10] sm:$0xff] %v7503
    %8016 = vst [vmem:[#allocation8 + $0x18] sm:$0xff] %v7504
    %8017 = vst [vmem:[#allocation8 + $0x20] sm:$0xff] %v7505
    %8018 = vst [vmem:[#allocation8 + $0x28] sm:$0xff] %v7506
    %8019 = vst [vmem:[#allocation8 + $0x30] sm:$0xff] %v7507
    %8020 = vst [vmem:[#allocation8 + $0x38] sm:$0xff] %v7508
    %8021 = vst [vmem:[#allocation8 + $0x40] sm:$0xff] %v7509
    %8022 = vst [vmem:[#allocation8 + $0x48] sm:$0xff] %v7510
    %8023 = vst [vmem:[#allocation8 + $0x50] sm:$0xff] %v7511
    %8024 = vst [vmem:[#allocation8 + $0x58] sm:$0xff] %v7512
    %8025 = vst [vmem:[#allocation8 + $0x60] sm:$0xff] %v7513
    %8026 = vst [vmem:[#allocation8 + $0x68] sm:$0xff] %v7514
    %8027 = vst [vmem:[#allocation8 + $0x70] sm:$0xff] %v7515
    %8028 = vst [vmem:[#allocation8 + $0x78] sm:$0xff] %v7516
    %8029 = vst [vmem:[#allocation8 + $0x80] sm:$0xff] %v7517
    %8030 = vst [vmem:[#allocation8 + $0x88] sm:$0xff] %v7518
    %8031 = vst [vmem:[#allocation8 + $0x90] sm:$0xff] %v7519
    %8032 = vst [vmem:[#allocation8 + $0x98] sm:$0xff] %v7520
    %8033 = vst [vmem:[#allocation8 + $0xa0] sm:$0xff] %v7521
    %8034 = vst [vmem:[#allocation8 + $0xa8] sm:$0xff] %v7522
    %8035 = vst [vmem:[#allocation8 + $0xb0] sm:$0xff] %v7523
    %8036 = vst [vmem:[#allocation8 + $0xb8] sm:$0xff] %v7524
    %8037 = vst [vmem:[#allocation8 + $0xc0] sm:$0xff] %v7525
    %8038 = vst [vmem:[#allocation8 + $0xc8] sm:$0xff] %v7526
    %8039 = vst [vmem:[#allocation8 + $0xd0] sm:$0xff] %v7527
    %8040 = vst [vmem:[#allocation8 + $0xd8] sm:$0xff] %v7528
    %8041 = vst [vmem:[#allocation8 + $0xe0] sm:$0xff] %v7529
    %8042 = vst [vmem:[#allocation8 + $0xe8] sm:$0xff] %v7530
    %8043 = vst [vmem:[#allocation8 + $0xf0] sm:$0xff] %v7531
    %8044 = vst [vmem:[#allocation8 + $0xf8] sm:$0xff] %v7532
    %8045 = vst [vmem:[#allocation8 + $0x100] sm:$0xff] %v7533
    %8046 = vst [vmem:[#allocation8 + $0x108] sm:$0xff] %v7534
    %8047 = vst [vmem:[#allocation8 + $0x110] sm:$0xff] %v7535
    %8048 = vst [vmem:[#allocation8 + $0x118] sm:$0xff] %v7536
    %8049 = vst [vmem:[#allocation8 + $0x120] sm:$0xff] %v7537
    %8050 = vst [vmem:[#allocation8 + $0x128] sm:$0xff] %v7538
    %8051 = vst [vmem:[#allocation8 + $0x130] sm:$0xff] %v7539
    %8052 = vst [vmem:[#allocation8 + $0x138] sm:$0xff] %v7540
    %8053 = vst [vmem:[#allocation8 + $0x140] sm:$0xff] %v7541
    %8054 = vst [vmem:[#allocation8 + $0x148] sm:$0xff] %v7542
    %8055 = vst [vmem:[#allocation8 + $0x150] sm:$0xff] %v7543
    %8056 = vst [vmem:[#allocation8 + $0x158] sm:$0xff] %v7544
    %8057 = vst [vmem:[#allocation8 + $0x160] sm:$0xff] %v7545
    %8058 = vst [vmem:[#allocation8 + $0x168] sm:$0xff] %v7546
    %8059 = vst [vmem:[#allocation8 + $0x170] sm:$0xff] %v7547
    %8060 = vst [vmem:[#allocation8 + $0x178] sm:$0xff] %v7548
    %8061 = vst [vmem:[#allocation8 + $0x180] sm:$0xff] %v7549
    %8062 = vst [vmem:[#allocation8 + $0x188] sm:$0xff] %v7550
    %8063 = vst [vmem:[#allocation8 + $0x190] sm:$0xff] %v7551
    %8064 = vst [vmem:[#allocation8 + $0x198] sm:$0xff] %v7552
    %8065 = vst [vmem:[#allocation8 + $0x1a0] sm:$0xff] %v7553
    %8066 = vst [vmem:[#allocation8 + $0x1a8] sm:$0xff] %v7554
    %8067 = vst [vmem:[#allocation8 + $0x1b0] sm:$0xff] %v7555
    %8068 = vst [vmem:[#allocation8 + $0x1b8] sm:$0xff] %v7556
    %8069 = vst [vmem:[#allocation8 + $0x1c0] sm:$0xff] %v7557
    %8070 = vst [vmem:[#allocation8 + $0x1c8] sm:$0xff] %v7558
    %8071 = vst [vmem:[#allocation8 + $0x1d0] sm:$0xff] %v7559
    %8072 = vst [vmem:[#allocation8 + $0x1d8] sm:$0xff] %v7560
    %8073 = vst [vmem:[#allocation8 + $0x1e0] sm:$0xff] %v7561
    %8074 = vst [vmem:[#allocation8 + $0x1e8] sm:$0xff] %v7562
    %8075 = vst [vmem:[#allocation8 + $0x1f0] sm:$0xff] %v7563
    %8076 = vst [vmem:[#allocation8 + $0x1f8] sm:$0xff] %v7564
    %8077 = vst [vmem:[#allocation8 + $0x200] sm:$0xff] %v7565
    %8078 = vst [vmem:[#allocation8 + $0x208] sm:$0xff] %v7566
    %8079 = vst [vmem:[#allocation8 + $0x210] sm:$0xff] %v7567
    %8080 = vst [vmem:[#allocation8 + $0x218] sm:$0xff] %v7568
    %8081 = vst [vmem:[#allocation8 + $0x220] sm:$0xff] %v7569
    %8082 = vst [vmem:[#allocation8 + $0x228] sm:$0xff] %v7570
    %8083 = vst [vmem:[#allocation8 + $0x230] sm:$0xff] %v7571
    %8084 = vst [vmem:[#allocation8 + $0x238] sm:$0xff] %v7572
    %8085 = vst [vmem:[#allocation8 + $0x240] sm:$0xff] %v7573
    %8086 = vst [vmem:[#allocation8 + $0x248] sm:$0xff] %v7574
    %8087 = vst [vmem:[#allocation8 + $0x250] sm:$0xff] %v7575
    %8088 = vst [vmem:[#allocation8 + $0x258] sm:$0xff] %v7576
    %8089 = vst [vmem:[#allocation8 + $0x260] sm:$0xff] %v7577
    %8090 = vst [vmem:[#allocation8 + $0x268] sm:$0xff] %v7578
    %8091 = vst [vmem:[#allocation8 + $0x270] sm:$0xff] %v7579
    %8092 = vst [vmem:[#allocation8 + $0x278] sm:$0xff] %v7580
    %8093 = vst [vmem:[#allocation8 + $0x280] sm:$0xff] %v7581
    %8094 = vst [vmem:[#allocation8 + $0x288] sm:$0xff] %v7582
    %8095 = vst [vmem:[#allocation8 + $0x290] sm:$0xff] %v7583
    %8096 = vst [vmem:[#allocation8 + $0x298] sm:$0xff] %v7584
    %8097 = vst [vmem:[#allocation8 + $0x2a0] sm:$0xff] %v7585
    %8098 = vst [vmem:[#allocation8 + $0x2a8] sm:$0xff] %v7586
    %8099 = vst [vmem:[#allocation8 + $0x2b0] sm:$0xff] %v7587
    %8100 = vst [vmem:[#allocation8 + $0x2b8] sm:$0xff] %v7588
    %8101 = vst [vmem:[#allocation8 + $0x2c0] sm:$0xff] %v7589
    %8102 = vst [vmem:[#allocation8 + $0x2c8] sm:$0xff] %v7590
    %8103 = vst [vmem:[#allocation8 + $0x2d0] sm:$0xff] %v7591
    %8104 = vst [vmem:[#allocation8 + $0x2d8] sm:$0xff] %v7592
    %8105 = vst [vmem:[#allocation8 + $0x2e0] sm:$0xff] %v7593
    %8106 = vst [vmem:[#allocation8 + $0x2e8] sm:$0xff] %v7594
    %8107 = vst [vmem:[#allocation8 + $0x2f0] sm:$0xff] %v7595
    %8108 = vst [vmem:[#allocation8 + $0x2f8] sm:$0xff] %v7596
    %8109 = vst [vmem:[#allocation8 + $0x300] sm:$0xff] %v7597
    %8110 = vst [vmem:[#allocation8 + $0x308] sm:$0xff] %v7598
    %8111 = vst [vmem:[#allocation8 + $0x310] sm:$0xff] %v7599
    %8112 = vst [vmem:[#allocation8 + $0x318] sm:$0xff] %v7600
    %8113 = vst [vmem:[#allocation8 + $0x320] sm:$0xff] %v7601
    %8114 = vst [vmem:[#allocation8 + $0x328] sm:$0xff] %v7602
    %8115 = vst [vmem:[#allocation8 + $0x330] sm:$0xff] %v7603
    %8116 = vst [vmem:[#allocation8 + $0x338] sm:$0xff] %v7604
    %8117 = vst [vmem:[#allocation8 + $0x340] sm:$0xff] %v7605
    %8118 = vst [vmem:[#allocation8 + $0x348] sm:$0xff] %v7606
    %8119 = vst [vmem:[#allocation8 + $0x350] sm:$0xff] %v7607
    %8120 = vst [vmem:[#allocation8 + $0x358] sm:$0xff] %v7608
    %8121 = vst [vmem:[#allocation8 + $0x360] sm:$0xff] %v7609
    %8122 = vst [vmem:[#allocation8 + $0x368] sm:$0xff] %v7610
    %8123 = vst [vmem:[#allocation8 + $0x370] sm:$0xff] %v7611
    %8124 = vst [vmem:[#allocation8 + $0x378] sm:$0xff] %v7612
    %8125 = vst [vmem:[#allocation8 + $0x380] sm:$0xff] %v7613
    %8126 = vst [vmem:[#allocation8 + $0x388] sm:$0xff] %v7614
    %8127 = vst [vmem:[#allocation8 + $0x390] sm:$0xff] %v7615
    %8128 = vst [vmem:[#allocation8 + $0x398] sm:$0xff] %v7616
    %8129 = vst [vmem:[#allocation8 + $0x3a0] sm:$0xff] %v7617
    %8130 = vst [vmem:[#allocation8 + $0x3a8] sm:$0xff] %v7618
    %8131 = vst [vmem:[#allocation8 + $0x3b0] sm:$0xff] %v7619
    %8132 = vst [vmem:[#allocation8 + $0x3b8] sm:$0xff] %v7620
    %8133 = vst [vmem:[#allocation8 + $0x3c0] sm:$0xff] %v7621
    %8134 = vst [vmem:[#allocation8 + $0x3c8] sm:$0xff] %v7622
    %8135 = vst [vmem:[#allocation8 + $0x3d0] sm:$0xff] %v7623
    %8136 = vst [vmem:[#allocation8 + $0x3d8] sm:$0xff] %v7624
    %8137 = vst [vmem:[#allocation8 + $0x3e0] sm:$0xff] %v7625
    %8138 = vst [vmem:[#allocation8 + $0x3e8] sm:$0xff] %v7626
    %8139 = vst [vmem:[#allocation8 + $0x3f0] sm:$0xff] %v7627
    %8140 = vst [vmem:[#allocation8 + $0x3f8] sm:$0xff] %v7628
    %8141 = vst [vmem:[#allocation8 + $0x400] sm:$0xff] %v7629
    %8142 = vst [vmem:[#allocation8 + $0x408] sm:$0xff] %v7630
    %8143 = vst [vmem:[#allocation8 + $0x410] sm:$0xff] %v7631
    %8144 = vst [vmem:[#allocation8 + $0x418] sm:$0xff] %v7632
    %8145 = vst [vmem:[#allocation8 + $0x420] sm:$0xff] %v7633
    %8146 = vst [vmem:[#allocation8 + $0x428] sm:$0xff] %v7634
    %8147 = vst [vmem:[#allocation8 + $0x430] sm:$0xff] %v7635
    %8148 = vst [vmem:[#allocation8 + $0x438] sm:$0xff] %v7636
    %8149 = vst [vmem:[#allocation8 + $0x440] sm:$0xff] %v7637
    %8150 = vst [vmem:[#allocation8 + $0x448] sm:$0xff] %v7638
    %8151 = vst [vmem:[#allocation8 + $0x450] sm:$0xff] %v7639
    %8152 = vst [vmem:[#allocation8 + $0x458] sm:$0xff] %v7640
    %8153 = vst [vmem:[#allocation8 + $0x460] sm:$0xff] %v7641
    %8154 = vst [vmem:[#allocation8 + $0x468] sm:$0xff] %v7642
    %8155 = vst [vmem:[#allocation8 + $0x470] sm:$0xff] %v7643
    %8156 = vst [vmem:[#allocation8 + $0x478] sm:$0xff] %v7644
    %8157 = vst [vmem:[#allocation8 + $0x480] sm:$0xff] %v7645
    %8158 = vst [vmem:[#allocation8 + $0x488] sm:$0xff] %v7646
    %8159 = vst [vmem:[#allocation8 + $0x490] sm:$0xff] %v7647
    %8160 = vst [vmem:[#allocation8 + $0x498] sm:$0xff] %v7648
    %8161 = vst [vmem:[#allocation8 + $0x4a0] sm:$0xff] %v7649
    %8162 = vst [vmem:[#allocation8 + $0x4a8] sm:$0xff] %v7650
    %8163 = vst [vmem:[#allocation8 + $0x4b0] sm:$0xff] %v7651
    %8164 = vst [vmem:[#allocation8 + $0x4b8] sm:$0xff] %v7652
    %8165 = vst [vmem:[#allocation8 + $0x4c0] sm:$0xff] %v7653
    %8166 = vst [vmem:[#allocation8 + $0x4c8] sm:$0xff] %v7654
    %8167 = vst [vmem:[#allocation8 + $0x4d0] sm:$0xff] %v7655
    %8168 = vst [vmem:[#allocation8 + $0x4d8] sm:$0xff] %v7656
    %8169 = vst [vmem:[#allocation8 + $0x4e0] sm:$0xff] %v7657
    %8170 = vst [vmem:[#allocation8 + $0x4e8] sm:$0xff] %v7658
    %8171 = vst [vmem:[#allocation8 + $0x4f0] sm:$0xff] %v7659
    %8172 = vst [vmem:[#allocation8 + $0x4f8] sm:$0xff] %v7660
    %8173 = vst [vmem:[#allocation8 + $0x500] sm:$0xff] %v7661
    %8174 = vst [vmem:[#allocation8 + $0x508] sm:$0xff] %v7662
    %8175 = vst [vmem:[#allocation8 + $0x510] sm:$0xff] %v7663
    %8176 = vst [vmem:[#allocation8 + $0x518] sm:$0xff] %v7664
    %8177 = vst [vmem:[#allocation8 + $0x520] sm:$0xff] %v7665
    %8178 = vst [vmem:[#allocation8 + $0x528] sm:$0xff] %v7666
    %8179 = vst [vmem:[#allocation8 + $0x530] sm:$0xff] %v7667
    %8180 = vst [vmem:[#allocation8 + $0x538] sm:$0xff] %v7668
    %8181 = vst [vmem:[#allocation8 + $0x540] sm:$0xff] %v7669
    %8182 = vst [vmem:[#allocation8 + $0x548] sm:$0xff] %v7670
    %8183 = vst [vmem:[#allocation8 + $0x550] sm:$0xff] %v7671
    %8184 = vst [vmem:[#allocation8 + $0x558] sm:$0xff] %v7672
    %8185 = vst [vmem:[#allocation8 + $0x560] sm:$0xff] %v7673
    %8186 = vst [vmem:[#allocation8 + $0x568] sm:$0xff] %v7674
    %8187 = vst [vmem:[#allocation8 + $0x570] sm:$0xff] %v7675
    %8188 = vst [vmem:[#allocation8 + $0x578] sm:$0xff] %v7676
    %8189 = vst [vmem:[#allocation8 + $0x580] sm:$0xff] %v7677
    %8190 = vst [vmem:[#allocation8 + $0x588] sm:$0xff] %v7678
    %8191 = vst [vmem:[#allocation8 + $0x590] sm:$0xff] %v7679
    %8192 = vst [vmem:[#allocation8 + $0x598] sm:$0xff] %v7680
    %8193 = vst [vmem:[#allocation8 + $0x5a0] sm:$0xff] %v7681
    %8194 = vst [vmem:[#allocation8 + $0x5a8] sm:$0xff] %v7682
    %8195 = vst [vmem:[#allocation8 + $0x5b0] sm:$0xff] %v7683
    %8196 = vst [vmem:[#allocation8 + $0x5b8] sm:$0xff] %v7684
    %8197 = vst [vmem:[#allocation8 + $0x5c0] sm:$0xff] %v7685
    %8198 = vst [vmem:[#allocation8 + $0x5c8] sm:$0xff] %v7686
    %8199 = vst [vmem:[#allocation8 + $0x5d0] sm:$0xff] %v7687
    %8200 = vst [vmem:[#allocation8 + $0x5d8] sm:$0xff] %v7688
    %8201 = vst [vmem:[#allocation8 + $0x5e0] sm:$0xff] %v7689
    %8202 = vst [vmem:[#allocation8 + $0x5e8] sm:$0xff] %v7690
    %8203 = vst [vmem:[#allocation8 + $0x5f0] sm:$0xff] %v7691
    %8204 = vst [vmem:[#allocation8 + $0x5f8] sm:$0xff] %v7692
    %8205 = vst [vmem:[#allocation8 + $0x600] sm:$0xff] %v7693
    %8206 = vst [vmem:[#allocation8 + $0x608] sm:$0xff] %v7694
    %8207 = vst [vmem:[#allocation8 + $0x610] sm:$0xff] %v7695
    %8208 = vst [vmem:[#allocation8 + $0x618] sm:$0xff] %v7696
    %8209 = vst [vmem:[#allocation8 + $0x620] sm:$0xff] %v7697
    %8210 = vst [vmem:[#allocation8 + $0x628] sm:$0xff] %v7698
    %8211 = vst [vmem:[#allocation8 + $0x630] sm:$0xff] %v7699
    %8212 = vst [vmem:[#allocation8 + $0x638] sm:$0xff] %v7700
    %8213 = vst [vmem:[#allocation8 + $0x640] sm:$0xff] %v7701
    %8214 = vst [vmem:[#allocation8 + $0x648] sm:$0xff] %v7702
    %8215 = vst [vmem:[#allocation8 + $0x650] sm:$0xff] %v7703
    %8216 = vst [vmem:[#allocation8 + $0x658] sm:$0xff] %v7704
    %8217 = vst [vmem:[#allocation8 + $0x660] sm:$0xff] %v7705
    %8218 = vst [vmem:[#allocation8 + $0x668] sm:$0xff] %v7706
    %8219 = vst [vmem:[#allocation8 + $0x670] sm:$0xff] %v7707
    %8220 = vst [vmem:[#allocation8 + $0x678] sm:$0xff] %v7708
    %8221 = vst [vmem:[#allocation8 + $0x680] sm:$0xff] %v7709
    %8222 = vst [vmem:[#allocation8 + $0x688] sm:$0xff] %v7710
    %8223 = vst [vmem:[#allocation8 + $0x690] sm:$0xff] %v7711
    %8224 = vst [vmem:[#allocation8 + $0x698] sm:$0xff] %v7712
    %8225 = vst [vmem:[#allocation8 + $0x6a0] sm:$0xff] %v7713
    %8226 = vst [vmem:[#allocation8 + $0x6a8] sm:$0xff] %v7714
    %8227 = vst [vmem:[#allocation8 + $0x6b0] sm:$0xff] %v7715
    %8228 = vst [vmem:[#allocation8 + $0x6b8] sm:$0xff] %v7716
    %8229 = vst [vmem:[#allocation8 + $0x6c0] sm:$0xff] %v7717
    %8230 = vst [vmem:[#allocation8 + $0x6c8] sm:$0xff] %v7718
    %8231 = vst [vmem:[#allocation8 + $0x6d0] sm:$0xff] %v7719
    %8232 = vst [vmem:[#allocation8 + $0x6d8] sm:$0xff] %v7720
    %8233 = vst [vmem:[#allocation8 + $0x6e0] sm:$0xff] %v7721
    %8234 = vst [vmem:[#allocation8 + $0x6e8] sm:$0xff] %v7722
    %8235 = vst [vmem:[#allocation8 + $0x6f0] sm:$0xff] %v7723
    %8236 = vst [vmem:[#allocation8 + $0x6f8] sm:$0xff] %v7724
    %8237 = vst [vmem:[#allocation8 + $0x700] sm:$0xff] %v7725
    %8238 = vst [vmem:[#allocation8 + $0x708] sm:$0xff] %v7726
    %8239 = vst [vmem:[#allocation8 + $0x710] sm:$0xff] %v7727
    %8240 = vst [vmem:[#allocation8 + $0x718] sm:$0xff] %v7728
    %8241 = vst [vmem:[#allocation8 + $0x720] sm:$0xff] %v7729
    %8242 = vst [vmem:[#allocation8 + $0x728] sm:$0xff] %v7730
    %8243 = vst [vmem:[#allocation8 + $0x730] sm:$0xff] %v7731
    %8244 = vst [vmem:[#allocation8 + $0x738] sm:$0xff] %v7732
    %8245 = vst [vmem:[#allocation8 + $0x740] sm:$0xff] %v7733
    %8246 = vst [vmem:[#allocation8 + $0x748] sm:$0xff] %v7734
    %8247 = vst [vmem:[#allocation8 + $0x750] sm:$0xff] %v7735
    %8248 = vst [vmem:[#allocation8 + $0x758] sm:$0xff] %v7736
    %8249 = vst [vmem:[#allocation8 + $0x760] sm:$0xff] %v7737
    %8250 = vst [vmem:[#allocation8 + $0x768] sm:$0xff] %v7738
    %8251 = vst [vmem:[#allocation8 + $0x770] sm:$0xff] %v7739
    %8252 = vst [vmem:[#allocation8 + $0x778] sm:$0xff] %v7740
    %8253 = vst [vmem:[#allocation8 + $0x780] sm:$0xff] %v7741
    %8254 = vst [vmem:[#allocation8 + $0x788] sm:$0xff] %v7742
    %8255 = vst [vmem:[#allocation8 + $0x790] sm:$0xff] %v7743
    %8256 = vst [vmem:[#allocation8 + $0x798] sm:$0xff] %v7744
    %8257 = vst [vmem:[#allocation8 + $0x7a0] sm:$0xff] %v7745
    %8258 = vst [vmem:[#allocation8 + $0x7a8] sm:$0xff] %v7746
    %8259 = vst [vmem:[#allocation8 + $0x7b0] sm:$0xff] %v7747
    %8260 = vst [vmem:[#allocation8 + $0x7b8] sm:$0xff] %v7748
    %8261 = vst [vmem:[#allocation8 + $0x7c0] sm:$0xff] %v7749
    %8262 = vst [vmem:[#allocation8 + $0x7c8] sm:$0xff] %v7750
    %8263 = vst [vmem:[#allocation8 + $0x7d0] sm:$0xff] %v7751
    %8264 = vst [vmem:[#allocation8 + $0x7d8] sm:$0xff] %v7752
    %8265 = vst [vmem:[#allocation8 + $0x7e0] sm:$0xff] %v7753
    %8266 = vst [vmem:[#allocation8 + $0x7e8] sm:$0xff] %v7754
    %8267 = vst [vmem:[#allocation8 + $0x7f0] sm:$0xff] %v7755
    %8268 = vst [vmem:[#allocation8 + $0x7f8] sm:$0xff] %v7756
    %8269 = vst [vmem:[#allocation8 + $0x800] sm:$0xff] %v7757
    %8270 = vst [vmem:[#allocation8 + $0x808] sm:$0xff] %v7758
    %8271 = vst [vmem:[#allocation8 + $0x810] sm:$0xff] %v7759
    %8272 = vst [vmem:[#allocation8 + $0x818] sm:$0xff] %v7760
    %8273 = vst [vmem:[#allocation8 + $0x820] sm:$0xff] %v7761
    %8274 = vst [vmem:[#allocation8 + $0x828] sm:$0xff] %v7762
    %8275 = vst [vmem:[#allocation8 + $0x830] sm:$0xff] %v7763
    %8276 = vst [vmem:[#allocation8 + $0x838] sm:$0xff] %v7764
    %8277 = vst [vmem:[#allocation8 + $0x840] sm:$0xff] %v7765
    %8278 = vst [vmem:[#allocation8 + $0x848] sm:$0xff] %v7766
    %8279 = vst [vmem:[#allocation8 + $0x850] sm:$0xff] %v7767
    %8280 = vst [vmem:[#allocation8 + $0x858] sm:$0xff] %v7768
    %8281 = vst [vmem:[#allocation8 + $0x860] sm:$0xff] %v7769
    %8282 = vst [vmem:[#allocation8 + $0x868] sm:$0xff] %v7770
    %8283 = vst [vmem:[#allocation8 + $0x870] sm:$0xff] %v7771
    %8284 = vst [vmem:[#allocation8 + $0x878] sm:$0xff] %v7772
    %8285 = vst [vmem:[#allocation8 + $0x880] sm:$0xff] %v7773
    %8286 = vst [vmem:[#allocation8 + $0x888] sm:$0xff] %v7774
    %8287 = vst [vmem:[#allocation8 + $0x890] sm:$0xff] %v7775
    %8288 = vst [vmem:[#allocation8 + $0x898] sm:$0xff] %v7776
    %8289 = vst [vmem:[#allocation8 + $0x8a0] sm:$0xff] %v7777
    %8290 = vst [vmem:[#allocation8 + $0x8a8] sm:$0xff] %v7778
    %8291 = vst [vmem:[#allocation8 + $0x8b0] sm:$0xff] %v7779
    %8292 = vst [vmem:[#allocation8 + $0x8b8] sm:$0xff] %v7780
    %8293 = vst [vmem:[#allocation8 + $0x8c0] sm:$0xff] %v7781
    %8294 = vst [vmem:[#allocation8 + $0x8c8] sm:$0xff] %v7782
    %8295 = vst [vmem:[#allocation8 + $0x8d0] sm:$0xff] %v7783
    %8296 = vst [vmem:[#allocation8 + $0x8d8] sm:$0xff] %v7784
    %8297 = vst [vmem:[#allocation8 + $0x8e0] sm:$0xff] %v7785
    %8298 = vst [vmem:[#allocation8 + $0x8e8] sm:$0xff] %v7786
    %8299 = vst [vmem:[#allocation8 + $0x8f0] sm:$0xff] %v7787
    %8300 = vst [vmem:[#allocation8 + $0x8f8] sm:$0xff] %v7788
    %8301 = vst [vmem:[#allocation8 + $0x900] sm:$0xff] %v7789
    %8302 = vst [vmem:[#allocation8 + $0x908] sm:$0xff] %v7790
    %8303 = vst [vmem:[#allocation8 + $0x910] sm:$0xff] %v7791
    %8304 = vst [vmem:[#allocation8 + $0x918] sm:$0xff] %v7792
    %8305 = vst [vmem:[#allocation8 + $0x920] sm:$0xff] %v7793
    %8306 = vst [vmem:[#allocation8 + $0x928] sm:$0xff] %v7794
    %8307 = vst [vmem:[#allocation8 + $0x930] sm:$0xff] %v7795
    %8308 = vst [vmem:[#allocation8 + $0x938] sm:$0xff] %v7796
    %8309 = vst [vmem:[#allocation8 + $0x940] sm:$0xff] %v7797
    %8310 = vst [vmem:[#allocation8 + $0x948] sm:$0xff] %v7798
    %8311 = vst [vmem:[#allocation8 + $0x950] sm:$0xff] %v7799
    %8312 = vst [vmem:[#allocation8 + $0x958] sm:$0xff] %v7800
    %8313 = vst [vmem:[#allocation8 + $0x960] sm:$0xff] %v7801
    %8314 = vst [vmem:[#allocation8 + $0x968] sm:$0xff] %v7802
    %8315 = vst [vmem:[#allocation8 + $0x970] sm:$0xff] %v7803
    %8316 = vst [vmem:[#allocation8 + $0x978] sm:$0xff] %v7804
    %8317 = vst [vmem:[#allocation8 + $0x980] sm:$0xff] %v7805
    %8318 = vst [vmem:[#allocation8 + $0x988] sm:$0xff] %v7806
    %8319 = vst [vmem:[#allocation8 + $0x990] sm:$0xff] %v7807
    %8320 = vst [vmem:[#allocation8 + $0x998] sm:$0xff] %v7808
    %8321 = vst [vmem:[#allocation8 + $0x9a0] sm:$0xff] %v7809
    %8322 = vst [vmem:[#allocation8 + $0x9a8] sm:$0xff] %v7810
    %8323 = vst [vmem:[#allocation8 + $0x9b0] sm:$0xff] %v7811
    %8324 = vst [vmem:[#allocation8 + $0x9b8] sm:$0xff] %v7812
    %8325 = vst [vmem:[#allocation8 + $0x9c0] sm:$0xff] %v7813
    %8326 = vst [vmem:[#allocation8 + $0x9c8] sm:$0xff] %v7814
    %8327 = vst [vmem:[#allocation8 + $0x9d0] sm:$0xff] %v7815
    %8328 = vst [vmem:[#allocation8 + $0x9d8] sm:$0xff] %v7816
    %8329 = vst [vmem:[#allocation8 + $0x9e0] sm:$0xff] %v7817
    %8330 = vst [vmem:[#allocation8 + $0x9e8] sm:$0xff] %v7818
    %8331 = vst [vmem:[#allocation8 + $0x9f0] sm:$0xff] %v7819
    %8332 = vst [vmem:[#allocation8 + $0x9f8] sm:$0xff] %v7820
    %8333 = vst [vmem:[#allocation8 + $0xa00] sm:$0xff] %v7821
    %8334 = vst [vmem:[#allocation8 + $0xa08] sm:$0xff] %v7822
    %8335 = vst [vmem:[#allocation8 + $0xa10] sm:$0xff] %v7823
    %8336 = vst [vmem:[#allocation8 + $0xa18] sm:$0xff] %v7824
    %8337 = vst [vmem:[#allocation8 + $0xa20] sm:$0xff] %v7825
    %8338 = vst [vmem:[#allocation8 + $0xa28] sm:$0xff] %v7826
    %8339 = vst [vmem:[#allocation8 + $0xa30] sm:$0xff] %v7827
    %8340 = vst [vmem:[#allocation8 + $0xa38] sm:$0xff] %v7828
    %8341 = vst [vmem:[#allocation8 + $0xa40] sm:$0xff] %v7829
    %8342 = vst [vmem:[#allocation8 + $0xa48] sm:$0xff] %v7830
    %8343 = vst [vmem:[#allocation8 + $0xa50] sm:$0xff] %v7831
    %8344 = vst [vmem:[#allocation8 + $0xa58] sm:$0xff] %v7832
    %8345 = vst [vmem:[#allocation8 + $0xa60] sm:$0xff] %v7833
    %8346 = vst [vmem:[#allocation8 + $0xa68] sm:$0xff] %v7834
    %8347 = vst [vmem:[#allocation8 + $0xa70] sm:$0xff] %v7835
    %8348 = vst [vmem:[#allocation8 + $0xa78] sm:$0xff] %v7836
    %8349 = vst [vmem:[#allocation8 + $0xa80] sm:$0xff] %v7837
    %8350 = vst [vmem:[#allocation8 + $0xa88] sm:$0xff] %v7838
    %8351 = vst [vmem:[#allocation8 + $0xa90] sm:$0xff] %v7839
    %8352 = vst [vmem:[#allocation8 + $0xa98] sm:$0xff] %v7840
    %8353 = vst [vmem:[#allocation8 + $0xaa0] sm:$0xff] %v7841
    %8354 = vst [vmem:[#allocation8 + $0xaa8] sm:$0xff] %v7842
    %8355 = vst [vmem:[#allocation8 + $0xab0] sm:$0xff] %v7843
    %8356 = vst [vmem:[#allocation8 + $0xab8] sm:$0xff] %v7844
    %8357 = vst [vmem:[#allocation8 + $0xac0] sm:$0xff] %v7845
    %8358 = vst [vmem:[#allocation8 + $0xac8] sm:$0xff] %v7846
    %8359 = vst [vmem:[#allocation8 + $0xad0] sm:$0xff] %v7847
    %8360 = vst [vmem:[#allocation8 + $0xad8] sm:$0xff] %v7848
    %8361 = vst [vmem:[#allocation8 + $0xae0] sm:$0xff] %v7849
    %8362 = vst [vmem:[#allocation8 + $0xae8] sm:$0xff] %v7850
    %8363 = vst [vmem:[#allocation8 + $0xaf0] sm:$0xff] %v7851
    %8364 = vst [vmem:[#allocation8 + $0xaf8] sm:$0xff] %v7852
    %8365 = vst [vmem:[#allocation8 + $0xb00] sm:$0xff] %v7853
    %8366 = vst [vmem:[#allocation8 + $0xb08] sm:$0xff] %v7854
    %8367 = vst [vmem:[#allocation8 + $0xb10] sm:$0xff] %v7855
    %8368 = vst [vmem:[#allocation8 + $0xb18] sm:$0xff] %v7856
    %8369 = vst [vmem:[#allocation8 + $0xb20] sm:$0xff] %v7857
    %8370 = vst [vmem:[#allocation8 + $0xb28] sm:$0xff] %v7858
    %8371 = vst [vmem:[#allocation8 + $0xb30] sm:$0xff] %v7859
    %8372 = vst [vmem:[#allocation8 + $0xb38] sm:$0xff] %v7860
    %8373 = vst [vmem:[#allocation8 + $0xb40] sm:$0xff] %v7861
    %8374 = vst [vmem:[#allocation8 + $0xb48] sm:$0xff] %v7862
    %8375 = vst [vmem:[#allocation8 + $0xb50] sm:$0xff] %v7863
    %8376 = vst [vmem:[#allocation8 + $0xb58] sm:$0xff] %v7864
    %8377 = vst [vmem:[#allocation8 + $0xb60] sm:$0xff] %v7865
    %8378 = vst [vmem:[#allocation8 + $0xb68] sm:$0xff] %v7866
    %8379 = vst [vmem:[#allocation8 + $0xb70] sm:$0xff] %v7867
    %8380 = vst [vmem:[#allocation8 + $0xb78] sm:$0xff] %v7868
    %8381 = vst [vmem:[#allocation8 + $0xb80] sm:$0xff] %v7869
    %8382 = vst [vmem:[#allocation8 + $0xb88] sm:$0xff] %v7870
    %8383 = vst [vmem:[#allocation8 + $0xb90] sm:$0xff] %v7871
    %8384 = vst [vmem:[#allocation8 + $0xb98] sm:$0xff] %v7872
    %8385 = vst [vmem:[#allocation8 + $0xba0] sm:$0xff] %v7873
    %8386 = vst [vmem:[#allocation8 + $0xba8] sm:$0xff] %v7874
    %8387 = vst [vmem:[#allocation8 + $0xbb0] sm:$0xff] %v7875
    %8388 = vst [vmem:[#allocation8 + $0xbb8] sm:$0xff] %v7876
    %8389 = vst [vmem:[#allocation8 + $0xbc0] sm:$0xff] %v7877
    %8390 = vst [vmem:[#allocation8 + $0xbc8] sm:$0xff] %v7878
    %8391 = vst [vmem:[#allocation8 + $0xbd0] sm:$0xff] %v7879
    %8392 = vst [vmem:[#allocation8 + $0xbd8] sm:$0xff] %v7880
    %8393 = vst [vmem:[#allocation8 + $0xbe0] sm:$0xff] %v7881
    %8394 = vst [vmem:[#allocation8 + $0xbe8] sm:$0xff] %v7882
    %8395 = vst [vmem:[#allocation8 + $0xbf0] sm:$0xff] %v7883
    %8396 = vst [vmem:[#allocation8 + $0xbf8] sm:$0xff] %v7884
    %8397 = vst [vmem:[#allocation8 + $0xc00] sm:$0xff] %v7885
    %8398 = vst [vmem:[#allocation8 + $0xc08] sm:$0xff] %v7886
    %8399 = vst [vmem:[#allocation8 + $0xc10] sm:$0xff] %v7887
    %8400 = vst [vmem:[#allocation8 + $0xc18] sm:$0xff] %v7888
    %8401 = vst [vmem:[#allocation8 + $0xc20] sm:$0xff] %v7889
    %8402 = vst [vmem:[#allocation8 + $0xc28] sm:$0xff] %v7890
    %8403 = vst [vmem:[#allocation8 + $0xc30] sm:$0xff] %v7891
    %8404 = vst [vmem:[#allocation8 + $0xc38] sm:$0xff] %v7892
    %8405 = vst [vmem:[#allocation8 + $0xc40] sm:$0xff] %v7893
    %8406 = vst [vmem:[#allocation8 + $0xc48] sm:$0xff] %v7894
    %8407 = vst [vmem:[#allocation8 + $0xc50] sm:$0xff] %v7895
    %8408 = vst [vmem:[#allocation8 + $0xc58] sm:$0xff] %v7896
    %8409 = vst [vmem:[#allocation8 + $0xc60] sm:$0xff] %v7897
    %8410 = vst [vmem:[#allocation8 + $0xc68] sm:$0xff] %v7898
    %8411 = vst [vmem:[#allocation8 + $0xc70] sm:$0xff] %v7899
    %8412 = vst [vmem:[#allocation8 + $0xc78] sm:$0xff] %v7900
    %8413 = vst [vmem:[#allocation8 + $0xc80] sm:$0xff] %v7901
    %8414 = vst [vmem:[#allocation8 + $0xc88] sm:$0xff] %v7902
    %8415 = vst [vmem:[#allocation8 + $0xc90] sm:$0xff] %v7903
    %8416 = vst [vmem:[#allocation8 + $0xc98] sm:$0xff] %v7904
    %8417 = vst [vmem:[#allocation8 + $0xca0] sm:$0xff] %v7905
    %8418 = vst [vmem:[#allocation8 + $0xca8] sm:$0xff] %v7906
    %8419 = vst [vmem:[#allocation8 + $0xcb0] sm:$0xff] %v7907
    %8420 = vst [vmem:[#allocation8 + $0xcb8] sm:$0xff] %v7908
    %8421 = vst [vmem:[#allocation8 + $0xcc0] sm:$0xff] %v7909
    %8422 = vst [vmem:[#allocation8 + $0xcc8] sm:$0xff] %v7910
    %8423 = vst [vmem:[#allocation8 + $0xcd0] sm:$0xff] %v7911
    %8424 = vst [vmem:[#allocation8 + $0xcd8] sm:$0xff] %v7912
    %8425 = vst [vmem:[#allocation8 + $0xce0] sm:$0xff] %v7913
    %8426 = vst [vmem:[#allocation8 + $0xce8] sm:$0xff] %v7914
    %8427 = vst [vmem:[#allocation8 + $0xcf0] sm:$0xff] %v7915
    %8428 = vst [vmem:[#allocation8 + $0xcf8] sm:$0xff] %v7916
    %8429 = vst [vmem:[#allocation8 + $0xd00] sm:$0xff] %v7917
    %8430 = vst [vmem:[#allocation8 + $0xd08] sm:$0xff] %v7918
    %8431 = vst [vmem:[#allocation8 + $0xd10] sm:$0xff] %v7919
    %8432 = vst [vmem:[#allocation8 + $0xd18] sm:$0xff] %v7920
    %8433 = vst [vmem:[#allocation8 + $0xd20] sm:$0xff] %v7921
    %8434 = vst [vmem:[#allocation8 + $0xd28] sm:$0xff] %v7922
    %8435 = vst [vmem:[#allocation8 + $0xd30] sm:$0xff] %v7923
    %8436 = vst [vmem:[#allocation8 + $0xd38] sm:$0xff] %v7924
    %8437 = vst [vmem:[#allocation8 + $0xd40] sm:$0xff] %v7925
    %8438 = vst [vmem:[#allocation8 + $0xd48] sm:$0xff] %v7926
    %8439 = vst [vmem:[#allocation8 + $0xd50] sm:$0xff] %v7927
    %8440 = vst [vmem:[#allocation8 + $0xd58] sm:$0xff] %v7928
    %8441 = vst [vmem:[#allocation8 + $0xd60] sm:$0xff] %v7929
    %8442 = vst [vmem:[#allocation8 + $0xd68] sm:$0xff] %v7930
    %8443 = vst [vmem:[#allocation8 + $0xd70] sm:$0xff] %v7931
    %8444 = vst [vmem:[#allocation8 + $0xd78] sm:$0xff] %v7932
    %8445 = vst [vmem:[#allocation8 + $0xd80] sm:$0xff] %v7933
    %8446 = vst [vmem:[#allocation8 + $0xd88] sm:$0xff] %v7934
    %8447 = vst [vmem:[#allocation8 + $0xd90] sm:$0xff] %v7935
    %8448 = vst [vmem:[#allocation8 + $0xd98] sm:$0xff] %v7936
    %8449 = vst [vmem:[#allocation8 + $0xda0] sm:$0xff] %v7937
    %8450 = vst [vmem:[#allocation8 + $0xda8] sm:$0xff] %v7938
    %8451 = vst [vmem:[#allocation8 + $0xdb0] sm:$0xff] %v7939
    %8452 = vst [vmem:[#allocation8 + $0xdb8] sm:$0xff] %v7940
    %8453 = vst [vmem:[#allocation8 + $0xdc0] sm:$0xff] %v7941
    %8454 = vst [vmem:[#allocation8 + $0xdc8] sm:$0xff] %v7942
    %8455 = vst [vmem:[#allocation8 + $0xdd0] sm:$0xff] %v7943
    %8456 = vst [vmem:[#allocation8 + $0xdd8] sm:$0xff] %v7944
    %8457 = vst [vmem:[#allocation8 + $0xde0] sm:$0xff] %v7945
    %8458 = vst [vmem:[#allocation8 + $0xde8] sm:$0xff] %v7946
    %8459 = vst [vmem:[#allocation8 + $0xdf0] sm:$0xff] %v7947
    %8460 = vst [vmem:[#allocation8 + $0xdf8] sm:$0xff] %v7948
    %8461 = vst [vmem:[#allocation8 + $0xe00] sm:$0xff] %v7949
    %8462 = vst [vmem:[#allocation8 + $0xe08] sm:$0xff] %v7950
    %8463 = vst [vmem:[#allocation8 + $0xe10] sm:$0xff] %v7951
    %8464 = vst [vmem:[#allocation8 + $0xe18] sm:$0xff] %v7952
    %8465 = vst [vmem:[#allocation8 + $0xe20] sm:$0xff] %v7953
    %8466 = vst [vmem:[#allocation8 + $0xe28] sm:$0xff] %v7954
    %8467 = vst [vmem:[#allocation8 + $0xe30] sm:$0xff] %v7955
    %8468 = vst [vmem:[#allocation8 + $0xe38] sm:$0xff] %v7956
    %8469 = vst [vmem:[#allocation8 + $0xe40] sm:$0xff] %v7957
    %8470 = vst [vmem:[#allocation8 + $0xe48] sm:$0xff] %v7958
    %8471 = vst [vmem:[#allocation8 + $0xe50] sm:$0xff] %v7959
    %8472 = vst [vmem:[#allocation8 + $0xe58] sm:$0xff] %v7960
    %8473 = vst [vmem:[#allocation8 + $0xe60] sm:$0xff] %v7961
    %8474 = vst [vmem:[#allocation8 + $0xe68] sm:$0xff] %v7962
    %8475 = vst [vmem:[#allocation8 + $0xe70] sm:$0xff] %v7963
    %8476 = vst [vmem:[#allocation8 + $0xe78] sm:$0xff] %v7964
    %8477 = vst [vmem:[#allocation8 + $0xe80] sm:$0xff] %v7965
    %8478 = vst [vmem:[#allocation8 + $0xe88] sm:$0xff] %v7966
    %8479 = vst [vmem:[#allocation8 + $0xe90] sm:$0xff] %v7967
    %8480 = vst [vmem:[#allocation8 + $0xe98] sm:$0xff] %v7968
    %8481 = vst [vmem:[#allocation8 + $0xea0] sm:$0xff] %v7969
    %8482 = vst [vmem:[#allocation8 + $0xea8] sm:$0xff] %v7970
    %8483 = vst [vmem:[#allocation8 + $0xeb0] sm:$0xff] %v7971
    %8484 = vst [vmem:[#allocation8 + $0xeb8] sm:$0xff] %v7972
    %8485 = vst [vmem:[#allocation8 + $0xec0] sm:$0xff] %v7973
    %8486 = vst [vmem:[#allocation8 + $0xec8] sm:$0xff] %v7974
    %8487 = vst [vmem:[#allocation8 + $0xed0] sm:$0xff] %v7975
    %8488 = vst [vmem:[#allocation8 + $0xed8] sm:$0xff] %v7976
    %8489 = vst [vmem:[#allocation8 + $0xee0] sm:$0xff] %v7977
    %8490 = vst [vmem:[#allocation8 + $0xee8] sm:$0xff] %v7978
    %8491 = vst [vmem:[#allocation8 + $0xef0] sm:$0xff] %v7979
    %8492 = vst [vmem:[#allocation8 + $0xef8] sm:$0xff] %v7980
    %8493 = vst [vmem:[#allocation8 + $0xf00] sm:$0xff] %v7981
    %8494 = vst [vmem:[#allocation8 + $0xf08] sm:$0xff] %v7982
    %8495 = vst [vmem:[#allocation8 + $0xf10] sm:$0xff] %v7983
    %8496 = vst [vmem:[#allocation8 + $0xf18] sm:$0xff] %v7984
    %8497 = vst [vmem:[#allocation8 + $0xf20] sm:$0xff] %v7985
    %8498 = vst [vmem:[#allocation8 + $0xf28] sm:$0xff] %v7986
    %8499 = vst [vmem:[#allocation8 + $0xf30] sm:$0xff] %v7987
    %8500 = vst [vmem:[#allocation8 + $0xf38] sm:$0xff] %v7988
    %8501 = vst [vmem:[#allocation8 + $0xf40] sm:$0xff] %v7989
    %8502 = vst [vmem:[#allocation8 + $0xf48] sm:$0xff] %v7990
    %8503 = vst [vmem:[#allocation8 + $0xf50] sm:$0xff] %v7991
    %8504 = vst [vmem:[#allocation8 + $0xf58] sm:$0xff] %v7992
    %8505 = vst [vmem:[#allocation8 + $0xf60] sm:$0xff] %v7993
    %8506 = vst [vmem:[#allocation8 + $0xf68] sm:$0xff] %v7994
    %8507 = vst [vmem:[#allocation8 + $0xf70] sm:$0xff] %v7995
    %8508 = vst [vmem:[#allocation8 + $0xf78] sm:$0xff] %v7996
    %8509 = vst [vmem:[#allocation8 + $0xf80] sm:$0xff] %v7997
    %8510 = vst [vmem:[#allocation8 + $0xf88] sm:$0xff] %v7998
    %8511 = vst [vmem:[#allocation8 + $0xf90] sm:$0xff] %v7999
    %8512 = vst [vmem:[#allocation8 + $0xf98] sm:$0xff] %v8000
    %8513 = vst [vmem:[#allocation8 + $0xfa0] sm:$0xff] %v8001
    %8514 = vst [vmem:[#allocation8 + $0xfa8] sm:$0xff] %v8002
    %8515 = vst [vmem:[#allocation8 + $0xfb0] sm:$0xff] %v8003
    %8516 = vst [vmem:[#allocation8 + $0xfb8] sm:$0xff] %v8004
    %8517 = vst [vmem:[#allocation8 + $0xfc0] sm:$0xff] %v8005
    %8518 = vst [vmem:[#allocation8 + $0xfc8] sm:$0xff] %v8006
    %8519 = vst [vmem:[#allocation8 + $0xfd0] sm:$0xff] %v8007
    %8520 = vst [vmem:[#allocation8 + $0xfd8] sm:$0xff] %v8008
    %8521 = vst [vmem:[#allocation8 + $0xfe0] sm:$0xff] %v8009
    %8522 = vst [vmem:[#allocation8 + $0xfe8] sm:$0xff] %v8010
    %8523 = vst [vmem:[#allocation8 + $0xff0] sm:$0xff] %v8011
    %8524 = vst [vmem:[#allocation8 + $0xff8] sm:$0xff] %v8012
    // Predicated region
    $region26: #{tpu_custom_call.1} parent=1 // pred_check
      _
    $region27: #{tpu_custom_call.1} parent=1 // pred_check_branch
      %8526 = sbr.rel (0) target = $region29
    $region28: #{tpu_custom_call.1} parent=1 // pred_region
      %8528 = vsyncadd [#allocation4], 0
      %s8529 = sshll.u32 [#allocation8], 4
      %s8530 = int_to_ptr.vmem [resolvable:$true] %s8529
      %s8531 = sshll.u32 %s3, 4
      %s8532 = int_to_ptr.hbm [resolvable:$true] %s8531
      %8537 = dma.vmem_to_hbm [thread:$0]  %s8530, 65536, %s8532, [#allocation4], 256, 256, 16
    $region29: #{tpu_custom_call.1} parent=1 // pred_fallthru
      _
    // Predicated region
    $region30: #{tpu_custom_call.1} parent=1 // pred_check
      _
    $region31: #{tpu_custom_call.1} parent=1 // pred_check_branch
      %8539 = sbr.rel (0) target = $region33
    $region32: #{tpu_custom_call.1} parent=1 // pred_region
      %8541 = dma.done [#allocation4], 65536
    $region33: #{tpu_custom_call.1} parent=1 // pred_fallthru
      _
    %8542 = vsyncpa [#allocation3], 1
    %8543 = vsyncpa [#allocation6], 1
    %8544 = vsyncpa [#allocation4], 1

</llo_original>
